<compile_context>
chip_gen: v6e
topology: v6e:2x2x1
jax: 0.10.0
libtpu: 0.0.40
codegen_flags: <defaults>
</compile_context>

<pallas_src>
import functools
import math

import jax
import jax.numpy as jnp
from jax.experimental import pallas as pl
from jax.experimental.pallas import tpu as pltpu

_LEAKY_SLOPE = 0.01   # nn.LeakyReLU default negative_slope
_BN_EPS = 1e-5        # nn.BatchNorm2d default eps
_LANE = 128


def _round_up(x, m):
    return (x + m - 1) // m * m


def _vmem_capacity_bytes():
    try:
        return int(pltpu.get_tpu_info().vmem_capacity_bytes)
    except Exception:
        return 64 * 1024 * 1024   # conservative fallback (v7x per-TensorCore VMEM)


# ------------------------------- kernel -------------------------------------

def _res_block_kernel(*refs, Bb, H, W, Cinp, Coutp, has_shortcut, slope):
    """One group of Bb images per grid step.

    refs (has_shortcut=True):
      x_ref  : VMEM (Bb, H+2, W+2, Cinp)  spatially pre-padded input (compute dtype)
      w1_ref : VMEM (9, Cinp, Coutp)      conv1 weights, BN1 folded, taps-major
      b1_ref : VMEM (1, Coutp)            conv1+BN1 bias (f32)
      w2_ref : VMEM (9, Coutp, Coutp)     conv2 weights, BN2 folded
      b2_ref : VMEM (1, Coutp)            conv2+BN2 bias (f32)
      ws_ref : VMEM (Cinp, Coutp)         1x1 shortcut weights, BN folded
      bs_ref : VMEM (1, Coutp)            shortcut bias (f32)
      o_ref  : VMEM (Bb, H, W, Coutp)     output block
      h_ref  : VMEM (Bb, H+2, W+2, Coutp) scratch staging conv1's padded output
    """
    if has_shortcut:
        x_ref, w1_ref, b1_ref, w2_ref, b2_ref, ws_ref, bs_ref, o_ref, h_ref = refs
    else:
        x_ref, w1_ref, b1_ref, w2_ref, b2_ref, o_ref, h_ref = refs
        ws_ref = bs_ref = None

    M = Bb * H * W

    def conv3x3(src_ref, w_ref, k, acc):
        # Nine shifted-window loads straight from the (pre-padded) ref; each is a
        # single (M, k) @ (k, Coutp) MXU matmul accumulated in f32.
        for dy in range(3):
            for dx in range(3):
                patch = src_ref[:, dy:dy + H, dx:dx + W, :].reshape(M, k)
                acc = acc + jnp.dot(patch, w_ref[dy * 3 + dx],
                                    preferred_element_type=jnp.float32)
        return acc

    def lrelu(v):
        return jnp.maximum(v, slope * v)   # mul+max instead of cmp+mul+select

    # conv1 + BN1 (folded) + LeakyReLU; accumulator seeded with the bias.
    h = lrelu(conv3x3(x_ref, w1_ref, Cinp, b1_ref[...]))          # (M, Coutp) f32

    # Stage conv1's output in a spatially padded VMEM scratch so conv2's nine
    # shifted windows are again plain ref loads. Only the 1-wide borders are
    # zeroed (every step: scratch persistence across steps is per-core, so do
    # not rely on a first-step-only init under "parallel" grid sharding).
    zrow = jnp.zeros((Bb, 1, W + 2, Coutp), h_ref.dtype)
    h_ref[:, 0:1, :, :] = zrow
    h_ref[:, H + 1:H + 2, :, :] = zrow
    zcol = jnp.zeros((Bb, H + 2, 1, Coutp), h_ref.dtype)
    h_ref[:, :, 0:1, :] = zcol
    h_ref[:, :, W + 1:W + 2, :] = zcol
    h_ref[:, 1:H + 1, 1:W + 1, :] = h.reshape(Bb, H, W, Coutp).astype(h_ref.dtype)

    # Residual branch seeds conv2's accumulator together with BN2's bias.
    x_center = x_ref[:, 1:H + 1, 1:W + 1, :].reshape(M, Cinp)
    if has_shortcut:
        res = jnp.dot(x_center, ws_ref[...],
                      preferred_element_type=jnp.float32) + bs_ref[...]
    else:
        res = x_center.astype(jnp.float32)          # Cinp == Coutp on this path

    out = lrelu(conv3x3(h_ref, w2_ref, Coutp, res + b2_ref[...]))
    o_ref[...] = out.reshape(Bb, H, W, Coutp).astype(o_ref.dtype)


# ------------------------------- wrapper ------------------------------------

def _fold_bn(w, b, bn):
    gamma, beta, mean, var = bn
    inv = gamma * jax.lax.rsqrt(var + _BN_EPS)
    return w * inv[:, None, None, None], (b - mean) * inv + beta


def _pick_batch_block(B, H, W, Cinp, Coutp, cbytes, obytes, budget):
    """Largest divisor of B (<= 8) whose per-step working set fits the budget."""
    weight_bytes = (cbytes * (9 * Cinp * Coutp + 9 * Coutp * Coutp + Cinp * Coutp)
                    + 3 * 4 * Coutp)

    def step_bytes(bb):
        m = bb * H * W
        x_in = bb * (H + 2) * (W + 2) * Cinp * cbytes
        o_out = m * Coutp * obytes
        scratch = bb * (H + 2) * (W + 2) * Coutp * cbytes
        live = 6 * m * Coutp * 4 + 2 * m * Cinp * cbytes     # f32 accum / temps
        return 2 * (x_in + o_out) + scratch + 2 * weight_bytes + live

    for bb in range(min(B, 8), 0, -1):
        if B % bb == 0 and step_bytes(bb) <= budget:
            return bb
    # TODO(synk): add a halo'd row-slab spatial grid axis for images whose
    # single-image working set exceeds VMEM (needed mainly on v7x, 64 MiB).
    raise NotImplementedError("Res_block image too large for whole-image VMEM blocking")


@functools.partial(jax.jit, static_argnames=("stride", "compute_dtype"))
def res_block_forward_nhwc(x, params, stride=1, compute_dtype=jnp.bfloat16):
    """x: (B, H, W, Cin) NHWC. params: conv / BN parameters (eval mode)."""
    if stride != 1:
        # TODO(synk): strided conv1 / shortcut (stride != 1) not implemented.
        raise NotImplementedError("res_block_forward: only stride=1 is supported")

    B, H, W, Cin = x.shape
    Cout = params["conv1_w"].shape[0]
    has_shortcut = "sc_w" in params
    if not has_shortcut and Cin != Cout:
        raise ValueError("identity shortcut requires in_channels == out_channels")

    Cinp = _round_up(Cin, _LANE)
    Coutp = _round_up(Cout, _LANE)
    cdt = jnp.dtype(compute_dtype)
    odt = jnp.dtype(x.dtype)

    w1, b1 = _fold_bn(params["conv1_w"], params["conv1_b"], params["bn1"])
    w2, b2 = _fold_bn(params["conv2_w"], params["conv2_b"], params["bn2"])

    def pack3x3(w, ci, cip, cop):
        # (co, ci, 3, 3) -> taps-major (9, cip, cop), channels zero-padded.
        wk = jnp.transpose(w, (2, 3, 1, 0)).reshape(9, ci, -1)
        return jnp.pad(wk, ((0, 0), (0, cip - ci),
                            (0, cop - wk.shape[-1]))).astype(cdt)

    w1_k = pack3x3(w1, Cin, Cinp, Coutp)
    w2_k = pack3x3(w2, Cout, Coutp, Coutp)
    b1_k = jnp.pad(b1, (0, Coutp - Cout)).reshape(1, Coutp).astype(jnp.float32)
    b2_k = jnp.pad(b2, (0, Coutp - Cout)).reshape(1, Coutp).astype(jnp.float32)

    # Spatially pre-padded, channel-padded, compute-dtype input slab (NHWC).
    x_pad = jnp.pad(x.astype(cdt), ((0, 0), (1, 1), (1, 1), (0, Cinp - Cin)))

    vmem_cap = _vmem_capacity_bytes()
    vmem_limit = min(vmem_cap * 3 // 4, 100 * 1024 * 1024)
    Bb = _pick_batch_block(B, H, W, Cinp, Coutp, cdt.itemsize, odt.itemsize,
                           int(vmem_limit * 0.9))
    grid = (B // Bb,)

    in_specs = [
        pl.BlockSpec((Bb, H + 2, W + 2, Cinp), lambda b: (b, 0, 0, 0)),
        pl.BlockSpec((9, Cinp, Coutp), lambda b: (0, 0, 0)),
        pl.BlockSpec((1, Coutp), lambda b: (0, 0)),
        pl.BlockSpec((9, Coutp, Coutp), lambda b: (0, 0, 0)),
        pl.BlockSpec((1, Coutp), lambda b: (0, 0)),
    ]
    args = [x_pad, w1_k, b1_k, w2_k, b2_k]

    if has_shortcut:
        ws, bs = _fold_bn(params["sc_w"], params["sc_b"], params["bn_sc"])
        ws_k = jnp.pad(jnp.transpose(ws[:, :, 0, 0], (1, 0)),
                       ((0, Cinp - Cin), (0, Coutp - Cout))).astype(cdt)
        bs_k = jnp.pad(bs, (0, Coutp - Cout)).reshape(1, Coutp).astype(jnp.float32)
        in_specs += [pl.BlockSpec((Cinp, Coutp), lambda b: (0, 0)),
                     pl.BlockSpec((1, Coutp), lambda b: (0, 0))]
        args += [ws_k, bs_k]

    kernel = functools.partial(
        _res_block_kernel, Bb=Bb, H=H, W=W, Cinp=Cinp, Coutp=Coutp,
        has_shortcut=has_shortcut, slope=_LEAKY_SLOPE)

    flops = B * H * W * (18 * Cinp * Coutp + 18 * Coutp * Coutp
                         + (2 * Cinp * Coutp if has_shortcut else 0))
    bytes_accessed = (x_pad.size * cdt.itemsize
                      + B * H * W * Coutp * odt.itemsize
                      + sum(int(a.size) * a.dtype.itemsize for a in args[1:]))

    out = pl.pallas_call(
        kernel,
        out_shape=jax.ShapeDtypeStruct((B, H, W, Coutp), odt),
        grid=grid,
        in_specs=in_specs,
        out_specs=pl.BlockSpec((Bb, H, W, Coutp), lambda b: (b, 0, 0, 0)),
        scratch_shapes=[pltpu.VMEM((Bb, H + 2, W + 2, Coutp), cdt)],
        compiler_params=pltpu.CompilerParams(
            dimension_semantics=("parallel",),
            vmem_limit_bytes=int(vmem_limit)),
        cost_estimate=pl.CostEstimate(
            flops=int(flops), transcendentals=0,
            bytes_accessed=int(bytes_accessed)),
    )(*args)

    return out[..., :Cout]


@functools.partial(jax.jit, static_argnames=("stride", "compute_dtype"))
def res_block_forward(x, params, stride=1, compute_dtype=jnp.bfloat16):
    """x: (B, Cin, H, W) NCHW (matches the PyTorch module's layout)."""
    # TODO(synk): NHWC callers should use res_block_forward_nhwc directly to avoid
    # these two extra HBM transpose passes around the fused kernel.
    out_nhwc = res_block_forward_nhwc(jnp.transpose(x, (0, 2, 3, 1)), params,
                                      stride=stride, compute_dtype=compute_dtype)
    return jnp.transpose(out_nhwc, (0, 3, 1, 2))


# ---------------- pure-JAX reference (mirrors the PyTorch forward) ----------------

def _conv2d_nchw(x, w, b, stride, padding):
    out = jax.lax.conv_general_dilated(
        x, w, window_strides=(stride, stride),
        padding=((padding, padding), (padding, padding)),
        dimension_numbers=("NCHW", "OIHW", "NCHW"),
        precision=jax.lax.Precision.HIGHEST)
    return out + b[None, :, None, None]


def _bn_nchw(x, bn):
    gamma, beta, mean, var = bn
    inv = gamma / jnp.sqrt(var + _BN_EPS)
    return ((x - mean[None, :, None, None]) * inv[None, :, None, None]
            + beta[None, :, None, None])


def _lrelu(x):
    return jnp.where(x >= 0, x, _LEAKY_SLOPE * x)


def _res_block_reference(x, params, stride=1):
    residual = x
    if "sc_w" in params:
        residual = _bn_nchw(
            _conv2d_nchw(x, params["sc_w"], params["sc_b"], stride, 0),
            params["bn_sc"])
    out = _lrelu(_bn_nchw(
        _conv2d_nchw(x, params["conv1_w"], params["conv1_b"], stride, 1),
        params["bn1"]))
    out = _bn_nchw(
        _conv2d_nchw(out, params["conv2_w"], params["conv2_b"], 1, 1),
        params["bn2"])
    return _lrelu(out + residual)


def _make_params(key, cin, cout, stride=1):
    keys = jax.random.split(key, 6)

    def conv_init(k, co, ci, kh, kw):
        bound = 1.0 / math.sqrt(ci * kh * kw)
        kw_, kb_ = jax.random.split(k)
        w = jax.random.uniform(kw_, (co, ci, kh, kw), minval=-bound,
                               maxval=bound, dtype=jnp.float32)
        b = jax.random.uniform(kb_, (co,), minval=-bound, maxval=bound,
                               dtype=jnp.float32)
        return w, b

    def bn_init(k, c):
        k1, k2, k3, k4 = jax.random.split(k, 4)
        gamma = jax.random.uniform(k1, (c,), minval=0.5, maxval=1.5, dtype=jnp.float32)
        beta = 0.1 * jax.random.normal(k2, (c,), dtype=jnp.float32)
        mean = 0.1 * jax.random.normal(k3, (c,), dtype=jnp.float32)
        var = jax.random.uniform(k4, (c,), minval=0.5, maxval=1.5, dtype=jnp.float32)
        return gamma, beta, mean, var

    params = {}
    params["conv1_w"], params["conv1_b"] = conv_init(keys[0], cout, cin, 3, 3)
    params["bn1"] = bn_init(keys[1], cout)
    params["conv2_w"], params["conv2_b"] = conv_init(keys[2], cout, cout, 3, 3)
    params["bn2"] = bn_init(keys[3], cout)
    if stride != 1 or cout != cin:
        params["sc_w"], params["sc_b"] = conv_init(keys[4], cout, cin, 1, 1)
        params["bn_sc"] = bn_init(keys[5], cout)
    return params


if __name__ == "__main__":
    root = jax.random.PRNGKey(0)
    B, H, W = 2, 16, 16

    # Exercise both branches: identity shortcut (cin==cout) and 1x1-conv shortcut,
    # each with the default bf16 compute path and an f32 compute path for a tight
    # numerical check.
    for cin, cout in [(4, 4), (4, 8)]:
        kx, kp, root = jax.random.split(root, 3)
        x = jax.random.normal(kx, (B, cin, H, W), dtype=jnp.float32)
        params = _make_params(kp, cin, cout, stride=1)
        ref = _res_block_reference(x, params, stride=1)

        for cdt, tol in [(jnp.float32, 2e-3), (jnp.bfloat16, 6e-2)]:
            out = res_block_forward(x, params, stride=1, compute_dtype=cdt)
            out = jax.block_until_ready(out)
            assert out.shape == (B, cout, H, W)
            assert jnp.allclose(out, ref, atol=tol, rtol=tol), (
                f"mismatch vs reference for (cin={cin}, cout={cout}, dtype={cdt})")

    print("KERNEL_OK")
</pallas_src>

<mosaic_0001>
module attributes {stable_mosaic.version = 11 : i64} {
  func.func @_res_block_kernel(%arg0: i32, %arg1: memref<2x18x18x128xf32, #tpu.memory_space<vmem>>, %arg2: memref<9x128x128xf32, #tpu.memory_space<vmem>>, %arg3: memref<1x128xf32, #tpu.memory_space<vmem>>, %arg4: memref<9x128x128xf32, #tpu.memory_space<vmem>>, %arg5: memref<1x128xf32, #tpu.memory_space<vmem>>, %arg6: memref<2x16x16x128xf32, #tpu.memory_space<vmem>>, %arg7: memref<2x18x18x128xf32, #tpu.memory_space<vmem>>) attributes {dimension_semantics = [#tpu.dimension_semantics<parallel>], iteration_bounds = array<i64: 1>, scalar_prefetch = 0 : i64, scratch_operands = 1 : i64, tpu.core_type = #tpu.core_type<tc>, window_params = [{transform_indices = @transform_0, window_bounds = array<i64: 2, 18, 18, 128>}, {pipeline_mode = #tpu.pipeline_mode<synchronous>, transform_indices = @transform_1, window_bounds = array<i64: 9, 128, 128>}, {pipeline_mode = #tpu.pipeline_mode<synchronous>, transform_indices = @transform_2, window_bounds = array<i64: 1, 128>}, {pipeline_mode = #tpu.pipeline_mode<synchronous>, transform_indices = @transform_3, window_bounds = array<i64: 9, 128, 128>}, {pipeline_mode = #tpu.pipeline_mode<synchronous>, transform_indices = @transform_4, window_bounds = array<i64: 1, 128>}, {transform_indices = @transform_5, window_bounds = array<i64: 2, 16, 16, 128>}]} {
    %c0 = arith.constant 0 : index
    %c0_0 = arith.constant 0 : index
    %0 = vector.load %arg3[%c0, %c0_0] : memref<1x128xf32, #tpu.memory_space<vmem>>, vector<1x128xf32>
    %c0_1 = arith.constant 0 : index
    %c0_2 = arith.constant 0 : index
    %c0_3 = arith.constant 0 : index
    %c0_4 = arith.constant 0 : index
    %1 = vector.load %arg1[%c0_1, %c0_2, %c0_3, %c0_4] : memref<2x18x18x128xf32, #tpu.memory_space<vmem>>, vector<2x16x16x128xf32>
    %2 = vector.shape_cast %1 : vector<2x16x16x128xf32> to vector<512x128xf32>
    %c0_5 = arith.constant 0 : index
    %c0_6 = arith.constant 0 : index
    %c0_7 = arith.constant 0 : index
    %3 = vector.load %arg2[%c0_5, %c0_6, %c0_7] : memref<9x128x128xf32, #tpu.memory_space<vmem>>, vector<1x128x128xf32>
    %4 = vector.shape_cast %3 : vector<1x128x128xf32> to vector<128x128xf32>
    %cst = arith.constant dense<0.000000e+00> : vector<512x128xf32>
    %5 = tpu.matmul %2, %4, %cst {dimension_numbers = #tpu.dot_dimension_numbers<[1], [0], [0], [1], [0, 0, 1, 1], [], []>} : vector<512x128xf32>, vector<128x128xf32>, vector<512x128xf32> -> vector<512x128xf32>
    %6 = vector.broadcast %0 : vector<1x128xf32> to vector<512x128xf32>
    %7 = arith.addf %6, %5 : vector<512x128xf32>
    %c0_8 = arith.constant 0 : index
    %c0_9 = arith.constant 0 : index
    %c1 = arith.constant 1 : index
    %c0_10 = arith.constant 0 : index
    %8 = vector.load %arg1[%c0_8, %c0_9, %c1, %c0_10] : memref<2x18x18x128xf32, #tpu.memory_space<vmem>>, vector<2x16x16x128xf32>
    %9 = vector.shape_cast %8 : vector<2x16x16x128xf32> to vector<512x128xf32>
    %c1_11 = arith.constant 1 : index
    %c0_12 = arith.constant 0 : index
    %c0_13 = arith.constant 0 : index
    %10 = vector.load %arg2[%c1_11, %c0_12, %c0_13] : memref<9x128x128xf32, #tpu.memory_space<vmem>>, vector<1x128x128xf32>
    %11 = vector.shape_cast %10 : vector<1x128x128xf32> to vector<128x128xf32>
    %cst_14 = arith.constant dense<0.000000e+00> : vector<512x128xf32>
    %12 = tpu.matmul %9, %11, %cst_14 {dimension_numbers = #tpu.dot_dimension_numbers<[1], [0], [0], [1], [0, 0, 1, 1], [], []>} : vector<512x128xf32>, vector<128x128xf32>, vector<512x128xf32> -> vector<512x128xf32>
    %13 = arith.addf %7, %12 : vector<512x128xf32>
    %c0_15 = arith.constant 0 : index
    %c0_16 = arith.constant 0 : index
    %c2 = arith.constant 2 : index
    %c0_17 = arith.constant 0 : index
    %14 = vector.load %arg1[%c0_15, %c0_16, %c2, %c0_17] : memref<2x18x18x128xf32, #tpu.memory_space<vmem>>, vector<2x16x16x128xf32>
    %15 = vector.shape_cast %14 : vector<2x16x16x128xf32> to vector<512x128xf32>
    %c2_18 = arith.constant 2 : index
    %c0_19 = arith.constant 0 : index
    %c0_20 = arith.constant 0 : index
    %16 = vector.load %arg2[%c2_18, %c0_19, %c0_20] : memref<9x128x128xf32, #tpu.memory_space<vmem>>, vector<1x128x128xf32>
    %17 = vector.shape_cast %16 : vector<1x128x128xf32> to vector<128x128xf32>
    %cst_21 = arith.constant dense<0.000000e+00> : vector<512x128xf32>
    %18 = tpu.matmul %15, %17, %cst_21 {dimension_numbers = #tpu.dot_dimension_numbers<[1], [0], [0], [1], [0, 0, 1, 1], [], []>} : vector<512x128xf32>, vector<128x128xf32>, vector<512x128xf32> -> vector<512x128xf32>
    %19 = arith.addf %13, %18 : vector<512x128xf32>
    %c0_22 = arith.constant 0 : index
    %c1_23 = arith.constant 1 : index
    %c0_24 = arith.constant 0 : index
    %c0_25 = arith.constant 0 : index
    %20 = vector.load %arg1[%c0_22, %c1_23, %c0_24, %c0_25] : memref<2x18x18x128xf32, #tpu.memory_space<vmem>>, vector<2x16x16x128xf32>
    %21 = vector.shape_cast %20 : vector<2x16x16x128xf32> to vector<512x128xf32>
    %c3 = arith.constant 3 : index
    %c0_26 = arith.constant 0 : index
    %c0_27 = arith.constant 0 : index
    %22 = vector.load %arg2[%c3, %c0_26, %c0_27] : memref<9x128x128xf32, #tpu.memory_space<vmem>>, vector<1x128x128xf32>
    %23 = vector.shape_cast %22 : vector<1x128x128xf32> to vector<128x128xf32>
    %cst_28 = arith.constant dense<0.000000e+00> : vector<512x128xf32>
    %24 = tpu.matmul %21, %23, %cst_28 {dimension_numbers = #tpu.dot_dimension_numbers<[1], [0], [0], [1], [0, 0, 1, 1], [], []>} : vector<512x128xf32>, vector<128x128xf32>, vector<512x128xf32> -> vector<512x128xf32>
    %25 = arith.addf %19, %24 : vector<512x128xf32>
    %c0_29 = arith.constant 0 : index
    %c1_30 = arith.constant 1 : index
    %c1_31 = arith.constant 1 : index
    %c0_32 = arith.constant 0 : index
    %26 = vector.load %arg1[%c0_29, %c1_30, %c1_31, %c0_32] : memref<2x18x18x128xf32, #tpu.memory_space<vmem>>, vector<2x16x16x128xf32>
    %27 = vector.shape_cast %26 : vector<2x16x16x128xf32> to vector<512x128xf32>
    %c4 = arith.constant 4 : index
    %c0_33 = arith.constant 0 : index
    %c0_34 = arith.constant 0 : index
    %28 = vector.load %arg2[%c4, %c0_33, %c0_34] : memref<9x128x128xf32, #tpu.memory_space<vmem>>, vector<1x128x128xf32>
    %29 = vector.shape_cast %28 : vector<1x128x128xf32> to vector<128x128xf32>
    %cst_35 = arith.constant dense<0.000000e+00> : vector<512x128xf32>
    %30 = tpu.matmul %27, %29, %cst_35 {dimension_numbers = #tpu.dot_dimension_numbers<[1], [0], [0], [1], [0, 0, 1, 1], [], []>} : vector<512x128xf32>, vector<128x128xf32>, vector<512x128xf32> -> vector<512x128xf32>
    %31 = arith.addf %25, %30 : vector<512x128xf32>
    %c0_36 = arith.constant 0 : index
    %c1_37 = arith.constant 1 : index
    %c2_38 = arith.constant 2 : index
    %c0_39 = arith.constant 0 : index
    %32 = vector.load %arg1[%c0_36, %c1_37, %c2_38, %c0_39] : memref<2x18x18x128xf32, #tpu.memory_space<vmem>>, vector<2x16x16x128xf32>
    %33 = vector.shape_cast %32 : vector<2x16x16x128xf32> to vector<512x128xf32>
    %c5 = arith.constant 5 : index
    %c0_40 = arith.constant 0 : index
    %c0_41 = arith.constant 0 : index
    %34 = vector.load %arg2[%c5, %c0_40, %c0_41] : memref<9x128x128xf32, #tpu.memory_space<vmem>>, vector<1x128x128xf32>
    %35 = vector.shape_cast %34 : vector<1x128x128xf32> to vector<128x128xf32>
    %cst_42 = arith.constant dense<0.000000e+00> : vector<512x128xf32>
    %36 = tpu.matmul %33, %35, %cst_42 {dimension_numbers = #tpu.dot_dimension_numbers<[1], [0], [0], [1], [0, 0, 1, 1], [], []>} : vector<512x128xf32>, vector<128x128xf32>, vector<512x128xf32> -> vector<512x128xf32>
    %37 = arith.addf %31, %36 : vector<512x128xf32>
    %c0_43 = arith.constant 0 : index
    %c2_44 = arith.constant 2 : index
    %c0_45 = arith.constant 0 : index
    %c0_46 = arith.constant 0 : index
    %38 = vector.load %arg1[%c0_43, %c2_44, %c0_45, %c0_46] : memref<2x18x18x128xf32, #tpu.memory_space<vmem>>, vector<2x16x16x128xf32>
    %39 = vector.shape_cast %38 : vector<2x16x16x128xf32> to vector<512x128xf32>
    %c6 = arith.constant 6 : index
    %c0_47 = arith.constant 0 : index
    %c0_48 = arith.constant 0 : index
    %40 = vector.load %arg2[%c6, %c0_47, %c0_48] : memref<9x128x128xf32, #tpu.memory_space<vmem>>, vector<1x128x128xf32>
    %41 = vector.shape_cast %40 : vector<1x128x128xf32> to vector<128x128xf32>
    %cst_49 = arith.constant dense<0.000000e+00> : vector<512x128xf32>
    %42 = tpu.matmul %39, %41, %cst_49 {dimension_numbers = #tpu.dot_dimension_numbers<[1], [0], [0], [1], [0, 0, 1, 1], [], []>} : vector<512x128xf32>, vector<128x128xf32>, vector<512x128xf32> -> vector<512x128xf32>
    %43 = arith.addf %37, %42 : vector<512x128xf32>
    %c0_50 = arith.constant 0 : index
    %c2_51 = arith.constant 2 : index
    %c1_52 = arith.constant 1 : index
    %c0_53 = arith.constant 0 : index
    %44 = vector.load %arg1[%c0_50, %c2_51, %c1_52, %c0_53] : memref<2x18x18x128xf32, #tpu.memory_space<vmem>>, vector<2x16x16x128xf32>
    %45 = vector.shape_cast %44 : vector<2x16x16x128xf32> to vector<512x128xf32>
    %c7 = arith.constant 7 : index
    %c0_54 = arith.constant 0 : index
    %c0_55 = arith.constant 0 : index
    %46 = vector.load %arg2[%c7, %c0_54, %c0_55] : memref<9x128x128xf32, #tpu.memory_space<vmem>>, vector<1x128x128xf32>
    %47 = vector.shape_cast %46 : vector<1x128x128xf32> to vector<128x128xf32>
    %cst_56 = arith.constant dense<0.000000e+00> : vector<512x128xf32>
    %48 = tpu.matmul %45, %47, %cst_56 {dimension_numbers = #tpu.dot_dimension_numbers<[1], [0], [0], [1], [0, 0, 1, 1], [], []>} : vector<512x128xf32>, vector<128x128xf32>, vector<512x128xf32> -> vector<512x128xf32>
    %49 = arith.addf %43, %48 : vector<512x128xf32>
    %c0_57 = arith.constant 0 : index
    %c2_58 = arith.constant 2 : index
    %c2_59 = arith.constant 2 : index
    %c0_60 = arith.constant 0 : index
    %50 = vector.load %arg1[%c0_57, %c2_58, %c2_59, %c0_60] : memref<2x18x18x128xf32, #tpu.memory_space<vmem>>, vector<2x16x16x128xf32>
    %51 = vector.shape_cast %50 : vector<2x16x16x128xf32> to vector<512x128xf32>
    %c8 = arith.constant 8 : index
    %c0_61 = arith.constant 0 : index
    %c0_62 = arith.constant 0 : index
    %52 = vector.load %arg2[%c8, %c0_61, %c0_62] : memref<9x128x128xf32, #tpu.memory_space<vmem>>, vector<1x128x128xf32>
    %53 = vector.shape_cast %52 : vector<1x128x128xf32> to vector<128x128xf32>
    %cst_63 = arith.constant dense<0.000000e+00> : vector<512x128xf32>
    %54 = tpu.matmul %51, %53, %cst_63 {dimension_numbers = #tpu.dot_dimension_numbers<[1], [0], [0], [1], [0, 0, 1, 1], [], []>} : vector<512x128xf32>, vector<128x128xf32>, vector<512x128xf32> -> vector<512x128xf32>
    %55 = arith.addf %49, %54 : vector<512x128xf32>
    %cst_64 = arith.constant 0.00999999977 : f32
    %56 = vector.broadcast %cst_64 : f32 to vector<512x128xf32>
    %57 = arith.mulf %56, %55 : vector<512x128xf32>
    %58 = arith.maximumf %55, %57 : vector<512x128xf32>
    %cst_65 = arith.constant 0.000000e+00 : f32
    %59 = vector.broadcast %cst_65 : f32 to vector<2x1x18x128xf32>
    %c0_66 = arith.constant 0 : index
    %c0_67 = arith.constant 0 : index
    %c0_68 = arith.constant 0 : index
    %c0_69 = arith.constant 0 : index
    %60 = vector.load %arg7[%c0_66, %c0_67, %c0_68, %c0_69] : memref<2x18x18x128xf32, #tpu.memory_space<vmem>>, vector<2x1x18x128xf32>
    tpu.vector_store %arg7[%c0_66, %c0_67, %c0_68, %c0_69], %59 {strides = array<i32>} : memref<2x18x18x128xf32, #tpu.memory_space<vmem>>, vector<2x1x18x128xf32>,
    %c0_70 = arith.constant 0 : index
    %c17 = arith.constant 17 : index
    %c0_71 = arith.constant 0 : index
    %c0_72 = arith.constant 0 : index
    %61 = vector.load %arg7[%c0_70, %c17, %c0_71, %c0_72] : memref<2x18x18x128xf32, #tpu.memory_space<vmem>>, vector<2x1x18x128xf32>
    tpu.vector_store %arg7[%c0_70, %c17, %c0_71, %c0_72], %59 {strides = array<i32>} : memref<2x18x18x128xf32, #tpu.memory_space<vmem>>, vector<2x1x18x128xf32>,
    %cst_73 = arith.constant 0.000000e+00 : f32
    %62 = vector.broadcast %cst_73 : f32 to vector<2x18x1x128xf32>
    %c0_74 = arith.constant 0 : index
    %c0_75 = arith.constant 0 : index
    %c0_76 = arith.constant 0 : index
    %c0_77 = arith.constant 0 : index
    %63 = vector.load %arg7[%c0_74, %c0_75, %c0_76, %c0_77] : memref<2x18x18x128xf32, #tpu.memory_space<vmem>>, vector<2x18x1x128xf32>
    tpu.vector_store %arg7[%c0_74, %c0_75, %c0_76, %c0_77], %62 {strides = array<i32>} : memref<2x18x18x128xf32, #tpu.memory_space<vmem>>, vector<2x18x1x128xf32>,
    %c0_78 = arith.constant 0 : index
    %c0_79 = arith.constant 0 : index
    %c17_80 = arith.constant 17 : index
    %c0_81 = arith.constant 0 : index
    %64 = vector.load %arg7[%c0_78, %c0_79, %c17_80, %c0_81] : memref<2x18x18x128xf32, #tpu.memory_space<vmem>>, vector<2x18x1x128xf32>
    tpu.vector_store %arg7[%c0_78, %c0_79, %c17_80, %c0_81], %62 {strides = array<i32>} : memref<2x18x18x128xf32, #tpu.memory_space<vmem>>, vector<2x18x1x128xf32>,
    %65 = vector.shape_cast %58 : vector<512x128xf32> to vector<2x16x16x128xf32>
    %c0_82 = arith.constant 0 : index
    %c1_83 = arith.constant 1 : index
    %c1_84 = arith.constant 1 : index
    %c0_85 = arith.constant 0 : index
    %66 = vector.load %arg7[%c0_82, %c1_83, %c1_84, %c0_85] : memref<2x18x18x128xf32, #tpu.memory_space<vmem>>, vector<2x16x16x128xf32>
    tpu.vector_store %arg7[%c0_82, %c1_83, %c1_84, %c0_85], %65 {strides = array<i32>} : memref<2x18x18x128xf32, #tpu.memory_space<vmem>>, vector<2x16x16x128xf32>,
    %c0_86 = arith.constant 0 : index
    %c1_87 = arith.constant 1 : index
    %c1_88 = arith.constant 1 : index
    %c0_89 = arith.constant 0 : index
    %67 = vector.load %arg1[%c0_86, %c1_87, %c1_88, %c0_89] : memref<2x18x18x128xf32, #tpu.memory_space<vmem>>, vector<2x16x16x128xf32>
    %68 = vector.shape_cast %67 : vector<2x16x16x128xf32> to vector<512x128xf32>
    %c0_90 = arith.constant 0 : index
    %c0_91 = arith.constant 0 : index
    %69 = vector.load %arg5[%c0_90, %c0_91] : memref<1x128xf32, #tpu.memory_space<vmem>>, vector<1x128xf32>
    %70 = vector.broadcast %69 : vector<1x128xf32> to vector<512x128xf32>
    %71 = arith.addf %68, %70 : vector<512x128xf32>
    %c0_92 = arith.constant 0 : index
    %c0_93 = arith.constant 0 : index
    %c0_94 = arith.constant 0 : index
    %c0_95 = arith.constant 0 : index
    %72 = vector.load %arg7[%c0_92, %c0_93, %c0_94, %c0_95] : memref<2x18x18x128xf32, #tpu.memory_space<vmem>>, vector<2x16x16x128xf32>
    %73 = vector.shape_cast %72 : vector<2x16x16x128xf32> to vector<512x128xf32>
    %c0_96 = arith.constant 0 : index
    %c0_97 = arith.constant 0 : index
    %c0_98 = arith.constant 0 : index
    %74 = vector.load %arg4[%c0_96, %c0_97, %c0_98] : memref<9x128x128xf32, #tpu.memory_space<vmem>>, vector<1x128x128xf32>
    %75 = vector.shape_cast %74 : vector<1x128x128xf32> to vector<128x128xf32>
    %cst_99 = arith.constant dense<0.000000e+00> : vector<512x128xf32>
    %76 = tpu.matmul %73, %75, %cst_99 {dimension_numbers = #tpu.dot_dimension_numbers<[1], [0], [0], [1], [0, 0, 1, 1], [], []>} : vector<512x128xf32>, vector<128x128xf32>, vector<512x128xf32> -> vector<512x128xf32>
    %77 = arith.addf %71, %76 : vector<512x128xf32>
    %c0_100 = arith.constant 0 : index
    %c0_101 = arith.constant 0 : index
    %c1_102 = arith.constant 1 : index
    %c0_103 = arith.constant 0 : index
    %78 = vector.load %arg7[%c0_100, %c0_101, %c1_102, %c0_103] : memref<2x18x18x128xf32, #tpu.memory_space<vmem>>, vector<2x16x16x128xf32>
    %79 = vector.shape_cast %78 : vector<2x16x16x128xf32> to vector<512x128xf32>
    %c1_104 = arith.constant 1 : index
    %c0_105 = arith.constant 0 : index
    %c0_106 = arith.constant 0 : index
    %80 = vector.load %arg4[%c1_104, %c0_105, %c0_106] : memref<9x128x128xf32, #tpu.memory_space<vmem>>, vector<1x128x128xf32>
    %81 = vector.shape_cast %80 : vector<1x128x128xf32> to vector<128x128xf32>
    %cst_107 = arith.constant dense<0.000000e+00> : vector<512x128xf32>
    %82 = tpu.matmul %79, %81, %cst_107 {dimension_numbers = #tpu.dot_dimension_numbers<[1], [0], [0], [1], [0, 0, 1, 1], [], []>} : vector<512x128xf32>, vector<128x128xf32>, vector<512x128xf32> -> vector<512x128xf32>
    %83 = arith.addf %77, %82 : vector<512x128xf32>
    %c0_108 = arith.constant 0 : index
    %c0_109 = arith.constant 0 : index
    %c2_110 = arith.constant 2 : index
    %c0_111 = arith.constant 0 : index
    %84 = vector.load %arg7[%c0_108, %c0_109, %c2_110, %c0_111] : memref<2x18x18x128xf32, #tpu.memory_space<vmem>>, vector<2x16x16x128xf32>
    %85 = vector.shape_cast %84 : vector<2x16x16x128xf32> to vector<512x128xf32>
    %c2_112 = arith.constant 2 : index
    %c0_113 = arith.constant 0 : index
    %c0_114 = arith.constant 0 : index
    %86 = vector.load %arg4[%c2_112, %c0_113, %c0_114] : memref<9x128x128xf32, #tpu.memory_space<vmem>>, vector<1x128x128xf32>
    %87 = vector.shape_cast %86 : vector<1x128x128xf32> to vector<128x128xf32>
    %cst_115 = arith.constant dense<0.000000e+00> : vector<512x128xf32>
    %88 = tpu.matmul %85, %87, %cst_115 {dimension_numbers = #tpu.dot_dimension_numbers<[1], [0], [0], [1], [0, 0, 1, 1], [], []>} : vector<512x128xf32>, vector<128x128xf32>, vector<512x128xf32> -> vector<512x128xf32>
    %89 = arith.addf %83, %88 : vector<512x128xf32>
    %c0_116 = arith.constant 0 : index
    %c1_117 = arith.constant 1 : index
    %c0_118 = arith.constant 0 : index
    %c0_119 = arith.constant 0 : index
    %90 = vector.load %arg7[%c0_116, %c1_117, %c0_118, %c0_119] : memref<2x18x18x128xf32, #tpu.memory_space<vmem>>, vector<2x16x16x128xf32>
    %91 = vector.shape_cast %90 : vector<2x16x16x128xf32> to vector<512x128xf32>
    %c3_120 = arith.constant 3 : index
    %c0_121 = arith.constant 0 : index
    %c0_122 = arith.constant 0 : index
    %92 = vector.load %arg4[%c3_120, %c0_121, %c0_122] : memref<9x128x128xf32, #tpu.memory_space<vmem>>, vector<1x128x128xf32>
    %93 = vector.shape_cast %92 : vector<1x128x128xf32> to vector<128x128xf32>
    %cst_123 = arith.constant dense<0.000000e+00> : vector<512x128xf32>
    %94 = tpu.matmul %91, %93, %cst_123 {dimension_numbers = #tpu.dot_dimension_numbers<[1], [0], [0], [1], [0, 0, 1, 1], [], []>} : vector<512x128xf32>, vector<128x128xf32>, vector<512x128xf32> -> vector<512x128xf32>
    %95 = arith.addf %89, %94 : vector<512x128xf32>
    %c0_124 = arith.constant 0 : index
    %c1_125 = arith.constant 1 : index
    %c1_126 = arith.constant 1 : index
    %c0_127 = arith.constant 0 : index
    %96 = vector.load %arg7[%c0_124, %c1_125, %c1_126, %c0_127] : memref<2x18x18x128xf32, #tpu.memory_space<vmem>>, vector<2x16x16x128xf32>
    %97 = vector.shape_cast %96 : vector<2x16x16x128xf32> to vector<512x128xf32>
    %c4_128 = arith.constant 4 : index
    %c0_129 = arith.constant 0 : index
    %c0_130 = arith.constant 0 : index
    %98 = vector.load %arg4[%c4_128, %c0_129, %c0_130] : memref<9x128x128xf32, #tpu.memory_space<vmem>>, vector<1x128x128xf32>
    %99 = vector.shape_cast %98 : vector<1x128x128xf32> to vector<128x128xf32>
    %cst_131 = arith.constant dense<0.000000e+00> : vector<512x128xf32>
    %100 = tpu.matmul %97, %99, %cst_131 {dimension_numbers = #tpu.dot_dimension_numbers<[1], [0], [0], [1], [0, 0, 1, 1], [], []>} : vector<512x128xf32>, vector<128x128xf32>, vector<512x128xf32> -> vector<512x128xf32>
    %101 = arith.addf %95, %100 : vector<512x128xf32>
    %c0_132 = arith.constant 0 : index
    %c1_133 = arith.constant 1 : index
    %c2_134 = arith.constant 2 : index
    %c0_135 = arith.constant 0 : index
    %102 = vector.load %arg7[%c0_132, %c1_133, %c2_134, %c0_135] : memref<2x18x18x128xf32, #tpu.memory_space<vmem>>, vector<2x16x16x128xf32>
    %103 = vector.shape_cast %102 : vector<2x16x16x128xf32> to vector<512x128xf32>
    %c5_136 = arith.constant 5 : index
    %c0_137 = arith.constant 0 : index
    %c0_138 = arith.constant 0 : index
    %104 = vector.load %arg4[%c5_136, %c0_137, %c0_138] : memref<9x128x128xf32, #tpu.memory_space<vmem>>, vector<1x128x128xf32>
    %105 = vector.shape_cast %104 : vector<1x128x128xf32> to vector<128x128xf32>
    %cst_139 = arith.constant dense<0.000000e+00> : vector<512x128xf32>
    %106 = tpu.matmul %103, %105, %cst_139 {dimension_numbers = #tpu.dot_dimension_numbers<[1], [0], [0], [1], [0, 0, 1, 1], [], []>} : vector<512x128xf32>, vector<128x128xf32>, vector<512x128xf32> -> vector<512x128xf32>
    %107 = arith.addf %101, %106 : vector<512x128xf32>
    %c0_140 = arith.constant 0 : index
    %c2_141 = arith.constant 2 : index
    %c0_142 = arith.constant 0 : index
    %c0_143 = arith.constant 0 : index
    %108 = vector.load %arg7[%c0_140, %c2_141, %c0_142, %c0_143] : memref<2x18x18x128xf32, #tpu.memory_space<vmem>>, vector<2x16x16x128xf32>
    %109 = vector.shape_cast %108 : vector<2x16x16x128xf32> to vector<512x128xf32>
    %c6_144 = arith.constant 6 : index
    %c0_145 = arith.constant 0 : index
    %c0_146 = arith.constant 0 : index
    %110 = vector.load %arg4[%c6_144, %c0_145, %c0_146] : memref<9x128x128xf32, #tpu.memory_space<vmem>>, vector<1x128x128xf32>
    %111 = vector.shape_cast %110 : vector<1x128x128xf32> to vector<128x128xf32>
    %cst_147 = arith.constant dense<0.000000e+00> : vector<512x128xf32>
    %112 = tpu.matmul %109, %111, %cst_147 {dimension_numbers = #tpu.dot_dimension_numbers<[1], [0], [0], [1], [0, 0, 1, 1], [], []>} : vector<512x128xf32>, vector<128x128xf32>, vector<512x128xf32> -> vector<512x128xf32>
    %113 = arith.addf %107, %112 : vector<512x128xf32>
    %c0_148 = arith.constant 0 : index
    %c2_149 = arith.constant 2 : index
    %c1_150 = arith.constant 1 : index
    %c0_151 = arith.constant 0 : index
    %114 = vector.load %arg7[%c0_148, %c2_149, %c1_150, %c0_151] : memref<2x18x18x128xf32, #tpu.memory_space<vmem>>, vector<2x16x16x128xf32>
    %115 = vector.shape_cast %114 : vector<2x16x16x128xf32> to vector<512x128xf32>
    %c7_152 = arith.constant 7 : index
    %c0_153 = arith.constant 0 : index
    %c0_154 = arith.constant 0 : index
    %116 = vector.load %arg4[%c7_152, %c0_153, %c0_154] : memref<9x128x128xf32, #tpu.memory_space<vmem>>, vector<1x128x128xf32>
    %117 = vector.shape_cast %116 : vector<1x128x128xf32> to vector<128x128xf32>
    %cst_155 = arith.constant dense<0.000000e+00> : vector<512x128xf32>
    %118 = tpu.matmul %115, %117, %cst_155 {dimension_numbers = #tpu.dot_dimension_numbers<[1], [0], [0], [1], [0, 0, 1, 1], [], []>} : vector<512x128xf32>, vector<128x128xf32>, vector<512x128xf32> -> vector<512x128xf32>
    %119 = arith.addf %113, %118 : vector<512x128xf32>
    %c0_156 = arith.constant 0 : index
    %c2_157 = arith.constant 2 : index
    %c2_158 = arith.constant 2 : index
    %c0_159 = arith.constant 0 : index
    %120 = vector.load %arg7[%c0_156, %c2_157, %c2_158, %c0_159] : memref<2x18x18x128xf32, #tpu.memory_space<vmem>>, vector<2x16x16x128xf32>
    %121 = vector.shape_cast %120 : vector<2x16x16x128xf32> to vector<512x128xf32>
    %c8_160 = arith.constant 8 : index
    %c0_161 = arith.constant 0 : index
    %c0_162 = arith.constant 0 : index
    %122 = vector.load %arg4[%c8_160, %c0_161, %c0_162] : memref<9x128x128xf32, #tpu.memory_space<vmem>>, vector<1x128x128xf32>
    %123 = vector.shape_cast %122 : vector<1x128x128xf32> to vector<128x128xf32>
    %cst_163 = arith.constant dense<0.000000e+00> : vector<512x128xf32>
    %124 = tpu.matmul %121, %123, %cst_163 {dimension_numbers = #tpu.dot_dimension_numbers<[1], [0], [0], [1], [0, 0, 1, 1], [], []>} : vector<512x128xf32>, vector<128x128xf32>, vector<512x128xf32> -> vector<512x128xf32>
    %125 = arith.addf %119, %124 : vector<512x128xf32>
    %cst_164 = arith.constant 0.00999999977 : f32
    %126 = vector.broadcast %cst_164 : f32 to vector<512x128xf32>
    %127 = arith.mulf %126, %125 : vector<512x128xf32>
    %128 = arith.maximumf %125, %127 : vector<512x128xf32>
    %129 = vector.shape_cast %128 : vector<512x128xf32> to vector<2x16x16x128xf32>
    %c0_165 = arith.constant 0 : index
    %c0_166 = arith.constant 0 : index
    %c0_167 = arith.constant 0 : index
    %c0_168 = arith.constant 0 : index
    %130 = vector.load %arg6[%c0_165, %c0_166, %c0_167, %c0_168] : memref<2x16x16x128xf32, #tpu.memory_space<vmem>>, vector<2x16x16x128xf32>
    tpu.vector_store %arg6[%c0_165, %c0_166, %c0_167, %c0_168], %129 {strides = array<i32>} : memref<2x16x16x128xf32, #tpu.memory_space<vmem>>, vector<2x16x16x128xf32>,
    return
  }
  func.func @transform_0(%arg0: i32) -> (i32, i32, i32, i32) {
    %c0_i32 = arith.constant 0 : i32
    %c0_i32_0 = arith.constant 0 : i32
    %c0_i32_1 = arith.constant 0 : i32
    %c0_i32_2 = arith.constant 0 : i32
    return %arg0, %c0_i32, %c0_i32_0, %c0_i32_1 : i32, i32, i32, i32
  }
  func.func @transform_1(%arg0: i32) -> (i32, i32, i32) {
    %c0_i32 = arith.constant 0 : i32
    %c0_i32_0 = arith.constant 0 : i32
    %c0_i32_1 = arith.constant 0 : i32
    %c0_i32_2 = arith.constant 0 : i32
    return %c0_i32, %c0_i32_0, %c0_i32_1 : i32, i32, i32
  }
  func.func @transform_2(%arg0: i32) -> (i32, i32) {
    %c0_i32 = arith.constant 0 : i32
    %c0_i32_0 = arith.constant 0 : i32
    %c0_i32_1 = arith.constant 0 : i32
    return %c0_i32, %c0_i32_0 : i32, i32
  }
  func.func @transform_3(%arg0: i32) -> (i32, i32, i32) {
    %c0_i32 = arith.constant 0 : i32
    %c0_i32_0 = arith.constant 0 : i32
    %c0_i32_1 = arith.constant 0 : i32
    %c0_i32_2 = arith.constant 0 : i32
    return %c0_i32, %c0_i32_0, %c0_i32_1 : i32, i32, i32
  }
  func.func @transform_4(%arg0: i32) -> (i32, i32) {
    %c0_i32 = arith.constant 0 : i32
    %c0_i32_0 = arith.constant 0 : i32
    %c0_i32_1 = arith.constant 0 : i32
    return %c0_i32, %c0_i32_0 : i32, i32
  }
  func.func @transform_5(%arg0: i32) -> (i32, i32, i32, i32) {
    %c0_i32 = arith.constant 0 : i32
    %c0_i32_0 = arith.constant 0 : i32
    %c0_i32_1 = arith.constant 0 : i32
    %c0_i32_2 = arith.constant 0 : i32
    return %arg0, %c0_i32, %c0_i32_0, %c0_i32_1 : i32, i32, i32, i32
  }
}

</mosaic_0001>

<llo_original>
// kernel: res_block_forward_nhwc.1
$region0: #{res_block_forward_nhwc.1}
  #allocation0 [shape = 'u32[]', space=smem, size = 0x4, offset = 0x4, fixed_abs, tag = 'smem constant byte address 0x4 - core index']
  #allocation1 [shape = 'u32[144,128]{1,0:T(1,128)}', space=vmem, size = 0x12000, scoped, tag = 'internal scratch']
  #allocation2 [shape = 'f32[2,18,18,128]{3,2,1,0:T(8,128)}', space=vmem, size = 0x6c000, scoped, tag = 'scratch operand']
  %s0 = inlined_call_operand.vmem [shape: f32[2,18,18,128], index: 0, kind: input, shape index: {}]
  %s1 = inlined_call_operand.vmem [shape: f32[9,128,128], index: 1, kind: input, shape index: {}]
  %s2 = inlined_call_operand.vmem [shape: f32[1,128], index: 2, kind: input, shape index: {}]
  %s3 = inlined_call_operand.vmem [shape: f32[9,128,128], index: 3, kind: input, shape index: {}]
  %s4 = inlined_call_operand.vmem [shape: f32[1,128], index: 4, kind: input, shape index: {}]
  %s5 = inlined_call_operand.vmem [shape: f32[2,16,16,128], index: 5, kind: output, shape index: {}]
  %s6 = sld [smem:[#allocation0]]
  $region30: #{res_block_forward_nhwc.1} parent=0
    _
  %s8 = ssub.s32 1, %s6
  %s9 = scalar_select 0, %s8, %s6
  // Predicated region
  $region2: #{res_block_forward_nhwc.1} parent=0 // pred_check
    _
  $region3: #{res_block_forward_nhwc.1} parent=0 // pred_check_branch
    %11 = sbr.rel (0) target = $region5
  $region4: #{res_block_forward_nhwc.1} parent=0 // pred_region
    _
  $region5: #{res_block_forward_nhwc.1} parent=0 // pred_fallthru
    _
  // Predicated region
  $region6: #{res_block_forward_nhwc.1} parent=0 // pred_check
    _
  $region7: #{res_block_forward_nhwc.1} parent=0 // pred_check_branch
    %13 = sbr.rel (0) target = $region9
  $region8: #{res_block_forward_nhwc.1} parent=0 // pred_region
    _
  $region9: #{res_block_forward_nhwc.1} parent=0 // pred_fallthru
    _
  // Predicated region
  $region10: #{res_block_forward_nhwc.1} parent=0 // pred_check
    _
  $region11: #{res_block_forward_nhwc.1} parent=0 // pred_check_branch
    %15 = sbr.rel (0) target = $region13
  $region12: #{res_block_forward_nhwc.1} parent=0 // pred_region
    _
  $region13: #{res_block_forward_nhwc.1} parent=0 // pred_fallthru
    _
  // Predicated region
  $region14: #{res_block_forward_nhwc.1} parent=0 // pred_check
    _
  $region15: #{res_block_forward_nhwc.1} parent=0 // pred_check_branch
    %17 = sbr.rel (0) target = $region17
  $region16: #{res_block_forward_nhwc.1} parent=0 // pred_region
    _
  $region17: #{res_block_forward_nhwc.1} parent=0 // pred_fallthru
    _
  // Predicated region
  $region18: #{res_block_forward_nhwc.1} parent=0 // pred_check
    _
  $region19: #{res_block_forward_nhwc.1} parent=0 // pred_check_branch
    %19 = sbr.rel (0) target = $region21
  $region20: #{res_block_forward_nhwc.1} parent=0 // pred_region
    _
  $region21: #{res_block_forward_nhwc.1} parent=0 // pred_fallthru
    _
  %v20 = vld [vmem:[%s2] sm:$0x1]
  %v21 = vld [vmem:[%s0] sm:$0xff]
  %v22 = vld [vmem:[%s0 + $0x8] sm:$0xff]
  %v23 = vld [vmem:[%s0 + $0x18] sm:$0xff]
  %v24 = vld [vmem:[%s0 + $0x20] sm:$0xff]
  %v25 = vld [vmem:[%s0 + $0x30] sm:$0xff]
  %v26 = vld [vmem:[%s0 + $0x38] sm:$0xff]
  %v27 = vld [vmem:[%s0 + $0x48] sm:$0xff]
  %v28 = vld [vmem:[%s0 + $0x50] sm:$0xff]
  %v29 = vld [vmem:[%s0 + $0x60] sm:$0xff]
  %v30 = vld [vmem:[%s0 + $0x68] sm:$0xff]
  %v31 = vld [vmem:[%s0 + $0x78] sm:$0xff]
  %v32 = vld [vmem:[%s0 + $0x80] sm:$0xff]
  %v33 = vld [vmem:[%s0 + $0x90] sm:$0xff]
  %v34 = vld [vmem:[%s0 + $0x98] sm:$0xff]
  %v35 = vld [vmem:[%s0 + $0xa8] sm:$0xff]
  %v36 = vld [vmem:[%s0 + $0xb0] sm:$0xff]
  %v37 = vld [vmem:[%s0 + $0xc0] sm:$0xff]
  %v38 = vld [vmem:[%s0 + $0xc8] sm:$0xff]
  %v39 = vld [vmem:[%s0 + $0xd8] sm:$0xff]
  %v40 = vld [vmem:[%s0 + $0xe0] sm:$0xff]
  %v41 = vld [vmem:[%s0 + $0xf0] sm:$0xff]
  %v42 = vld [vmem:[%s0 + $0xf8] sm:$0xff]
  %v43 = vld [vmem:[%s0 + $0x108] sm:$0xff]
  %v44 = vld [vmem:[%s0 + $0x110] sm:$0xff]
  %v45 = vld [vmem:[%s0 + $0x120] sm:$0xff]
  %v46 = vld [vmem:[%s0 + $0x128] sm:$0xff]
  %v47 = vld [vmem:[%s0 + $0x138] sm:$0xff]
  %v48 = vld [vmem:[%s0 + $0x140] sm:$0xff]
  %v49 = vld [vmem:[%s0 + $0x150] sm:$0xff]
  %v50 = vld [vmem:[%s0 + $0x158] sm:$0xff]
  %v51 = vld [vmem:[%s0 + $0x168] sm:$0xff]
  %v52 = vld [vmem:[%s0 + $0x170] sm:$0xff]
  %v53 = vld [vmem:[%s0 + $0x1b0] sm:$0xff]
  %v54 = vld [vmem:[%s0 + $0x1b8] sm:$0xff]
  %v55 = vld [vmem:[%s0 + $0x1c8] sm:$0xff]
  %v56 = vld [vmem:[%s0 + $0x1d0] sm:$0xff]
  %v57 = vld [vmem:[%s0 + $0x1e0] sm:$0xff]
  %v58 = vld [vmem:[%s0 + $0x1e8] sm:$0xff]
  %v59 = vld [vmem:[%s0 + $0x1f8] sm:$0xff]
  %v60 = vld [vmem:[%s0 + $0x200] sm:$0xff]
  %v61 = vld [vmem:[%s0 + $0x210] sm:$0xff]
  %v62 = vld [vmem:[%s0 + $0x218] sm:$0xff]
  %v63 = vld [vmem:[%s0 + $0x228] sm:$0xff]
  %v64 = vld [vmem:[%s0 + $0x230] sm:$0xff]
  %v65 = vld [vmem:[%s0 + $0x240] sm:$0xff]
  %v66 = vld [vmem:[%s0 + $0x248] sm:$0xff]
  %v67 = vld [vmem:[%s0 + $0x258] sm:$0xff]
  %v68 = vld [vmem:[%s0 + $0x260] sm:$0xff]
  %v69 = vld [vmem:[%s0 + $0x270] sm:$0xff]
  %v70 = vld [vmem:[%s0 + $0x278] sm:$0xff]
  %v71 = vld [vmem:[%s0 + $0x288] sm:$0xff]
  %v72 = vld [vmem:[%s0 + $0x290] sm:$0xff]
  %v73 = vld [vmem:[%s0 + $0x2a0] sm:$0xff]
  %v74 = vld [vmem:[%s0 + $0x2a8] sm:$0xff]
  %v75 = vld [vmem:[%s0 + $0x2b8] sm:$0xff]
  %v76 = vld [vmem:[%s0 + $0x2c0] sm:$0xff]
  %v77 = vld [vmem:[%s0 + $0x2d0] sm:$0xff]
  %v78 = vld [vmem:[%s0 + $0x2d8] sm:$0xff]
  %v79 = vld [vmem:[%s0 + $0x2e8] sm:$0xff]
  %v80 = vld [vmem:[%s0 + $0x2f0] sm:$0xff]
  %v81 = vld [vmem:[%s0 + $0x300] sm:$0xff]
  %v82 = vld [vmem:[%s0 + $0x308] sm:$0xff]
  %v83 = vld [vmem:[%s0 + $0x318] sm:$0xff]
  %v84 = vld [vmem:[%s0 + $0x320] sm:$0xff]
  %v85 = vld [vmem:[%s1] sm:$0xff]
  %v86 = vld [vmem:[%s1 + $0x8] sm:$0xff]
  %v87 = vld [vmem:[%s1 + $0x10] sm:$0xff]
  %v88 = vld [vmem:[%s1 + $0x18] sm:$0xff]
  %v89 = vld [vmem:[%s1 + $0x20] sm:$0xff]
  %v90 = vld [vmem:[%s1 + $0x28] sm:$0xff]
  %v91 = vld [vmem:[%s1 + $0x30] sm:$0xff]
  %v92 = vld [vmem:[%s1 + $0x38] sm:$0xff]
  %v93 = vld [vmem:[%s1 + $0x40] sm:$0xff]
  %v94 = vld [vmem:[%s1 + $0x48] sm:$0xff]
  %v95 = vld [vmem:[%s1 + $0x50] sm:$0xff]
  %v96 = vld [vmem:[%s1 + $0x58] sm:$0xff]
  %v97 = vld [vmem:[%s1 + $0x60] sm:$0xff]
  %v98 = vld [vmem:[%s1 + $0x68] sm:$0xff]
  %v99 = vld [vmem:[%s1 + $0x70] sm:$0xff]
  %v100 = vld [vmem:[%s1 + $0x78] sm:$0xff]
  %101 = vmatprep.subr.mxu0 0.0
  %102 = vmatpush1.msra.mxu0 %v100
  %103 = vmatprep.subr.mxu0 0.0
  %104 = vmatpush1.msra.mxu0 %v99
  %105 = vmatprep.subr.mxu0 0.0
  %106 = vmatpush1.msra.mxu0 %v98
  %107 = vmatprep.subr.mxu0 0.0
  %108 = vmatpush1.msra.mxu0 %v97
  %109 = vmatprep.subr.mxu0 0.0
  %110 = vmatpush1.msra.mxu0 %v96
  %111 = vmatprep.subr.mxu0 0.0
  %112 = vmatpush1.msra.mxu0 %v95
  %113 = vmatprep.subr.mxu0 0.0
  %114 = vmatpush1.msra.mxu0 %v94
  %115 = vmatprep.subr.mxu0 0.0
  %116 = vmatpush1.msra.mxu0 %v93
  %117 = vmatprep.subr.mxu0 0.0
  %118 = vmatpush1.msra.mxu0 %v92
  %119 = vmatprep.subr.mxu0 0.0
  %120 = vmatpush1.msra.mxu0 %v91
  %121 = vmatprep.subr.mxu0 0.0
  %122 = vmatpush1.msra.mxu0 %v90
  %123 = vmatprep.subr.mxu0 0.0
  %124 = vmatpush1.msra.mxu0 %v89
  %125 = vmatprep.subr.mxu0 0.0
  %126 = vmatpush1.msra.mxu0 %v88
  %127 = vmatprep.subr.mxu0 0.0
  %128 = vmatpush1.msra.mxu0 %v87
  %129 = vmatprep.subr.mxu0 0.0
  %130 = vmatpush1.msra.mxu0 %v86
  %131 = vmatprep.subr.mxu0 0.0
  %132 = vmatpush1.msra.mxu0 %v85
  %133 = vmatprep.subr.mxu0 0.0
  %134 = vmatpush2.msra.mxu0 0.0
  %135 = vmatprep.subr.mxu0 0.0
  %136 = vmatpush2.msra.mxu0 0.0
  %137 = vmatprep.subr.mxu0 0.0
  %138 = vmatpush2.msra.mxu0 0.0
  %139 = vmatprep.subr.mxu0 0.0
  %140 = vmatpush2.msra.mxu0 0.0
  %141 = vmatprep.subr.mxu0 0.0
  %142 = vmatpush2.msra.mxu0 0.0
  %143 = vmatprep.subr.mxu0 0.0
  %144 = vmatpush2.msra.mxu0 0.0
  %145 = vmatprep.subr.mxu0 0.0
  %146 = vmatpush2.msra.mxu0 0.0
  %147 = vmatprep.subr.mxu0 0.0
  %148 = vmatpush2.msra.mxu0 0.0
  %149 = vmatprep.subr.mxu0 0.0
  %150 = vmatpush2.msra.mxu0 0.0
  %151 = vmatprep.subr.mxu0 0.0
  %152 = vmatpush2.msra.mxu0 0.0
  %153 = vmatprep.subr.mxu0 0.0
  %154 = vmatpush2.msra.mxu0 0.0
  %155 = vmatprep.subr.mxu0 0.0
  %156 = vmatpush2.msra.mxu0 0.0
  %157 = vmatprep.subr.mxu0 0.0
  %158 = vmatpush2.msra.mxu0 0.0
  %159 = vmatprep.subr.mxu0 0.0
  %160 = vmatpush2.msra.mxu0 0.0
  %161 = vmatprep.subr.mxu0 0.0
  %162 = vmatpush2.msra.mxu0 0.0
  %163 = vmatprep.subr.mxu0 0.0
  %164 = vmatpush2.msra.mxu0 0.0
  %165 = vmatprep.mubr.f32.mxu0 0.0
  %166 = vmatmul.mubr.f32.gmra.mxu0 %v21
  %v167 = vpop.f32.mrf.mxu0
  %v168 = vadd.f32 0.0, %v167
  %v169 = vpop.f32.mrf.mxu0
  %170 = vmatprep.mubr.f32.mxu0 0.0
  %171 = vmatmul.mubr.f32.gmra.mxu0 %v22
  %v172 = vpop.f32.mrf.mxu0
  %v173 = vadd.f32 0.0, %v172
  %v174 = vpop.f32.mrf.mxu0
  %175 = vmatprep.mubr.f32.mxu0 0.0
  %176 = vmatmul.mubr.f32.gmra.mxu0 %v23
  %v177 = vpop.f32.mrf.mxu0
  %v178 = vadd.f32 0.0, %v177
  %v179 = vpop.f32.mrf.mxu0
  %180 = vmatprep.mubr.f32.mxu0 0.0
  %181 = vmatmul.mubr.f32.gmra.mxu0 %v24
  %v182 = vpop.f32.mrf.mxu0
  %v183 = vadd.f32 0.0, %v182
  %v184 = vpop.f32.mrf.mxu0
  %185 = vmatprep.mubr.f32.mxu0 0.0
  %186 = vmatmul.mubr.f32.gmra.mxu0 %v25
  %v187 = vpop.f32.mrf.mxu0
  %v188 = vadd.f32 0.0, %v187
  %v189 = vpop.f32.mrf.mxu0
  %190 = vmatprep.mubr.f32.mxu0 0.0
  %191 = vmatmul.mubr.f32.gmra.mxu0 %v26
  %v192 = vpop.f32.mrf.mxu0
  %v193 = vadd.f32 0.0, %v192
  %v194 = vpop.f32.mrf.mxu0
  %195 = vmatprep.mubr.f32.mxu0 0.0
  %196 = vmatmul.mubr.f32.gmra.mxu0 %v27
  %v197 = vpop.f32.mrf.mxu0
  %v198 = vadd.f32 0.0, %v197
  %v199 = vpop.f32.mrf.mxu0
  %200 = vmatprep.mubr.f32.mxu0 0.0
  %201 = vmatmul.mubr.f32.gmra.mxu0 %v28
  %v202 = vpop.f32.mrf.mxu0
  %v203 = vadd.f32 0.0, %v202
  %v204 = vpop.f32.mrf.mxu0
  %205 = vmatprep.mubr.f32.mxu0 0.0
  %206 = vmatmul.mubr.f32.gmra.mxu0 %v29
  %v207 = vpop.f32.mrf.mxu0
  %v208 = vadd.f32 0.0, %v207
  %v209 = vpop.f32.mrf.mxu0
  %210 = vmatprep.mubr.f32.mxu0 0.0
  %211 = vmatmul.mubr.f32.gmra.mxu0 %v30
  %v212 = vpop.f32.mrf.mxu0
  %v213 = vadd.f32 0.0, %v212
  %v214 = vpop.f32.mrf.mxu0
  %215 = vmatprep.mubr.f32.mxu0 0.0
  %216 = vmatmul.mubr.f32.gmra.mxu0 %v31
  %v217 = vpop.f32.mrf.mxu0
  %v218 = vadd.f32 0.0, %v217
  %v219 = vpop.f32.mrf.mxu0
  %220 = vmatprep.mubr.f32.mxu0 0.0
  %221 = vmatmul.mubr.f32.gmra.mxu0 %v32
  %v222 = vpop.f32.mrf.mxu0
  %v223 = vadd.f32 0.0, %v222
  %v224 = vpop.f32.mrf.mxu0
  %225 = vmatprep.mubr.f32.mxu0 0.0
  %226 = vmatmul.mubr.f32.gmra.mxu0 %v33
  %v227 = vpop.f32.mrf.mxu0
  %v228 = vadd.f32 0.0, %v227
  %v229 = vpop.f32.mrf.mxu0
  %230 = vmatprep.mubr.f32.mxu0 0.0
  %231 = vmatmul.mubr.f32.gmra.mxu0 %v34
  %v232 = vpop.f32.mrf.mxu0
  %v233 = vadd.f32 0.0, %v232
  %v234 = vpop.f32.mrf.mxu0
  %235 = vmatprep.mubr.f32.mxu0 0.0
  %236 = vmatmul.mubr.f32.gmra.mxu0 %v35
  %v237 = vpop.f32.mrf.mxu0
  %v238 = vadd.f32 0.0, %v237
  %v239 = vpop.f32.mrf.mxu0
  %240 = vmatprep.mubr.f32.mxu0 0.0
  %241 = vmatmul.mubr.f32.gmra.mxu0 %v36
  %v242 = vpop.f32.mrf.mxu0
  %v243 = vadd.f32 0.0, %v242
  %v244 = vpop.f32.mrf.mxu0
  %245 = vmatprep.mubr.f32.mxu0 0.0
  %246 = vmatmul.mubr.f32.gmra.mxu0 %v37
  %v247 = vpop.f32.mrf.mxu0
  %v248 = vadd.f32 0.0, %v247
  %v249 = vpop.f32.mrf.mxu0
  %250 = vmatprep.mubr.f32.mxu0 0.0
  %251 = vmatmul.mubr.f32.gmra.mxu0 %v38
  %v252 = vpop.f32.mrf.mxu0
  %v253 = vadd.f32 0.0, %v252
  %v254 = vpop.f32.mrf.mxu0
  %255 = vmatprep.mubr.f32.mxu0 0.0
  %256 = vmatmul.mubr.f32.gmra.mxu0 %v39
  %v257 = vpop.f32.mrf.mxu0
  %v258 = vadd.f32 0.0, %v257
  %v259 = vpop.f32.mrf.mxu0
  %260 = vmatprep.mubr.f32.mxu0 0.0
  %261 = vmatmul.mubr.f32.gmra.mxu0 %v40
  %v262 = vpop.f32.mrf.mxu0
  %v263 = vadd.f32 0.0, %v262
  %v264 = vpop.f32.mrf.mxu0
  %265 = vmatprep.mubr.f32.mxu0 0.0
  %266 = vmatmul.mubr.f32.gmra.mxu0 %v41
  %v267 = vpop.f32.mrf.mxu0
  %v268 = vadd.f32 0.0, %v267
  %v269 = vpop.f32.mrf.mxu0
  %270 = vmatprep.mubr.f32.mxu0 0.0
  %271 = vmatmul.mubr.f32.gmra.mxu0 %v42
  %v272 = vpop.f32.mrf.mxu0
  %v273 = vadd.f32 0.0, %v272
  %v274 = vpop.f32.mrf.mxu0
  %275 = vmatprep.mubr.f32.mxu0 0.0
  %276 = vmatmul.mubr.f32.gmra.mxu0 %v43
  %v277 = vpop.f32.mrf.mxu0
  %v278 = vadd.f32 0.0, %v277
  %v279 = vpop.f32.mrf.mxu0
  %280 = vmatprep.mubr.f32.mxu0 0.0
  %281 = vmatmul.mubr.f32.gmra.mxu0 %v44
  %v282 = vpop.f32.mrf.mxu0
  %v283 = vadd.f32 0.0, %v282
  %v284 = vpop.f32.mrf.mxu0
  %285 = vmatprep.mubr.f32.mxu0 0.0
  %286 = vmatmul.mubr.f32.gmra.mxu0 %v45
  %v287 = vpop.f32.mrf.mxu0
  %v288 = vadd.f32 0.0, %v287
  %v289 = vpop.f32.mrf.mxu0
  %290 = vmatprep.mubr.f32.mxu0 0.0
  %291 = vmatmul.mubr.f32.gmra.mxu0 %v46
  %v292 = vpop.f32.mrf.mxu0
  %v293 = vadd.f32 0.0, %v292
  %v294 = vpop.f32.mrf.mxu0
  %295 = vmatprep.mubr.f32.mxu0 0.0
  %296 = vmatmul.mubr.f32.gmra.mxu0 %v47
  %v297 = vpop.f32.mrf.mxu0
  %v298 = vadd.f32 0.0, %v297
  %v299 = vpop.f32.mrf.mxu0
  %300 = vmatprep.mubr.f32.mxu0 0.0
  %301 = vmatmul.mubr.f32.gmra.mxu0 %v48
  %v302 = vpop.f32.mrf.mxu0
  %v303 = vadd.f32 0.0, %v302
  %v304 = vpop.f32.mrf.mxu0
  %305 = vmatprep.mubr.f32.mxu0 0.0
  %306 = vmatmul.mubr.f32.gmra.mxu0 %v49
  %v307 = vpop.f32.mrf.mxu0
  %v308 = vadd.f32 0.0, %v307
  %v309 = vpop.f32.mrf.mxu0
  %310 = vmatprep.mubr.f32.mxu0 0.0
  %311 = vmatmul.mubr.f32.gmra.mxu0 %v50
  %v312 = vpop.f32.mrf.mxu0
  %v313 = vadd.f32 0.0, %v312
  %v314 = vpop.f32.mrf.mxu0
  %315 = vmatprep.mubr.f32.mxu0 0.0
  %316 = vmatmul.mubr.f32.gmra.mxu0 %v51
  %v317 = vpop.f32.mrf.mxu0
  %v318 = vadd.f32 0.0, %v317
  %v319 = vpop.f32.mrf.mxu0
  %320 = vmatprep.mubr.f32.mxu0 0.0
  %321 = vmatmul.mubr.f32.gmra.mxu0 %v52
  %v322 = vpop.f32.mrf.mxu0
  %v323 = vadd.f32 0.0, %v322
  %v324 = vpop.f32.mrf.mxu0
  %325 = vmatprep.mubr.f32.mxu0 0.0
  %326 = vmatmul.mubr.f32.gmra.mxu0 %v53
  %v327 = vpop.f32.mrf.mxu0
  %v328 = vadd.f32 0.0, %v327
  %v329 = vpop.f32.mrf.mxu0
  %330 = vmatprep.mubr.f32.mxu0 0.0
  %331 = vmatmul.mubr.f32.gmra.mxu0 %v54
  %v332 = vpop.f32.mrf.mxu0
  %v333 = vadd.f32 0.0, %v332
  %v334 = vpop.f32.mrf.mxu0
  %335 = vmatprep.mubr.f32.mxu0 0.0
  %336 = vmatmul.mubr.f32.gmra.mxu0 %v55
  %v337 = vpop.f32.mrf.mxu0
  %v338 = vadd.f32 0.0, %v337
  %v339 = vpop.f32.mrf.mxu0
  %340 = vmatprep.mubr.f32.mxu0 0.0
  %341 = vmatmul.mubr.f32.gmra.mxu0 %v56
  %v342 = vpop.f32.mrf.mxu0
  %v343 = vadd.f32 0.0, %v342
  %v344 = vpop.f32.mrf.mxu0
  %345 = vmatprep.mubr.f32.mxu0 0.0
  %346 = vmatmul.mubr.f32.gmra.mxu0 %v57
  %v347 = vpop.f32.mrf.mxu0
  %v348 = vadd.f32 0.0, %v347
  %v349 = vpop.f32.mrf.mxu0
  %350 = vmatprep.mubr.f32.mxu0 0.0
  %351 = vmatmul.mubr.f32.gmra.mxu0 %v58
  %v352 = vpop.f32.mrf.mxu0
  %v353 = vadd.f32 0.0, %v352
  %v354 = vpop.f32.mrf.mxu0
  %355 = vmatprep.mubr.f32.mxu0 0.0
  %356 = vmatmul.mubr.f32.gmra.mxu0 %v59
  %v357 = vpop.f32.mrf.mxu0
  %v358 = vadd.f32 0.0, %v357
  %v359 = vpop.f32.mrf.mxu0
  %360 = vmatprep.mubr.f32.mxu0 0.0
  %361 = vmatmul.mubr.f32.gmra.mxu0 %v60
  %v362 = vpop.f32.mrf.mxu0
  %v363 = vadd.f32 0.0, %v362
  %v364 = vpop.f32.mrf.mxu0
  %365 = vmatprep.mubr.f32.mxu0 0.0
  %366 = vmatmul.mubr.f32.gmra.mxu0 %v61
  %v367 = vpop.f32.mrf.mxu0
  %v368 = vadd.f32 0.0, %v367
  %v369 = vpop.f32.mrf.mxu0
  %370 = vmatprep.mubr.f32.mxu0 0.0
  %371 = vmatmul.mubr.f32.gmra.mxu0 %v62
  %v372 = vpop.f32.mrf.mxu0
  %v373 = vadd.f32 0.0, %v372
  %v374 = vpop.f32.mrf.mxu0
  %375 = vmatprep.mubr.f32.mxu0 0.0
  %376 = vmatmul.mubr.f32.gmra.mxu0 %v63
  %v377 = vpop.f32.mrf.mxu0
  %v378 = vadd.f32 0.0, %v377
  %v379 = vpop.f32.mrf.mxu0
  %380 = vmatprep.mubr.f32.mxu0 0.0
  %381 = vmatmul.mubr.f32.gmra.mxu0 %v64
  %v382 = vpop.f32.mrf.mxu0
  %v383 = vadd.f32 0.0, %v382
  %v384 = vpop.f32.mrf.mxu0
  %385 = vmatprep.mubr.f32.mxu0 0.0
  %386 = vmatmul.mubr.f32.gmra.mxu0 %v65
  %v387 = vpop.f32.mrf.mxu0
  %v388 = vadd.f32 0.0, %v387
  %v389 = vpop.f32.mrf.mxu0
  %390 = vmatprep.mubr.f32.mxu0 0.0
  %391 = vmatmul.mubr.f32.gmra.mxu0 %v66
  %v392 = vpop.f32.mrf.mxu0
  %v393 = vadd.f32 0.0, %v392
  %v394 = vpop.f32.mrf.mxu0
  %395 = vmatprep.mubr.f32.mxu0 0.0
  %396 = vmatmul.mubr.f32.gmra.mxu0 %v67
  %v397 = vpop.f32.mrf.mxu0
  %v398 = vadd.f32 0.0, %v397
  %v399 = vpop.f32.mrf.mxu0
  %400 = vmatprep.mubr.f32.mxu0 0.0
  %401 = vmatmul.mubr.f32.gmra.mxu0 %v68
  %v402 = vpop.f32.mrf.mxu0
  %v403 = vadd.f32 0.0, %v402
  %v404 = vpop.f32.mrf.mxu0
  %405 = vmatprep.mubr.f32.mxu0 0.0
  %406 = vmatmul.mubr.f32.gmra.mxu0 %v69
  %v407 = vpop.f32.mrf.mxu0
  %v408 = vadd.f32 0.0, %v407
  %v409 = vpop.f32.mrf.mxu0
  %410 = vmatprep.mubr.f32.mxu0 0.0
  %411 = vmatmul.mubr.f32.gmra.mxu0 %v70
  %v412 = vpop.f32.mrf.mxu0
  %v413 = vadd.f32 0.0, %v412
  %v414 = vpop.f32.mrf.mxu0
  %415 = vmatprep.mubr.f32.mxu0 0.0
  %416 = vmatmul.mubr.f32.gmra.mxu0 %v71
  %v417 = vpop.f32.mrf.mxu0
  %v418 = vadd.f32 0.0, %v417
  %v419 = vpop.f32.mrf.mxu0
  %420 = vmatprep.mubr.f32.mxu0 0.0
  %421 = vmatmul.mubr.f32.gmra.mxu0 %v72
  %v422 = vpop.f32.mrf.mxu0
  %v423 = vadd.f32 0.0, %v422
  %v424 = vpop.f32.mrf.mxu0
  %425 = vmatprep.mubr.f32.mxu0 0.0
  %426 = vmatmul.mubr.f32.gmra.mxu0 %v73
  %v427 = vpop.f32.mrf.mxu0
  %v428 = vadd.f32 0.0, %v427
  %v429 = vpop.f32.mrf.mxu0
  %430 = vmatprep.mubr.f32.mxu0 0.0
  %431 = vmatmul.mubr.f32.gmra.mxu0 %v74
  %v432 = vpop.f32.mrf.mxu0
  %v433 = vadd.f32 0.0, %v432
  %v434 = vpop.f32.mrf.mxu0
  %435 = vmatprep.mubr.f32.mxu0 0.0
  %436 = vmatmul.mubr.f32.gmra.mxu0 %v75
  %v437 = vpop.f32.mrf.mxu0
  %v438 = vadd.f32 0.0, %v437
  %v439 = vpop.f32.mrf.mxu0
  %440 = vmatprep.mubr.f32.mxu0 0.0
  %441 = vmatmul.mubr.f32.gmra.mxu0 %v76
  %v442 = vpop.f32.mrf.mxu0
  %v443 = vadd.f32 0.0, %v442
  %v444 = vpop.f32.mrf.mxu0
  %445 = vmatprep.mubr.f32.mxu0 0.0
  %446 = vmatmul.mubr.f32.gmra.mxu0 %v77
  %v447 = vpop.f32.mrf.mxu0
  %v448 = vadd.f32 0.0, %v447
  %v449 = vpop.f32.mrf.mxu0
  %450 = vmatprep.mubr.f32.mxu0 0.0
  %451 = vmatmul.mubr.f32.gmra.mxu0 %v78
  %v452 = vpop.f32.mrf.mxu0
  %v453 = vadd.f32 0.0, %v452
  %v454 = vpop.f32.mrf.mxu0
  %455 = vmatprep.mubr.f32.mxu0 0.0
  %456 = vmatmul.mubr.f32.gmra.mxu0 %v79
  %v457 = vpop.f32.mrf.mxu0
  %v458 = vadd.f32 0.0, %v457
  %v459 = vpop.f32.mrf.mxu0
  %460 = vmatprep.mubr.f32.mxu0 0.0
  %461 = vmatmul.mubr.f32.gmra.mxu0 %v80
  %v462 = vpop.f32.mrf.mxu0
  %v463 = vadd.f32 0.0, %v462
  %v464 = vpop.f32.mrf.mxu0
  %465 = vmatprep.mubr.f32.mxu0 0.0
  %466 = vmatmul.mubr.f32.gmra.mxu0 %v81
  %v467 = vpop.f32.mrf.mxu0
  %v468 = vadd.f32 0.0, %v467
  %v469 = vpop.f32.mrf.mxu0
  %470 = vmatprep.mubr.f32.mxu0 0.0
  %471 = vmatmul.mubr.f32.gmra.mxu0 %v82
  %v472 = vpop.f32.mrf.mxu0
  %v473 = vadd.f32 0.0, %v472
  %v474 = vpop.f32.mrf.mxu0
  %475 = vmatprep.mubr.f32.mxu0 0.0
  %476 = vmatmul.mubr.f32.gmra.mxu0 %v83
  %v477 = vpop.f32.mrf.mxu0
  %v478 = vadd.f32 0.0, %v477
  %v479 = vpop.f32.mrf.mxu0
  %480 = vmatprep.mubr.f32.mxu0 0.0
  %481 = vmatmul.mubr.f32.gmra.mxu0 %v84
  %v482 = vpop.f32.mrf.mxu0
  %v483 = vadd.f32 0.0, %v482
  %v484 = vpop.f32.mrf.mxu0
  %485 = vdwg.mxu0
  %v487 = vlaneseq
  %v488 = vshrl.u32 %v487, 7
  %v489 = vsub.s32 0, %v488
  %v490 = vrot.slane %v20, %v489
  %v492 = vadd.f32 %v490, %v168
  %v493 = vadd.f32 %v490, %v173
  %v494 = vadd.f32 %v490, %v178
  %v495 = vadd.f32 %v490, %v183
  %v496 = vadd.f32 %v490, %v188
  %v497 = vadd.f32 %v490, %v193
  %v498 = vadd.f32 %v490, %v198
  %v499 = vadd.f32 %v490, %v203
  %v500 = vadd.f32 %v490, %v208
  %v501 = vadd.f32 %v490, %v213
  %v502 = vadd.f32 %v490, %v218
  %v503 = vadd.f32 %v490, %v223
  %v504 = vadd.f32 %v490, %v228
  %v505 = vadd.f32 %v490, %v233
  %v506 = vadd.f32 %v490, %v238
  %v507 = vadd.f32 %v490, %v243
  %v508 = vadd.f32 %v490, %v248
  %v509 = vadd.f32 %v490, %v253
  %v510 = vadd.f32 %v490, %v258
  %v511 = vadd.f32 %v490, %v263
  %v512 = vadd.f32 %v490, %v268
  %v513 = vadd.f32 %v490, %v273
  %v514 = vadd.f32 %v490, %v278
  %v515 = vadd.f32 %v490, %v283
  %v516 = vadd.f32 %v490, %v288
  %v517 = vadd.f32 %v490, %v293
  %v518 = vadd.f32 %v490, %v298
  %v519 = vadd.f32 %v490, %v303
  %v520 = vadd.f32 %v490, %v308
  %v521 = vadd.f32 %v490, %v313
  %v522 = vadd.f32 %v490, %v318
  %v523 = vadd.f32 %v490, %v323
  %v524 = vadd.f32 %v490, %v328
  %v525 = vadd.f32 %v490, %v333
  %v526 = vadd.f32 %v490, %v338
  %v527 = vadd.f32 %v490, %v343
  %v528 = vadd.f32 %v490, %v348
  %v529 = vadd.f32 %v490, %v353
  %v530 = vadd.f32 %v490, %v358
  %v531 = vadd.f32 %v490, %v363
  %v532 = vadd.f32 %v490, %v368
  %v533 = vadd.f32 %v490, %v373
  %v534 = vadd.f32 %v490, %v378
  %v535 = vadd.f32 %v490, %v383
  %v536 = vadd.f32 %v490, %v388
  %v537 = vadd.f32 %v490, %v393
  %v538 = vadd.f32 %v490, %v398
  %v539 = vadd.f32 %v490, %v403
  %v540 = vadd.f32 %v490, %v408
  %v541 = vadd.f32 %v490, %v413
  %v542 = vadd.f32 %v490, %v418
  %v543 = vadd.f32 %v490, %v423
  %v544 = vadd.f32 %v490, %v428
  %v545 = vadd.f32 %v490, %v433
  %v546 = vadd.f32 %v490, %v438
  %v547 = vadd.f32 %v490, %v443
  %v548 = vadd.f32 %v490, %v448
  %v549 = vadd.f32 %v490, %v453
  %v550 = vadd.f32 %v490, %v458
  %v551 = vadd.f32 %v490, %v463
  %v552 = vadd.f32 %v490, %v468
  %v553 = vadd.f32 %v490, %v473
  %v554 = vadd.f32 %v490, %v478
  %v555 = vadd.f32 %v490, %v483
  %v556 = vld [vmem:[%s0 + $0x1] sm:$0xff]
  %v557 = vld [vmem:[%s0 + $0x9] sm:$0xff]
  %v558 = vld [vmem:[%s0 + $0x19] sm:$0xff]
  %v559 = vld [vmem:[%s0 + $0x21] sm:$0xff]
  %v560 = vld [vmem:[%s0 + $0x31] sm:$0xff]
  %v561 = vld [vmem:[%s0 + $0x39] sm:$0xff]
  %v562 = vld [vmem:[%s0 + $0x49] sm:$0xff]
  %v563 = vld [vmem:[%s0 + $0x51] sm:$0xff]
  %v564 = vld [vmem:[%s0 + $0x61] sm:$0xff]
  %v565 = vld [vmem:[%s0 + $0x69] sm:$0xff]
  %v566 = vld [vmem:[%s0 + $0x79] sm:$0xff]
  %v567 = vld [vmem:[%s0 + $0x81] sm:$0xff]
  %v568 = vld [vmem:[%s0 + $0x91] sm:$0xff]
  %v569 = vld [vmem:[%s0 + $0x99] sm:$0xff]
  %v570 = vld [vmem:[%s0 + $0xa9] sm:$0xff]
  %v571 = vld [vmem:[%s0 + $0xb1] sm:$0xff]
  %v572 = vld [vmem:[%s0 + $0xc1] sm:$0xff]
  %v573 = vld [vmem:[%s0 + $0xc9] sm:$0xff]
  %v574 = vld [vmem:[%s0 + $0xd9] sm:$0xff]
  %v575 = vld [vmem:[%s0 + $0xe1] sm:$0xff]
  %v576 = vld [vmem:[%s0 + $0xf1] sm:$0xff]
  %v577 = vld [vmem:[%s0 + $0xf9] sm:$0xff]
  %v578 = vld [vmem:[%s0 + $0x109] sm:$0xff]
  %v579 = vld [vmem:[%s0 + $0x111] sm:$0xff]
  %v580 = vld [vmem:[%s0 + $0x121] sm:$0xff]
  %v581 = vld [vmem:[%s0 + $0x129] sm:$0xff]
  %v582 = vld [vmem:[%s0 + $0x139] sm:$0xff]
  %v583 = vld [vmem:[%s0 + $0x141] sm:$0xff]
  %v584 = vld [vmem:[%s0 + $0x151] sm:$0xff]
  %v585 = vld [vmem:[%s0 + $0x159] sm:$0xff]
  %v586 = vld [vmem:[%s0 + $0x169] sm:$0xff]
  %v587 = vld [vmem:[%s0 + $0x171] sm:$0xff]
  %v588 = vld [vmem:[%s0 + $0x1b1] sm:$0xff]
  %v589 = vld [vmem:[%s0 + $0x1b9] sm:$0xff]
  %v590 = vld [vmem:[%s0 + $0x1c9] sm:$0xff]
  %v591 = vld [vmem:[%s0 + $0x1d1] sm:$0xff]
  %v592 = vld [vmem:[%s0 + $0x1e1] sm:$0xff]
  %v593 = vld [vmem:[%s0 + $0x1e9] sm:$0xff]
  %v594 = vld [vmem:[%s0 + $0x1f9] sm:$0xff]
  %v595 = vld [vmem:[%s0 + $0x201] sm:$0xff]
  %v596 = vld [vmem:[%s0 + $0x211] sm:$0xff]
  %v597 = vld [vmem:[%s0 + $0x219] sm:$0xff]
  %v598 = vld [vmem:[%s0 + $0x229] sm:$0xff]
  %v599 = vld [vmem:[%s0 + $0x231] sm:$0xff]
  %v600 = vld [vmem:[%s0 + $0x241] sm:$0xff]
  %v601 = vld [vmem:[%s0 + $0x249] sm:$0xff]
  %v602 = vld [vmem:[%s0 + $0x259] sm:$0xff]
  %v603 = vld [vmem:[%s0 + $0x261] sm:$0xff]
  %v604 = vld [vmem:[%s0 + $0x271] sm:$0xff]
  %v605 = vld [vmem:[%s0 + $0x279] sm:$0xff]
  %v606 = vld [vmem:[%s0 + $0x289] sm:$0xff]
  %v607 = vld [vmem:[%s0 + $0x291] sm:$0xff]
  %v608 = vld [vmem:[%s0 + $0x2a1] sm:$0xff]
  %v609 = vld [vmem:[%s0 + $0x2a9] sm:$0xff]
  %v610 = vld [vmem:[%s0 + $0x2b9] sm:$0xff]
  %v611 = vld [vmem:[%s0 + $0x2c1] sm:$0xff]
  %v612 = vld [vmem:[%s0 + $0x2d1] sm:$0xff]
  %v613 = vld [vmem:[%s0 + $0x2d9] sm:$0xff]
  %v614 = vld [vmem:[%s0 + $0x2e9] sm:$0xff]
  %v615 = vld [vmem:[%s0 + $0x2f1] sm:$0xff]
  %v616 = vld [vmem:[%s0 + $0x301] sm:$0xff]
  %v617 = vld [vmem:[%s0 + $0x309] sm:$0xff]
  %v618 = vld [vmem:[%s0 + $0x319] sm:$0xff]
  %v619 = vld [vmem:[%s0 + $0x321] sm:$0xff]
  %s620 = scalar_lea.vmem %s1, 128
  %v621 = vld [vmem:[%s620] sm:$0xff]
  %v622 = vld [vmem:[%s620 + $0x8] sm:$0xff]
  %v623 = vld [vmem:[%s620 + $0x10] sm:$0xff]
  %v624 = vld [vmem:[%s620 + $0x18] sm:$0xff]
  %v625 = vld [vmem:[%s620 + $0x20] sm:$0xff]
  %v626 = vld [vmem:[%s620 + $0x28] sm:$0xff]
  %v627 = vld [vmem:[%s620 + $0x30] sm:$0xff]
  %v628 = vld [vmem:[%s620 + $0x38] sm:$0xff]
  %v629 = vld [vmem:[%s620 + $0x40] sm:$0xff]
  %v630 = vld [vmem:[%s620 + $0x48] sm:$0xff]
  %v631 = vld [vmem:[%s620 + $0x50] sm:$0xff]
  %v632 = vld [vmem:[%s620 + $0x58] sm:$0xff]
  %v633 = vld [vmem:[%s620 + $0x60] sm:$0xff]
  %v634 = vld [vmem:[%s620 + $0x68] sm:$0xff]
  %v635 = vld [vmem:[%s620 + $0x70] sm:$0xff]
  %v636 = vld [vmem:[%s620 + $0x78] sm:$0xff]
  %637 = vmatprep.subr.mxu0 0.0
  %638 = vmatpush1.msra.mxu0 %v636
  %639 = vmatprep.subr.mxu0 0.0
  %640 = vmatpush1.msra.mxu0 %v635
  %641 = vmatprep.subr.mxu0 0.0
  %642 = vmatpush1.msra.mxu0 %v634
  %643 = vmatprep.subr.mxu0 0.0
  %644 = vmatpush1.msra.mxu0 %v633
  %645 = vmatprep.subr.mxu0 0.0
  %646 = vmatpush1.msra.mxu0 %v632
  %647 = vmatprep.subr.mxu0 0.0
  %648 = vmatpush1.msra.mxu0 %v631
  %649 = vmatprep.subr.mxu0 0.0
  %650 = vmatpush1.msra.mxu0 %v630
  %651 = vmatprep.subr.mxu0 0.0
  %652 = vmatpush1.msra.mxu0 %v629
  %653 = vmatprep.subr.mxu0 0.0
  %654 = vmatpush1.msra.mxu0 %v628
  %655 = vmatprep.subr.mxu0 0.0
  %656 = vmatpush1.msra.mxu0 %v627
  %657 = vmatprep.subr.mxu0 0.0
  %658 = vmatpush1.msra.mxu0 %v626
  %659 = vmatprep.subr.mxu0 0.0
  %660 = vmatpush1.msra.mxu0 %v625
  %661 = vmatprep.subr.mxu0 0.0
  %662 = vmatpush1.msra.mxu0 %v624
  %663 = vmatprep.subr.mxu0 0.0
  %664 = vmatpush1.msra.mxu0 %v623
  %665 = vmatprep.subr.mxu0 0.0
  %666 = vmatpush1.msra.mxu0 %v622
  %667 = vmatprep.subr.mxu0 0.0
  %668 = vmatpush1.msra.mxu0 %v621
  %669 = vmatprep.subr.mxu0 0.0
  %670 = vmatpush2.msra.mxu0 0.0
  %671 = vmatprep.subr.mxu0 0.0
  %672 = vmatpush2.msra.mxu0 0.0
  %673 = vmatprep.subr.mxu0 0.0
  %674 = vmatpush2.msra.mxu0 0.0
  %675 = vmatprep.subr.mxu0 0.0
  %676 = vmatpush2.msra.mxu0 0.0
  %677 = vmatprep.subr.mxu0 0.0
  %678 = vmatpush2.msra.mxu0 0.0
  %679 = vmatprep.subr.mxu0 0.0
  %680 = vmatpush2.msra.mxu0 0.0
  %681 = vmatprep.subr.mxu0 0.0
  %682 = vmatpush2.msra.mxu0 0.0
  %683 = vmatprep.subr.mxu0 0.0
  %684 = vmatpush2.msra.mxu0 0.0
  %685 = vmatprep.subr.mxu0 0.0
  %686 = vmatpush2.msra.mxu0 0.0
  %687 = vmatprep.subr.mxu0 0.0
  %688 = vmatpush2.msra.mxu0 0.0
  %689 = vmatprep.subr.mxu0 0.0
  %690 = vmatpush2.msra.mxu0 0.0
  %691 = vmatprep.subr.mxu0 0.0
  %692 = vmatpush2.msra.mxu0 0.0
  %693 = vmatprep.subr.mxu0 0.0
  %694 = vmatpush2.msra.mxu0 0.0
  %695 = vmatprep.subr.mxu0 0.0
  %696 = vmatpush2.msra.mxu0 0.0
  %697 = vmatprep.subr.mxu0 0.0
  %698 = vmatpush2.msra.mxu0 0.0
  %699 = vmatprep.subr.mxu0 0.0
  %700 = vmatpush2.msra.mxu0 0.0
  %701 = vmatprep.mubr.f32.mxu0 0.0
  %702 = vmatmul.mubr.f32.gmra.mxu0 %v556
  %v703 = vpop.f32.mrf.mxu0
  %v704 = vadd.f32 0.0, %v703
  %v705 = vpop.f32.mrf.mxu0
  %706 = vmatprep.mubr.f32.mxu0 0.0
  %707 = vmatmul.mubr.f32.gmra.mxu0 %v557
  %v708 = vpop.f32.mrf.mxu0
  %v709 = vadd.f32 0.0, %v708
  %v710 = vpop.f32.mrf.mxu0
  %711 = vmatprep.mubr.f32.mxu0 0.0
  %712 = vmatmul.mubr.f32.gmra.mxu0 %v558
  %v713 = vpop.f32.mrf.mxu0
  %v714 = vadd.f32 0.0, %v713
  %v715 = vpop.f32.mrf.mxu0
  %716 = vmatprep.mubr.f32.mxu0 0.0
  %717 = vmatmul.mubr.f32.gmra.mxu0 %v559
  %v718 = vpop.f32.mrf.mxu0
  %v719 = vadd.f32 0.0, %v718
  %v720 = vpop.f32.mrf.mxu0
  %721 = vmatprep.mubr.f32.mxu0 0.0
  %722 = vmatmul.mubr.f32.gmra.mxu0 %v560
  %v723 = vpop.f32.mrf.mxu0
  %v724 = vadd.f32 0.0, %v723
  %v725 = vpop.f32.mrf.mxu0
  %726 = vmatprep.mubr.f32.mxu0 0.0
  %727 = vmatmul.mubr.f32.gmra.mxu0 %v561
  %v728 = vpop.f32.mrf.mxu0
  %v729 = vadd.f32 0.0, %v728
  %v730 = vpop.f32.mrf.mxu0
  %731 = vmatprep.mubr.f32.mxu0 0.0
  %732 = vmatmul.mubr.f32.gmra.mxu0 %v562
  %v733 = vpop.f32.mrf.mxu0
  %v734 = vadd.f32 0.0, %v733
  %v735 = vpop.f32.mrf.mxu0
  %736 = vmatprep.mubr.f32.mxu0 0.0
  %737 = vmatmul.mubr.f32.gmra.mxu0 %v563
  %v738 = vpop.f32.mrf.mxu0
  %v739 = vadd.f32 0.0, %v738
  %v740 = vpop.f32.mrf.mxu0
  %741 = vmatprep.mubr.f32.mxu0 0.0
  %742 = vmatmul.mubr.f32.gmra.mxu0 %v564
  %v743 = vpop.f32.mrf.mxu0
  %v744 = vadd.f32 0.0, %v743
  %v745 = vpop.f32.mrf.mxu0
  %746 = vmatprep.mubr.f32.mxu0 0.0
  %747 = vmatmul.mubr.f32.gmra.mxu0 %v565
  %v748 = vpop.f32.mrf.mxu0
  %v749 = vadd.f32 0.0, %v748
  %v750 = vpop.f32.mrf.mxu0
  %751 = vmatprep.mubr.f32.mxu0 0.0
  %752 = vmatmul.mubr.f32.gmra.mxu0 %v566
  %v753 = vpop.f32.mrf.mxu0
  %v754 = vadd.f32 0.0, %v753
  %v755 = vpop.f32.mrf.mxu0
  %756 = vmatprep.mubr.f32.mxu0 0.0
  %757 = vmatmul.mubr.f32.gmra.mxu0 %v567
  %v758 = vpop.f32.mrf.mxu0
  %v759 = vadd.f32 0.0, %v758
  %v760 = vpop.f32.mrf.mxu0
  %761 = vmatprep.mubr.f32.mxu0 0.0
  %762 = vmatmul.mubr.f32.gmra.mxu0 %v568
  %v763 = vpop.f32.mrf.mxu0
  %v764 = vadd.f32 0.0, %v763
  %v765 = vpop.f32.mrf.mxu0
  %766 = vmatprep.mubr.f32.mxu0 0.0
  %767 = vmatmul.mubr.f32.gmra.mxu0 %v569
  %v768 = vpop.f32.mrf.mxu0
  %v769 = vadd.f32 0.0, %v768
  %v770 = vpop.f32.mrf.mxu0
  %771 = vmatprep.mubr.f32.mxu0 0.0
  %772 = vmatmul.mubr.f32.gmra.mxu0 %v570
  %v773 = vpop.f32.mrf.mxu0
  %v774 = vadd.f32 0.0, %v773
  %v775 = vpop.f32.mrf.mxu0
  %776 = vmatprep.mubr.f32.mxu0 0.0
  %777 = vmatmul.mubr.f32.gmra.mxu0 %v571
  %v778 = vpop.f32.mrf.mxu0
  %v779 = vadd.f32 0.0, %v778
  %v780 = vpop.f32.mrf.mxu0
  %781 = vmatprep.mubr.f32.mxu0 0.0
  %782 = vmatmul.mubr.f32.gmra.mxu0 %v572
  %v783 = vpop.f32.mrf.mxu0
  %v784 = vadd.f32 0.0, %v783
  %v785 = vpop.f32.mrf.mxu0
  %786 = vmatprep.mubr.f32.mxu0 0.0
  %787 = vmatmul.mubr.f32.gmra.mxu0 %v573
  %v788 = vpop.f32.mrf.mxu0
  %v789 = vadd.f32 0.0, %v788
  %v790 = vpop.f32.mrf.mxu0
  %791 = vmatprep.mubr.f32.mxu0 0.0
  %792 = vmatmul.mubr.f32.gmra.mxu0 %v574
  %v793 = vpop.f32.mrf.mxu0
  %v794 = vadd.f32 0.0, %v793
  %v795 = vpop.f32.mrf.mxu0
  %796 = vmatprep.mubr.f32.mxu0 0.0
  %797 = vmatmul.mubr.f32.gmra.mxu0 %v575
  %v798 = vpop.f32.mrf.mxu0
  %v799 = vadd.f32 0.0, %v798
  %v800 = vpop.f32.mrf.mxu0
  %801 = vmatprep.mubr.f32.mxu0 0.0
  %802 = vmatmul.mubr.f32.gmra.mxu0 %v576
  %v803 = vpop.f32.mrf.mxu0
  %v804 = vadd.f32 0.0, %v803
  %v805 = vpop.f32.mrf.mxu0
  %806 = vmatprep.mubr.f32.mxu0 0.0
  %807 = vmatmul.mubr.f32.gmra.mxu0 %v577
  %v808 = vpop.f32.mrf.mxu0
  %v809 = vadd.f32 0.0, %v808
  %v810 = vpop.f32.mrf.mxu0
  %811 = vmatprep.mubr.f32.mxu0 0.0
  %812 = vmatmul.mubr.f32.gmra.mxu0 %v578
  %v813 = vpop.f32.mrf.mxu0
  %v814 = vadd.f32 0.0, %v813
  %v815 = vpop.f32.mrf.mxu0
  %816 = vmatprep.mubr.f32.mxu0 0.0
  %817 = vmatmul.mubr.f32.gmra.mxu0 %v579
  %v818 = vpop.f32.mrf.mxu0
  %v819 = vadd.f32 0.0, %v818
  %v820 = vpop.f32.mrf.mxu0
  %821 = vmatprep.mubr.f32.mxu0 0.0
  %822 = vmatmul.mubr.f32.gmra.mxu0 %v580
  %v823 = vpop.f32.mrf.mxu0
  %v824 = vadd.f32 0.0, %v823
  %v825 = vpop.f32.mrf.mxu0
  %826 = vmatprep.mubr.f32.mxu0 0.0
  %827 = vmatmul.mubr.f32.gmra.mxu0 %v581
  %v828 = vpop.f32.mrf.mxu0
  %v829 = vadd.f32 0.0, %v828
  %v830 = vpop.f32.mrf.mxu0
  %831 = vmatprep.mubr.f32.mxu0 0.0
  %832 = vmatmul.mubr.f32.gmra.mxu0 %v582
  %v833 = vpop.f32.mrf.mxu0
  %v834 = vadd.f32 0.0, %v833
  %v835 = vpop.f32.mrf.mxu0
  %836 = vmatprep.mubr.f32.mxu0 0.0
  %837 = vmatmul.mubr.f32.gmra.mxu0 %v583
  %v838 = vpop.f32.mrf.mxu0
  %v839 = vadd.f32 0.0, %v838
  %v840 = vpop.f32.mrf.mxu0
  %841 = vmatprep.mubr.f32.mxu0 0.0
  %842 = vmatmul.mubr.f32.gmra.mxu0 %v584
  %v843 = vpop.f32.mrf.mxu0
  %v844 = vadd.f32 0.0, %v843
  %v845 = vpop.f32.mrf.mxu0
  %846 = vmatprep.mubr.f32.mxu0 0.0
  %847 = vmatmul.mubr.f32.gmra.mxu0 %v585
  %v848 = vpop.f32.mrf.mxu0
  %v849 = vadd.f32 0.0, %v848
  %v850 = vpop.f32.mrf.mxu0
  %851 = vmatprep.mubr.f32.mxu0 0.0
  %852 = vmatmul.mubr.f32.gmra.mxu0 %v586
  %v853 = vpop.f32.mrf.mxu0
  %v854 = vadd.f32 0.0, %v853
  %v855 = vpop.f32.mrf.mxu0
  %856 = vmatprep.mubr.f32.mxu0 0.0
  %857 = vmatmul.mubr.f32.gmra.mxu0 %v587
  %v858 = vpop.f32.mrf.mxu0
  %v859 = vadd.f32 0.0, %v858
  %v860 = vpop.f32.mrf.mxu0
  %861 = vmatprep.mubr.f32.mxu0 0.0
  %862 = vmatmul.mubr.f32.gmra.mxu0 %v588
  %v863 = vpop.f32.mrf.mxu0
  %v864 = vadd.f32 0.0, %v863
  %v865 = vpop.f32.mrf.mxu0
  %866 = vmatprep.mubr.f32.mxu0 0.0
  %867 = vmatmul.mubr.f32.gmra.mxu0 %v589
  %v868 = vpop.f32.mrf.mxu0
  %v869 = vadd.f32 0.0, %v868
  %v870 = vpop.f32.mrf.mxu0
  %871 = vmatprep.mubr.f32.mxu0 0.0
  %872 = vmatmul.mubr.f32.gmra.mxu0 %v590
  %v873 = vpop.f32.mrf.mxu0
  %v874 = vadd.f32 0.0, %v873
  %v875 = vpop.f32.mrf.mxu0
  %876 = vmatprep.mubr.f32.mxu0 0.0
  %877 = vmatmul.mubr.f32.gmra.mxu0 %v591
  %v878 = vpop.f32.mrf.mxu0
  %v879 = vadd.f32 0.0, %v878
  %v880 = vpop.f32.mrf.mxu0
  %881 = vmatprep.mubr.f32.mxu0 0.0
  %882 = vmatmul.mubr.f32.gmra.mxu0 %v592
  %v883 = vpop.f32.mrf.mxu0
  %v884 = vadd.f32 0.0, %v883
  %v885 = vpop.f32.mrf.mxu0
  %886 = vmatprep.mubr.f32.mxu0 0.0
  %887 = vmatmul.mubr.f32.gmra.mxu0 %v593
  %v888 = vpop.f32.mrf.mxu0
  %v889 = vadd.f32 0.0, %v888
  %v890 = vpop.f32.mrf.mxu0
  %891 = vmatprep.mubr.f32.mxu0 0.0
  %892 = vmatmul.mubr.f32.gmra.mxu0 %v594
  %v893 = vpop.f32.mrf.mxu0
  %v894 = vadd.f32 0.0, %v893
  %v895 = vpop.f32.mrf.mxu0
  %896 = vmatprep.mubr.f32.mxu0 0.0
  %897 = vmatmul.mubr.f32.gmra.mxu0 %v595
  %v898 = vpop.f32.mrf.mxu0
  %v899 = vadd.f32 0.0, %v898
  %v900 = vpop.f32.mrf.mxu0
  %901 = vmatprep.mubr.f32.mxu0 0.0
  %902 = vmatmul.mubr.f32.gmra.mxu0 %v596
  %v903 = vpop.f32.mrf.mxu0
  %v904 = vadd.f32 0.0, %v903
  %v905 = vpop.f32.mrf.mxu0
  %906 = vmatprep.mubr.f32.mxu0 0.0
  %907 = vmatmul.mubr.f32.gmra.mxu0 %v597
  %v908 = vpop.f32.mrf.mxu0
  %v909 = vadd.f32 0.0, %v908
  %v910 = vpop.f32.mrf.mxu0
  %911 = vmatprep.mubr.f32.mxu0 0.0
  %912 = vmatmul.mubr.f32.gmra.mxu0 %v598
  %v913 = vpop.f32.mrf.mxu0
  %v914 = vadd.f32 0.0, %v913
  %v915 = vpop.f32.mrf.mxu0
  %916 = vmatprep.mubr.f32.mxu0 0.0
  %917 = vmatmul.mubr.f32.gmra.mxu0 %v599
  %v918 = vpop.f32.mrf.mxu0
  %v919 = vadd.f32 0.0, %v918
  %v920 = vpop.f32.mrf.mxu0
  %921 = vmatprep.mubr.f32.mxu0 0.0
  %922 = vmatmul.mubr.f32.gmra.mxu0 %v600
  %v923 = vpop.f32.mrf.mxu0
  %v924 = vadd.f32 0.0, %v923
  %v925 = vpop.f32.mrf.mxu0
  %926 = vmatprep.mubr.f32.mxu0 0.0
  %927 = vmatmul.mubr.f32.gmra.mxu0 %v601
  %v928 = vpop.f32.mrf.mxu0
  %v929 = vadd.f32 0.0, %v928
  %v930 = vpop.f32.mrf.mxu0
  %931 = vmatprep.mubr.f32.mxu0 0.0
  %932 = vmatmul.mubr.f32.gmra.mxu0 %v602
  %v933 = vpop.f32.mrf.mxu0
  %v934 = vadd.f32 0.0, %v933
  %v935 = vpop.f32.mrf.mxu0
  %936 = vmatprep.mubr.f32.mxu0 0.0
  %937 = vmatmul.mubr.f32.gmra.mxu0 %v603
  %v938 = vpop.f32.mrf.mxu0
  %v939 = vadd.f32 0.0, %v938
  %v940 = vpop.f32.mrf.mxu0
  %941 = vmatprep.mubr.f32.mxu0 0.0
  %942 = vmatmul.mubr.f32.gmra.mxu0 %v604
  %v943 = vpop.f32.mrf.mxu0
  %v944 = vadd.f32 0.0, %v943
  %v945 = vpop.f32.mrf.mxu0
  %946 = vmatprep.mubr.f32.mxu0 0.0
  %947 = vmatmul.mubr.f32.gmra.mxu0 %v605
  %v948 = vpop.f32.mrf.mxu0
  %v949 = vadd.f32 0.0, %v948
  %v950 = vpop.f32.mrf.mxu0
  %951 = vmatprep.mubr.f32.mxu0 0.0
  %952 = vmatmul.mubr.f32.gmra.mxu0 %v606
  %v953 = vpop.f32.mrf.mxu0
  %v954 = vadd.f32 0.0, %v953
  %v955 = vpop.f32.mrf.mxu0
  %956 = vmatprep.mubr.f32.mxu0 0.0
  %957 = vmatmul.mubr.f32.gmra.mxu0 %v607
  %v958 = vpop.f32.mrf.mxu0
  %v959 = vadd.f32 0.0, %v958
  %v960 = vpop.f32.mrf.mxu0
  %961 = vmatprep.mubr.f32.mxu0 0.0
  %962 = vmatmul.mubr.f32.gmra.mxu0 %v608
  %v963 = vpop.f32.mrf.mxu0
  %v964 = vadd.f32 0.0, %v963
  %v965 = vpop.f32.mrf.mxu0
  %966 = vmatprep.mubr.f32.mxu0 0.0
  %967 = vmatmul.mubr.f32.gmra.mxu0 %v609
  %v968 = vpop.f32.mrf.mxu0
  %v969 = vadd.f32 0.0, %v968
  %v970 = vpop.f32.mrf.mxu0
  %971 = vmatprep.mubr.f32.mxu0 0.0
  %972 = vmatmul.mubr.f32.gmra.mxu0 %v610
  %v973 = vpop.f32.mrf.mxu0
  %v974 = vadd.f32 0.0, %v973
  %v975 = vpop.f32.mrf.mxu0
  %976 = vmatprep.mubr.f32.mxu0 0.0
  %977 = vmatmul.mubr.f32.gmra.mxu0 %v611
  %v978 = vpop.f32.mrf.mxu0
  %v979 = vadd.f32 0.0, %v978
  %v980 = vpop.f32.mrf.mxu0
  %981 = vmatprep.mubr.f32.mxu0 0.0
  %982 = vmatmul.mubr.f32.gmra.mxu0 %v612
  %v983 = vpop.f32.mrf.mxu0
  %v984 = vadd.f32 0.0, %v983
  %v985 = vpop.f32.mrf.mxu0
  %986 = vmatprep.mubr.f32.mxu0 0.0
  %987 = vmatmul.mubr.f32.gmra.mxu0 %v613
  %v988 = vpop.f32.mrf.mxu0
  %v989 = vadd.f32 0.0, %v988
  %v990 = vpop.f32.mrf.mxu0
  %991 = vmatprep.mubr.f32.mxu0 0.0
  %992 = vmatmul.mubr.f32.gmra.mxu0 %v614
  %v993 = vpop.f32.mrf.mxu0
  %v994 = vadd.f32 0.0, %v993
  %v995 = vpop.f32.mrf.mxu0
  %996 = vmatprep.mubr.f32.mxu0 0.0
  %997 = vmatmul.mubr.f32.gmra.mxu0 %v615
  %v998 = vpop.f32.mrf.mxu0
  %v999 = vadd.f32 0.0, %v998
  %v1000 = vpop.f32.mrf.mxu0
  %1001 = vmatprep.mubr.f32.mxu0 0.0
  %1002 = vmatmul.mubr.f32.gmra.mxu0 %v616
  %v1003 = vpop.f32.mrf.mxu0
  %v1004 = vadd.f32 0.0, %v1003
  %v1005 = vpop.f32.mrf.mxu0
  %1006 = vmatprep.mubr.f32.mxu0 0.0
  %1007 = vmatmul.mubr.f32.gmra.mxu0 %v617
  %v1008 = vpop.f32.mrf.mxu0
  %v1009 = vadd.f32 0.0, %v1008
  %v1010 = vpop.f32.mrf.mxu0
  %1011 = vmatprep.mubr.f32.mxu0 0.0
  %1012 = vmatmul.mubr.f32.gmra.mxu0 %v618
  %v1013 = vpop.f32.mrf.mxu0
  %v1014 = vadd.f32 0.0, %v1013
  %v1015 = vpop.f32.mrf.mxu0
  %1016 = vmatprep.mubr.f32.mxu0 0.0
  %1017 = vmatmul.mubr.f32.gmra.mxu0 %v619
  %v1018 = vpop.f32.mrf.mxu0
  %v1019 = vadd.f32 0.0, %v1018
  %v1020 = vpop.f32.mrf.mxu0
  %1021 = vdwg.mxu0
  %v1022 = vadd.f32 %v492, %v704
  %v1023 = vadd.f32 %v493, %v709
  %v1024 = vadd.f32 %v494, %v714
  %v1025 = vadd.f32 %v495, %v719
  %v1026 = vadd.f32 %v496, %v724
  %v1027 = vadd.f32 %v497, %v729
  %v1028 = vadd.f32 %v498, %v734
  %v1029 = vadd.f32 %v499, %v739
  %v1030 = vadd.f32 %v500, %v744
  %v1031 = vadd.f32 %v501, %v749
  %v1032 = vadd.f32 %v502, %v754
  %v1033 = vadd.f32 %v503, %v759
  %v1034 = vadd.f32 %v504, %v764
  %v1035 = vadd.f32 %v505, %v769
  %v1036 = vadd.f32 %v506, %v774
  %v1037 = vadd.f32 %v507, %v779
  %v1038 = vadd.f32 %v508, %v784
  %v1039 = vadd.f32 %v509, %v789
  %v1040 = vadd.f32 %v510, %v794
  %v1041 = vadd.f32 %v511, %v799
  %v1042 = vadd.f32 %v512, %v804
  %v1043 = vadd.f32 %v513, %v809
  %v1044 = vadd.f32 %v514, %v814
  %v1045 = vadd.f32 %v515, %v819
  %v1046 = vadd.f32 %v516, %v824
  %v1047 = vadd.f32 %v517, %v829
  %v1048 = vadd.f32 %v518, %v834
  %v1049 = vadd.f32 %v519, %v839
  %v1050 = vadd.f32 %v520, %v844
  %v1051 = vadd.f32 %v521, %v849
  %v1052 = vadd.f32 %v522, %v854
  %v1053 = vadd.f32 %v523, %v859
  %v1054 = vadd.f32 %v524, %v864
  %v1055 = vadd.f32 %v525, %v869
  %v1056 = vadd.f32 %v526, %v874
  %v1057 = vadd.f32 %v527, %v879
  %v1058 = vadd.f32 %v528, %v884
  %v1059 = vadd.f32 %v529, %v889
  %v1060 = vadd.f32 %v530, %v894
  %v1061 = vadd.f32 %v531, %v899
  %v1062 = vadd.f32 %v532, %v904
  %v1063 = vadd.f32 %v533, %v909
  %v1064 = vadd.f32 %v534, %v914
  %v1065 = vadd.f32 %v535, %v919
  %v1066 = vadd.f32 %v536, %v924
  %v1067 = vadd.f32 %v537, %v929
  %v1068 = vadd.f32 %v538, %v934
  %v1069 = vadd.f32 %v539, %v939
  %v1070 = vadd.f32 %v540, %v944
  %v1071 = vadd.f32 %v541, %v949
  %v1072 = vadd.f32 %v542, %v954
  %v1073 = vadd.f32 %v543, %v959
  %v1074 = vadd.f32 %v544, %v964
  %v1075 = vadd.f32 %v545, %v969
  %v1076 = vadd.f32 %v546, %v974
  %v1077 = vadd.f32 %v547, %v979
  %v1078 = vadd.f32 %v548, %v984
  %v1079 = vadd.f32 %v549, %v989
  %v1080 = vadd.f32 %v550, %v994
  %v1081 = vadd.f32 %v551, %v999
  %v1082 = vadd.f32 %v552, %v1004
  %v1083 = vadd.f32 %v553, %v1009
  %v1084 = vadd.f32 %v554, %v1014
  %v1085 = vadd.f32 %v555, %v1019
  %v1086 = vld [vmem:[%s0 + $0x2] sm:$0xff]
  %v1087 = vld [vmem:[%s0 + $0xa] sm:$0xff]
  %v1088 = vld [vmem:[%s0 + $0x1a] sm:$0xff]
  %v1089 = vld [vmem:[%s0 + $0x22] sm:$0xff]
  %v1090 = vld [vmem:[%s0 + $0x32] sm:$0xff]
  %v1091 = vld [vmem:[%s0 + $0x3a] sm:$0xff]
  %v1092 = vld [vmem:[%s0 + $0x4a] sm:$0xff]
  %v1093 = vld [vmem:[%s0 + $0x52] sm:$0xff]
  %v1094 = vld [vmem:[%s0 + $0x62] sm:$0xff]
  %v1095 = vld [vmem:[%s0 + $0x6a] sm:$0xff]
  %v1096 = vld [vmem:[%s0 + $0x7a] sm:$0xff]
  %v1097 = vld [vmem:[%s0 + $0x82] sm:$0xff]
  %v1098 = vld [vmem:[%s0 + $0x92] sm:$0xff]
  %v1099 = vld [vmem:[%s0 + $0x9a] sm:$0xff]
  %v1100 = vld [vmem:[%s0 + $0xaa] sm:$0xff]
  %v1101 = vld [vmem:[%s0 + $0xb2] sm:$0xff]
  %v1102 = vld [vmem:[%s0 + $0xc2] sm:$0xff]
  %v1103 = vld [vmem:[%s0 + $0xca] sm:$0xff]
  %v1104 = vld [vmem:[%s0 + $0xda] sm:$0xff]
  %v1105 = vld [vmem:[%s0 + $0xe2] sm:$0xff]
  %v1106 = vld [vmem:[%s0 + $0xf2] sm:$0xff]
  %v1107 = vld [vmem:[%s0 + $0xfa] sm:$0xff]
  %v1108 = vld [vmem:[%s0 + $0x10a] sm:$0xff]
  %v1109 = vld [vmem:[%s0 + $0x112] sm:$0xff]
  %v1110 = vld [vmem:[%s0 + $0x122] sm:$0xff]
  %v1111 = vld [vmem:[%s0 + $0x12a] sm:$0xff]
  %v1112 = vld [vmem:[%s0 + $0x13a] sm:$0xff]
  %v1113 = vld [vmem:[%s0 + $0x142] sm:$0xff]
  %v1114 = vld [vmem:[%s0 + $0x152] sm:$0xff]
  %v1115 = vld [vmem:[%s0 + $0x15a] sm:$0xff]
  %v1116 = vld [vmem:[%s0 + $0x16a] sm:$0xff]
  %v1117 = vld [vmem:[%s0 + $0x172] sm:$0xff]
  %v1118 = vld [vmem:[%s0 + $0x1b2] sm:$0xff]
  %v1119 = vld [vmem:[%s0 + $0x1ba] sm:$0xff]
  %v1120 = vld [vmem:[%s0 + $0x1ca] sm:$0xff]
  %v1121 = vld [vmem:[%s0 + $0x1d2] sm:$0xff]
  %v1122 = vld [vmem:[%s0 + $0x1e2] sm:$0xff]
  %v1123 = vld [vmem:[%s0 + $0x1ea] sm:$0xff]
  %v1124 = vld [vmem:[%s0 + $0x1fa] sm:$0xff]
  %v1125 = vld [vmem:[%s0 + $0x202] sm:$0xff]
  %v1126 = vld [vmem:[%s0 + $0x212] sm:$0xff]
  %v1127 = vld [vmem:[%s0 + $0x21a] sm:$0xff]
  %v1128 = vld [vmem:[%s0 + $0x22a] sm:$0xff]
  %v1129 = vld [vmem:[%s0 + $0x232] sm:$0xff]
  %v1130 = vld [vmem:[%s0 + $0x242] sm:$0xff]
  %v1131 = vld [vmem:[%s0 + $0x24a] sm:$0xff]
  %v1132 = vld [vmem:[%s0 + $0x25a] sm:$0xff]
  %v1133 = vld [vmem:[%s0 + $0x262] sm:$0xff]
  %v1134 = vld [vmem:[%s0 + $0x272] sm:$0xff]
  %v1135 = vld [vmem:[%s0 + $0x27a] sm:$0xff]
  %v1136 = vld [vmem:[%s0 + $0x28a] sm:$0xff]
  %v1137 = vld [vmem:[%s0 + $0x292] sm:$0xff]
  %v1138 = vld [vmem:[%s0 + $0x2a2] sm:$0xff]
  %v1139 = vld [vmem:[%s0 + $0x2aa] sm:$0xff]
  %v1140 = vld [vmem:[%s0 + $0x2ba] sm:$0xff]
  %v1141 = vld [vmem:[%s0 + $0x2c2] sm:$0xff]
  %v1142 = vld [vmem:[%s0 + $0x2d2] sm:$0xff]
  %v1143 = vld [vmem:[%s0 + $0x2da] sm:$0xff]
  %v1144 = vld [vmem:[%s0 + $0x2ea] sm:$0xff]
  %v1145 = vld [vmem:[%s0 + $0x2f2] sm:$0xff]
  %v1146 = vld [vmem:[%s0 + $0x302] sm:$0xff]
  %v1147 = vld [vmem:[%s0 + $0x30a] sm:$0xff]
  %v1148 = vld [vmem:[%s0 + $0x31a] sm:$0xff]
  %v1149 = vld [vmem:[%s0 + $0x322] sm:$0xff]
  %s1150 = scalar_lea.vmem %s1, 256
  %v1151 = vld [vmem:[%s1150] sm:$0xff]
  %v1152 = vld [vmem:[%s1150 + $0x8] sm:$0xff]
  %v1153 = vld [vmem:[%s1150 + $0x10] sm:$0xff]
  %v1154 = vld [vmem:[%s1150 + $0x18] sm:$0xff]
  %v1155 = vld [vmem:[%s1150 + $0x20] sm:$0xff]
  %v1156 = vld [vmem:[%s1150 + $0x28] sm:$0xff]
  %v1157 = vld [vmem:[%s1150 + $0x30] sm:$0xff]
  %v1158 = vld [vmem:[%s1150 + $0x38] sm:$0xff]
  %v1159 = vld [vmem:[%s1150 + $0x40] sm:$0xff]
  %v1160 = vld [vmem:[%s1150 + $0x48] sm:$0xff]
  %v1161 = vld [vmem:[%s1150 + $0x50] sm:$0xff]
  %v1162 = vld [vmem:[%s1150 + $0x58] sm:$0xff]
  %v1163 = vld [vmem:[%s1150 + $0x60] sm:$0xff]
  %v1164 = vld [vmem:[%s1150 + $0x68] sm:$0xff]
  %v1165 = vld [vmem:[%s1150 + $0x70] sm:$0xff]
  %v1166 = vld [vmem:[%s1150 + $0x78] sm:$0xff]
  %1167 = vmatprep.subr.mxu0 0.0
  %1168 = vmatpush1.msra.mxu0 %v1166
  %1169 = vmatprep.subr.mxu0 0.0
  %1170 = vmatpush1.msra.mxu0 %v1165
  %1171 = vmatprep.subr.mxu0 0.0
  %1172 = vmatpush1.msra.mxu0 %v1164
  %1173 = vmatprep.subr.mxu0 0.0
  %1174 = vmatpush1.msra.mxu0 %v1163
  %1175 = vmatprep.subr.mxu0 0.0
  %1176 = vmatpush1.msra.mxu0 %v1162
  %1177 = vmatprep.subr.mxu0 0.0
  %1178 = vmatpush1.msra.mxu0 %v1161
  %1179 = vmatprep.subr.mxu0 0.0
  %1180 = vmatpush1.msra.mxu0 %v1160
  %1181 = vmatprep.subr.mxu0 0.0
  %1182 = vmatpush1.msra.mxu0 %v1159
  %1183 = vmatprep.subr.mxu0 0.0
  %1184 = vmatpush1.msra.mxu0 %v1158
  %1185 = vmatprep.subr.mxu0 0.0
  %1186 = vmatpush1.msra.mxu0 %v1157
  %1187 = vmatprep.subr.mxu0 0.0
  %1188 = vmatpush1.msra.mxu0 %v1156
  %1189 = vmatprep.subr.mxu0 0.0
  %1190 = vmatpush1.msra.mxu0 %v1155
  %1191 = vmatprep.subr.mxu0 0.0
  %1192 = vmatpush1.msra.mxu0 %v1154
  %1193 = vmatprep.subr.mxu0 0.0
  %1194 = vmatpush1.msra.mxu0 %v1153
  %1195 = vmatprep.subr.mxu0 0.0
  %1196 = vmatpush1.msra.mxu0 %v1152
  %1197 = vmatprep.subr.mxu0 0.0
  %1198 = vmatpush1.msra.mxu0 %v1151
  %1199 = vmatprep.subr.mxu0 0.0
  %1200 = vmatpush2.msra.mxu0 0.0
  %1201 = vmatprep.subr.mxu0 0.0
  %1202 = vmatpush2.msra.mxu0 0.0
  %1203 = vmatprep.subr.mxu0 0.0
  %1204 = vmatpush2.msra.mxu0 0.0
  %1205 = vmatprep.subr.mxu0 0.0
  %1206 = vmatpush2.msra.mxu0 0.0
  %1207 = vmatprep.subr.mxu0 0.0
  %1208 = vmatpush2.msra.mxu0 0.0
  %1209 = vmatprep.subr.mxu0 0.0
  %1210 = vmatpush2.msra.mxu0 0.0
  %1211 = vmatprep.subr.mxu0 0.0
  %1212 = vmatpush2.msra.mxu0 0.0
  %1213 = vmatprep.subr.mxu0 0.0
  %1214 = vmatpush2.msra.mxu0 0.0
  %1215 = vmatprep.subr.mxu0 0.0
  %1216 = vmatpush2.msra.mxu0 0.0
  %1217 = vmatprep.subr.mxu0 0.0
  %1218 = vmatpush2.msra.mxu0 0.0
  %1219 = vmatprep.subr.mxu0 0.0
  %1220 = vmatpush2.msra.mxu0 0.0
  %1221 = vmatprep.subr.mxu0 0.0
  %1222 = vmatpush2.msra.mxu0 0.0
  %1223 = vmatprep.subr.mxu0 0.0
  %1224 = vmatpush2.msra.mxu0 0.0
  %1225 = vmatprep.subr.mxu0 0.0
  %1226 = vmatpush2.msra.mxu0 0.0
  %1227 = vmatprep.subr.mxu0 0.0
  %1228 = vmatpush2.msra.mxu0 0.0
  %1229 = vmatprep.subr.mxu0 0.0
  %1230 = vmatpush2.msra.mxu0 0.0
  %1231 = vmatprep.mubr.f32.mxu0 0.0
  %1232 = vmatmul.mubr.f32.gmra.mxu0 %v1086
  %v1233 = vpop.f32.mrf.mxu0
  %v1234 = vadd.f32 0.0, %v1233
  %v1235 = vpop.f32.mrf.mxu0
  %1236 = vmatprep.mubr.f32.mxu0 0.0
  %1237 = vmatmul.mubr.f32.gmra.mxu0 %v1087
  %v1238 = vpop.f32.mrf.mxu0
  %v1239 = vadd.f32 0.0, %v1238
  %v1240 = vpop.f32.mrf.mxu0
  %1241 = vmatprep.mubr.f32.mxu0 0.0
  %1242 = vmatmul.mubr.f32.gmra.mxu0 %v1088
  %v1243 = vpop.f32.mrf.mxu0
  %v1244 = vadd.f32 0.0, %v1243
  %v1245 = vpop.f32.mrf.mxu0
  %1246 = vmatprep.mubr.f32.mxu0 0.0
  %1247 = vmatmul.mubr.f32.gmra.mxu0 %v1089
  %v1248 = vpop.f32.mrf.mxu0
  %v1249 = vadd.f32 0.0, %v1248
  %v1250 = vpop.f32.mrf.mxu0
  %1251 = vmatprep.mubr.f32.mxu0 0.0
  %1252 = vmatmul.mubr.f32.gmra.mxu0 %v1090
  %v1253 = vpop.f32.mrf.mxu0
  %v1254 = vadd.f32 0.0, %v1253
  %v1255 = vpop.f32.mrf.mxu0
  %1256 = vmatprep.mubr.f32.mxu0 0.0
  %1257 = vmatmul.mubr.f32.gmra.mxu0 %v1091
  %v1258 = vpop.f32.mrf.mxu0
  %v1259 = vadd.f32 0.0, %v1258
  %v1260 = vpop.f32.mrf.mxu0
  %1261 = vmatprep.mubr.f32.mxu0 0.0
  %1262 = vmatmul.mubr.f32.gmra.mxu0 %v1092
  %v1263 = vpop.f32.mrf.mxu0
  %v1264 = vadd.f32 0.0, %v1263
  %v1265 = vpop.f32.mrf.mxu0
  %1266 = vmatprep.mubr.f32.mxu0 0.0
  %1267 = vmatmul.mubr.f32.gmra.mxu0 %v1093
  %v1268 = vpop.f32.mrf.mxu0
  %v1269 = vadd.f32 0.0, %v1268
  %v1270 = vpop.f32.mrf.mxu0
  %1271 = vmatprep.mubr.f32.mxu0 0.0
  %1272 = vmatmul.mubr.f32.gmra.mxu0 %v1094
  %v1273 = vpop.f32.mrf.mxu0
  %v1274 = vadd.f32 0.0, %v1273
  %v1275 = vpop.f32.mrf.mxu0
  %1276 = vmatprep.mubr.f32.mxu0 0.0
  %1277 = vmatmul.mubr.f32.gmra.mxu0 %v1095
  %v1278 = vpop.f32.mrf.mxu0
  %v1279 = vadd.f32 0.0, %v1278
  %v1280 = vpop.f32.mrf.mxu0
  %1281 = vmatprep.mubr.f32.mxu0 0.0
  %1282 = vmatmul.mubr.f32.gmra.mxu0 %v1096
  %v1283 = vpop.f32.mrf.mxu0
  %v1284 = vadd.f32 0.0, %v1283
  %v1285 = vpop.f32.mrf.mxu0
  %1286 = vmatprep.mubr.f32.mxu0 0.0
  %1287 = vmatmul.mubr.f32.gmra.mxu0 %v1097
  %v1288 = vpop.f32.mrf.mxu0
  %v1289 = vadd.f32 0.0, %v1288
  %v1290 = vpop.f32.mrf.mxu0
  %1291 = vmatprep.mubr.f32.mxu0 0.0
  %1292 = vmatmul.mubr.f32.gmra.mxu0 %v1098
  %v1293 = vpop.f32.mrf.mxu0
  %v1294 = vadd.f32 0.0, %v1293
  %v1295 = vpop.f32.mrf.mxu0
  %1296 = vmatprep.mubr.f32.mxu0 0.0
  %1297 = vmatmul.mubr.f32.gmra.mxu0 %v1099
  %v1298 = vpop.f32.mrf.mxu0
  %v1299 = vadd.f32 0.0, %v1298
  %v1300 = vpop.f32.mrf.mxu0
  %1301 = vmatprep.mubr.f32.mxu0 0.0
  %1302 = vmatmul.mubr.f32.gmra.mxu0 %v1100
  %v1303 = vpop.f32.mrf.mxu0
  %v1304 = vadd.f32 0.0, %v1303
  %v1305 = vpop.f32.mrf.mxu0
  %1306 = vmatprep.mubr.f32.mxu0 0.0
  %1307 = vmatmul.mubr.f32.gmra.mxu0 %v1101
  %v1308 = vpop.f32.mrf.mxu0
  %v1309 = vadd.f32 0.0, %v1308
  %v1310 = vpop.f32.mrf.mxu0
  %1311 = vmatprep.mubr.f32.mxu0 0.0
  %1312 = vmatmul.mubr.f32.gmra.mxu0 %v1102
  %v1313 = vpop.f32.mrf.mxu0
  %v1314 = vadd.f32 0.0, %v1313
  %v1315 = vpop.f32.mrf.mxu0
  %1316 = vmatprep.mubr.f32.mxu0 0.0
  %1317 = vmatmul.mubr.f32.gmra.mxu0 %v1103
  %v1318 = vpop.f32.mrf.mxu0
  %v1319 = vadd.f32 0.0, %v1318
  %v1320 = vpop.f32.mrf.mxu0
  %1321 = vmatprep.mubr.f32.mxu0 0.0
  %1322 = vmatmul.mubr.f32.gmra.mxu0 %v1104
  %v1323 = vpop.f32.mrf.mxu0
  %v1324 = vadd.f32 0.0, %v1323
  %v1325 = vpop.f32.mrf.mxu0
  %1326 = vmatprep.mubr.f32.mxu0 0.0
  %1327 = vmatmul.mubr.f32.gmra.mxu0 %v1105
  %v1328 = vpop.f32.mrf.mxu0
  %v1329 = vadd.f32 0.0, %v1328
  %v1330 = vpop.f32.mrf.mxu0
  %1331 = vmatprep.mubr.f32.mxu0 0.0
  %1332 = vmatmul.mubr.f32.gmra.mxu0 %v1106
  %v1333 = vpop.f32.mrf.mxu0
  %v1334 = vadd.f32 0.0, %v1333
  %v1335 = vpop.f32.mrf.mxu0
  %1336 = vmatprep.mubr.f32.mxu0 0.0
  %1337 = vmatmul.mubr.f32.gmra.mxu0 %v1107
  %v1338 = vpop.f32.mrf.mxu0
  %v1339 = vadd.f32 0.0, %v1338
  %v1340 = vpop.f32.mrf.mxu0
  %1341 = vmatprep.mubr.f32.mxu0 0.0
  %1342 = vmatmul.mubr.f32.gmra.mxu0 %v1108
  %v1343 = vpop.f32.mrf.mxu0
  %v1344 = vadd.f32 0.0, %v1343
  %v1345 = vpop.f32.mrf.mxu0
  %1346 = vmatprep.mubr.f32.mxu0 0.0
  %1347 = vmatmul.mubr.f32.gmra.mxu0 %v1109
  %v1348 = vpop.f32.mrf.mxu0
  %v1349 = vadd.f32 0.0, %v1348
  %v1350 = vpop.f32.mrf.mxu0
  %1351 = vmatprep.mubr.f32.mxu0 0.0
  %1352 = vmatmul.mubr.f32.gmra.mxu0 %v1110
  %v1353 = vpop.f32.mrf.mxu0
  %v1354 = vadd.f32 0.0, %v1353
  %v1355 = vpop.f32.mrf.mxu0
  %1356 = vmatprep.mubr.f32.mxu0 0.0
  %1357 = vmatmul.mubr.f32.gmra.mxu0 %v1111
  %v1358 = vpop.f32.mrf.mxu0
  %v1359 = vadd.f32 0.0, %v1358
  %v1360 = vpop.f32.mrf.mxu0
  %1361 = vmatprep.mubr.f32.mxu0 0.0
  %1362 = vmatmul.mubr.f32.gmra.mxu0 %v1112
  %v1363 = vpop.f32.mrf.mxu0
  %v1364 = vadd.f32 0.0, %v1363
  %v1365 = vpop.f32.mrf.mxu0
  %1366 = vmatprep.mubr.f32.mxu0 0.0
  %1367 = vmatmul.mubr.f32.gmra.mxu0 %v1113
  %v1368 = vpop.f32.mrf.mxu0
  %v1369 = vadd.f32 0.0, %v1368
  %v1370 = vpop.f32.mrf.mxu0
  %1371 = vmatprep.mubr.f32.mxu0 0.0
  %1372 = vmatmul.mubr.f32.gmra.mxu0 %v1114
  %v1373 = vpop.f32.mrf.mxu0
  %v1374 = vadd.f32 0.0, %v1373
  %v1375 = vpop.f32.mrf.mxu0
  %1376 = vmatprep.mubr.f32.mxu0 0.0
  %1377 = vmatmul.mubr.f32.gmra.mxu0 %v1115
  %v1378 = vpop.f32.mrf.mxu0
  %v1379 = vadd.f32 0.0, %v1378
  %v1380 = vpop.f32.mrf.mxu0
  %1381 = vmatprep.mubr.f32.mxu0 0.0
  %1382 = vmatmul.mubr.f32.gmra.mxu0 %v1116
  %v1383 = vpop.f32.mrf.mxu0
  %v1384 = vadd.f32 0.0, %v1383
  %v1385 = vpop.f32.mrf.mxu0
  %1386 = vmatprep.mubr.f32.mxu0 0.0
  %1387 = vmatmul.mubr.f32.gmra.mxu0 %v1117
  %v1388 = vpop.f32.mrf.mxu0
  %v1389 = vadd.f32 0.0, %v1388
  %v1390 = vpop.f32.mrf.mxu0
  %1391 = vmatprep.mubr.f32.mxu0 0.0
  %1392 = vmatmul.mubr.f32.gmra.mxu0 %v1118
  %v1393 = vpop.f32.mrf.mxu0
  %v1394 = vadd.f32 0.0, %v1393
  %v1395 = vpop.f32.mrf.mxu0
  %1396 = vmatprep.mubr.f32.mxu0 0.0
  %1397 = vmatmul.mubr.f32.gmra.mxu0 %v1119
  %v1398 = vpop.f32.mrf.mxu0
  %v1399 = vadd.f32 0.0, %v1398
  %v1400 = vpop.f32.mrf.mxu0
  %1401 = vmatprep.mubr.f32.mxu0 0.0
  %1402 = vmatmul.mubr.f32.gmra.mxu0 %v1120
  %v1403 = vpop.f32.mrf.mxu0
  %v1404 = vadd.f32 0.0, %v1403
  %v1405 = vpop.f32.mrf.mxu0
  %1406 = vmatprep.mubr.f32.mxu0 0.0
  %1407 = vmatmul.mubr.f32.gmra.mxu0 %v1121
  %v1408 = vpop.f32.mrf.mxu0
  %v1409 = vadd.f32 0.0, %v1408
  %v1410 = vpop.f32.mrf.mxu0
  %1411 = vmatprep.mubr.f32.mxu0 0.0
  %1412 = vmatmul.mubr.f32.gmra.mxu0 %v1122
  %v1413 = vpop.f32.mrf.mxu0
  %v1414 = vadd.f32 0.0, %v1413
  %v1415 = vpop.f32.mrf.mxu0
  %1416 = vmatprep.mubr.f32.mxu0 0.0
  %1417 = vmatmul.mubr.f32.gmra.mxu0 %v1123
  %v1418 = vpop.f32.mrf.mxu0
  %v1419 = vadd.f32 0.0, %v1418
  %v1420 = vpop.f32.mrf.mxu0
  %1421 = vmatprep.mubr.f32.mxu0 0.0
  %1422 = vmatmul.mubr.f32.gmra.mxu0 %v1124
  %v1423 = vpop.f32.mrf.mxu0
  %v1424 = vadd.f32 0.0, %v1423
  %v1425 = vpop.f32.mrf.mxu0
  %1426 = vmatprep.mubr.f32.mxu0 0.0
  %1427 = vmatmul.mubr.f32.gmra.mxu0 %v1125
  %v1428 = vpop.f32.mrf.mxu0
  %v1429 = vadd.f32 0.0, %v1428
  %v1430 = vpop.f32.mrf.mxu0
  %1431 = vmatprep.mubr.f32.mxu0 0.0
  %1432 = vmatmul.mubr.f32.gmra.mxu0 %v1126
  %v1433 = vpop.f32.mrf.mxu0
  %v1434 = vadd.f32 0.0, %v1433
  %v1435 = vpop.f32.mrf.mxu0
  %1436 = vmatprep.mubr.f32.mxu0 0.0
  %1437 = vmatmul.mubr.f32.gmra.mxu0 %v1127
  %v1438 = vpop.f32.mrf.mxu0
  %v1439 = vadd.f32 0.0, %v1438
  %v1440 = vpop.f32.mrf.mxu0
  %1441 = vmatprep.mubr.f32.mxu0 0.0
  %1442 = vmatmul.mubr.f32.gmra.mxu0 %v1128
  %v1443 = vpop.f32.mrf.mxu0
  %v1444 = vadd.f32 0.0, %v1443
  %v1445 = vpop.f32.mrf.mxu0
  %1446 = vmatprep.mubr.f32.mxu0 0.0
  %1447 = vmatmul.mubr.f32.gmra.mxu0 %v1129
  %v1448 = vpop.f32.mrf.mxu0
  %v1449 = vadd.f32 0.0, %v1448
  %v1450 = vpop.f32.mrf.mxu0
  %1451 = vmatprep.mubr.f32.mxu0 0.0
  %1452 = vmatmul.mubr.f32.gmra.mxu0 %v1130
  %v1453 = vpop.f32.mrf.mxu0
  %v1454 = vadd.f32 0.0, %v1453
  %v1455 = vpop.f32.mrf.mxu0
  %1456 = vmatprep.mubr.f32.mxu0 0.0
  %1457 = vmatmul.mubr.f32.gmra.mxu0 %v1131
  %v1458 = vpop.f32.mrf.mxu0
  %v1459 = vadd.f32 0.0, %v1458
  %v1460 = vpop.f32.mrf.mxu0
  %1461 = vmatprep.mubr.f32.mxu0 0.0
  %1462 = vmatmul.mubr.f32.gmra.mxu0 %v1132
  %v1463 = vpop.f32.mrf.mxu0
  %v1464 = vadd.f32 0.0, %v1463
  %v1465 = vpop.f32.mrf.mxu0
  %1466 = vmatprep.mubr.f32.mxu0 0.0
  %1467 = vmatmul.mubr.f32.gmra.mxu0 %v1133
  %v1468 = vpop.f32.mrf.mxu0
  %v1469 = vadd.f32 0.0, %v1468
  %v1470 = vpop.f32.mrf.mxu0
  %1471 = vmatprep.mubr.f32.mxu0 0.0
  %1472 = vmatmul.mubr.f32.gmra.mxu0 %v1134
  %v1473 = vpop.f32.mrf.mxu0
  %v1474 = vadd.f32 0.0, %v1473
  %v1475 = vpop.f32.mrf.mxu0
  %1476 = vmatprep.mubr.f32.mxu0 0.0
  %1477 = vmatmul.mubr.f32.gmra.mxu0 %v1135
  %v1478 = vpop.f32.mrf.mxu0
  %v1479 = vadd.f32 0.0, %v1478
  %v1480 = vpop.f32.mrf.mxu0
  %1481 = vmatprep.mubr.f32.mxu0 0.0
  %1482 = vmatmul.mubr.f32.gmra.mxu0 %v1136
  %v1483 = vpop.f32.mrf.mxu0
  %v1484 = vadd.f32 0.0, %v1483
  %v1485 = vpop.f32.mrf.mxu0
  %1486 = vmatprep.mubr.f32.mxu0 0.0
  %1487 = vmatmul.mubr.f32.gmra.mxu0 %v1137
  %v1488 = vpop.f32.mrf.mxu0
  %v1489 = vadd.f32 0.0, %v1488
  %v1490 = vpop.f32.mrf.mxu0
  %1491 = vmatprep.mubr.f32.mxu0 0.0
  %1492 = vmatmul.mubr.f32.gmra.mxu0 %v1138
  %v1493 = vpop.f32.mrf.mxu0
  %v1494 = vadd.f32 0.0, %v1493
  %v1495 = vpop.f32.mrf.mxu0
  %1496 = vmatprep.mubr.f32.mxu0 0.0
  %1497 = vmatmul.mubr.f32.gmra.mxu0 %v1139
  %v1498 = vpop.f32.mrf.mxu0
  %v1499 = vadd.f32 0.0, %v1498
  %v1500 = vpop.f32.mrf.mxu0
  %1501 = vmatprep.mubr.f32.mxu0 0.0
  %1502 = vmatmul.mubr.f32.gmra.mxu0 %v1140
  %v1503 = vpop.f32.mrf.mxu0
  %v1504 = vadd.f32 0.0, %v1503
  %v1505 = vpop.f32.mrf.mxu0
  %1506 = vmatprep.mubr.f32.mxu0 0.0
  %1507 = vmatmul.mubr.f32.gmra.mxu0 %v1141
  %v1508 = vpop.f32.mrf.mxu0
  %v1509 = vadd.f32 0.0, %v1508
  %v1510 = vpop.f32.mrf.mxu0
  %1511 = vmatprep.mubr.f32.mxu0 0.0
  %1512 = vmatmul.mubr.f32.gmra.mxu0 %v1142
  %v1513 = vpop.f32.mrf.mxu0
  %v1514 = vadd.f32 0.0, %v1513
  %v1515 = vpop.f32.mrf.mxu0
  %1516 = vmatprep.mubr.f32.mxu0 0.0
  %1517 = vmatmul.mubr.f32.gmra.mxu0 %v1143
  %v1518 = vpop.f32.mrf.mxu0
  %v1519 = vadd.f32 0.0, %v1518
  %v1520 = vpop.f32.mrf.mxu0
  %1521 = vmatprep.mubr.f32.mxu0 0.0
  %1522 = vmatmul.mubr.f32.gmra.mxu0 %v1144
  %v1523 = vpop.f32.mrf.mxu0
  %v1524 = vadd.f32 0.0, %v1523
  %v1525 = vpop.f32.mrf.mxu0
  %1526 = vmatprep.mubr.f32.mxu0 0.0
  %1527 = vmatmul.mubr.f32.gmra.mxu0 %v1145
  %v1528 = vpop.f32.mrf.mxu0
  %v1529 = vadd.f32 0.0, %v1528
  %v1530 = vpop.f32.mrf.mxu0
  %1531 = vmatprep.mubr.f32.mxu0 0.0
  %1532 = vmatmul.mubr.f32.gmra.mxu0 %v1146
  %v1533 = vpop.f32.mrf.mxu0
  %v1534 = vadd.f32 0.0, %v1533
  %v1535 = vpop.f32.mrf.mxu0
  %1536 = vmatprep.mubr.f32.mxu0 0.0
  %1537 = vmatmul.mubr.f32.gmra.mxu0 %v1147
  %v1538 = vpop.f32.mrf.mxu0
  %v1539 = vadd.f32 0.0, %v1538
  %v1540 = vpop.f32.mrf.mxu0
  %1541 = vmatprep.mubr.f32.mxu0 0.0
  %1542 = vmatmul.mubr.f32.gmra.mxu0 %v1148
  %v1543 = vpop.f32.mrf.mxu0
  %v1544 = vadd.f32 0.0, %v1543
  %v1545 = vpop.f32.mrf.mxu0
  %1546 = vmatprep.mubr.f32.mxu0 0.0
  %1547 = vmatmul.mubr.f32.gmra.mxu0 %v1149
  %v1548 = vpop.f32.mrf.mxu0
  %v1549 = vadd.f32 0.0, %v1548
  %v1550 = vpop.f32.mrf.mxu0
  %1551 = vdwg.mxu0
  %v1552 = vadd.f32 %v1022, %v1234
  %v1553 = vadd.f32 %v1023, %v1239
  %v1554 = vadd.f32 %v1024, %v1244
  %v1555 = vadd.f32 %v1025, %v1249
  %v1556 = vadd.f32 %v1026, %v1254
  %v1557 = vadd.f32 %v1027, %v1259
  %v1558 = vadd.f32 %v1028, %v1264
  %v1559 = vadd.f32 %v1029, %v1269
  %v1560 = vadd.f32 %v1030, %v1274
  %v1561 = vadd.f32 %v1031, %v1279
  %v1562 = vadd.f32 %v1032, %v1284
  %v1563 = vadd.f32 %v1033, %v1289
  %v1564 = vadd.f32 %v1034, %v1294
  %v1565 = vadd.f32 %v1035, %v1299
  %v1566 = vadd.f32 %v1036, %v1304
  %v1567 = vadd.f32 %v1037, %v1309
  %v1568 = vadd.f32 %v1038, %v1314
  %v1569 = vadd.f32 %v1039, %v1319
  %v1570 = vadd.f32 %v1040, %v1324
  %v1571 = vadd.f32 %v1041, %v1329
  %v1572 = vadd.f32 %v1042, %v1334
  %v1573 = vadd.f32 %v1043, %v1339
  %v1574 = vadd.f32 %v1044, %v1344
  %v1575 = vadd.f32 %v1045, %v1349
  %v1576 = vadd.f32 %v1046, %v1354
  %v1577 = vadd.f32 %v1047, %v1359
  %v1578 = vadd.f32 %v1048, %v1364
  %v1579 = vadd.f32 %v1049, %v1369
  %v1580 = vadd.f32 %v1050, %v1374
  %v1581 = vadd.f32 %v1051, %v1379
  %v1582 = vadd.f32 %v1052, %v1384
  %v1583 = vadd.f32 %v1053, %v1389
  %v1584 = vadd.f32 %v1054, %v1394
  %v1585 = vadd.f32 %v1055, %v1399
  %v1586 = vadd.f32 %v1056, %v1404
  %v1587 = vadd.f32 %v1057, %v1409
  %v1588 = vadd.f32 %v1058, %v1414
  %v1589 = vadd.f32 %v1059, %v1419
  %v1590 = vadd.f32 %v1060, %v1424
  %v1591 = vadd.f32 %v1061, %v1429
  %v1592 = vadd.f32 %v1062, %v1434
  %v1593 = vadd.f32 %v1063, %v1439
  %v1594 = vadd.f32 %v1064, %v1444
  %v1595 = vadd.f32 %v1065, %v1449
  %v1596 = vadd.f32 %v1066, %v1454
  %v1597 = vadd.f32 %v1067, %v1459
  %v1598 = vadd.f32 %v1068, %v1464
  %v1599 = vadd.f32 %v1069, %v1469
  %v1600 = vadd.f32 %v1070, %v1474
  %v1601 = vadd.f32 %v1071, %v1479
  %v1602 = vadd.f32 %v1072, %v1484
  %v1603 = vadd.f32 %v1073, %v1489
  %v1604 = vadd.f32 %v1074, %v1494
  %v1605 = vadd.f32 %v1075, %v1499
  %v1606 = vadd.f32 %v1076, %v1504
  %v1607 = vadd.f32 %v1077, %v1509
  %v1608 = vadd.f32 %v1078, %v1514
  %v1609 = vadd.f32 %v1079, %v1519
  %v1610 = vadd.f32 %v1080, %v1524
  %v1611 = vadd.f32 %v1081, %v1529
  %v1612 = vadd.f32 %v1082, %v1534
  %v1613 = vadd.f32 %v1083, %v1539
  %v1614 = vadd.f32 %v1084, %v1544
  %v1615 = vadd.f32 %v1085, %v1549
  %s1616 = scalar_lea.vmem %s0, 24
  %v1617 = vld [vmem:[%s1616] sm:$0xff]
  %v1618 = vld [vmem:[%s1616 + $0x8] sm:$0xff]
  %v1619 = vld [vmem:[%s1616 + $0x18] sm:$0xff]
  %v1620 = vld [vmem:[%s1616 + $0x20] sm:$0xff]
  %v1621 = vld [vmem:[%s1616 + $0x30] sm:$0xff]
  %v1622 = vld [vmem:[%s1616 + $0x38] sm:$0xff]
  %v1623 = vld [vmem:[%s1616 + $0x48] sm:$0xff]
  %v1624 = vld [vmem:[%s1616 + $0x50] sm:$0xff]
  %v1625 = vld [vmem:[%s1616 + $0x60] sm:$0xff]
  %v1626 = vld [vmem:[%s1616 + $0x68] sm:$0xff]
  %v1627 = vld [vmem:[%s1616 + $0x78] sm:$0xff]
  %v1628 = vld [vmem:[%s1616 + $0x80] sm:$0xff]
  %v1629 = vld [vmem:[%s1616 + $0x90] sm:$0xff]
  %v1630 = vld [vmem:[%s1616 + $0x98] sm:$0xff]
  %v1631 = vld [vmem:[%s1616 + $0xa8] sm:$0xff]
  %v1632 = vld [vmem:[%s1616 + $0xb0] sm:$0xff]
  %v1633 = vld [vmem:[%s1616 + $0xc0] sm:$0xff]
  %v1634 = vld [vmem:[%s1616 + $0xc8] sm:$0xff]
  %v1635 = vld [vmem:[%s1616 + $0xd8] sm:$0xff]
  %v1636 = vld [vmem:[%s1616 + $0xe0] sm:$0xff]
  %v1637 = vld [vmem:[%s1616 + $0xf0] sm:$0xff]
  %v1638 = vld [vmem:[%s1616 + $0xf8] sm:$0xff]
  %v1639 = vld [vmem:[%s1616 + $0x108] sm:$0xff]
  %v1640 = vld [vmem:[%s1616 + $0x110] sm:$0xff]
  %v1641 = vld [vmem:[%s1616 + $0x120] sm:$0xff]
  %v1642 = vld [vmem:[%s1616 + $0x128] sm:$0xff]
  %v1643 = vld [vmem:[%s1616 + $0x138] sm:$0xff]
  %v1644 = vld [vmem:[%s1616 + $0x140] sm:$0xff]
  %v1645 = vld [vmem:[%s1616 + $0x150] sm:$0xff]
  %v1646 = vld [vmem:[%s1616 + $0x158] sm:$0xff]
  %v1647 = vld [vmem:[%s1616 + $0x168] sm:$0xff]
  %v1648 = vld [vmem:[%s1616 + $0x170] sm:$0xff]
  %v1649 = vld [vmem:[%s1616 + $0x1b0] sm:$0xff]
  %v1650 = vld [vmem:[%s1616 + $0x1b8] sm:$0xff]
  %v1651 = vld [vmem:[%s1616 + $0x1c8] sm:$0xff]
  %v1652 = vld [vmem:[%s1616 + $0x1d0] sm:$0xff]
  %v1653 = vld [vmem:[%s1616 + $0x1e0] sm:$0xff]
  %v1654 = vld [vmem:[%s1616 + $0x1e8] sm:$0xff]
  %v1655 = vld [vmem:[%s1616 + $0x1f8] sm:$0xff]
  %v1656 = vld [vmem:[%s1616 + $0x200] sm:$0xff]
  %v1657 = vld [vmem:[%s1616 + $0x210] sm:$0xff]
  %v1658 = vld [vmem:[%s1616 + $0x218] sm:$0xff]
  %v1659 = vld [vmem:[%s1616 + $0x228] sm:$0xff]
  %v1660 = vld [vmem:[%s1616 + $0x230] sm:$0xff]
  %v1661 = vld [vmem:[%s1616 + $0x240] sm:$0xff]
  %v1662 = vld [vmem:[%s1616 + $0x248] sm:$0xff]
  %v1663 = vld [vmem:[%s1616 + $0x258] sm:$0xff]
  %v1664 = vld [vmem:[%s1616 + $0x260] sm:$0xff]
  %v1665 = vld [vmem:[%s1616 + $0x270] sm:$0xff]
  %v1666 = vld [vmem:[%s1616 + $0x278] sm:$0xff]
  %v1667 = vld [vmem:[%s1616 + $0x288] sm:$0xff]
  %v1668 = vld [vmem:[%s1616 + $0x290] sm:$0xff]
  %v1669 = vld [vmem:[%s1616 + $0x2a0] sm:$0xff]
  %v1670 = vld [vmem:[%s1616 + $0x2a8] sm:$0xff]
  %v1671 = vld [vmem:[%s1616 + $0x2b8] sm:$0xff]
  %v1672 = vld [vmem:[%s1616 + $0x2c0] sm:$0xff]
  %v1673 = vld [vmem:[%s1616 + $0x2d0] sm:$0xff]
  %v1674 = vld [vmem:[%s1616 + $0x2d8] sm:$0xff]
  %v1675 = vld [vmem:[%s1616 + $0x2e8] sm:$0xff]
  %v1676 = vld [vmem:[%s1616 + $0x2f0] sm:$0xff]
  %v1677 = vld [vmem:[%s1616 + $0x300] sm:$0xff]
  %v1678 = vld [vmem:[%s1616 + $0x308] sm:$0xff]
  %v1679 = vld [vmem:[%s1616 + $0x318] sm:$0xff]
  %v1680 = vld [vmem:[%s1616 + $0x320] sm:$0xff]
  %s1681 = scalar_lea.vmem %s1, 384
  %v1682 = vld [vmem:[%s1681] sm:$0xff]
  %v1683 = vld [vmem:[%s1681 + $0x8] sm:$0xff]
  %v1684 = vld [vmem:[%s1681 + $0x10] sm:$0xff]
  %v1685 = vld [vmem:[%s1681 + $0x18] sm:$0xff]
  %v1686 = vld [vmem:[%s1681 + $0x20] sm:$0xff]
  %v1687 = vld [vmem:[%s1681 + $0x28] sm:$0xff]
  %v1688 = vld [vmem:[%s1681 + $0x30] sm:$0xff]
  %v1689 = vld [vmem:[%s1681 + $0x38] sm:$0xff]
  %v1690 = vld [vmem:[%s1681 + $0x40] sm:$0xff]
  %v1691 = vld [vmem:[%s1681 + $0x48] sm:$0xff]
  %v1692 = vld [vmem:[%s1681 + $0x50] sm:$0xff]
  %v1693 = vld [vmem:[%s1681 + $0x58] sm:$0xff]
  %v1694 = vld [vmem:[%s1681 + $0x60] sm:$0xff]
  %v1695 = vld [vmem:[%s1681 + $0x68] sm:$0xff]
  %v1696 = vld [vmem:[%s1681 + $0x70] sm:$0xff]
  %v1697 = vld [vmem:[%s1681 + $0x78] sm:$0xff]
  %1698 = vmatprep.subr.mxu0 0.0
  %1699 = vmatpush1.msra.mxu0 %v1697
  %1700 = vmatprep.subr.mxu0 0.0
  %1701 = vmatpush1.msra.mxu0 %v1696
  %1702 = vmatprep.subr.mxu0 0.0
  %1703 = vmatpush1.msra.mxu0 %v1695
  %1704 = vmatprep.subr.mxu0 0.0
  %1705 = vmatpush1.msra.mxu0 %v1694
  %1706 = vmatprep.subr.mxu0 0.0
  %1707 = vmatpush1.msra.mxu0 %v1693
  %1708 = vmatprep.subr.mxu0 0.0
  %1709 = vmatpush1.msra.mxu0 %v1692
  %1710 = vmatprep.subr.mxu0 0.0
  %1711 = vmatpush1.msra.mxu0 %v1691
  %1712 = vmatprep.subr.mxu0 0.0
  %1713 = vmatpush1.msra.mxu0 %v1690
  %1714 = vmatprep.subr.mxu0 0.0
  %1715 = vmatpush1.msra.mxu0 %v1689
  %1716 = vmatprep.subr.mxu0 0.0
  %1717 = vmatpush1.msra.mxu0 %v1688
  %1718 = vmatprep.subr.mxu0 0.0
  %1719 = vmatpush1.msra.mxu0 %v1687
  %1720 = vmatprep.subr.mxu0 0.0
  %1721 = vmatpush1.msra.mxu0 %v1686
  %1722 = vmatprep.subr.mxu0 0.0
  %1723 = vmatpush1.msra.mxu0 %v1685
  %1724 = vmatprep.subr.mxu0 0.0
  %1725 = vmatpush1.msra.mxu0 %v1684
  %1726 = vmatprep.subr.mxu0 0.0
  %1727 = vmatpush1.msra.mxu0 %v1683
  %1728 = vmatprep.subr.mxu0 0.0
  %1729 = vmatpush1.msra.mxu0 %v1682
  %1730 = vmatprep.subr.mxu0 0.0
  %1731 = vmatpush2.msra.mxu0 0.0
  %1732 = vmatprep.subr.mxu0 0.0
  %1733 = vmatpush2.msra.mxu0 0.0
  %1734 = vmatprep.subr.mxu0 0.0
  %1735 = vmatpush2.msra.mxu0 0.0
  %1736 = vmatprep.subr.mxu0 0.0
  %1737 = vmatpush2.msra.mxu0 0.0
  %1738 = vmatprep.subr.mxu0 0.0
  %1739 = vmatpush2.msra.mxu0 0.0
  %1740 = vmatprep.subr.mxu0 0.0
  %1741 = vmatpush2.msra.mxu0 0.0
  %1742 = vmatprep.subr.mxu0 0.0
  %1743 = vmatpush2.msra.mxu0 0.0
  %1744 = vmatprep.subr.mxu0 0.0
  %1745 = vmatpush2.msra.mxu0 0.0
  %1746 = vmatprep.subr.mxu0 0.0
  %1747 = vmatpush2.msra.mxu0 0.0
  %1748 = vmatprep.subr.mxu0 0.0
  %1749 = vmatpush2.msra.mxu0 0.0
  %1750 = vmatprep.subr.mxu0 0.0
  %1751 = vmatpush2.msra.mxu0 0.0
  %1752 = vmatprep.subr.mxu0 0.0
  %1753 = vmatpush2.msra.mxu0 0.0
  %1754 = vmatprep.subr.mxu0 0.0
  %1755 = vmatpush2.msra.mxu0 0.0
  %1756 = vmatprep.subr.mxu0 0.0
  %1757 = vmatpush2.msra.mxu0 0.0
  %1758 = vmatprep.subr.mxu0 0.0
  %1759 = vmatpush2.msra.mxu0 0.0
  %1760 = vmatprep.subr.mxu0 0.0
  %1761 = vmatpush2.msra.mxu0 0.0
  %1762 = vmatprep.mubr.f32.mxu0 0.0
  %1763 = vmatmul.mubr.f32.gmra.mxu0 %v1617
  %v1764 = vpop.f32.mrf.mxu0
  %v1765 = vadd.f32 0.0, %v1764
  %v1766 = vpop.f32.mrf.mxu0
  %1767 = vmatprep.mubr.f32.mxu0 0.0
  %1768 = vmatmul.mubr.f32.gmra.mxu0 %v1618
  %v1769 = vpop.f32.mrf.mxu0
  %v1770 = vadd.f32 0.0, %v1769
  %v1771 = vpop.f32.mrf.mxu0
  %1772 = vmatprep.mubr.f32.mxu0 0.0
  %1773 = vmatmul.mubr.f32.gmra.mxu0 %v1619
  %v1774 = vpop.f32.mrf.mxu0
  %v1775 = vadd.f32 0.0, %v1774
  %v1776 = vpop.f32.mrf.mxu0
  %1777 = vmatprep.mubr.f32.mxu0 0.0
  %1778 = vmatmul.mubr.f32.gmra.mxu0 %v1620
  %v1779 = vpop.f32.mrf.mxu0
  %v1780 = vadd.f32 0.0, %v1779
  %v1781 = vpop.f32.mrf.mxu0
  %1782 = vmatprep.mubr.f32.mxu0 0.0
  %1783 = vmatmul.mubr.f32.gmra.mxu0 %v1621
  %v1784 = vpop.f32.mrf.mxu0
  %v1785 = vadd.f32 0.0, %v1784
  %v1786 = vpop.f32.mrf.mxu0
  %1787 = vmatprep.mubr.f32.mxu0 0.0
  %1788 = vmatmul.mubr.f32.gmra.mxu0 %v1622
  %v1789 = vpop.f32.mrf.mxu0
  %v1790 = vadd.f32 0.0, %v1789
  %v1791 = vpop.f32.mrf.mxu0
  %1792 = vmatprep.mubr.f32.mxu0 0.0
  %1793 = vmatmul.mubr.f32.gmra.mxu0 %v1623
  %v1794 = vpop.f32.mrf.mxu0
  %v1795 = vadd.f32 0.0, %v1794
  %v1796 = vpop.f32.mrf.mxu0
  %1797 = vmatprep.mubr.f32.mxu0 0.0
  %1798 = vmatmul.mubr.f32.gmra.mxu0 %v1624
  %v1799 = vpop.f32.mrf.mxu0
  %v1800 = vadd.f32 0.0, %v1799
  %v1801 = vpop.f32.mrf.mxu0
  %1802 = vmatprep.mubr.f32.mxu0 0.0
  %1803 = vmatmul.mubr.f32.gmra.mxu0 %v1625
  %v1804 = vpop.f32.mrf.mxu0
  %v1805 = vadd.f32 0.0, %v1804
  %v1806 = vpop.f32.mrf.mxu0
  %1807 = vmatprep.mubr.f32.mxu0 0.0
  %1808 = vmatmul.mubr.f32.gmra.mxu0 %v1626
  %v1809 = vpop.f32.mrf.mxu0
  %v1810 = vadd.f32 0.0, %v1809
  %v1811 = vpop.f32.mrf.mxu0
  %1812 = vmatprep.mubr.f32.mxu0 0.0
  %1813 = vmatmul.mubr.f32.gmra.mxu0 %v1627
  %v1814 = vpop.f32.mrf.mxu0
  %v1815 = vadd.f32 0.0, %v1814
  %v1816 = vpop.f32.mrf.mxu0
  %1817 = vmatprep.mubr.f32.mxu0 0.0
  %1818 = vmatmul.mubr.f32.gmra.mxu0 %v1628
  %v1819 = vpop.f32.mrf.mxu0
  %v1820 = vadd.f32 0.0, %v1819
  %v1821 = vpop.f32.mrf.mxu0
  %1822 = vmatprep.mubr.f32.mxu0 0.0
  %1823 = vmatmul.mubr.f32.gmra.mxu0 %v1629
  %v1824 = vpop.f32.mrf.mxu0
  %v1825 = vadd.f32 0.0, %v1824
  %v1826 = vpop.f32.mrf.mxu0
  %1827 = vmatprep.mubr.f32.mxu0 0.0
  %1828 = vmatmul.mubr.f32.gmra.mxu0 %v1630
  %v1829 = vpop.f32.mrf.mxu0
  %v1830 = vadd.f32 0.0, %v1829
  %v1831 = vpop.f32.mrf.mxu0
  %1832 = vmatprep.mubr.f32.mxu0 0.0
  %1833 = vmatmul.mubr.f32.gmra.mxu0 %v1631
  %v1834 = vpop.f32.mrf.mxu0
  %v1835 = vadd.f32 0.0, %v1834
  %v1836 = vpop.f32.mrf.mxu0
  %1837 = vmatprep.mubr.f32.mxu0 0.0
  %1838 = vmatmul.mubr.f32.gmra.mxu0 %v1632
  %v1839 = vpop.f32.mrf.mxu0
  %v1840 = vadd.f32 0.0, %v1839
  %v1841 = vpop.f32.mrf.mxu0
  %1842 = vmatprep.mubr.f32.mxu0 0.0
  %1843 = vmatmul.mubr.f32.gmra.mxu0 %v1633
  %v1844 = vpop.f32.mrf.mxu0
  %v1845 = vadd.f32 0.0, %v1844
  %v1846 = vpop.f32.mrf.mxu0
  %1847 = vmatprep.mubr.f32.mxu0 0.0
  %1848 = vmatmul.mubr.f32.gmra.mxu0 %v1634
  %v1849 = vpop.f32.mrf.mxu0
  %v1850 = vadd.f32 0.0, %v1849
  %v1851 = vpop.f32.mrf.mxu0
  %1852 = vmatprep.mubr.f32.mxu0 0.0
  %1853 = vmatmul.mubr.f32.gmra.mxu0 %v1635
  %v1854 = vpop.f32.mrf.mxu0
  %v1855 = vadd.f32 0.0, %v1854
  %v1856 = vpop.f32.mrf.mxu0
  %1857 = vmatprep.mubr.f32.mxu0 0.0
  %1858 = vmatmul.mubr.f32.gmra.mxu0 %v1636
  %v1859 = vpop.f32.mrf.mxu0
  %v1860 = vadd.f32 0.0, %v1859
  %v1861 = vpop.f32.mrf.mxu0
  %1862 = vmatprep.mubr.f32.mxu0 0.0
  %1863 = vmatmul.mubr.f32.gmra.mxu0 %v1637
  %v1864 = vpop.f32.mrf.mxu0
  %v1865 = vadd.f32 0.0, %v1864
  %v1866 = vpop.f32.mrf.mxu0
  %1867 = vmatprep.mubr.f32.mxu0 0.0
  %1868 = vmatmul.mubr.f32.gmra.mxu0 %v1638
  %v1869 = vpop.f32.mrf.mxu0
  %v1870 = vadd.f32 0.0, %v1869
  %v1871 = vpop.f32.mrf.mxu0
  %1872 = vmatprep.mubr.f32.mxu0 0.0
  %1873 = vmatmul.mubr.f32.gmra.mxu0 %v1639
  %v1874 = vpop.f32.mrf.mxu0
  %v1875 = vadd.f32 0.0, %v1874
  %v1876 = vpop.f32.mrf.mxu0
  %1877 = vmatprep.mubr.f32.mxu0 0.0
  %1878 = vmatmul.mubr.f32.gmra.mxu0 %v1640
  %v1879 = vpop.f32.mrf.mxu0
  %v1880 = vadd.f32 0.0, %v1879
  %v1881 = vpop.f32.mrf.mxu0
  %1882 = vmatprep.mubr.f32.mxu0 0.0
  %1883 = vmatmul.mubr.f32.gmra.mxu0 %v1641
  %v1884 = vpop.f32.mrf.mxu0
  %v1885 = vadd.f32 0.0, %v1884
  %v1886 = vpop.f32.mrf.mxu0
  %1887 = vmatprep.mubr.f32.mxu0 0.0
  %1888 = vmatmul.mubr.f32.gmra.mxu0 %v1642
  %v1889 = vpop.f32.mrf.mxu0
  %v1890 = vadd.f32 0.0, %v1889
  %v1891 = vpop.f32.mrf.mxu0
  %1892 = vmatprep.mubr.f32.mxu0 0.0
  %1893 = vmatmul.mubr.f32.gmra.mxu0 %v1643
  %v1894 = vpop.f32.mrf.mxu0
  %v1895 = vadd.f32 0.0, %v1894
  %v1896 = vpop.f32.mrf.mxu0
  %1897 = vmatprep.mubr.f32.mxu0 0.0
  %1898 = vmatmul.mubr.f32.gmra.mxu0 %v1644
  %v1899 = vpop.f32.mrf.mxu0
  %v1900 = vadd.f32 0.0, %v1899
  %v1901 = vpop.f32.mrf.mxu0
  %1902 = vmatprep.mubr.f32.mxu0 0.0
  %1903 = vmatmul.mubr.f32.gmra.mxu0 %v1645
  %v1904 = vpop.f32.mrf.mxu0
  %v1905 = vadd.f32 0.0, %v1904
  %v1906 = vpop.f32.mrf.mxu0
  %1907 = vmatprep.mubr.f32.mxu0 0.0
  %1908 = vmatmul.mubr.f32.gmra.mxu0 %v1646
  %v1909 = vpop.f32.mrf.mxu0
  %v1910 = vadd.f32 0.0, %v1909
  %v1911 = vpop.f32.mrf.mxu0
  %1912 = vmatprep.mubr.f32.mxu0 0.0
  %1913 = vmatmul.mubr.f32.gmra.mxu0 %v1647
  %v1914 = vpop.f32.mrf.mxu0
  %v1915 = vadd.f32 0.0, %v1914
  %v1916 = vpop.f32.mrf.mxu0
  %1917 = vmatprep.mubr.f32.mxu0 0.0
  %1918 = vmatmul.mubr.f32.gmra.mxu0 %v1648
  %v1919 = vpop.f32.mrf.mxu0
  %v1920 = vadd.f32 0.0, %v1919
  %v1921 = vpop.f32.mrf.mxu0
  %1922 = vmatprep.mubr.f32.mxu0 0.0
  %1923 = vmatmul.mubr.f32.gmra.mxu0 %v1649
  %v1924 = vpop.f32.mrf.mxu0
  %v1925 = vadd.f32 0.0, %v1924
  %v1926 = vpop.f32.mrf.mxu0
  %1927 = vmatprep.mubr.f32.mxu0 0.0
  %1928 = vmatmul.mubr.f32.gmra.mxu0 %v1650
  %v1929 = vpop.f32.mrf.mxu0
  %v1930 = vadd.f32 0.0, %v1929
  %v1931 = vpop.f32.mrf.mxu0
  %1932 = vmatprep.mubr.f32.mxu0 0.0
  %1933 = vmatmul.mubr.f32.gmra.mxu0 %v1651
  %v1934 = vpop.f32.mrf.mxu0
  %v1935 = vadd.f32 0.0, %v1934
  %v1936 = vpop.f32.mrf.mxu0
  %1937 = vmatprep.mubr.f32.mxu0 0.0
  %1938 = vmatmul.mubr.f32.gmra.mxu0 %v1652
  %v1939 = vpop.f32.mrf.mxu0
  %v1940 = vadd.f32 0.0, %v1939
  %v1941 = vpop.f32.mrf.mxu0
  %1942 = vmatprep.mubr.f32.mxu0 0.0
  %1943 = vmatmul.mubr.f32.gmra.mxu0 %v1653
  %v1944 = vpop.f32.mrf.mxu0
  %v1945 = vadd.f32 0.0, %v1944
  %v1946 = vpop.f32.mrf.mxu0
  %1947 = vmatprep.mubr.f32.mxu0 0.0
  %1948 = vmatmul.mubr.f32.gmra.mxu0 %v1654
  %v1949 = vpop.f32.mrf.mxu0
  %v1950 = vadd.f32 0.0, %v1949
  %v1951 = vpop.f32.mrf.mxu0
  %1952 = vmatprep.mubr.f32.mxu0 0.0
  %1953 = vmatmul.mubr.f32.gmra.mxu0 %v1655
  %v1954 = vpop.f32.mrf.mxu0
  %v1955 = vadd.f32 0.0, %v1954
  %v1956 = vpop.f32.mrf.mxu0
  %1957 = vmatprep.mubr.f32.mxu0 0.0
  %1958 = vmatmul.mubr.f32.gmra.mxu0 %v1656
  %v1959 = vpop.f32.mrf.mxu0
  %v1960 = vadd.f32 0.0, %v1959
  %v1961 = vpop.f32.mrf.mxu0
  %1962 = vmatprep.mubr.f32.mxu0 0.0
  %1963 = vmatmul.mubr.f32.gmra.mxu0 %v1657
  %v1964 = vpop.f32.mrf.mxu0
  %v1965 = vadd.f32 0.0, %v1964
  %v1966 = vpop.f32.mrf.mxu0
  %1967 = vmatprep.mubr.f32.mxu0 0.0
  %1968 = vmatmul.mubr.f32.gmra.mxu0 %v1658
  %v1969 = vpop.f32.mrf.mxu0
  %v1970 = vadd.f32 0.0, %v1969
  %v1971 = vpop.f32.mrf.mxu0
  %1972 = vmatprep.mubr.f32.mxu0 0.0
  %1973 = vmatmul.mubr.f32.gmra.mxu0 %v1659
  %v1974 = vpop.f32.mrf.mxu0
  %v1975 = vadd.f32 0.0, %v1974
  %v1976 = vpop.f32.mrf.mxu0
  %1977 = vmatprep.mubr.f32.mxu0 0.0
  %1978 = vmatmul.mubr.f32.gmra.mxu0 %v1660
  %v1979 = vpop.f32.mrf.mxu0
  %v1980 = vadd.f32 0.0, %v1979
  %v1981 = vpop.f32.mrf.mxu0
  %1982 = vmatprep.mubr.f32.mxu0 0.0
  %1983 = vmatmul.mubr.f32.gmra.mxu0 %v1661
  %v1984 = vpop.f32.mrf.mxu0
  %v1985 = vadd.f32 0.0, %v1984
  %v1986 = vpop.f32.mrf.mxu0
  %1987 = vmatprep.mubr.f32.mxu0 0.0
  %1988 = vmatmul.mubr.f32.gmra.mxu0 %v1662
  %v1989 = vpop.f32.mrf.mxu0
  %v1990 = vadd.f32 0.0, %v1989
  %v1991 = vpop.f32.mrf.mxu0
  %1992 = vmatprep.mubr.f32.mxu0 0.0
  %1993 = vmatmul.mubr.f32.gmra.mxu0 %v1663
  %v1994 = vpop.f32.mrf.mxu0
  %v1995 = vadd.f32 0.0, %v1994
  %v1996 = vpop.f32.mrf.mxu0
  %1997 = vmatprep.mubr.f32.mxu0 0.0
  %1998 = vmatmul.mubr.f32.gmra.mxu0 %v1664
  %v1999 = vpop.f32.mrf.mxu0
  %v2000 = vadd.f32 0.0, %v1999
  %v2001 = vpop.f32.mrf.mxu0
  %2002 = vmatprep.mubr.f32.mxu0 0.0
  %2003 = vmatmul.mubr.f32.gmra.mxu0 %v1665
  %v2004 = vpop.f32.mrf.mxu0
  %v2005 = vadd.f32 0.0, %v2004
  %v2006 = vpop.f32.mrf.mxu0
  %2007 = vmatprep.mubr.f32.mxu0 0.0
  %2008 = vmatmul.mubr.f32.gmra.mxu0 %v1666
  %v2009 = vpop.f32.mrf.mxu0
  %v2010 = vadd.f32 0.0, %v2009
  %v2011 = vpop.f32.mrf.mxu0
  %2012 = vmatprep.mubr.f32.mxu0 0.0
  %2013 = vmatmul.mubr.f32.gmra.mxu0 %v1667
  %v2014 = vpop.f32.mrf.mxu0
  %v2015 = vadd.f32 0.0, %v2014
  %v2016 = vpop.f32.mrf.mxu0
  %2017 = vmatprep.mubr.f32.mxu0 0.0
  %2018 = vmatmul.mubr.f32.gmra.mxu0 %v1668
  %v2019 = vpop.f32.mrf.mxu0
  %v2020 = vadd.f32 0.0, %v2019
  %v2021 = vpop.f32.mrf.mxu0
  %2022 = vmatprep.mubr.f32.mxu0 0.0
  %2023 = vmatmul.mubr.f32.gmra.mxu0 %v1669
  %v2024 = vpop.f32.mrf.mxu0
  %v2025 = vadd.f32 0.0, %v2024
  %v2026 = vpop.f32.mrf.mxu0
  %2027 = vmatprep.mubr.f32.mxu0 0.0
  %2028 = vmatmul.mubr.f32.gmra.mxu0 %v1670
  %v2029 = vpop.f32.mrf.mxu0
  %v2030 = vadd.f32 0.0, %v2029
  %v2031 = vpop.f32.mrf.mxu0
  %2032 = vmatprep.mubr.f32.mxu0 0.0
  %2033 = vmatmul.mubr.f32.gmra.mxu0 %v1671
  %v2034 = vpop.f32.mrf.mxu0
  %v2035 = vadd.f32 0.0, %v2034
  %v2036 = vpop.f32.mrf.mxu0
  %2037 = vmatprep.mubr.f32.mxu0 0.0
  %2038 = vmatmul.mubr.f32.gmra.mxu0 %v1672
  %v2039 = vpop.f32.mrf.mxu0
  %v2040 = vadd.f32 0.0, %v2039
  %v2041 = vpop.f32.mrf.mxu0
  %2042 = vmatprep.mubr.f32.mxu0 0.0
  %2043 = vmatmul.mubr.f32.gmra.mxu0 %v1673
  %v2044 = vpop.f32.mrf.mxu0
  %v2045 = vadd.f32 0.0, %v2044
  %v2046 = vpop.f32.mrf.mxu0
  %2047 = vmatprep.mubr.f32.mxu0 0.0
  %2048 = vmatmul.mubr.f32.gmra.mxu0 %v1674
  %v2049 = vpop.f32.mrf.mxu0
  %v2050 = vadd.f32 0.0, %v2049
  %v2051 = vpop.f32.mrf.mxu0
  %2052 = vmatprep.mubr.f32.mxu0 0.0
  %2053 = vmatmul.mubr.f32.gmra.mxu0 %v1675
  %v2054 = vpop.f32.mrf.mxu0
  %v2055 = vadd.f32 0.0, %v2054
  %v2056 = vpop.f32.mrf.mxu0
  %2057 = vmatprep.mubr.f32.mxu0 0.0
  %2058 = vmatmul.mubr.f32.gmra.mxu0 %v1676
  %v2059 = vpop.f32.mrf.mxu0
  %v2060 = vadd.f32 0.0, %v2059
  %v2061 = vpop.f32.mrf.mxu0
  %2062 = vmatprep.mubr.f32.mxu0 0.0
  %2063 = vmatmul.mubr.f32.gmra.mxu0 %v1677
  %v2064 = vpop.f32.mrf.mxu0
  %v2065 = vadd.f32 0.0, %v2064
  %v2066 = vpop.f32.mrf.mxu0
  %2067 = vmatprep.mubr.f32.mxu0 0.0
  %2068 = vmatmul.mubr.f32.gmra.mxu0 %v1678
  %v2069 = vpop.f32.mrf.mxu0
  %v2070 = vadd.f32 0.0, %v2069
  %v2071 = vpop.f32.mrf.mxu0
  %2072 = vmatprep.mubr.f32.mxu0 0.0
  %2073 = vmatmul.mubr.f32.gmra.mxu0 %v1679
  %v2074 = vpop.f32.mrf.mxu0
  %v2075 = vadd.f32 0.0, %v2074
  %v2076 = vpop.f32.mrf.mxu0
  %2077 = vmatprep.mubr.f32.mxu0 0.0
  %2078 = vmatmul.mubr.f32.gmra.mxu0 %v1680
  %v2079 = vpop.f32.mrf.mxu0
  %v2080 = vadd.f32 0.0, %v2079
  %v2081 = vpop.f32.mrf.mxu0
  %2082 = vdwg.mxu0
  %v2083 = vadd.f32 %v1552, %v1765
  %v2084 = vadd.f32 %v1553, %v1770
  %v2085 = vadd.f32 %v1554, %v1775
  %v2086 = vadd.f32 %v1555, %v1780
  %v2087 = vadd.f32 %v1556, %v1785
  %v2088 = vadd.f32 %v1557, %v1790
  %v2089 = vadd.f32 %v1558, %v1795
  %v2090 = vadd.f32 %v1559, %v1800
  %v2091 = vadd.f32 %v1560, %v1805
  %v2092 = vadd.f32 %v1561, %v1810
  %v2093 = vadd.f32 %v1562, %v1815
  %v2094 = vadd.f32 %v1563, %v1820
  %v2095 = vadd.f32 %v1564, %v1825
  %v2096 = vadd.f32 %v1565, %v1830
  %v2097 = vadd.f32 %v1566, %v1835
  %v2098 = vadd.f32 %v1567, %v1840
  %v2099 = vadd.f32 %v1568, %v1845
  %v2100 = vadd.f32 %v1569, %v1850
  %v2101 = vadd.f32 %v1570, %v1855
  %v2102 = vadd.f32 %v1571, %v1860
  %v2103 = vadd.f32 %v1572, %v1865
  %v2104 = vadd.f32 %v1573, %v1870
  %v2105 = vadd.f32 %v1574, %v1875
  %v2106 = vadd.f32 %v1575, %v1880
  %v2107 = vadd.f32 %v1576, %v1885
  %v2108 = vadd.f32 %v1577, %v1890
  %v2109 = vadd.f32 %v1578, %v1895
  %v2110 = vadd.f32 %v1579, %v1900
  %v2111 = vadd.f32 %v1580, %v1905
  %v2112 = vadd.f32 %v1581, %v1910
  %v2113 = vadd.f32 %v1582, %v1915
  %v2114 = vadd.f32 %v1583, %v1920
  %v2115 = vadd.f32 %v1584, %v1925
  %v2116 = vadd.f32 %v1585, %v1930
  %v2117 = vadd.f32 %v1586, %v1935
  %v2118 = vadd.f32 %v1587, %v1940
  %v2119 = vadd.f32 %v1588, %v1945
  %v2120 = vadd.f32 %v1589, %v1950
  %v2121 = vadd.f32 %v1590, %v1955
  %v2122 = vadd.f32 %v1591, %v1960
  %v2123 = vadd.f32 %v1592, %v1965
  %v2124 = vadd.f32 %v1593, %v1970
  %v2125 = vadd.f32 %v1594, %v1975
  %v2126 = vadd.f32 %v1595, %v1980
  %v2127 = vadd.f32 %v1596, %v1985
  %v2128 = vadd.f32 %v1597, %v1990
  %v2129 = vadd.f32 %v1598, %v1995
  %v2130 = vadd.f32 %v1599, %v2000
  %v2131 = vadd.f32 %v1600, %v2005
  %v2132 = vadd.f32 %v1601, %v2010
  %v2133 = vadd.f32 %v1602, %v2015
  %v2134 = vadd.f32 %v1603, %v2020
  %v2135 = vadd.f32 %v1604, %v2025
  %v2136 = vadd.f32 %v1605, %v2030
  %v2137 = vadd.f32 %v1606, %v2035
  %v2138 = vadd.f32 %v1607, %v2040
  %v2139 = vadd.f32 %v1608, %v2045
  %v2140 = vadd.f32 %v1609, %v2050
  %v2141 = vadd.f32 %v1610, %v2055
  %v2142 = vadd.f32 %v1611, %v2060
  %v2143 = vadd.f32 %v1612, %v2065
  %v2144 = vadd.f32 %v1613, %v2070
  %v2145 = vadd.f32 %v1614, %v2075
  %v2146 = vadd.f32 %v1615, %v2080
  %v2147 = vld [vmem:[%s1616 + $0x1] sm:$0xff]
  %v2148 = vld [vmem:[%s1616 + $0x9] sm:$0xff]
  %v2149 = vld [vmem:[%s1616 + $0x19] sm:$0xff]
  %v2150 = vld [vmem:[%s1616 + $0x21] sm:$0xff]
  %v2151 = vld [vmem:[%s1616 + $0x31] sm:$0xff]
  %v2152 = vld [vmem:[%s1616 + $0x39] sm:$0xff]
  %v2153 = vld [vmem:[%s1616 + $0x49] sm:$0xff]
  %v2154 = vld [vmem:[%s1616 + $0x51] sm:$0xff]
  %v2155 = vld [vmem:[%s1616 + $0x61] sm:$0xff]
  %v2156 = vld [vmem:[%s1616 + $0x69] sm:$0xff]
  %v2157 = vld [vmem:[%s1616 + $0x79] sm:$0xff]
  %v2158 = vld [vmem:[%s1616 + $0x81] sm:$0xff]
  %v2159 = vld [vmem:[%s1616 + $0x91] sm:$0xff]
  %v2160 = vld [vmem:[%s1616 + $0x99] sm:$0xff]
  %v2161 = vld [vmem:[%s1616 + $0xa9] sm:$0xff]
  %v2162 = vld [vmem:[%s1616 + $0xb1] sm:$0xff]
  %v2163 = vld [vmem:[%s1616 + $0xc1] sm:$0xff]
  %v2164 = vld [vmem:[%s1616 + $0xc9] sm:$0xff]
  %v2165 = vld [vmem:[%s1616 + $0xd9] sm:$0xff]
  %v2166 = vld [vmem:[%s1616 + $0xe1] sm:$0xff]
  %v2167 = vld [vmem:[%s1616 + $0xf1] sm:$0xff]
  %v2168 = vld [vmem:[%s1616 + $0xf9] sm:$0xff]
  %v2169 = vld [vmem:[%s1616 + $0x109] sm:$0xff]
  %v2170 = vld [vmem:[%s1616 + $0x111] sm:$0xff]
  %v2171 = vld [vmem:[%s1616 + $0x121] sm:$0xff]
  %v2172 = vld [vmem:[%s1616 + $0x129] sm:$0xff]
  %v2173 = vld [vmem:[%s1616 + $0x139] sm:$0xff]
  %v2174 = vld [vmem:[%s1616 + $0x141] sm:$0xff]
  %v2175 = vld [vmem:[%s1616 + $0x151] sm:$0xff]
  %v2176 = vld [vmem:[%s1616 + $0x159] sm:$0xff]
  %v2177 = vld [vmem:[%s1616 + $0x169] sm:$0xff]
  %v2178 = vld [vmem:[%s1616 + $0x171] sm:$0xff]
  %v2179 = vld [vmem:[%s1616 + $0x1b1] sm:$0xff]
  %v2180 = vld [vmem:[%s1616 + $0x1b9] sm:$0xff]
  %v2181 = vld [vmem:[%s1616 + $0x1c9] sm:$0xff]
  %v2182 = vld [vmem:[%s1616 + $0x1d1] sm:$0xff]
  %v2183 = vld [vmem:[%s1616 + $0x1e1] sm:$0xff]
  %v2184 = vld [vmem:[%s1616 + $0x1e9] sm:$0xff]
  %v2185 = vld [vmem:[%s1616 + $0x1f9] sm:$0xff]
  %v2186 = vld [vmem:[%s1616 + $0x201] sm:$0xff]
  %v2187 = vld [vmem:[%s1616 + $0x211] sm:$0xff]
  %v2188 = vld [vmem:[%s1616 + $0x219] sm:$0xff]
  %v2189 = vld [vmem:[%s1616 + $0x229] sm:$0xff]
  %v2190 = vld [vmem:[%s1616 + $0x231] sm:$0xff]
  %v2191 = vld [vmem:[%s1616 + $0x241] sm:$0xff]
  %v2192 = vld [vmem:[%s1616 + $0x249] sm:$0xff]
  %v2193 = vld [vmem:[%s1616 + $0x259] sm:$0xff]
  %v2194 = vld [vmem:[%s1616 + $0x261] sm:$0xff]
  %v2195 = vld [vmem:[%s1616 + $0x271] sm:$0xff]
  %v2196 = vld [vmem:[%s1616 + $0x279] sm:$0xff]
  %v2197 = vld [vmem:[%s1616 + $0x289] sm:$0xff]
  %v2198 = vld [vmem:[%s1616 + $0x291] sm:$0xff]
  %v2199 = vld [vmem:[%s1616 + $0x2a1] sm:$0xff]
  %v2200 = vld [vmem:[%s1616 + $0x2a9] sm:$0xff]
  %v2201 = vld [vmem:[%s1616 + $0x2b9] sm:$0xff]
  %v2202 = vld [vmem:[%s1616 + $0x2c1] sm:$0xff]
  %v2203 = vld [vmem:[%s1616 + $0x2d1] sm:$0xff]
  %v2204 = vld [vmem:[%s1616 + $0x2d9] sm:$0xff]
  %v2205 = vld [vmem:[%s1616 + $0x2e9] sm:$0xff]
  %v2206 = vld [vmem:[%s1616 + $0x2f1] sm:$0xff]
  %v2207 = vld [vmem:[%s1616 + $0x301] sm:$0xff]
  %v2208 = vld [vmem:[%s1616 + $0x309] sm:$0xff]
  %v2209 = vld [vmem:[%s1616 + $0x319] sm:$0xff]
  %v2210 = vld [vmem:[%s1616 + $0x321] sm:$0xff]
  %s2211 = scalar_lea.vmem %s1, 512
  %v2212 = vld [vmem:[%s2211] sm:$0xff]
  %v2213 = vld [vmem:[%s2211 + $0x8] sm:$0xff]
  %v2214 = vld [vmem:[%s2211 + $0x10] sm:$0xff]
  %v2215 = vld [vmem:[%s2211 + $0x18] sm:$0xff]
  %v2216 = vld [vmem:[%s2211 + $0x20] sm:$0xff]
  %v2217 = vld [vmem:[%s2211 + $0x28] sm:$0xff]
  %v2218 = vld [vmem:[%s2211 + $0x30] sm:$0xff]
  %v2219 = vld [vmem:[%s2211 + $0x38] sm:$0xff]
  %v2220 = vld [vmem:[%s2211 + $0x40] sm:$0xff]
  %v2221 = vld [vmem:[%s2211 + $0x48] sm:$0xff]
  %v2222 = vld [vmem:[%s2211 + $0x50] sm:$0xff]
  %v2223 = vld [vmem:[%s2211 + $0x58] sm:$0xff]
  %v2224 = vld [vmem:[%s2211 + $0x60] sm:$0xff]
  %v2225 = vld [vmem:[%s2211 + $0x68] sm:$0xff]
  %v2226 = vld [vmem:[%s2211 + $0x70] sm:$0xff]
  %v2227 = vld [vmem:[%s2211 + $0x78] sm:$0xff]
  %2228 = vmatprep.subr.mxu0 0.0
  %2229 = vmatpush1.msra.mxu0 %v2227
  %2230 = vmatprep.subr.mxu0 0.0
  %2231 = vmatpush1.msra.mxu0 %v2226
  %2232 = vmatprep.subr.mxu0 0.0
  %2233 = vmatpush1.msra.mxu0 %v2225
  %2234 = vmatprep.subr.mxu0 0.0
  %2235 = vmatpush1.msra.mxu0 %v2224
  %2236 = vmatprep.subr.mxu0 0.0
  %2237 = vmatpush1.msra.mxu0 %v2223
  %2238 = vmatprep.subr.mxu0 0.0
  %2239 = vmatpush1.msra.mxu0 %v2222
  %2240 = vmatprep.subr.mxu0 0.0
  %2241 = vmatpush1.msra.mxu0 %v2221
  %2242 = vmatprep.subr.mxu0 0.0
  %2243 = vmatpush1.msra.mxu0 %v2220
  %2244 = vmatprep.subr.mxu0 0.0
  %2245 = vmatpush1.msra.mxu0 %v2219
  %2246 = vmatprep.subr.mxu0 0.0
  %2247 = vmatpush1.msra.mxu0 %v2218
  %2248 = vmatprep.subr.mxu0 0.0
  %2249 = vmatpush1.msra.mxu0 %v2217
  %2250 = vmatprep.subr.mxu0 0.0
  %2251 = vmatpush1.msra.mxu0 %v2216
  %2252 = vmatprep.subr.mxu0 0.0
  %2253 = vmatpush1.msra.mxu0 %v2215
  %2254 = vmatprep.subr.mxu0 0.0
  %2255 = vmatpush1.msra.mxu0 %v2214
  %2256 = vmatprep.subr.mxu0 0.0
  %2257 = vmatpush1.msra.mxu0 %v2213
  %2258 = vmatprep.subr.mxu0 0.0
  %2259 = vmatpush1.msra.mxu0 %v2212
  %2260 = vmatprep.subr.mxu0 0.0
  %2261 = vmatpush2.msra.mxu0 0.0
  %2262 = vmatprep.subr.mxu0 0.0
  %2263 = vmatpush2.msra.mxu0 0.0
  %2264 = vmatprep.subr.mxu0 0.0
  %2265 = vmatpush2.msra.mxu0 0.0
  %2266 = vmatprep.subr.mxu0 0.0
  %2267 = vmatpush2.msra.mxu0 0.0
  %2268 = vmatprep.subr.mxu0 0.0
  %2269 = vmatpush2.msra.mxu0 0.0
  %2270 = vmatprep.subr.mxu0 0.0
  %2271 = vmatpush2.msra.mxu0 0.0
  %2272 = vmatprep.subr.mxu0 0.0
  %2273 = vmatpush2.msra.mxu0 0.0
  %2274 = vmatprep.subr.mxu0 0.0
  %2275 = vmatpush2.msra.mxu0 0.0
  %2276 = vmatprep.subr.mxu0 0.0
  %2277 = vmatpush2.msra.mxu0 0.0
  %2278 = vmatprep.subr.mxu0 0.0
  %2279 = vmatpush2.msra.mxu0 0.0
  %2280 = vmatprep.subr.mxu0 0.0
  %2281 = vmatpush2.msra.mxu0 0.0
  %2282 = vmatprep.subr.mxu0 0.0
  %2283 = vmatpush2.msra.mxu0 0.0
  %2284 = vmatprep.subr.mxu0 0.0
  %2285 = vmatpush2.msra.mxu0 0.0
  %2286 = vmatprep.subr.mxu0 0.0
  %2287 = vmatpush2.msra.mxu0 0.0
  %2288 = vmatprep.subr.mxu0 0.0
  %2289 = vmatpush2.msra.mxu0 0.0
  %2290 = vmatprep.subr.mxu0 0.0
  %2291 = vmatpush2.msra.mxu0 0.0
  %2292 = vmatprep.mubr.f32.mxu0 0.0
  %2293 = vmatmul.mubr.f32.gmra.mxu0 %v2147
  %v2294 = vpop.f32.mrf.mxu0
  %v2295 = vadd.f32 0.0, %v2294
  %v2296 = vpop.f32.mrf.mxu0
  %2297 = vmatprep.mubr.f32.mxu0 0.0
  %2298 = vmatmul.mubr.f32.gmra.mxu0 %v2148
  %v2299 = vpop.f32.mrf.mxu0
  %v2300 = vadd.f32 0.0, %v2299
  %v2301 = vpop.f32.mrf.mxu0
  %2302 = vmatprep.mubr.f32.mxu0 0.0
  %2303 = vmatmul.mubr.f32.gmra.mxu0 %v2149
  %v2304 = vpop.f32.mrf.mxu0
  %v2305 = vadd.f32 0.0, %v2304
  %v2306 = vpop.f32.mrf.mxu0
  %2307 = vmatprep.mubr.f32.mxu0 0.0
  %2308 = vmatmul.mubr.f32.gmra.mxu0 %v2150
  %v2309 = vpop.f32.mrf.mxu0
  %v2310 = vadd.f32 0.0, %v2309
  %v2311 = vpop.f32.mrf.mxu0
  %2312 = vmatprep.mubr.f32.mxu0 0.0
  %2313 = vmatmul.mubr.f32.gmra.mxu0 %v2151
  %v2314 = vpop.f32.mrf.mxu0
  %v2315 = vadd.f32 0.0, %v2314
  %v2316 = vpop.f32.mrf.mxu0
  %2317 = vmatprep.mubr.f32.mxu0 0.0
  %2318 = vmatmul.mubr.f32.gmra.mxu0 %v2152
  %v2319 = vpop.f32.mrf.mxu0
  %v2320 = vadd.f32 0.0, %v2319
  %v2321 = vpop.f32.mrf.mxu0
  %2322 = vmatprep.mubr.f32.mxu0 0.0
  %2323 = vmatmul.mubr.f32.gmra.mxu0 %v2153
  %v2324 = vpop.f32.mrf.mxu0
  %v2325 = vadd.f32 0.0, %v2324
  %v2326 = vpop.f32.mrf.mxu0
  %2327 = vmatprep.mubr.f32.mxu0 0.0
  %2328 = vmatmul.mubr.f32.gmra.mxu0 %v2154
  %v2329 = vpop.f32.mrf.mxu0
  %v2330 = vadd.f32 0.0, %v2329
  %v2331 = vpop.f32.mrf.mxu0
  %2332 = vmatprep.mubr.f32.mxu0 0.0
  %2333 = vmatmul.mubr.f32.gmra.mxu0 %v2155
  %v2334 = vpop.f32.mrf.mxu0
  %v2335 = vadd.f32 0.0, %v2334
  %v2336 = vpop.f32.mrf.mxu0
  %2337 = vmatprep.mubr.f32.mxu0 0.0
  %2338 = vmatmul.mubr.f32.gmra.mxu0 %v2156
  %v2339 = vpop.f32.mrf.mxu0
  %v2340 = vadd.f32 0.0, %v2339
  %v2341 = vpop.f32.mrf.mxu0
  %2342 = vmatprep.mubr.f32.mxu0 0.0
  %2343 = vmatmul.mubr.f32.gmra.mxu0 %v2157
  %v2344 = vpop.f32.mrf.mxu0
  %v2345 = vadd.f32 0.0, %v2344
  %v2346 = vpop.f32.mrf.mxu0
  %2347 = vmatprep.mubr.f32.mxu0 0.0
  %2348 = vmatmul.mubr.f32.gmra.mxu0 %v2158
  %v2349 = vpop.f32.mrf.mxu0
  %v2350 = vadd.f32 0.0, %v2349
  %v2351 = vpop.f32.mrf.mxu0
  %2352 = vmatprep.mubr.f32.mxu0 0.0
  %2353 = vmatmul.mubr.f32.gmra.mxu0 %v2159
  %v2354 = vpop.f32.mrf.mxu0
  %v2355 = vadd.f32 0.0, %v2354
  %v2356 = vpop.f32.mrf.mxu0
  %2357 = vmatprep.mubr.f32.mxu0 0.0
  %2358 = vmatmul.mubr.f32.gmra.mxu0 %v2160
  %v2359 = vpop.f32.mrf.mxu0
  %v2360 = vadd.f32 0.0, %v2359
  %v2361 = vpop.f32.mrf.mxu0
  %2362 = vmatprep.mubr.f32.mxu0 0.0
  %2363 = vmatmul.mubr.f32.gmra.mxu0 %v2161
  %v2364 = vpop.f32.mrf.mxu0
  %v2365 = vadd.f32 0.0, %v2364
  %v2366 = vpop.f32.mrf.mxu0
  %2367 = vmatprep.mubr.f32.mxu0 0.0
  %2368 = vmatmul.mubr.f32.gmra.mxu0 %v2162
  %v2369 = vpop.f32.mrf.mxu0
  %v2370 = vadd.f32 0.0, %v2369
  %v2371 = vpop.f32.mrf.mxu0
  %2372 = vmatprep.mubr.f32.mxu0 0.0
  %2373 = vmatmul.mubr.f32.gmra.mxu0 %v2163
  %v2374 = vpop.f32.mrf.mxu0
  %v2375 = vadd.f32 0.0, %v2374
  %v2376 = vpop.f32.mrf.mxu0
  %2377 = vmatprep.mubr.f32.mxu0 0.0
  %2378 = vmatmul.mubr.f32.gmra.mxu0 %v2164
  %v2379 = vpop.f32.mrf.mxu0
  %v2380 = vadd.f32 0.0, %v2379
  %v2381 = vpop.f32.mrf.mxu0
  %2382 = vmatprep.mubr.f32.mxu0 0.0
  %2383 = vmatmul.mubr.f32.gmra.mxu0 %v2165
  %v2384 = vpop.f32.mrf.mxu0
  %v2385 = vadd.f32 0.0, %v2384
  %v2386 = vpop.f32.mrf.mxu0
  %2387 = vmatprep.mubr.f32.mxu0 0.0
  %2388 = vmatmul.mubr.f32.gmra.mxu0 %v2166
  %v2389 = vpop.f32.mrf.mxu0
  %v2390 = vadd.f32 0.0, %v2389
  %v2391 = vpop.f32.mrf.mxu0
  %2392 = vmatprep.mubr.f32.mxu0 0.0
  %2393 = vmatmul.mubr.f32.gmra.mxu0 %v2167
  %v2394 = vpop.f32.mrf.mxu0
  %v2395 = vadd.f32 0.0, %v2394
  %v2396 = vpop.f32.mrf.mxu0
  %2397 = vmatprep.mubr.f32.mxu0 0.0
  %2398 = vmatmul.mubr.f32.gmra.mxu0 %v2168
  %v2399 = vpop.f32.mrf.mxu0
  %v2400 = vadd.f32 0.0, %v2399
  %v2401 = vpop.f32.mrf.mxu0
  %2402 = vmatprep.mubr.f32.mxu0 0.0
  %2403 = vmatmul.mubr.f32.gmra.mxu0 %v2169
  %v2404 = vpop.f32.mrf.mxu0
  %v2405 = vadd.f32 0.0, %v2404
  %v2406 = vpop.f32.mrf.mxu0
  %2407 = vmatprep.mubr.f32.mxu0 0.0
  %2408 = vmatmul.mubr.f32.gmra.mxu0 %v2170
  %v2409 = vpop.f32.mrf.mxu0
  %v2410 = vadd.f32 0.0, %v2409
  %v2411 = vpop.f32.mrf.mxu0
  %2412 = vmatprep.mubr.f32.mxu0 0.0
  %2413 = vmatmul.mubr.f32.gmra.mxu0 %v2171
  %v2414 = vpop.f32.mrf.mxu0
  %v2415 = vadd.f32 0.0, %v2414
  %v2416 = vpop.f32.mrf.mxu0
  %2417 = vmatprep.mubr.f32.mxu0 0.0
  %2418 = vmatmul.mubr.f32.gmra.mxu0 %v2172
  %v2419 = vpop.f32.mrf.mxu0
  %v2420 = vadd.f32 0.0, %v2419
  %v2421 = vpop.f32.mrf.mxu0
  %2422 = vmatprep.mubr.f32.mxu0 0.0
  %2423 = vmatmul.mubr.f32.gmra.mxu0 %v2173
  %v2424 = vpop.f32.mrf.mxu0
  %v2425 = vadd.f32 0.0, %v2424
  %v2426 = vpop.f32.mrf.mxu0
  %2427 = vmatprep.mubr.f32.mxu0 0.0
  %2428 = vmatmul.mubr.f32.gmra.mxu0 %v2174
  %v2429 = vpop.f32.mrf.mxu0
  %v2430 = vadd.f32 0.0, %v2429
  %v2431 = vpop.f32.mrf.mxu0
  %2432 = vmatprep.mubr.f32.mxu0 0.0
  %2433 = vmatmul.mubr.f32.gmra.mxu0 %v2175
  %v2434 = vpop.f32.mrf.mxu0
  %v2435 = vadd.f32 0.0, %v2434
  %v2436 = vpop.f32.mrf.mxu0
  %2437 = vmatprep.mubr.f32.mxu0 0.0
  %2438 = vmatmul.mubr.f32.gmra.mxu0 %v2176
  %v2439 = vpop.f32.mrf.mxu0
  %v2440 = vadd.f32 0.0, %v2439
  %v2441 = vpop.f32.mrf.mxu0
  %2442 = vmatprep.mubr.f32.mxu0 0.0
  %2443 = vmatmul.mubr.f32.gmra.mxu0 %v2177
  %v2444 = vpop.f32.mrf.mxu0
  %v2445 = vadd.f32 0.0, %v2444
  %v2446 = vpop.f32.mrf.mxu0
  %2447 = vmatprep.mubr.f32.mxu0 0.0
  %2448 = vmatmul.mubr.f32.gmra.mxu0 %v2178
  %v2449 = vpop.f32.mrf.mxu0
  %v2450 = vadd.f32 0.0, %v2449
  %v2451 = vpop.f32.mrf.mxu0
  %2452 = vmatprep.mubr.f32.mxu0 0.0
  %2453 = vmatmul.mubr.f32.gmra.mxu0 %v2179
  %v2454 = vpop.f32.mrf.mxu0
  %v2455 = vadd.f32 0.0, %v2454
  %v2456 = vpop.f32.mrf.mxu0
  %2457 = vmatprep.mubr.f32.mxu0 0.0
  %2458 = vmatmul.mubr.f32.gmra.mxu0 %v2180
  %v2459 = vpop.f32.mrf.mxu0
  %v2460 = vadd.f32 0.0, %v2459
  %v2461 = vpop.f32.mrf.mxu0
  %2462 = vmatprep.mubr.f32.mxu0 0.0
  %2463 = vmatmul.mubr.f32.gmra.mxu0 %v2181
  %v2464 = vpop.f32.mrf.mxu0
  %v2465 = vadd.f32 0.0, %v2464
  %v2466 = vpop.f32.mrf.mxu0
  %2467 = vmatprep.mubr.f32.mxu0 0.0
  %2468 = vmatmul.mubr.f32.gmra.mxu0 %v2182
  %v2469 = vpop.f32.mrf.mxu0
  %v2470 = vadd.f32 0.0, %v2469
  %v2471 = vpop.f32.mrf.mxu0
  %2472 = vmatprep.mubr.f32.mxu0 0.0
  %2473 = vmatmul.mubr.f32.gmra.mxu0 %v2183
  %v2474 = vpop.f32.mrf.mxu0
  %v2475 = vadd.f32 0.0, %v2474
  %v2476 = vpop.f32.mrf.mxu0
  %2477 = vmatprep.mubr.f32.mxu0 0.0
  %2478 = vmatmul.mubr.f32.gmra.mxu0 %v2184
  %v2479 = vpop.f32.mrf.mxu0
  %v2480 = vadd.f32 0.0, %v2479
  %v2481 = vpop.f32.mrf.mxu0
  %2482 = vmatprep.mubr.f32.mxu0 0.0
  %2483 = vmatmul.mubr.f32.gmra.mxu0 %v2185
  %v2484 = vpop.f32.mrf.mxu0
  %v2485 = vadd.f32 0.0, %v2484
  %v2486 = vpop.f32.mrf.mxu0
  %2487 = vmatprep.mubr.f32.mxu0 0.0
  %2488 = vmatmul.mubr.f32.gmra.mxu0 %v2186
  %v2489 = vpop.f32.mrf.mxu0
  %v2490 = vadd.f32 0.0, %v2489
  %v2491 = vpop.f32.mrf.mxu0
  %2492 = vmatprep.mubr.f32.mxu0 0.0
  %2493 = vmatmul.mubr.f32.gmra.mxu0 %v2187
  %v2494 = vpop.f32.mrf.mxu0
  %v2495 = vadd.f32 0.0, %v2494
  %v2496 = vpop.f32.mrf.mxu0
  %2497 = vmatprep.mubr.f32.mxu0 0.0
  %2498 = vmatmul.mubr.f32.gmra.mxu0 %v2188
  %v2499 = vpop.f32.mrf.mxu0
  %v2500 = vadd.f32 0.0, %v2499
  %v2501 = vpop.f32.mrf.mxu0
  %2502 = vmatprep.mubr.f32.mxu0 0.0
  %2503 = vmatmul.mubr.f32.gmra.mxu0 %v2189
  %v2504 = vpop.f32.mrf.mxu0
  %v2505 = vadd.f32 0.0, %v2504
  %v2506 = vpop.f32.mrf.mxu0
  %2507 = vmatprep.mubr.f32.mxu0 0.0
  %2508 = vmatmul.mubr.f32.gmra.mxu0 %v2190
  %v2509 = vpop.f32.mrf.mxu0
  %v2510 = vadd.f32 0.0, %v2509
  %v2511 = vpop.f32.mrf.mxu0
  %2512 = vmatprep.mubr.f32.mxu0 0.0
  %2513 = vmatmul.mubr.f32.gmra.mxu0 %v2191
  %v2514 = vpop.f32.mrf.mxu0
  %v2515 = vadd.f32 0.0, %v2514
  %v2516 = vpop.f32.mrf.mxu0
  %2517 = vmatprep.mubr.f32.mxu0 0.0
  %2518 = vmatmul.mubr.f32.gmra.mxu0 %v2192
  %v2519 = vpop.f32.mrf.mxu0
  %v2520 = vadd.f32 0.0, %v2519
  %v2521 = vpop.f32.mrf.mxu0
  %2522 = vmatprep.mubr.f32.mxu0 0.0
  %2523 = vmatmul.mubr.f32.gmra.mxu0 %v2193
  %v2524 = vpop.f32.mrf.mxu0
  %v2525 = vadd.f32 0.0, %v2524
  %v2526 = vpop.f32.mrf.mxu0
  %2527 = vmatprep.mubr.f32.mxu0 0.0
  %2528 = vmatmul.mubr.f32.gmra.mxu0 %v2194
  %v2529 = vpop.f32.mrf.mxu0
  %v2530 = vadd.f32 0.0, %v2529
  %v2531 = vpop.f32.mrf.mxu0
  %2532 = vmatprep.mubr.f32.mxu0 0.0
  %2533 = vmatmul.mubr.f32.gmra.mxu0 %v2195
  %v2534 = vpop.f32.mrf.mxu0
  %v2535 = vadd.f32 0.0, %v2534
  %v2536 = vpop.f32.mrf.mxu0
  %2537 = vmatprep.mubr.f32.mxu0 0.0
  %2538 = vmatmul.mubr.f32.gmra.mxu0 %v2196
  %v2539 = vpop.f32.mrf.mxu0
  %v2540 = vadd.f32 0.0, %v2539
  %v2541 = vpop.f32.mrf.mxu0
  %2542 = vmatprep.mubr.f32.mxu0 0.0
  %2543 = vmatmul.mubr.f32.gmra.mxu0 %v2197
  %v2544 = vpop.f32.mrf.mxu0
  %v2545 = vadd.f32 0.0, %v2544
  %v2546 = vpop.f32.mrf.mxu0
  %2547 = vmatprep.mubr.f32.mxu0 0.0
  %2548 = vmatmul.mubr.f32.gmra.mxu0 %v2198
  %v2549 = vpop.f32.mrf.mxu0
  %v2550 = vadd.f32 0.0, %v2549
  %v2551 = vpop.f32.mrf.mxu0
  %2552 = vmatprep.mubr.f32.mxu0 0.0
  %2553 = vmatmul.mubr.f32.gmra.mxu0 %v2199
  %v2554 = vpop.f32.mrf.mxu0
  %v2555 = vadd.f32 0.0, %v2554
  %v2556 = vpop.f32.mrf.mxu0
  %2557 = vmatprep.mubr.f32.mxu0 0.0
  %2558 = vmatmul.mubr.f32.gmra.mxu0 %v2200
  %v2559 = vpop.f32.mrf.mxu0
  %v2560 = vadd.f32 0.0, %v2559
  %v2561 = vpop.f32.mrf.mxu0
  %2562 = vmatprep.mubr.f32.mxu0 0.0
  %2563 = vmatmul.mubr.f32.gmra.mxu0 %v2201
  %v2564 = vpop.f32.mrf.mxu0
  %v2565 = vadd.f32 0.0, %v2564
  %v2566 = vpop.f32.mrf.mxu0
  %2567 = vmatprep.mubr.f32.mxu0 0.0
  %2568 = vmatmul.mubr.f32.gmra.mxu0 %v2202
  %v2569 = vpop.f32.mrf.mxu0
  %v2570 = vadd.f32 0.0, %v2569
  %v2571 = vpop.f32.mrf.mxu0
  %2572 = vmatprep.mubr.f32.mxu0 0.0
  %2573 = vmatmul.mubr.f32.gmra.mxu0 %v2203
  %v2574 = vpop.f32.mrf.mxu0
  %v2575 = vadd.f32 0.0, %v2574
  %v2576 = vpop.f32.mrf.mxu0
  %2577 = vmatprep.mubr.f32.mxu0 0.0
  %2578 = vmatmul.mubr.f32.gmra.mxu0 %v2204
  %v2579 = vpop.f32.mrf.mxu0
  %v2580 = vadd.f32 0.0, %v2579
  %v2581 = vpop.f32.mrf.mxu0
  %2582 = vmatprep.mubr.f32.mxu0 0.0
  %2583 = vmatmul.mubr.f32.gmra.mxu0 %v2205
  %v2584 = vpop.f32.mrf.mxu0
  %v2585 = vadd.f32 0.0, %v2584
  %v2586 = vpop.f32.mrf.mxu0
  %2587 = vmatprep.mubr.f32.mxu0 0.0
  %2588 = vmatmul.mubr.f32.gmra.mxu0 %v2206
  %v2589 = vpop.f32.mrf.mxu0
  %v2590 = vadd.f32 0.0, %v2589
  %v2591 = vpop.f32.mrf.mxu0
  %2592 = vmatprep.mubr.f32.mxu0 0.0
  %2593 = vmatmul.mubr.f32.gmra.mxu0 %v2207
  %v2594 = vpop.f32.mrf.mxu0
  %v2595 = vadd.f32 0.0, %v2594
  %v2596 = vpop.f32.mrf.mxu0
  %2597 = vmatprep.mubr.f32.mxu0 0.0
  %2598 = vmatmul.mubr.f32.gmra.mxu0 %v2208
  %v2599 = vpop.f32.mrf.mxu0
  %v2600 = vadd.f32 0.0, %v2599
  %v2601 = vpop.f32.mrf.mxu0
  %2602 = vmatprep.mubr.f32.mxu0 0.0
  %2603 = vmatmul.mubr.f32.gmra.mxu0 %v2209
  %v2604 = vpop.f32.mrf.mxu0
  %v2605 = vadd.f32 0.0, %v2604
  %v2606 = vpop.f32.mrf.mxu0
  %2607 = vmatprep.mubr.f32.mxu0 0.0
  %2608 = vmatmul.mubr.f32.gmra.mxu0 %v2210
  %v2609 = vpop.f32.mrf.mxu0
  %v2610 = vadd.f32 0.0, %v2609
  %v2611 = vpop.f32.mrf.mxu0
  %2612 = vdwg.mxu0
  %v2613 = vadd.f32 %v2083, %v2295
  %v2614 = vadd.f32 %v2084, %v2300
  %v2615 = vadd.f32 %v2085, %v2305
  %v2616 = vadd.f32 %v2086, %v2310
  %v2617 = vadd.f32 %v2087, %v2315
  %v2618 = vadd.f32 %v2088, %v2320
  %v2619 = vadd.f32 %v2089, %v2325
  %v2620 = vadd.f32 %v2090, %v2330
  %v2621 = vadd.f32 %v2091, %v2335
  %v2622 = vadd.f32 %v2092, %v2340
  %v2623 = vadd.f32 %v2093, %v2345
  %v2624 = vadd.f32 %v2094, %v2350
  %v2625 = vadd.f32 %v2095, %v2355
  %v2626 = vadd.f32 %v2096, %v2360
  %v2627 = vadd.f32 %v2097, %v2365
  %v2628 = vadd.f32 %v2098, %v2370
  %v2629 = vadd.f32 %v2099, %v2375
  %v2630 = vadd.f32 %v2100, %v2380
  %v2631 = vadd.f32 %v2101, %v2385
  %v2632 = vadd.f32 %v2102, %v2390
  %v2633 = vadd.f32 %v2103, %v2395
  %v2634 = vadd.f32 %v2104, %v2400
  %v2635 = vadd.f32 %v2105, %v2405
  %v2636 = vadd.f32 %v2106, %v2410
  %v2637 = vadd.f32 %v2107, %v2415
  %v2638 = vadd.f32 %v2108, %v2420
  %v2639 = vadd.f32 %v2109, %v2425
  %v2640 = vadd.f32 %v2110, %v2430
  %v2641 = vadd.f32 %v2111, %v2435
  %v2642 = vadd.f32 %v2112, %v2440
  %v2643 = vadd.f32 %v2113, %v2445
  %v2644 = vadd.f32 %v2114, %v2450
  %v2645 = vadd.f32 %v2115, %v2455
  %v2646 = vadd.f32 %v2116, %v2460
  %v2647 = vadd.f32 %v2117, %v2465
  %v2648 = vadd.f32 %v2118, %v2470
  %v2649 = vadd.f32 %v2119, %v2475
  %v2650 = vadd.f32 %v2120, %v2480
  %v2651 = vadd.f32 %v2121, %v2485
  %v2652 = vadd.f32 %v2122, %v2490
  %v2653 = vadd.f32 %v2123, %v2495
  %v2654 = vadd.f32 %v2124, %v2500
  %v2655 = vadd.f32 %v2125, %v2505
  %v2656 = vadd.f32 %v2126, %v2510
  %v2657 = vadd.f32 %v2127, %v2515
  %v2658 = vadd.f32 %v2128, %v2520
  %v2659 = vadd.f32 %v2129, %v2525
  %v2660 = vadd.f32 %v2130, %v2530
  %v2661 = vadd.f32 %v2131, %v2535
  %v2662 = vadd.f32 %v2132, %v2540
  %v2663 = vadd.f32 %v2133, %v2545
  %v2664 = vadd.f32 %v2134, %v2550
  %v2665 = vadd.f32 %v2135, %v2555
  %v2666 = vadd.f32 %v2136, %v2560
  %v2667 = vadd.f32 %v2137, %v2565
  %v2668 = vadd.f32 %v2138, %v2570
  %v2669 = vadd.f32 %v2139, %v2575
  %v2670 = vadd.f32 %v2140, %v2580
  %v2671 = vadd.f32 %v2141, %v2585
  %v2672 = vadd.f32 %v2142, %v2590
  %v2673 = vadd.f32 %v2143, %v2595
  %v2674 = vadd.f32 %v2144, %v2600
  %v2675 = vadd.f32 %v2145, %v2605
  %v2676 = vadd.f32 %v2146, %v2610
  %v2677 = vld [vmem:[%s1616 + $0x2] sm:$0xff]
  %v2678 = vld [vmem:[%s1616 + $0xa] sm:$0xff]
  %v2679 = vld [vmem:[%s1616 + $0x1a] sm:$0xff]
  %v2680 = vld [vmem:[%s1616 + $0x22] sm:$0xff]
  %v2681 = vld [vmem:[%s1616 + $0x32] sm:$0xff]
  %v2682 = vld [vmem:[%s1616 + $0x3a] sm:$0xff]
  %v2683 = vld [vmem:[%s1616 + $0x4a] sm:$0xff]
  %v2684 = vld [vmem:[%s1616 + $0x52] sm:$0xff]
  %v2685 = vld [vmem:[%s1616 + $0x62] sm:$0xff]
  %v2686 = vld [vmem:[%s1616 + $0x6a] sm:$0xff]
  %v2687 = vld [vmem:[%s1616 + $0x7a] sm:$0xff]
  %v2688 = vld [vmem:[%s1616 + $0x82] sm:$0xff]
  %v2689 = vld [vmem:[%s1616 + $0x92] sm:$0xff]
  %v2690 = vld [vmem:[%s1616 + $0x9a] sm:$0xff]
  %v2691 = vld [vmem:[%s1616 + $0xaa] sm:$0xff]
  %v2692 = vld [vmem:[%s1616 + $0xb2] sm:$0xff]
  %v2693 = vld [vmem:[%s1616 + $0xc2] sm:$0xff]
  %v2694 = vld [vmem:[%s1616 + $0xca] sm:$0xff]
  %v2695 = vld [vmem:[%s1616 + $0xda] sm:$0xff]
  %v2696 = vld [vmem:[%s1616 + $0xe2] sm:$0xff]
  %v2697 = vld [vmem:[%s1616 + $0xf2] sm:$0xff]
  %v2698 = vld [vmem:[%s1616 + $0xfa] sm:$0xff]
  %v2699 = vld [vmem:[%s1616 + $0x10a] sm:$0xff]
  %v2700 = vld [vmem:[%s1616 + $0x112] sm:$0xff]
  %v2701 = vld [vmem:[%s1616 + $0x122] sm:$0xff]
  %v2702 = vld [vmem:[%s1616 + $0x12a] sm:$0xff]
  %v2703 = vld [vmem:[%s1616 + $0x13a] sm:$0xff]
  %v2704 = vld [vmem:[%s1616 + $0x142] sm:$0xff]
  %v2705 = vld [vmem:[%s1616 + $0x152] sm:$0xff]
  %v2706 = vld [vmem:[%s1616 + $0x15a] sm:$0xff]
  %v2707 = vld [vmem:[%s1616 + $0x16a] sm:$0xff]
  %v2708 = vld [vmem:[%s1616 + $0x172] sm:$0xff]
  %v2709 = vld [vmem:[%s1616 + $0x1b2] sm:$0xff]
  %v2710 = vld [vmem:[%s1616 + $0x1ba] sm:$0xff]
  %v2711 = vld [vmem:[%s1616 + $0x1ca] sm:$0xff]
  %v2712 = vld [vmem:[%s1616 + $0x1d2] sm:$0xff]
  %v2713 = vld [vmem:[%s1616 + $0x1e2] sm:$0xff]
  %v2714 = vld [vmem:[%s1616 + $0x1ea] sm:$0xff]
  %v2715 = vld [vmem:[%s1616 + $0x1fa] sm:$0xff]
  %v2716 = vld [vmem:[%s1616 + $0x202] sm:$0xff]
  %v2717 = vld [vmem:[%s1616 + $0x212] sm:$0xff]
  %v2718 = vld [vmem:[%s1616 + $0x21a] sm:$0xff]
  %v2719 = vld [vmem:[%s1616 + $0x22a] sm:$0xff]
  %v2720 = vld [vmem:[%s1616 + $0x232] sm:$0xff]
  %v2721 = vld [vmem:[%s1616 + $0x242] sm:$0xff]
  %v2722 = vld [vmem:[%s1616 + $0x24a] sm:$0xff]
  %v2723 = vld [vmem:[%s1616 + $0x25a] sm:$0xff]
  %v2724 = vld [vmem:[%s1616 + $0x262] sm:$0xff]
  %v2725 = vld [vmem:[%s1616 + $0x272] sm:$0xff]
  %v2726 = vld [vmem:[%s1616 + $0x27a] sm:$0xff]
  %v2727 = vld [vmem:[%s1616 + $0x28a] sm:$0xff]
  %v2728 = vld [vmem:[%s1616 + $0x292] sm:$0xff]
  %v2729 = vld [vmem:[%s1616 + $0x2a2] sm:$0xff]
  %v2730 = vld [vmem:[%s1616 + $0x2aa] sm:$0xff]
  %v2731 = vld [vmem:[%s1616 + $0x2ba] sm:$0xff]
  %v2732 = vld [vmem:[%s1616 + $0x2c2] sm:$0xff]
  %v2733 = vld [vmem:[%s1616 + $0x2d2] sm:$0xff]
  %v2734 = vld [vmem:[%s1616 + $0x2da] sm:$0xff]
  %v2735 = vld [vmem:[%s1616 + $0x2ea] sm:$0xff]
  %v2736 = vld [vmem:[%s1616 + $0x2f2] sm:$0xff]
  %v2737 = vld [vmem:[%s1616 + $0x302] sm:$0xff]
  %v2738 = vld [vmem:[%s1616 + $0x30a] sm:$0xff]
  %v2739 = vld [vmem:[%s1616 + $0x31a] sm:$0xff]
  %v2740 = vld [vmem:[%s1616 + $0x322] sm:$0xff]
  %s2741 = scalar_lea.vmem %s1, 640
  %v2742 = vld [vmem:[%s2741] sm:$0xff]
  %v2743 = vld [vmem:[%s2741 + $0x8] sm:$0xff]
  %v2744 = vld [vmem:[%s2741 + $0x10] sm:$0xff]
  %v2745 = vld [vmem:[%s2741 + $0x18] sm:$0xff]
  %v2746 = vld [vmem:[%s2741 + $0x20] sm:$0xff]
  %v2747 = vld [vmem:[%s2741 + $0x28] sm:$0xff]
  %v2748 = vld [vmem:[%s2741 + $0x30] sm:$0xff]
  %v2749 = vld [vmem:[%s2741 + $0x38] sm:$0xff]
  %v2750 = vld [vmem:[%s2741 + $0x40] sm:$0xff]
  %v2751 = vld [vmem:[%s2741 + $0x48] sm:$0xff]
  %v2752 = vld [vmem:[%s2741 + $0x50] sm:$0xff]
  %v2753 = vld [vmem:[%s2741 + $0x58] sm:$0xff]
  %v2754 = vld [vmem:[%s2741 + $0x60] sm:$0xff]
  %v2755 = vld [vmem:[%s2741 + $0x68] sm:$0xff]
  %v2756 = vld [vmem:[%s2741 + $0x70] sm:$0xff]
  %v2757 = vld [vmem:[%s2741 + $0x78] sm:$0xff]
  %2758 = vmatprep.subr.mxu0 0.0
  %2759 = vmatpush1.msra.mxu0 %v2757
  %2760 = vmatprep.subr.mxu0 0.0
  %2761 = vmatpush1.msra.mxu0 %v2756
  %2762 = vmatprep.subr.mxu0 0.0
  %2763 = vmatpush1.msra.mxu0 %v2755
  %2764 = vmatprep.subr.mxu0 0.0
  %2765 = vmatpush1.msra.mxu0 %v2754
  %2766 = vmatprep.subr.mxu0 0.0
  %2767 = vmatpush1.msra.mxu0 %v2753
  %2768 = vmatprep.subr.mxu0 0.0
  %2769 = vmatpush1.msra.mxu0 %v2752
  %2770 = vmatprep.subr.mxu0 0.0
  %2771 = vmatpush1.msra.mxu0 %v2751
  %2772 = vmatprep.subr.mxu0 0.0
  %2773 = vmatpush1.msra.mxu0 %v2750
  %2774 = vmatprep.subr.mxu0 0.0
  %2775 = vmatpush1.msra.mxu0 %v2749
  %2776 = vmatprep.subr.mxu0 0.0
  %2777 = vmatpush1.msra.mxu0 %v2748
  %2778 = vmatprep.subr.mxu0 0.0
  %2779 = vmatpush1.msra.mxu0 %v2747
  %2780 = vmatprep.subr.mxu0 0.0
  %2781 = vmatpush1.msra.mxu0 %v2746
  %2782 = vmatprep.subr.mxu0 0.0
  %2783 = vmatpush1.msra.mxu0 %v2745
  %2784 = vmatprep.subr.mxu0 0.0
  %2785 = vmatpush1.msra.mxu0 %v2744
  %2786 = vmatprep.subr.mxu0 0.0
  %2787 = vmatpush1.msra.mxu0 %v2743
  %2788 = vmatprep.subr.mxu0 0.0
  %2789 = vmatpush1.msra.mxu0 %v2742
  %2790 = vmatprep.subr.mxu0 0.0
  %2791 = vmatpush2.msra.mxu0 0.0
  %2792 = vmatprep.subr.mxu0 0.0
  %2793 = vmatpush2.msra.mxu0 0.0
  %2794 = vmatprep.subr.mxu0 0.0
  %2795 = vmatpush2.msra.mxu0 0.0
  %2796 = vmatprep.subr.mxu0 0.0
  %2797 = vmatpush2.msra.mxu0 0.0
  %2798 = vmatprep.subr.mxu0 0.0
  %2799 = vmatpush2.msra.mxu0 0.0
  %2800 = vmatprep.subr.mxu0 0.0
  %2801 = vmatpush2.msra.mxu0 0.0
  %2802 = vmatprep.subr.mxu0 0.0
  %2803 = vmatpush2.msra.mxu0 0.0
  %2804 = vmatprep.subr.mxu0 0.0
  %2805 = vmatpush2.msra.mxu0 0.0
  %2806 = vmatprep.subr.mxu0 0.0
  %2807 = vmatpush2.msra.mxu0 0.0
  %2808 = vmatprep.subr.mxu0 0.0
  %2809 = vmatpush2.msra.mxu0 0.0
  %2810 = vmatprep.subr.mxu0 0.0
  %2811 = vmatpush2.msra.mxu0 0.0
  %2812 = vmatprep.subr.mxu0 0.0
  %2813 = vmatpush2.msra.mxu0 0.0
  %2814 = vmatprep.subr.mxu0 0.0
  %2815 = vmatpush2.msra.mxu0 0.0
  %2816 = vmatprep.subr.mxu0 0.0
  %2817 = vmatpush2.msra.mxu0 0.0
  %2818 = vmatprep.subr.mxu0 0.0
  %2819 = vmatpush2.msra.mxu0 0.0
  %2820 = vmatprep.subr.mxu0 0.0
  %2821 = vmatpush2.msra.mxu0 0.0
  %2822 = vmatprep.mubr.f32.mxu0 0.0
  %2823 = vmatmul.mubr.f32.gmra.mxu0 %v2677
  %v2824 = vpop.f32.mrf.mxu0
  %v2825 = vadd.f32 0.0, %v2824
  %v2826 = vpop.f32.mrf.mxu0
  %2827 = vmatprep.mubr.f32.mxu0 0.0
  %2828 = vmatmul.mubr.f32.gmra.mxu0 %v2678
  %v2829 = vpop.f32.mrf.mxu0
  %v2830 = vadd.f32 0.0, %v2829
  %v2831 = vpop.f32.mrf.mxu0
  %2832 = vmatprep.mubr.f32.mxu0 0.0
  %2833 = vmatmul.mubr.f32.gmra.mxu0 %v2679
  %v2834 = vpop.f32.mrf.mxu0
  %v2835 = vadd.f32 0.0, %v2834
  %v2836 = vpop.f32.mrf.mxu0
  %2837 = vmatprep.mubr.f32.mxu0 0.0
  %2838 = vmatmul.mubr.f32.gmra.mxu0 %v2680
  %v2839 = vpop.f32.mrf.mxu0
  %v2840 = vadd.f32 0.0, %v2839
  %v2841 = vpop.f32.mrf.mxu0
  %2842 = vmatprep.mubr.f32.mxu0 0.0
  %2843 = vmatmul.mubr.f32.gmra.mxu0 %v2681
  %v2844 = vpop.f32.mrf.mxu0
  %v2845 = vadd.f32 0.0, %v2844
  %v2846 = vpop.f32.mrf.mxu0
  %2847 = vmatprep.mubr.f32.mxu0 0.0
  %2848 = vmatmul.mubr.f32.gmra.mxu0 %v2682
  %v2849 = vpop.f32.mrf.mxu0
  %v2850 = vadd.f32 0.0, %v2849
  %v2851 = vpop.f32.mrf.mxu0
  %2852 = vmatprep.mubr.f32.mxu0 0.0
  %2853 = vmatmul.mubr.f32.gmra.mxu0 %v2683
  %v2854 = vpop.f32.mrf.mxu0
  %v2855 = vadd.f32 0.0, %v2854
  %v2856 = vpop.f32.mrf.mxu0
  %2857 = vmatprep.mubr.f32.mxu0 0.0
  %2858 = vmatmul.mubr.f32.gmra.mxu0 %v2684
  %v2859 = vpop.f32.mrf.mxu0
  %v2860 = vadd.f32 0.0, %v2859
  %v2861 = vpop.f32.mrf.mxu0
  %2862 = vmatprep.mubr.f32.mxu0 0.0
  %2863 = vmatmul.mubr.f32.gmra.mxu0 %v2685
  %v2864 = vpop.f32.mrf.mxu0
  %v2865 = vadd.f32 0.0, %v2864
  %v2866 = vpop.f32.mrf.mxu0
  %2867 = vmatprep.mubr.f32.mxu0 0.0
  %2868 = vmatmul.mubr.f32.gmra.mxu0 %v2686
  %v2869 = vpop.f32.mrf.mxu0
  %v2870 = vadd.f32 0.0, %v2869
  %v2871 = vpop.f32.mrf.mxu0
  %2872 = vmatprep.mubr.f32.mxu0 0.0
  %2873 = vmatmul.mubr.f32.gmra.mxu0 %v2687
  %v2874 = vpop.f32.mrf.mxu0
  %v2875 = vadd.f32 0.0, %v2874
  %v2876 = vpop.f32.mrf.mxu0
  %2877 = vmatprep.mubr.f32.mxu0 0.0
  %2878 = vmatmul.mubr.f32.gmra.mxu0 %v2688
  %v2879 = vpop.f32.mrf.mxu0
  %v2880 = vadd.f32 0.0, %v2879
  %v2881 = vpop.f32.mrf.mxu0
  %2882 = vmatprep.mubr.f32.mxu0 0.0
  %2883 = vmatmul.mubr.f32.gmra.mxu0 %v2689
  %v2884 = vpop.f32.mrf.mxu0
  %v2885 = vadd.f32 0.0, %v2884
  %v2886 = vpop.f32.mrf.mxu0
  %2887 = vmatprep.mubr.f32.mxu0 0.0
  %2888 = vmatmul.mubr.f32.gmra.mxu0 %v2690
  %v2889 = vpop.f32.mrf.mxu0
  %v2890 = vadd.f32 0.0, %v2889
  %v2891 = vpop.f32.mrf.mxu0
  %2892 = vmatprep.mubr.f32.mxu0 0.0
  %2893 = vmatmul.mubr.f32.gmra.mxu0 %v2691
  %v2894 = vpop.f32.mrf.mxu0
  %v2895 = vadd.f32 0.0, %v2894
  %v2896 = vpop.f32.mrf.mxu0
  %2897 = vmatprep.mubr.f32.mxu0 0.0
  %2898 = vmatmul.mubr.f32.gmra.mxu0 %v2692
  %v2899 = vpop.f32.mrf.mxu0
  %v2900 = vadd.f32 0.0, %v2899
  %v2901 = vpop.f32.mrf.mxu0
  %2902 = vmatprep.mubr.f32.mxu0 0.0
  %2903 = vmatmul.mubr.f32.gmra.mxu0 %v2693
  %v2904 = vpop.f32.mrf.mxu0
  %v2905 = vadd.f32 0.0, %v2904
  %v2906 = vpop.f32.mrf.mxu0
  %2907 = vmatprep.mubr.f32.mxu0 0.0
  %2908 = vmatmul.mubr.f32.gmra.mxu0 %v2694
  %v2909 = vpop.f32.mrf.mxu0
  %v2910 = vadd.f32 0.0, %v2909
  %v2911 = vpop.f32.mrf.mxu0
  %2912 = vmatprep.mubr.f32.mxu0 0.0
  %2913 = vmatmul.mubr.f32.gmra.mxu0 %v2695
  %v2914 = vpop.f32.mrf.mxu0
  %v2915 = vadd.f32 0.0, %v2914
  %v2916 = vpop.f32.mrf.mxu0
  %2917 = vmatprep.mubr.f32.mxu0 0.0
  %2918 = vmatmul.mubr.f32.gmra.mxu0 %v2696
  %v2919 = vpop.f32.mrf.mxu0
  %v2920 = vadd.f32 0.0, %v2919
  %v2921 = vpop.f32.mrf.mxu0
  %2922 = vmatprep.mubr.f32.mxu0 0.0
  %2923 = vmatmul.mubr.f32.gmra.mxu0 %v2697
  %v2924 = vpop.f32.mrf.mxu0
  %v2925 = vadd.f32 0.0, %v2924
  %v2926 = vpop.f32.mrf.mxu0
  %2927 = vmatprep.mubr.f32.mxu0 0.0
  %2928 = vmatmul.mubr.f32.gmra.mxu0 %v2698
  %v2929 = vpop.f32.mrf.mxu0
  %v2930 = vadd.f32 0.0, %v2929
  %v2931 = vpop.f32.mrf.mxu0
  %2932 = vmatprep.mubr.f32.mxu0 0.0
  %2933 = vmatmul.mubr.f32.gmra.mxu0 %v2699
  %v2934 = vpop.f32.mrf.mxu0
  %v2935 = vadd.f32 0.0, %v2934
  %v2936 = vpop.f32.mrf.mxu0
  %2937 = vmatprep.mubr.f32.mxu0 0.0
  %2938 = vmatmul.mubr.f32.gmra.mxu0 %v2700
  %v2939 = vpop.f32.mrf.mxu0
  %v2940 = vadd.f32 0.0, %v2939
  %v2941 = vpop.f32.mrf.mxu0
  %2942 = vmatprep.mubr.f32.mxu0 0.0
  %2943 = vmatmul.mubr.f32.gmra.mxu0 %v2701
  %v2944 = vpop.f32.mrf.mxu0
  %v2945 = vadd.f32 0.0, %v2944
  %v2946 = vpop.f32.mrf.mxu0
  %2947 = vmatprep.mubr.f32.mxu0 0.0
  %2948 = vmatmul.mubr.f32.gmra.mxu0 %v2702
  %v2949 = vpop.f32.mrf.mxu0
  %v2950 = vadd.f32 0.0, %v2949
  %v2951 = vpop.f32.mrf.mxu0
  %2952 = vmatprep.mubr.f32.mxu0 0.0
  %2953 = vmatmul.mubr.f32.gmra.mxu0 %v2703
  %v2954 = vpop.f32.mrf.mxu0
  %v2955 = vadd.f32 0.0, %v2954
  %v2956 = vpop.f32.mrf.mxu0
  %2957 = vmatprep.mubr.f32.mxu0 0.0
  %2958 = vmatmul.mubr.f32.gmra.mxu0 %v2704
  %v2959 = vpop.f32.mrf.mxu0
  %v2960 = vadd.f32 0.0, %v2959
  %v2961 = vpop.f32.mrf.mxu0
  %2962 = vmatprep.mubr.f32.mxu0 0.0
  %2963 = vmatmul.mubr.f32.gmra.mxu0 %v2705
  %v2964 = vpop.f32.mrf.mxu0
  %v2965 = vadd.f32 0.0, %v2964
  %v2966 = vpop.f32.mrf.mxu0
  %2967 = vmatprep.mubr.f32.mxu0 0.0
  %2968 = vmatmul.mubr.f32.gmra.mxu0 %v2706
  %v2969 = vpop.f32.mrf.mxu0
  %v2970 = vadd.f32 0.0, %v2969
  %v2971 = vpop.f32.mrf.mxu0
  %2972 = vmatprep.mubr.f32.mxu0 0.0
  %2973 = vmatmul.mubr.f32.gmra.mxu0 %v2707
  %v2974 = vpop.f32.mrf.mxu0
  %v2975 = vadd.f32 0.0, %v2974
  %v2976 = vpop.f32.mrf.mxu0
  %2977 = vmatprep.mubr.f32.mxu0 0.0
  %2978 = vmatmul.mubr.f32.gmra.mxu0 %v2708
  %v2979 = vpop.f32.mrf.mxu0
  %v2980 = vadd.f32 0.0, %v2979
  %v2981 = vpop.f32.mrf.mxu0
  %2982 = vmatprep.mubr.f32.mxu0 0.0
  %2983 = vmatmul.mubr.f32.gmra.mxu0 %v2709
  %v2984 = vpop.f32.mrf.mxu0
  %v2985 = vadd.f32 0.0, %v2984
  %v2986 = vpop.f32.mrf.mxu0
  %2987 = vmatprep.mubr.f32.mxu0 0.0
  %2988 = vmatmul.mubr.f32.gmra.mxu0 %v2710
  %v2989 = vpop.f32.mrf.mxu0
  %v2990 = vadd.f32 0.0, %v2989
  %v2991 = vpop.f32.mrf.mxu0
  %2992 = vmatprep.mubr.f32.mxu0 0.0
  %2993 = vmatmul.mubr.f32.gmra.mxu0 %v2711
  %v2994 = vpop.f32.mrf.mxu0
  %v2995 = vadd.f32 0.0, %v2994
  %v2996 = vpop.f32.mrf.mxu0
  %2997 = vmatprep.mubr.f32.mxu0 0.0
  %2998 = vmatmul.mubr.f32.gmra.mxu0 %v2712
  %v2999 = vpop.f32.mrf.mxu0
  %v3000 = vadd.f32 0.0, %v2999
  %v3001 = vpop.f32.mrf.mxu0
  %3002 = vmatprep.mubr.f32.mxu0 0.0
  %3003 = vmatmul.mubr.f32.gmra.mxu0 %v2713
  %v3004 = vpop.f32.mrf.mxu0
  %v3005 = vadd.f32 0.0, %v3004
  %v3006 = vpop.f32.mrf.mxu0
  %3007 = vmatprep.mubr.f32.mxu0 0.0
  %3008 = vmatmul.mubr.f32.gmra.mxu0 %v2714
  %v3009 = vpop.f32.mrf.mxu0
  %v3010 = vadd.f32 0.0, %v3009
  %v3011 = vpop.f32.mrf.mxu0
  %3012 = vmatprep.mubr.f32.mxu0 0.0
  %3013 = vmatmul.mubr.f32.gmra.mxu0 %v2715
  %v3014 = vpop.f32.mrf.mxu0
  %v3015 = vadd.f32 0.0, %v3014
  %v3016 = vpop.f32.mrf.mxu0
  %3017 = vmatprep.mubr.f32.mxu0 0.0
  %3018 = vmatmul.mubr.f32.gmra.mxu0 %v2716
  %v3019 = vpop.f32.mrf.mxu0
  %v3020 = vadd.f32 0.0, %v3019
  %v3021 = vpop.f32.mrf.mxu0
  %3022 = vmatprep.mubr.f32.mxu0 0.0
  %3023 = vmatmul.mubr.f32.gmra.mxu0 %v2717
  %v3024 = vpop.f32.mrf.mxu0
  %v3025 = vadd.f32 0.0, %v3024
  %v3026 = vpop.f32.mrf.mxu0
  %3027 = vmatprep.mubr.f32.mxu0 0.0
  %3028 = vmatmul.mubr.f32.gmra.mxu0 %v2718
  %v3029 = vpop.f32.mrf.mxu0
  %v3030 = vadd.f32 0.0, %v3029
  %v3031 = vpop.f32.mrf.mxu0
  %3032 = vmatprep.mubr.f32.mxu0 0.0
  %3033 = vmatmul.mubr.f32.gmra.mxu0 %v2719
  %v3034 = vpop.f32.mrf.mxu0
  %v3035 = vadd.f32 0.0, %v3034
  %v3036 = vpop.f32.mrf.mxu0
  %3037 = vmatprep.mubr.f32.mxu0 0.0
  %3038 = vmatmul.mubr.f32.gmra.mxu0 %v2720
  %v3039 = vpop.f32.mrf.mxu0
  %v3040 = vadd.f32 0.0, %v3039
  %v3041 = vpop.f32.mrf.mxu0
  %3042 = vmatprep.mubr.f32.mxu0 0.0
  %3043 = vmatmul.mubr.f32.gmra.mxu0 %v2721
  %v3044 = vpop.f32.mrf.mxu0
  %v3045 = vadd.f32 0.0, %v3044
  %v3046 = vpop.f32.mrf.mxu0
  %3047 = vmatprep.mubr.f32.mxu0 0.0
  %3048 = vmatmul.mubr.f32.gmra.mxu0 %v2722
  %v3049 = vpop.f32.mrf.mxu0
  %v3050 = vadd.f32 0.0, %v3049
  %v3051 = vpop.f32.mrf.mxu0
  %3052 = vmatprep.mubr.f32.mxu0 0.0
  %3053 = vmatmul.mubr.f32.gmra.mxu0 %v2723
  %v3054 = vpop.f32.mrf.mxu0
  %v3055 = vadd.f32 0.0, %v3054
  %v3056 = vpop.f32.mrf.mxu0
  %3057 = vmatprep.mubr.f32.mxu0 0.0
  %3058 = vmatmul.mubr.f32.gmra.mxu0 %v2724
  %v3059 = vpop.f32.mrf.mxu0
  %v3060 = vadd.f32 0.0, %v3059
  %v3061 = vpop.f32.mrf.mxu0
  %3062 = vmatprep.mubr.f32.mxu0 0.0
  %3063 = vmatmul.mubr.f32.gmra.mxu0 %v2725
  %v3064 = vpop.f32.mrf.mxu0
  %v3065 = vadd.f32 0.0, %v3064
  %v3066 = vpop.f32.mrf.mxu0
  %3067 = vmatprep.mubr.f32.mxu0 0.0
  %3068 = vmatmul.mubr.f32.gmra.mxu0 %v2726
  %v3069 = vpop.f32.mrf.mxu0
  %v3070 = vadd.f32 0.0, %v3069
  %v3071 = vpop.f32.mrf.mxu0
  %3072 = vmatprep.mubr.f32.mxu0 0.0
  %3073 = vmatmul.mubr.f32.gmra.mxu0 %v2727
  %v3074 = vpop.f32.mrf.mxu0
  %v3075 = vadd.f32 0.0, %v3074
  %v3076 = vpop.f32.mrf.mxu0
  %3077 = vmatprep.mubr.f32.mxu0 0.0
  %3078 = vmatmul.mubr.f32.gmra.mxu0 %v2728
  %v3079 = vpop.f32.mrf.mxu0
  %v3080 = vadd.f32 0.0, %v3079
  %v3081 = vpop.f32.mrf.mxu0
  %3082 = vmatprep.mubr.f32.mxu0 0.0
  %3083 = vmatmul.mubr.f32.gmra.mxu0 %v2729
  %v3084 = vpop.f32.mrf.mxu0
  %v3085 = vadd.f32 0.0, %v3084
  %v3086 = vpop.f32.mrf.mxu0
  %3087 = vmatprep.mubr.f32.mxu0 0.0
  %3088 = vmatmul.mubr.f32.gmra.mxu0 %v2730
  %v3089 = vpop.f32.mrf.mxu0
  %v3090 = vadd.f32 0.0, %v3089
  %v3091 = vpop.f32.mrf.mxu0
  %3092 = vmatprep.mubr.f32.mxu0 0.0
  %3093 = vmatmul.mubr.f32.gmra.mxu0 %v2731
  %v3094 = vpop.f32.mrf.mxu0
  %v3095 = vadd.f32 0.0, %v3094
  %v3096 = vpop.f32.mrf.mxu0
  %3097 = vmatprep.mubr.f32.mxu0 0.0
  %3098 = vmatmul.mubr.f32.gmra.mxu0 %v2732
  %v3099 = vpop.f32.mrf.mxu0
  %v3100 = vadd.f32 0.0, %v3099
  %v3101 = vpop.f32.mrf.mxu0
  %3102 = vmatprep.mubr.f32.mxu0 0.0
  %3103 = vmatmul.mubr.f32.gmra.mxu0 %v2733
  %v3104 = vpop.f32.mrf.mxu0
  %v3105 = vadd.f32 0.0, %v3104
  %v3106 = vpop.f32.mrf.mxu0
  %3107 = vmatprep.mubr.f32.mxu0 0.0
  %3108 = vmatmul.mubr.f32.gmra.mxu0 %v2734
  %v3109 = vpop.f32.mrf.mxu0
  %v3110 = vadd.f32 0.0, %v3109
  %v3111 = vpop.f32.mrf.mxu0
  %3112 = vmatprep.mubr.f32.mxu0 0.0
  %3113 = vmatmul.mubr.f32.gmra.mxu0 %v2735
  %v3114 = vpop.f32.mrf.mxu0
  %v3115 = vadd.f32 0.0, %v3114
  %v3116 = vpop.f32.mrf.mxu0
  %3117 = vmatprep.mubr.f32.mxu0 0.0
  %3118 = vmatmul.mubr.f32.gmra.mxu0 %v2736
  %v3119 = vpop.f32.mrf.mxu0
  %v3120 = vadd.f32 0.0, %v3119
  %v3121 = vpop.f32.mrf.mxu0
  %3122 = vmatprep.mubr.f32.mxu0 0.0
  %3123 = vmatmul.mubr.f32.gmra.mxu0 %v2737
  %v3124 = vpop.f32.mrf.mxu0
  %v3125 = vadd.f32 0.0, %v3124
  %v3126 = vpop.f32.mrf.mxu0
  %3127 = vmatprep.mubr.f32.mxu0 0.0
  %3128 = vmatmul.mubr.f32.gmra.mxu0 %v2738
  %v3129 = vpop.f32.mrf.mxu0
  %v3130 = vadd.f32 0.0, %v3129
  %v3131 = vpop.f32.mrf.mxu0
  %3132 = vmatprep.mubr.f32.mxu0 0.0
  %3133 = vmatmul.mubr.f32.gmra.mxu0 %v2739
  %v3134 = vpop.f32.mrf.mxu0
  %v3135 = vadd.f32 0.0, %v3134
  %v3136 = vpop.f32.mrf.mxu0
  %3137 = vmatprep.mubr.f32.mxu0 0.0
  %3138 = vmatmul.mubr.f32.gmra.mxu0 %v2740
  %v3139 = vpop.f32.mrf.mxu0
  %v3140 = vadd.f32 0.0, %v3139
  %v3141 = vpop.f32.mrf.mxu0
  %3142 = vdwg.mxu0
  %v3143 = vadd.f32 %v2613, %v2825
  %v3144 = vadd.f32 %v2614, %v2830
  %v3145 = vadd.f32 %v2615, %v2835
  %v3146 = vadd.f32 %v2616, %v2840
  %v3147 = vadd.f32 %v2617, %v2845
  %v3148 = vadd.f32 %v2618, %v2850
  %v3149 = vadd.f32 %v2619, %v2855
  %v3150 = vadd.f32 %v2620, %v2860
  %v3151 = vadd.f32 %v2621, %v2865
  %v3152 = vadd.f32 %v2622, %v2870
  %v3153 = vadd.f32 %v2623, %v2875
  %v3154 = vadd.f32 %v2624, %v2880
  %v3155 = vadd.f32 %v2625, %v2885
  %v3156 = vadd.f32 %v2626, %v2890
  %v3157 = vadd.f32 %v2627, %v2895
  %v3158 = vadd.f32 %v2628, %v2900
  %v3159 = vadd.f32 %v2629, %v2905
  %v3160 = vadd.f32 %v2630, %v2910
  %v3161 = vadd.f32 %v2631, %v2915
  %v3162 = vadd.f32 %v2632, %v2920
  %v3163 = vadd.f32 %v2633, %v2925
  %v3164 = vadd.f32 %v2634, %v2930
  %v3165 = vadd.f32 %v2635, %v2935
  %v3166 = vadd.f32 %v2636, %v2940
  %v3167 = vadd.f32 %v2637, %v2945
  %v3168 = vadd.f32 %v2638, %v2950
  %v3169 = vadd.f32 %v2639, %v2955
  %v3170 = vadd.f32 %v2640, %v2960
  %v3171 = vadd.f32 %v2641, %v2965
  %v3172 = vadd.f32 %v2642, %v2970
  %v3173 = vadd.f32 %v2643, %v2975
  %v3174 = vadd.f32 %v2644, %v2980
  %v3175 = vadd.f32 %v2645, %v2985
  %v3176 = vadd.f32 %v2646, %v2990
  %v3177 = vadd.f32 %v2647, %v2995
  %v3178 = vadd.f32 %v2648, %v3000
  %v3179 = vadd.f32 %v2649, %v3005
  %v3180 = vadd.f32 %v2650, %v3010
  %v3181 = vadd.f32 %v2651, %v3015
  %v3182 = vadd.f32 %v2652, %v3020
  %v3183 = vadd.f32 %v2653, %v3025
  %v3184 = vadd.f32 %v2654, %v3030
  %v3185 = vadd.f32 %v2655, %v3035
  %v3186 = vadd.f32 %v2656, %v3040
  %v3187 = vadd.f32 %v2657, %v3045
  %v3188 = vadd.f32 %v2658, %v3050
  %v3189 = vadd.f32 %v2659, %v3055
  %v3190 = vadd.f32 %v2660, %v3060
  %v3191 = vadd.f32 %v2661, %v3065
  %v3192 = vadd.f32 %v2662, %v3070
  %v3193 = vadd.f32 %v2663, %v3075
  %v3194 = vadd.f32 %v2664, %v3080
  %v3195 = vadd.f32 %v2665, %v3085
  %v3196 = vadd.f32 %v2666, %v3090
  %v3197 = vadd.f32 %v2667, %v3095
  %v3198 = vadd.f32 %v2668, %v3100
  %v3199 = vadd.f32 %v2669, %v3105
  %v3200 = vadd.f32 %v2670, %v3110
  %v3201 = vadd.f32 %v2671, %v3115
  %v3202 = vadd.f32 %v2672, %v3120
  %v3203 = vadd.f32 %v2673, %v3125
  %v3204 = vadd.f32 %v2674, %v3130
  %v3205 = vadd.f32 %v2675, %v3135
  %v3206 = vadd.f32 %v2676, %v3140
  %s3207 = scalar_lea.vmem %s0, 48
  %v3208 = vld [vmem:[%s3207] sm:$0xff]
  %v3209 = vld [vmem:[%s3207 + $0x8] sm:$0xff]
  %v3210 = vld [vmem:[%s3207 + $0x18] sm:$0xff]
  %v3211 = vld [vmem:[%s3207 + $0x20] sm:$0xff]
  %v3212 = vld [vmem:[%s3207 + $0x30] sm:$0xff]
  %v3213 = vld [vmem:[%s3207 + $0x38] sm:$0xff]
  %v3214 = vld [vmem:[%s3207 + $0x48] sm:$0xff]
  %v3215 = vld [vmem:[%s3207 + $0x50] sm:$0xff]
  %v3216 = vld [vmem:[%s3207 + $0x60] sm:$0xff]
  %v3217 = vld [vmem:[%s3207 + $0x68] sm:$0xff]
  %v3218 = vld [vmem:[%s3207 + $0x78] sm:$0xff]
  %v3219 = vld [vmem:[%s3207 + $0x80] sm:$0xff]
  %v3220 = vld [vmem:[%s3207 + $0x90] sm:$0xff]
  %v3221 = vld [vmem:[%s3207 + $0x98] sm:$0xff]
  %v3222 = vld [vmem:[%s3207 + $0xa8] sm:$0xff]
  %v3223 = vld [vmem:[%s3207 + $0xb0] sm:$0xff]
  %v3224 = vld [vmem:[%s3207 + $0xc0] sm:$0xff]
  %v3225 = vld [vmem:[%s3207 + $0xc8] sm:$0xff]
  %v3226 = vld [vmem:[%s3207 + $0xd8] sm:$0xff]
  %v3227 = vld [vmem:[%s3207 + $0xe0] sm:$0xff]
  %v3228 = vld [vmem:[%s3207 + $0xf0] sm:$0xff]
  %v3229 = vld [vmem:[%s3207 + $0xf8] sm:$0xff]
  %v3230 = vld [vmem:[%s3207 + $0x108] sm:$0xff]
  %v3231 = vld [vmem:[%s3207 + $0x110] sm:$0xff]
  %v3232 = vld [vmem:[%s3207 + $0x120] sm:$0xff]
  %v3233 = vld [vmem:[%s3207 + $0x128] sm:$0xff]
  %v3234 = vld [vmem:[%s3207 + $0x138] sm:$0xff]
  %v3235 = vld [vmem:[%s3207 + $0x140] sm:$0xff]
  %v3236 = vld [vmem:[%s3207 + $0x150] sm:$0xff]
  %v3237 = vld [vmem:[%s3207 + $0x158] sm:$0xff]
  %v3238 = vld [vmem:[%s3207 + $0x168] sm:$0xff]
  %v3239 = vld [vmem:[%s3207 + $0x170] sm:$0xff]
  %v3240 = vld [vmem:[%s3207 + $0x1b0] sm:$0xff]
  %v3241 = vld [vmem:[%s3207 + $0x1b8] sm:$0xff]
  %v3242 = vld [vmem:[%s3207 + $0x1c8] sm:$0xff]
  %v3243 = vld [vmem:[%s3207 + $0x1d0] sm:$0xff]
  %v3244 = vld [vmem:[%s3207 + $0x1e0] sm:$0xff]
  %v3245 = vld [vmem:[%s3207 + $0x1e8] sm:$0xff]
  %v3246 = vld [vmem:[%s3207 + $0x1f8] sm:$0xff]
  %v3247 = vld [vmem:[%s3207 + $0x200] sm:$0xff]
  %v3248 = vld [vmem:[%s3207 + $0x210] sm:$0xff]
  %v3249 = vld [vmem:[%s3207 + $0x218] sm:$0xff]
  %v3250 = vld [vmem:[%s3207 + $0x228] sm:$0xff]
  %v3251 = vld [vmem:[%s3207 + $0x230] sm:$0xff]
  %v3252 = vld [vmem:[%s3207 + $0x240] sm:$0xff]
  %v3253 = vld [vmem:[%s3207 + $0x248] sm:$0xff]
  %v3254 = vld [vmem:[%s3207 + $0x258] sm:$0xff]
  %v3255 = vld [vmem:[%s3207 + $0x260] sm:$0xff]
  %v3256 = vld [vmem:[%s3207 + $0x270] sm:$0xff]
  %v3257 = vld [vmem:[%s3207 + $0x278] sm:$0xff]
  %v3258 = vld [vmem:[%s3207 + $0x288] sm:$0xff]
  %v3259 = vld [vmem:[%s3207 + $0x290] sm:$0xff]
  %v3260 = vld [vmem:[%s3207 + $0x2a0] sm:$0xff]
  %v3261 = vld [vmem:[%s3207 + $0x2a8] sm:$0xff]
  %v3262 = vld [vmem:[%s3207 + $0x2b8] sm:$0xff]
  %v3263 = vld [vmem:[%s3207 + $0x2c0] sm:$0xff]
  %v3264 = vld [vmem:[%s3207 + $0x2d0] sm:$0xff]
  %v3265 = vld [vmem:[%s3207 + $0x2d8] sm:$0xff]
  %v3266 = vld [vmem:[%s3207 + $0x2e8] sm:$0xff]
  %v3267 = vld [vmem:[%s3207 + $0x2f0] sm:$0xff]
  %v3268 = vld [vmem:[%s3207 + $0x300] sm:$0xff]
  %v3269 = vld [vmem:[%s3207 + $0x308] sm:$0xff]
  %v3270 = vld [vmem:[%s3207 + $0x318] sm:$0xff]
  %v3271 = vld [vmem:[%s3207 + $0x320] sm:$0xff]
  %s3272 = scalar_lea.vmem %s1, 768
  %v3273 = vld [vmem:[%s3272] sm:$0xff]
  %v3274 = vld [vmem:[%s3272 + $0x8] sm:$0xff]
  %v3275 = vld [vmem:[%s3272 + $0x10] sm:$0xff]
  %v3276 = vld [vmem:[%s3272 + $0x18] sm:$0xff]
  %v3277 = vld [vmem:[%s3272 + $0x20] sm:$0xff]
  %v3278 = vld [vmem:[%s3272 + $0x28] sm:$0xff]
  %v3279 = vld [vmem:[%s3272 + $0x30] sm:$0xff]
  %v3280 = vld [vmem:[%s3272 + $0x38] sm:$0xff]
  %v3281 = vld [vmem:[%s3272 + $0x40] sm:$0xff]
  %v3282 = vld [vmem:[%s3272 + $0x48] sm:$0xff]
  %v3283 = vld [vmem:[%s3272 + $0x50] sm:$0xff]
  %v3284 = vld [vmem:[%s3272 + $0x58] sm:$0xff]
  %v3285 = vld [vmem:[%s3272 + $0x60] sm:$0xff]
  %v3286 = vld [vmem:[%s3272 + $0x68] sm:$0xff]
  %v3287 = vld [vmem:[%s3272 + $0x70] sm:$0xff]
  %v3288 = vld [vmem:[%s3272 + $0x78] sm:$0xff]
  %3289 = vmatprep.subr.mxu0 0.0
  %3290 = vmatpush1.msra.mxu0 %v3288
  %3291 = vmatprep.subr.mxu0 0.0
  %3292 = vmatpush1.msra.mxu0 %v3287
  %3293 = vmatprep.subr.mxu0 0.0
  %3294 = vmatpush1.msra.mxu0 %v3286
  %3295 = vmatprep.subr.mxu0 0.0
  %3296 = vmatpush1.msra.mxu0 %v3285
  %3297 = vmatprep.subr.mxu0 0.0
  %3298 = vmatpush1.msra.mxu0 %v3284
  %3299 = vmatprep.subr.mxu0 0.0
  %3300 = vmatpush1.msra.mxu0 %v3283
  %3301 = vmatprep.subr.mxu0 0.0
  %3302 = vmatpush1.msra.mxu0 %v3282
  %3303 = vmatprep.subr.mxu0 0.0
  %3304 = vmatpush1.msra.mxu0 %v3281
  %3305 = vmatprep.subr.mxu0 0.0
  %3306 = vmatpush1.msra.mxu0 %v3280
  %3307 = vmatprep.subr.mxu0 0.0
  %3308 = vmatpush1.msra.mxu0 %v3279
  %3309 = vmatprep.subr.mxu0 0.0
  %3310 = vmatpush1.msra.mxu0 %v3278
  %3311 = vmatprep.subr.mxu0 0.0
  %3312 = vmatpush1.msra.mxu0 %v3277
  %3313 = vmatprep.subr.mxu0 0.0
  %3314 = vmatpush1.msra.mxu0 %v3276
  %3315 = vmatprep.subr.mxu0 0.0
  %3316 = vmatpush1.msra.mxu0 %v3275
  %3317 = vmatprep.subr.mxu0 0.0
  %3318 = vmatpush1.msra.mxu0 %v3274
  %3319 = vmatprep.subr.mxu0 0.0
  %3320 = vmatpush1.msra.mxu0 %v3273
  %3321 = vmatprep.subr.mxu0 0.0
  %3322 = vmatpush2.msra.mxu0 0.0
  %3323 = vmatprep.subr.mxu0 0.0
  %3324 = vmatpush2.msra.mxu0 0.0
  %3325 = vmatprep.subr.mxu0 0.0
  %3326 = vmatpush2.msra.mxu0 0.0
  %3327 = vmatprep.subr.mxu0 0.0
  %3328 = vmatpush2.msra.mxu0 0.0
  %3329 = vmatprep.subr.mxu0 0.0
  %3330 = vmatpush2.msra.mxu0 0.0
  %3331 = vmatprep.subr.mxu0 0.0
  %3332 = vmatpush2.msra.mxu0 0.0
  %3333 = vmatprep.subr.mxu0 0.0
  %3334 = vmatpush2.msra.mxu0 0.0
  %3335 = vmatprep.subr.mxu0 0.0
  %3336 = vmatpush2.msra.mxu0 0.0
  %3337 = vmatprep.subr.mxu0 0.0
  %3338 = vmatpush2.msra.mxu0 0.0
  %3339 = vmatprep.subr.mxu0 0.0
  %3340 = vmatpush2.msra.mxu0 0.0
  %3341 = vmatprep.subr.mxu0 0.0
  %3342 = vmatpush2.msra.mxu0 0.0
  %3343 = vmatprep.subr.mxu0 0.0
  %3344 = vmatpush2.msra.mxu0 0.0
  %3345 = vmatprep.subr.mxu0 0.0
  %3346 = vmatpush2.msra.mxu0 0.0
  %3347 = vmatprep.subr.mxu0 0.0
  %3348 = vmatpush2.msra.mxu0 0.0
  %3349 = vmatprep.subr.mxu0 0.0
  %3350 = vmatpush2.msra.mxu0 0.0
  %3351 = vmatprep.subr.mxu0 0.0
  %3352 = vmatpush2.msra.mxu0 0.0
  %3353 = vmatprep.mubr.f32.mxu0 0.0
  %3354 = vmatmul.mubr.f32.gmra.mxu0 %v3208
  %v3355 = vpop.f32.mrf.mxu0
  %v3356 = vadd.f32 0.0, %v3355
  %v3357 = vpop.f32.mrf.mxu0
  %3358 = vmatprep.mubr.f32.mxu0 0.0
  %3359 = vmatmul.mubr.f32.gmra.mxu0 %v3209
  %v3360 = vpop.f32.mrf.mxu0
  %v3361 = vadd.f32 0.0, %v3360
  %v3362 = vpop.f32.mrf.mxu0
  %3363 = vmatprep.mubr.f32.mxu0 0.0
  %3364 = vmatmul.mubr.f32.gmra.mxu0 %v3210
  %v3365 = vpop.f32.mrf.mxu0
  %v3366 = vadd.f32 0.0, %v3365
  %v3367 = vpop.f32.mrf.mxu0
  %3368 = vmatprep.mubr.f32.mxu0 0.0
  %3369 = vmatmul.mubr.f32.gmra.mxu0 %v3211
  %v3370 = vpop.f32.mrf.mxu0
  %v3371 = vadd.f32 0.0, %v3370
  %v3372 = vpop.f32.mrf.mxu0
  %3373 = vmatprep.mubr.f32.mxu0 0.0
  %3374 = vmatmul.mubr.f32.gmra.mxu0 %v3212
  %v3375 = vpop.f32.mrf.mxu0
  %v3376 = vadd.f32 0.0, %v3375
  %v3377 = vpop.f32.mrf.mxu0
  %3378 = vmatprep.mubr.f32.mxu0 0.0
  %3379 = vmatmul.mubr.f32.gmra.mxu0 %v3213
  %v3380 = vpop.f32.mrf.mxu0
  %v3381 = vadd.f32 0.0, %v3380
  %v3382 = vpop.f32.mrf.mxu0
  %3383 = vmatprep.mubr.f32.mxu0 0.0
  %3384 = vmatmul.mubr.f32.gmra.mxu0 %v3214
  %v3385 = vpop.f32.mrf.mxu0
  %v3386 = vadd.f32 0.0, %v3385
  %v3387 = vpop.f32.mrf.mxu0
  %3388 = vmatprep.mubr.f32.mxu0 0.0
  %3389 = vmatmul.mubr.f32.gmra.mxu0 %v3215
  %v3390 = vpop.f32.mrf.mxu0
  %v3391 = vadd.f32 0.0, %v3390
  %v3392 = vpop.f32.mrf.mxu0
  %3393 = vmatprep.mubr.f32.mxu0 0.0
  %3394 = vmatmul.mubr.f32.gmra.mxu0 %v3216
  %v3395 = vpop.f32.mrf.mxu0
  %v3396 = vadd.f32 0.0, %v3395
  %v3397 = vpop.f32.mrf.mxu0
  %3398 = vmatprep.mubr.f32.mxu0 0.0
  %3399 = vmatmul.mubr.f32.gmra.mxu0 %v3217
  %v3400 = vpop.f32.mrf.mxu0
  %v3401 = vadd.f32 0.0, %v3400
  %v3402 = vpop.f32.mrf.mxu0
  %3403 = vmatprep.mubr.f32.mxu0 0.0
  %3404 = vmatmul.mubr.f32.gmra.mxu0 %v3218
  %v3405 = vpop.f32.mrf.mxu0
  %v3406 = vadd.f32 0.0, %v3405
  %v3407 = vpop.f32.mrf.mxu0
  %3408 = vmatprep.mubr.f32.mxu0 0.0
  %3409 = vmatmul.mubr.f32.gmra.mxu0 %v3219
  %v3410 = vpop.f32.mrf.mxu0
  %v3411 = vadd.f32 0.0, %v3410
  %v3412 = vpop.f32.mrf.mxu0
  %3413 = vmatprep.mubr.f32.mxu0 0.0
  %3414 = vmatmul.mubr.f32.gmra.mxu0 %v3220
  %v3415 = vpop.f32.mrf.mxu0
  %v3416 = vadd.f32 0.0, %v3415
  %v3417 = vpop.f32.mrf.mxu0
  %3418 = vmatprep.mubr.f32.mxu0 0.0
  %3419 = vmatmul.mubr.f32.gmra.mxu0 %v3221
  %v3420 = vpop.f32.mrf.mxu0
  %v3421 = vadd.f32 0.0, %v3420
  %v3422 = vpop.f32.mrf.mxu0
  %3423 = vmatprep.mubr.f32.mxu0 0.0
  %3424 = vmatmul.mubr.f32.gmra.mxu0 %v3222
  %v3425 = vpop.f32.mrf.mxu0
  %v3426 = vadd.f32 0.0, %v3425
  %v3427 = vpop.f32.mrf.mxu0
  %3428 = vmatprep.mubr.f32.mxu0 0.0
  %3429 = vmatmul.mubr.f32.gmra.mxu0 %v3223
  %v3430 = vpop.f32.mrf.mxu0
  %v3431 = vadd.f32 0.0, %v3430
  %v3432 = vpop.f32.mrf.mxu0
  %3433 = vmatprep.mubr.f32.mxu0 0.0
  %3434 = vmatmul.mubr.f32.gmra.mxu0 %v3224
  %v3435 = vpop.f32.mrf.mxu0
  %v3436 = vadd.f32 0.0, %v3435
  %v3437 = vpop.f32.mrf.mxu0
  %3438 = vmatprep.mubr.f32.mxu0 0.0
  %3439 = vmatmul.mubr.f32.gmra.mxu0 %v3225
  %v3440 = vpop.f32.mrf.mxu0
  %v3441 = vadd.f32 0.0, %v3440
  %v3442 = vpop.f32.mrf.mxu0
  %3443 = vmatprep.mubr.f32.mxu0 0.0
  %3444 = vmatmul.mubr.f32.gmra.mxu0 %v3226
  %v3445 = vpop.f32.mrf.mxu0
  %v3446 = vadd.f32 0.0, %v3445
  %v3447 = vpop.f32.mrf.mxu0
  %3448 = vmatprep.mubr.f32.mxu0 0.0
  %3449 = vmatmul.mubr.f32.gmra.mxu0 %v3227
  %v3450 = vpop.f32.mrf.mxu0
  %v3451 = vadd.f32 0.0, %v3450
  %v3452 = vpop.f32.mrf.mxu0
  %3453 = vmatprep.mubr.f32.mxu0 0.0
  %3454 = vmatmul.mubr.f32.gmra.mxu0 %v3228
  %v3455 = vpop.f32.mrf.mxu0
  %v3456 = vadd.f32 0.0, %v3455
  %v3457 = vpop.f32.mrf.mxu0
  %3458 = vmatprep.mubr.f32.mxu0 0.0
  %3459 = vmatmul.mubr.f32.gmra.mxu0 %v3229
  %v3460 = vpop.f32.mrf.mxu0
  %v3461 = vadd.f32 0.0, %v3460
  %v3462 = vpop.f32.mrf.mxu0
  %3463 = vmatprep.mubr.f32.mxu0 0.0
  %3464 = vmatmul.mubr.f32.gmra.mxu0 %v3230
  %v3465 = vpop.f32.mrf.mxu0
  %v3466 = vadd.f32 0.0, %v3465
  %v3467 = vpop.f32.mrf.mxu0
  %3468 = vmatprep.mubr.f32.mxu0 0.0
  %3469 = vmatmul.mubr.f32.gmra.mxu0 %v3231
  %v3470 = vpop.f32.mrf.mxu0
  %v3471 = vadd.f32 0.0, %v3470
  %v3472 = vpop.f32.mrf.mxu0
  %3473 = vmatprep.mubr.f32.mxu0 0.0
  %3474 = vmatmul.mubr.f32.gmra.mxu0 %v3232
  %v3475 = vpop.f32.mrf.mxu0
  %v3476 = vadd.f32 0.0, %v3475
  %v3477 = vpop.f32.mrf.mxu0
  %3478 = vmatprep.mubr.f32.mxu0 0.0
  %3479 = vmatmul.mubr.f32.gmra.mxu0 %v3233
  %v3480 = vpop.f32.mrf.mxu0
  %v3481 = vadd.f32 0.0, %v3480
  %v3482 = vpop.f32.mrf.mxu0
  %3483 = vmatprep.mubr.f32.mxu0 0.0
  %3484 = vmatmul.mubr.f32.gmra.mxu0 %v3234
  %v3485 = vpop.f32.mrf.mxu0
  %v3486 = vadd.f32 0.0, %v3485
  %v3487 = vpop.f32.mrf.mxu0
  %3488 = vmatprep.mubr.f32.mxu0 0.0
  %3489 = vmatmul.mubr.f32.gmra.mxu0 %v3235
  %v3490 = vpop.f32.mrf.mxu0
  %v3491 = vadd.f32 0.0, %v3490
  %v3492 = vpop.f32.mrf.mxu0
  %3493 = vmatprep.mubr.f32.mxu0 0.0
  %3494 = vmatmul.mubr.f32.gmra.mxu0 %v3236
  %v3495 = vpop.f32.mrf.mxu0
  %v3496 = vadd.f32 0.0, %v3495
  %v3497 = vpop.f32.mrf.mxu0
  %3498 = vmatprep.mubr.f32.mxu0 0.0
  %3499 = vmatmul.mubr.f32.gmra.mxu0 %v3237
  %v3500 = vpop.f32.mrf.mxu0
  %v3501 = vadd.f32 0.0, %v3500
  %v3502 = vpop.f32.mrf.mxu0
  %3503 = vmatprep.mubr.f32.mxu0 0.0
  %3504 = vmatmul.mubr.f32.gmra.mxu0 %v3238
  %v3505 = vpop.f32.mrf.mxu0
  %v3506 = vadd.f32 0.0, %v3505
  %v3507 = vpop.f32.mrf.mxu0
  %3508 = vmatprep.mubr.f32.mxu0 0.0
  %3509 = vmatmul.mubr.f32.gmra.mxu0 %v3239
  %v3510 = vpop.f32.mrf.mxu0
  %v3511 = vadd.f32 0.0, %v3510
  %v3512 = vpop.f32.mrf.mxu0
  %3513 = vmatprep.mubr.f32.mxu0 0.0
  %3514 = vmatmul.mubr.f32.gmra.mxu0 %v3240
  %v3515 = vpop.f32.mrf.mxu0
  %v3516 = vadd.f32 0.0, %v3515
  %v3517 = vpop.f32.mrf.mxu0
  %3518 = vmatprep.mubr.f32.mxu0 0.0
  %3519 = vmatmul.mubr.f32.gmra.mxu0 %v3241
  %v3520 = vpop.f32.mrf.mxu0
  %v3521 = vadd.f32 0.0, %v3520
  %v3522 = vpop.f32.mrf.mxu0
  %3523 = vmatprep.mubr.f32.mxu0 0.0
  %3524 = vmatmul.mubr.f32.gmra.mxu0 %v3242
  %v3525 = vpop.f32.mrf.mxu0
  %v3526 = vadd.f32 0.0, %v3525
  %v3527 = vpop.f32.mrf.mxu0
  %3528 = vmatprep.mubr.f32.mxu0 0.0
  %3529 = vmatmul.mubr.f32.gmra.mxu0 %v3243
  %v3530 = vpop.f32.mrf.mxu0
  %v3531 = vadd.f32 0.0, %v3530
  %v3532 = vpop.f32.mrf.mxu0
  %3533 = vmatprep.mubr.f32.mxu0 0.0
  %3534 = vmatmul.mubr.f32.gmra.mxu0 %v3244
  %v3535 = vpop.f32.mrf.mxu0
  %v3536 = vadd.f32 0.0, %v3535
  %v3537 = vpop.f32.mrf.mxu0
  %3538 = vmatprep.mubr.f32.mxu0 0.0
  %3539 = vmatmul.mubr.f32.gmra.mxu0 %v3245
  %v3540 = vpop.f32.mrf.mxu0
  %v3541 = vadd.f32 0.0, %v3540
  %v3542 = vpop.f32.mrf.mxu0
  %3543 = vmatprep.mubr.f32.mxu0 0.0
  %3544 = vmatmul.mubr.f32.gmra.mxu0 %v3246
  %v3545 = vpop.f32.mrf.mxu0
  %v3546 = vadd.f32 0.0, %v3545
  %v3547 = vpop.f32.mrf.mxu0
  %3548 = vmatprep.mubr.f32.mxu0 0.0
  %3549 = vmatmul.mubr.f32.gmra.mxu0 %v3247
  %v3550 = vpop.f32.mrf.mxu0
  %v3551 = vadd.f32 0.0, %v3550
  %v3552 = vpop.f32.mrf.mxu0
  %3553 = vmatprep.mubr.f32.mxu0 0.0
  %3554 = vmatmul.mubr.f32.gmra.mxu0 %v3248
  %v3555 = vpop.f32.mrf.mxu0
  %v3556 = vadd.f32 0.0, %v3555
  %v3557 = vpop.f32.mrf.mxu0
  %3558 = vmatprep.mubr.f32.mxu0 0.0
  %3559 = vmatmul.mubr.f32.gmra.mxu0 %v3249
  %v3560 = vpop.f32.mrf.mxu0
  %v3561 = vadd.f32 0.0, %v3560
  %v3562 = vpop.f32.mrf.mxu0
  %3563 = vmatprep.mubr.f32.mxu0 0.0
  %3564 = vmatmul.mubr.f32.gmra.mxu0 %v3250
  %v3565 = vpop.f32.mrf.mxu0
  %v3566 = vadd.f32 0.0, %v3565
  %v3567 = vpop.f32.mrf.mxu0
  %3568 = vmatprep.mubr.f32.mxu0 0.0
  %3569 = vmatmul.mubr.f32.gmra.mxu0 %v3251
  %v3570 = vpop.f32.mrf.mxu0
  %v3571 = vadd.f32 0.0, %v3570
  %v3572 = vpop.f32.mrf.mxu0
  %3573 = vmatprep.mubr.f32.mxu0 0.0
  %3574 = vmatmul.mubr.f32.gmra.mxu0 %v3252
  %v3575 = vpop.f32.mrf.mxu0
  %v3576 = vadd.f32 0.0, %v3575
  %v3577 = vpop.f32.mrf.mxu0
  %3578 = vmatprep.mubr.f32.mxu0 0.0
  %3579 = vmatmul.mubr.f32.gmra.mxu0 %v3253
  %v3580 = vpop.f32.mrf.mxu0
  %v3581 = vadd.f32 0.0, %v3580
  %v3582 = vpop.f32.mrf.mxu0
  %3583 = vmatprep.mubr.f32.mxu0 0.0
  %3584 = vmatmul.mubr.f32.gmra.mxu0 %v3254
  %v3585 = vpop.f32.mrf.mxu0
  %v3586 = vadd.f32 0.0, %v3585
  %v3587 = vpop.f32.mrf.mxu0
  %3588 = vmatprep.mubr.f32.mxu0 0.0
  %3589 = vmatmul.mubr.f32.gmra.mxu0 %v3255
  %v3590 = vpop.f32.mrf.mxu0
  %v3591 = vadd.f32 0.0, %v3590
  %v3592 = vpop.f32.mrf.mxu0
  %3593 = vmatprep.mubr.f32.mxu0 0.0
  %3594 = vmatmul.mubr.f32.gmra.mxu0 %v3256
  %v3595 = vpop.f32.mrf.mxu0
  %v3596 = vadd.f32 0.0, %v3595
  %v3597 = vpop.f32.mrf.mxu0
  %3598 = vmatprep.mubr.f32.mxu0 0.0
  %3599 = vmatmul.mubr.f32.gmra.mxu0 %v3257
  %v3600 = vpop.f32.mrf.mxu0
  %v3601 = vadd.f32 0.0, %v3600
  %v3602 = vpop.f32.mrf.mxu0
  %3603 = vmatprep.mubr.f32.mxu0 0.0
  %3604 = vmatmul.mubr.f32.gmra.mxu0 %v3258
  %v3605 = vpop.f32.mrf.mxu0
  %v3606 = vadd.f32 0.0, %v3605
  %v3607 = vpop.f32.mrf.mxu0
  %3608 = vmatprep.mubr.f32.mxu0 0.0
  %3609 = vmatmul.mubr.f32.gmra.mxu0 %v3259
  %v3610 = vpop.f32.mrf.mxu0
  %v3611 = vadd.f32 0.0, %v3610
  %v3612 = vpop.f32.mrf.mxu0
  %3613 = vmatprep.mubr.f32.mxu0 0.0
  %3614 = vmatmul.mubr.f32.gmra.mxu0 %v3260
  %v3615 = vpop.f32.mrf.mxu0
  %v3616 = vadd.f32 0.0, %v3615
  %v3617 = vpop.f32.mrf.mxu0
  %3618 = vmatprep.mubr.f32.mxu0 0.0
  %3619 = vmatmul.mubr.f32.gmra.mxu0 %v3261
  %v3620 = vpop.f32.mrf.mxu0
  %v3621 = vadd.f32 0.0, %v3620
  %v3622 = vpop.f32.mrf.mxu0
  %3623 = vmatprep.mubr.f32.mxu0 0.0
  %3624 = vmatmul.mubr.f32.gmra.mxu0 %v3262
  %v3625 = vpop.f32.mrf.mxu0
  %v3626 = vadd.f32 0.0, %v3625
  %v3627 = vpop.f32.mrf.mxu0
  %3628 = vmatprep.mubr.f32.mxu0 0.0
  %3629 = vmatmul.mubr.f32.gmra.mxu0 %v3263
  %v3630 = vpop.f32.mrf.mxu0
  %v3631 = vadd.f32 0.0, %v3630
  %v3632 = vpop.f32.mrf.mxu0
  %3633 = vmatprep.mubr.f32.mxu0 0.0
  %3634 = vmatmul.mubr.f32.gmra.mxu0 %v3264
  %v3635 = vpop.f32.mrf.mxu0
  %v3636 = vadd.f32 0.0, %v3635
  %v3637 = vpop.f32.mrf.mxu0
  %3638 = vmatprep.mubr.f32.mxu0 0.0
  %3639 = vmatmul.mubr.f32.gmra.mxu0 %v3265
  %v3640 = vpop.f32.mrf.mxu0
  %v3641 = vadd.f32 0.0, %v3640
  %v3642 = vpop.f32.mrf.mxu0
  %3643 = vmatprep.mubr.f32.mxu0 0.0
  %3644 = vmatmul.mubr.f32.gmra.mxu0 %v3266
  %v3645 = vpop.f32.mrf.mxu0
  %v3646 = vadd.f32 0.0, %v3645
  %v3647 = vpop.f32.mrf.mxu0
  %3648 = vmatprep.mubr.f32.mxu0 0.0
  %3649 = vmatmul.mubr.f32.gmra.mxu0 %v3267
  %v3650 = vpop.f32.mrf.mxu0
  %v3651 = vadd.f32 0.0, %v3650
  %v3652 = vpop.f32.mrf.mxu0
  %3653 = vmatprep.mubr.f32.mxu0 0.0
  %3654 = vmatmul.mubr.f32.gmra.mxu0 %v3268
  %v3655 = vpop.f32.mrf.mxu0
  %v3656 = vadd.f32 0.0, %v3655
  %v3657 = vpop.f32.mrf.mxu0
  %3658 = vmatprep.mubr.f32.mxu0 0.0
  %3659 = vmatmul.mubr.f32.gmra.mxu0 %v3269
  %v3660 = vpop.f32.mrf.mxu0
  %v3661 = vadd.f32 0.0, %v3660
  %v3662 = vpop.f32.mrf.mxu0
  %3663 = vmatprep.mubr.f32.mxu0 0.0
  %3664 = vmatmul.mubr.f32.gmra.mxu0 %v3270
  %v3665 = vpop.f32.mrf.mxu0
  %v3666 = vadd.f32 0.0, %v3665
  %v3667 = vpop.f32.mrf.mxu0
  %3668 = vmatprep.mubr.f32.mxu0 0.0
  %3669 = vmatmul.mubr.f32.gmra.mxu0 %v3271
  %v3670 = vpop.f32.mrf.mxu0
  %v3671 = vadd.f32 0.0, %v3670
  %v3672 = vpop.f32.mrf.mxu0
  %3673 = vdwg.mxu0
  %v3674 = vadd.f32 %v3143, %v3356
  %v3675 = vadd.f32 %v3144, %v3361
  %v3676 = vadd.f32 %v3145, %v3366
  %v3677 = vadd.f32 %v3146, %v3371
  %v3678 = vadd.f32 %v3147, %v3376
  %v3679 = vadd.f32 %v3148, %v3381
  %v3680 = vadd.f32 %v3149, %v3386
  %v3681 = vadd.f32 %v3150, %v3391
  %v3682 = vadd.f32 %v3151, %v3396
  %v3683 = vadd.f32 %v3152, %v3401
  %v3684 = vadd.f32 %v3153, %v3406
  %v3685 = vadd.f32 %v3154, %v3411
  %v3686 = vadd.f32 %v3155, %v3416
  %v3687 = vadd.f32 %v3156, %v3421
  %v3688 = vadd.f32 %v3157, %v3426
  %v3689 = vadd.f32 %v3158, %v3431
  %v3690 = vadd.f32 %v3159, %v3436
  %v3691 = vadd.f32 %v3160, %v3441
  %v3692 = vadd.f32 %v3161, %v3446
  %v3693 = vadd.f32 %v3162, %v3451
  %v3694 = vadd.f32 %v3163, %v3456
  %v3695 = vadd.f32 %v3164, %v3461
  %v3696 = vadd.f32 %v3165, %v3466
  %v3697 = vadd.f32 %v3166, %v3471
  %v3698 = vadd.f32 %v3167, %v3476
  %v3699 = vadd.f32 %v3168, %v3481
  %v3700 = vadd.f32 %v3169, %v3486
  %v3701 = vadd.f32 %v3170, %v3491
  %v3702 = vadd.f32 %v3171, %v3496
  %v3703 = vadd.f32 %v3172, %v3501
  %v3704 = vadd.f32 %v3173, %v3506
  %v3705 = vadd.f32 %v3174, %v3511
  %v3706 = vadd.f32 %v3175, %v3516
  %v3707 = vadd.f32 %v3176, %v3521
  %v3708 = vadd.f32 %v3177, %v3526
  %v3709 = vadd.f32 %v3178, %v3531
  %v3710 = vadd.f32 %v3179, %v3536
  %v3711 = vadd.f32 %v3180, %v3541
  %v3712 = vadd.f32 %v3181, %v3546
  %v3713 = vadd.f32 %v3182, %v3551
  %v3714 = vadd.f32 %v3183, %v3556
  %v3715 = vadd.f32 %v3184, %v3561
  %v3716 = vadd.f32 %v3185, %v3566
  %v3717 = vadd.f32 %v3186, %v3571
  %v3718 = vadd.f32 %v3187, %v3576
  %v3719 = vadd.f32 %v3188, %v3581
  %v3720 = vadd.f32 %v3189, %v3586
  %v3721 = vadd.f32 %v3190, %v3591
  %v3722 = vadd.f32 %v3191, %v3596
  %v3723 = vadd.f32 %v3192, %v3601
  %v3724 = vadd.f32 %v3193, %v3606
  %v3725 = vadd.f32 %v3194, %v3611
  %v3726 = vadd.f32 %v3195, %v3616
  %v3727 = vadd.f32 %v3196, %v3621
  %v3728 = vadd.f32 %v3197, %v3626
  %v3729 = vadd.f32 %v3198, %v3631
  %v3730 = vadd.f32 %v3199, %v3636
  %v3731 = vadd.f32 %v3200, %v3641
  %v3732 = vadd.f32 %v3201, %v3646
  %v3733 = vadd.f32 %v3202, %v3651
  %v3734 = vadd.f32 %v3203, %v3656
  %v3735 = vadd.f32 %v3204, %v3661
  %v3736 = vadd.f32 %v3205, %v3666
  %v3737 = vadd.f32 %v3206, %v3671
  %v3738 = vld [vmem:[%s3207 + $0x1] sm:$0xff]
  %v3739 = vld [vmem:[%s3207 + $0x9] sm:$0xff]
  %v3740 = vld [vmem:[%s3207 + $0x19] sm:$0xff]
  %v3741 = vld [vmem:[%s3207 + $0x21] sm:$0xff]
  %v3742 = vld [vmem:[%s3207 + $0x31] sm:$0xff]
  %v3743 = vld [vmem:[%s3207 + $0x39] sm:$0xff]
  %v3744 = vld [vmem:[%s3207 + $0x49] sm:$0xff]
  %v3745 = vld [vmem:[%s3207 + $0x51] sm:$0xff]
  %v3746 = vld [vmem:[%s3207 + $0x61] sm:$0xff]
  %v3747 = vld [vmem:[%s3207 + $0x69] sm:$0xff]
  %v3748 = vld [vmem:[%s3207 + $0x79] sm:$0xff]
  %v3749 = vld [vmem:[%s3207 + $0x81] sm:$0xff]
  %v3750 = vld [vmem:[%s3207 + $0x91] sm:$0xff]
  %v3751 = vld [vmem:[%s3207 + $0x99] sm:$0xff]
  %v3752 = vld [vmem:[%s3207 + $0xa9] sm:$0xff]
  %v3753 = vld [vmem:[%s3207 + $0xb1] sm:$0xff]
  %v3754 = vld [vmem:[%s3207 + $0xc1] sm:$0xff]
  %v3755 = vld [vmem:[%s3207 + $0xc9] sm:$0xff]
  %v3756 = vld [vmem:[%s3207 + $0xd9] sm:$0xff]
  %v3757 = vld [vmem:[%s3207 + $0xe1] sm:$0xff]
  %v3758 = vld [vmem:[%s3207 + $0xf1] sm:$0xff]
  %v3759 = vld [vmem:[%s3207 + $0xf9] sm:$0xff]
  %v3760 = vld [vmem:[%s3207 + $0x109] sm:$0xff]
  %v3761 = vld [vmem:[%s3207 + $0x111] sm:$0xff]
  %v3762 = vld [vmem:[%s3207 + $0x121] sm:$0xff]
  %v3763 = vld [vmem:[%s3207 + $0x129] sm:$0xff]
  %v3764 = vld [vmem:[%s3207 + $0x139] sm:$0xff]
  %v3765 = vld [vmem:[%s3207 + $0x141] sm:$0xff]
  %v3766 = vld [vmem:[%s3207 + $0x151] sm:$0xff]
  %v3767 = vld [vmem:[%s3207 + $0x159] sm:$0xff]
  %v3768 = vld [vmem:[%s3207 + $0x169] sm:$0xff]
  %v3769 = vld [vmem:[%s3207 + $0x171] sm:$0xff]
  %v3770 = vld [vmem:[%s3207 + $0x1b1] sm:$0xff]
  %v3771 = vld [vmem:[%s3207 + $0x1b9] sm:$0xff]
  %v3772 = vld [vmem:[%s3207 + $0x1c9] sm:$0xff]
  %v3773 = vld [vmem:[%s3207 + $0x1d1] sm:$0xff]
  %v3774 = vld [vmem:[%s3207 + $0x1e1] sm:$0xff]
  %v3775 = vld [vmem:[%s3207 + $0x1e9] sm:$0xff]
  %v3776 = vld [vmem:[%s3207 + $0x1f9] sm:$0xff]
  %v3777 = vld [vmem:[%s3207 + $0x201] sm:$0xff]
  %v3778 = vld [vmem:[%s3207 + $0x211] sm:$0xff]
  %v3779 = vld [vmem:[%s3207 + $0x219] sm:$0xff]
  %v3780 = vld [vmem:[%s3207 + $0x229] sm:$0xff]
  %v3781 = vld [vmem:[%s3207 + $0x231] sm:$0xff]
  %v3782 = vld [vmem:[%s3207 + $0x241] sm:$0xff]
  %v3783 = vld [vmem:[%s3207 + $0x249] sm:$0xff]
  %v3784 = vld [vmem:[%s3207 + $0x259] sm:$0xff]
  %v3785 = vld [vmem:[%s3207 + $0x261] sm:$0xff]
  %v3786 = vld [vmem:[%s3207 + $0x271] sm:$0xff]
  %v3787 = vld [vmem:[%s3207 + $0x279] sm:$0xff]
  %v3788 = vld [vmem:[%s3207 + $0x289] sm:$0xff]
  %v3789 = vld [vmem:[%s3207 + $0x291] sm:$0xff]
  %v3790 = vld [vmem:[%s3207 + $0x2a1] sm:$0xff]
  %v3791 = vld [vmem:[%s3207 + $0x2a9] sm:$0xff]
  %v3792 = vld [vmem:[%s3207 + $0x2b9] sm:$0xff]
  %v3793 = vld [vmem:[%s3207 + $0x2c1] sm:$0xff]
  %v3794 = vld [vmem:[%s3207 + $0x2d1] sm:$0xff]
  %v3795 = vld [vmem:[%s3207 + $0x2d9] sm:$0xff]
  %v3796 = vld [vmem:[%s3207 + $0x2e9] sm:$0xff]
  %v3797 = vld [vmem:[%s3207 + $0x2f1] sm:$0xff]
  %v3798 = vld [vmem:[%s3207 + $0x301] sm:$0xff]
  %v3799 = vld [vmem:[%s3207 + $0x309] sm:$0xff]
  %v3800 = vld [vmem:[%s3207 + $0x319] sm:$0xff]
  %v3801 = vld [vmem:[%s3207 + $0x321] sm:$0xff]
  %s3802 = scalar_lea.vmem %s1, 896
  %v3803 = vld [vmem:[%s3802] sm:$0xff]
  %v3804 = vld [vmem:[%s3802 + $0x8] sm:$0xff]
  %v3805 = vld [vmem:[%s3802 + $0x10] sm:$0xff]
  %v3806 = vld [vmem:[%s3802 + $0x18] sm:$0xff]
  %v3807 = vld [vmem:[%s3802 + $0x20] sm:$0xff]
  %v3808 = vld [vmem:[%s3802 + $0x28] sm:$0xff]
  %v3809 = vld [vmem:[%s3802 + $0x30] sm:$0xff]
  %v3810 = vld [vmem:[%s3802 + $0x38] sm:$0xff]
  %v3811 = vld [vmem:[%s3802 + $0x40] sm:$0xff]
  %v3812 = vld [vmem:[%s3802 + $0x48] sm:$0xff]
  %v3813 = vld [vmem:[%s3802 + $0x50] sm:$0xff]
  %v3814 = vld [vmem:[%s3802 + $0x58] sm:$0xff]
  %v3815 = vld [vmem:[%s3802 + $0x60] sm:$0xff]
  %v3816 = vld [vmem:[%s3802 + $0x68] sm:$0xff]
  %v3817 = vld [vmem:[%s3802 + $0x70] sm:$0xff]
  %v3818 = vld [vmem:[%s3802 + $0x78] sm:$0xff]
  %3819 = vmatprep.subr.mxu0 0.0
  %3820 = vmatpush1.msra.mxu0 %v3818
  %3821 = vmatprep.subr.mxu0 0.0
  %3822 = vmatpush1.msra.mxu0 %v3817
  %3823 = vmatprep.subr.mxu0 0.0
  %3824 = vmatpush1.msra.mxu0 %v3816
  %3825 = vmatprep.subr.mxu0 0.0
  %3826 = vmatpush1.msra.mxu0 %v3815
  %3827 = vmatprep.subr.mxu0 0.0
  %3828 = vmatpush1.msra.mxu0 %v3814
  %3829 = vmatprep.subr.mxu0 0.0
  %3830 = vmatpush1.msra.mxu0 %v3813
  %3831 = vmatprep.subr.mxu0 0.0
  %3832 = vmatpush1.msra.mxu0 %v3812
  %3833 = vmatprep.subr.mxu0 0.0
  %3834 = vmatpush1.msra.mxu0 %v3811
  %3835 = vmatprep.subr.mxu0 0.0
  %3836 = vmatpush1.msra.mxu0 %v3810
  %3837 = vmatprep.subr.mxu0 0.0
  %3838 = vmatpush1.msra.mxu0 %v3809
  %3839 = vmatprep.subr.mxu0 0.0
  %3840 = vmatpush1.msra.mxu0 %v3808
  %3841 = vmatprep.subr.mxu0 0.0
  %3842 = vmatpush1.msra.mxu0 %v3807
  %3843 = vmatprep.subr.mxu0 0.0
  %3844 = vmatpush1.msra.mxu0 %v3806
  %3845 = vmatprep.subr.mxu0 0.0
  %3846 = vmatpush1.msra.mxu0 %v3805
  %3847 = vmatprep.subr.mxu0 0.0
  %3848 = vmatpush1.msra.mxu0 %v3804
  %3849 = vmatprep.subr.mxu0 0.0
  %3850 = vmatpush1.msra.mxu0 %v3803
  %3851 = vmatprep.subr.mxu0 0.0
  %3852 = vmatpush2.msra.mxu0 0.0
  %3853 = vmatprep.subr.mxu0 0.0
  %3854 = vmatpush2.msra.mxu0 0.0
  %3855 = vmatprep.subr.mxu0 0.0
  %3856 = vmatpush2.msra.mxu0 0.0
  %3857 = vmatprep.subr.mxu0 0.0
  %3858 = vmatpush2.msra.mxu0 0.0
  %3859 = vmatprep.subr.mxu0 0.0
  %3860 = vmatpush2.msra.mxu0 0.0
  %3861 = vmatprep.subr.mxu0 0.0
  %3862 = vmatpush2.msra.mxu0 0.0
  %3863 = vmatprep.subr.mxu0 0.0
  %3864 = vmatpush2.msra.mxu0 0.0
  %3865 = vmatprep.subr.mxu0 0.0
  %3866 = vmatpush2.msra.mxu0 0.0
  %3867 = vmatprep.subr.mxu0 0.0
  %3868 = vmatpush2.msra.mxu0 0.0
  %3869 = vmatprep.subr.mxu0 0.0
  %3870 = vmatpush2.msra.mxu0 0.0
  %3871 = vmatprep.subr.mxu0 0.0
  %3872 = vmatpush2.msra.mxu0 0.0
  %3873 = vmatprep.subr.mxu0 0.0
  %3874 = vmatpush2.msra.mxu0 0.0
  %3875 = vmatprep.subr.mxu0 0.0
  %3876 = vmatpush2.msra.mxu0 0.0
  %3877 = vmatprep.subr.mxu0 0.0
  %3878 = vmatpush2.msra.mxu0 0.0
  %3879 = vmatprep.subr.mxu0 0.0
  %3880 = vmatpush2.msra.mxu0 0.0
  %3881 = vmatprep.subr.mxu0 0.0
  %3882 = vmatpush2.msra.mxu0 0.0
  %3883 = vmatprep.mubr.f32.mxu0 0.0
  %3884 = vmatmul.mubr.f32.gmra.mxu0 %v3738
  %v3885 = vpop.f32.mrf.mxu0
  %v3886 = vadd.f32 0.0, %v3885
  %v3887 = vpop.f32.mrf.mxu0
  %3888 = vmatprep.mubr.f32.mxu0 0.0
  %3889 = vmatmul.mubr.f32.gmra.mxu0 %v3739
  %v3890 = vpop.f32.mrf.mxu0
  %v3891 = vadd.f32 0.0, %v3890
  %v3892 = vpop.f32.mrf.mxu0
  %3893 = vmatprep.mubr.f32.mxu0 0.0
  %3894 = vmatmul.mubr.f32.gmra.mxu0 %v3740
  %v3895 = vpop.f32.mrf.mxu0
  %v3896 = vadd.f32 0.0, %v3895
  %v3897 = vpop.f32.mrf.mxu0
  %3898 = vmatprep.mubr.f32.mxu0 0.0
  %3899 = vmatmul.mubr.f32.gmra.mxu0 %v3741
  %v3900 = vpop.f32.mrf.mxu0
  %v3901 = vadd.f32 0.0, %v3900
  %v3902 = vpop.f32.mrf.mxu0
  %3903 = vmatprep.mubr.f32.mxu0 0.0
  %3904 = vmatmul.mubr.f32.gmra.mxu0 %v3742
  %v3905 = vpop.f32.mrf.mxu0
  %v3906 = vadd.f32 0.0, %v3905
  %v3907 = vpop.f32.mrf.mxu0
  %3908 = vmatprep.mubr.f32.mxu0 0.0
  %3909 = vmatmul.mubr.f32.gmra.mxu0 %v3743
  %v3910 = vpop.f32.mrf.mxu0
  %v3911 = vadd.f32 0.0, %v3910
  %v3912 = vpop.f32.mrf.mxu0
  %3913 = vmatprep.mubr.f32.mxu0 0.0
  %3914 = vmatmul.mubr.f32.gmra.mxu0 %v3744
  %v3915 = vpop.f32.mrf.mxu0
  %v3916 = vadd.f32 0.0, %v3915
  %v3917 = vpop.f32.mrf.mxu0
  %3918 = vmatprep.mubr.f32.mxu0 0.0
  %3919 = vmatmul.mubr.f32.gmra.mxu0 %v3745
  %v3920 = vpop.f32.mrf.mxu0
  %v3921 = vadd.f32 0.0, %v3920
  %v3922 = vpop.f32.mrf.mxu0
  %3923 = vmatprep.mubr.f32.mxu0 0.0
  %3924 = vmatmul.mubr.f32.gmra.mxu0 %v3746
  %v3925 = vpop.f32.mrf.mxu0
  %v3926 = vadd.f32 0.0, %v3925
  %v3927 = vpop.f32.mrf.mxu0
  %3928 = vmatprep.mubr.f32.mxu0 0.0
  %3929 = vmatmul.mubr.f32.gmra.mxu0 %v3747
  %v3930 = vpop.f32.mrf.mxu0
  %v3931 = vadd.f32 0.0, %v3930
  %v3932 = vpop.f32.mrf.mxu0
  %3933 = vmatprep.mubr.f32.mxu0 0.0
  %3934 = vmatmul.mubr.f32.gmra.mxu0 %v3748
  %v3935 = vpop.f32.mrf.mxu0
  %v3936 = vadd.f32 0.0, %v3935
  %v3937 = vpop.f32.mrf.mxu0
  %3938 = vmatprep.mubr.f32.mxu0 0.0
  %3939 = vmatmul.mubr.f32.gmra.mxu0 %v3749
  %v3940 = vpop.f32.mrf.mxu0
  %v3941 = vadd.f32 0.0, %v3940
  %v3942 = vpop.f32.mrf.mxu0
  %3943 = vmatprep.mubr.f32.mxu0 0.0
  %3944 = vmatmul.mubr.f32.gmra.mxu0 %v3750
  %v3945 = vpop.f32.mrf.mxu0
  %v3946 = vadd.f32 0.0, %v3945
  %v3947 = vpop.f32.mrf.mxu0
  %3948 = vmatprep.mubr.f32.mxu0 0.0
  %3949 = vmatmul.mubr.f32.gmra.mxu0 %v3751
  %v3950 = vpop.f32.mrf.mxu0
  %v3951 = vadd.f32 0.0, %v3950
  %v3952 = vpop.f32.mrf.mxu0
  %3953 = vmatprep.mubr.f32.mxu0 0.0
  %3954 = vmatmul.mubr.f32.gmra.mxu0 %v3752
  %v3955 = vpop.f32.mrf.mxu0
  %v3956 = vadd.f32 0.0, %v3955
  %v3957 = vpop.f32.mrf.mxu0
  %3958 = vmatprep.mubr.f32.mxu0 0.0
  %3959 = vmatmul.mubr.f32.gmra.mxu0 %v3753
  %v3960 = vpop.f32.mrf.mxu0
  %v3961 = vadd.f32 0.0, %v3960
  %v3962 = vpop.f32.mrf.mxu0
  %3963 = vmatprep.mubr.f32.mxu0 0.0
  %3964 = vmatmul.mubr.f32.gmra.mxu0 %v3754
  %v3965 = vpop.f32.mrf.mxu0
  %v3966 = vadd.f32 0.0, %v3965
  %v3967 = vpop.f32.mrf.mxu0
  %3968 = vmatprep.mubr.f32.mxu0 0.0
  %3969 = vmatmul.mubr.f32.gmra.mxu0 %v3755
  %v3970 = vpop.f32.mrf.mxu0
  %v3971 = vadd.f32 0.0, %v3970
  %v3972 = vpop.f32.mrf.mxu0
  %3973 = vmatprep.mubr.f32.mxu0 0.0
  %3974 = vmatmul.mubr.f32.gmra.mxu0 %v3756
  %v3975 = vpop.f32.mrf.mxu0
  %v3976 = vadd.f32 0.0, %v3975
  %v3977 = vpop.f32.mrf.mxu0
  %3978 = vmatprep.mubr.f32.mxu0 0.0
  %3979 = vmatmul.mubr.f32.gmra.mxu0 %v3757
  %v3980 = vpop.f32.mrf.mxu0
  %v3981 = vadd.f32 0.0, %v3980
  %v3982 = vpop.f32.mrf.mxu0
  %3983 = vmatprep.mubr.f32.mxu0 0.0
  %3984 = vmatmul.mubr.f32.gmra.mxu0 %v3758
  %v3985 = vpop.f32.mrf.mxu0
  %v3986 = vadd.f32 0.0, %v3985
  %v3987 = vpop.f32.mrf.mxu0
  %3988 = vmatprep.mubr.f32.mxu0 0.0
  %3989 = vmatmul.mubr.f32.gmra.mxu0 %v3759
  %v3990 = vpop.f32.mrf.mxu0
  %v3991 = vadd.f32 0.0, %v3990
  %v3992 = vpop.f32.mrf.mxu0
  %3993 = vmatprep.mubr.f32.mxu0 0.0
  %3994 = vmatmul.mubr.f32.gmra.mxu0 %v3760
  %v3995 = vpop.f32.mrf.mxu0
  %v3996 = vadd.f32 0.0, %v3995
  %v3997 = vpop.f32.mrf.mxu0
  %3998 = vmatprep.mubr.f32.mxu0 0.0
  %3999 = vmatmul.mubr.f32.gmra.mxu0 %v3761
  %v4000 = vpop.f32.mrf.mxu0
  %v4001 = vadd.f32 0.0, %v4000
  %v4002 = vpop.f32.mrf.mxu0
  %4003 = vmatprep.mubr.f32.mxu0 0.0
  %4004 = vmatmul.mubr.f32.gmra.mxu0 %v3762
  %v4005 = vpop.f32.mrf.mxu0
  %v4006 = vadd.f32 0.0, %v4005
  %v4007 = vpop.f32.mrf.mxu0
  %4008 = vmatprep.mubr.f32.mxu0 0.0
  %4009 = vmatmul.mubr.f32.gmra.mxu0 %v3763
  %v4010 = vpop.f32.mrf.mxu0
  %v4011 = vadd.f32 0.0, %v4010
  %v4012 = vpop.f32.mrf.mxu0
  %4013 = vmatprep.mubr.f32.mxu0 0.0
  %4014 = vmatmul.mubr.f32.gmra.mxu0 %v3764
  %v4015 = vpop.f32.mrf.mxu0
  %v4016 = vadd.f32 0.0, %v4015
  %v4017 = vpop.f32.mrf.mxu0
  %4018 = vmatprep.mubr.f32.mxu0 0.0
  %4019 = vmatmul.mubr.f32.gmra.mxu0 %v3765
  %v4020 = vpop.f32.mrf.mxu0
  %v4021 = vadd.f32 0.0, %v4020
  %v4022 = vpop.f32.mrf.mxu0
  %4023 = vmatprep.mubr.f32.mxu0 0.0
  %4024 = vmatmul.mubr.f32.gmra.mxu0 %v3766
  %v4025 = vpop.f32.mrf.mxu0
  %v4026 = vadd.f32 0.0, %v4025
  %v4027 = vpop.f32.mrf.mxu0
  %4028 = vmatprep.mubr.f32.mxu0 0.0
  %4029 = vmatmul.mubr.f32.gmra.mxu0 %v3767
  %v4030 = vpop.f32.mrf.mxu0
  %v4031 = vadd.f32 0.0, %v4030
  %v4032 = vpop.f32.mrf.mxu0
  %4033 = vmatprep.mubr.f32.mxu0 0.0
  %4034 = vmatmul.mubr.f32.gmra.mxu0 %v3768
  %v4035 = vpop.f32.mrf.mxu0
  %v4036 = vadd.f32 0.0, %v4035
  %v4037 = vpop.f32.mrf.mxu0
  %4038 = vmatprep.mubr.f32.mxu0 0.0
  %4039 = vmatmul.mubr.f32.gmra.mxu0 %v3769
  %v4040 = vpop.f32.mrf.mxu0
  %v4041 = vadd.f32 0.0, %v4040
  %v4042 = vpop.f32.mrf.mxu0
  %4043 = vmatprep.mubr.f32.mxu0 0.0
  %4044 = vmatmul.mubr.f32.gmra.mxu0 %v3770
  %v4045 = vpop.f32.mrf.mxu0
  %v4046 = vadd.f32 0.0, %v4045
  %v4047 = vpop.f32.mrf.mxu0
  %4048 = vmatprep.mubr.f32.mxu0 0.0
  %4049 = vmatmul.mubr.f32.gmra.mxu0 %v3771
  %v4050 = vpop.f32.mrf.mxu0
  %v4051 = vadd.f32 0.0, %v4050
  %v4052 = vpop.f32.mrf.mxu0
  %4053 = vmatprep.mubr.f32.mxu0 0.0
  %4054 = vmatmul.mubr.f32.gmra.mxu0 %v3772
  %v4055 = vpop.f32.mrf.mxu0
  %v4056 = vadd.f32 0.0, %v4055
  %v4057 = vpop.f32.mrf.mxu0
  %4058 = vmatprep.mubr.f32.mxu0 0.0
  %4059 = vmatmul.mubr.f32.gmra.mxu0 %v3773
  %v4060 = vpop.f32.mrf.mxu0
  %v4061 = vadd.f32 0.0, %v4060
  %v4062 = vpop.f32.mrf.mxu0
  %4063 = vmatprep.mubr.f32.mxu0 0.0
  %4064 = vmatmul.mubr.f32.gmra.mxu0 %v3774
  %v4065 = vpop.f32.mrf.mxu0
  %v4066 = vadd.f32 0.0, %v4065
  %v4067 = vpop.f32.mrf.mxu0
  %4068 = vmatprep.mubr.f32.mxu0 0.0
  %4069 = vmatmul.mubr.f32.gmra.mxu0 %v3775
  %v4070 = vpop.f32.mrf.mxu0
  %v4071 = vadd.f32 0.0, %v4070
  %v4072 = vpop.f32.mrf.mxu0
  %4073 = vmatprep.mubr.f32.mxu0 0.0
  %4074 = vmatmul.mubr.f32.gmra.mxu0 %v3776
  %v4075 = vpop.f32.mrf.mxu0
  %v4076 = vadd.f32 0.0, %v4075
  %v4077 = vpop.f32.mrf.mxu0
  %4078 = vmatprep.mubr.f32.mxu0 0.0
  %4079 = vmatmul.mubr.f32.gmra.mxu0 %v3777
  %v4080 = vpop.f32.mrf.mxu0
  %v4081 = vadd.f32 0.0, %v4080
  %v4082 = vpop.f32.mrf.mxu0
  %4083 = vmatprep.mubr.f32.mxu0 0.0
  %4084 = vmatmul.mubr.f32.gmra.mxu0 %v3778
  %v4085 = vpop.f32.mrf.mxu0
  %v4086 = vadd.f32 0.0, %v4085
  %v4087 = vpop.f32.mrf.mxu0
  %4088 = vmatprep.mubr.f32.mxu0 0.0
  %4089 = vmatmul.mubr.f32.gmra.mxu0 %v3779
  %v4090 = vpop.f32.mrf.mxu0
  %v4091 = vadd.f32 0.0, %v4090
  %v4092 = vpop.f32.mrf.mxu0
  %4093 = vmatprep.mubr.f32.mxu0 0.0
  %4094 = vmatmul.mubr.f32.gmra.mxu0 %v3780
  %v4095 = vpop.f32.mrf.mxu0
  %v4096 = vadd.f32 0.0, %v4095
  %v4097 = vpop.f32.mrf.mxu0
  %4098 = vmatprep.mubr.f32.mxu0 0.0
  %4099 = vmatmul.mubr.f32.gmra.mxu0 %v3781
  %v4100 = vpop.f32.mrf.mxu0
  %v4101 = vadd.f32 0.0, %v4100
  %v4102 = vpop.f32.mrf.mxu0
  %4103 = vmatprep.mubr.f32.mxu0 0.0
  %4104 = vmatmul.mubr.f32.gmra.mxu0 %v3782
  %v4105 = vpop.f32.mrf.mxu0
  %v4106 = vadd.f32 0.0, %v4105
  %v4107 = vpop.f32.mrf.mxu0
  %4108 = vmatprep.mubr.f32.mxu0 0.0
  %4109 = vmatmul.mubr.f32.gmra.mxu0 %v3783
  %v4110 = vpop.f32.mrf.mxu0
  %v4111 = vadd.f32 0.0, %v4110
  %v4112 = vpop.f32.mrf.mxu0
  %4113 = vmatprep.mubr.f32.mxu0 0.0
  %4114 = vmatmul.mubr.f32.gmra.mxu0 %v3784
  %v4115 = vpop.f32.mrf.mxu0
  %v4116 = vadd.f32 0.0, %v4115
  %v4117 = vpop.f32.mrf.mxu0
  %4118 = vmatprep.mubr.f32.mxu0 0.0
  %4119 = vmatmul.mubr.f32.gmra.mxu0 %v3785
  %v4120 = vpop.f32.mrf.mxu0
  %v4121 = vadd.f32 0.0, %v4120
  %v4122 = vpop.f32.mrf.mxu0
  %4123 = vmatprep.mubr.f32.mxu0 0.0
  %4124 = vmatmul.mubr.f32.gmra.mxu0 %v3786
  %v4125 = vpop.f32.mrf.mxu0
  %v4126 = vadd.f32 0.0, %v4125
  %v4127 = vpop.f32.mrf.mxu0
  %4128 = vmatprep.mubr.f32.mxu0 0.0
  %4129 = vmatmul.mubr.f32.gmra.mxu0 %v3787
  %v4130 = vpop.f32.mrf.mxu0
  %v4131 = vadd.f32 0.0, %v4130
  %v4132 = vpop.f32.mrf.mxu0
  %4133 = vmatprep.mubr.f32.mxu0 0.0
  %4134 = vmatmul.mubr.f32.gmra.mxu0 %v3788
  %v4135 = vpop.f32.mrf.mxu0
  %v4136 = vadd.f32 0.0, %v4135
  %v4137 = vpop.f32.mrf.mxu0
  %4138 = vmatprep.mubr.f32.mxu0 0.0
  %4139 = vmatmul.mubr.f32.gmra.mxu0 %v3789
  %v4140 = vpop.f32.mrf.mxu0
  %v4141 = vadd.f32 0.0, %v4140
  %v4142 = vpop.f32.mrf.mxu0
  %4143 = vmatprep.mubr.f32.mxu0 0.0
  %4144 = vmatmul.mubr.f32.gmra.mxu0 %v3790
  %v4145 = vpop.f32.mrf.mxu0
  %v4146 = vadd.f32 0.0, %v4145
  %v4147 = vpop.f32.mrf.mxu0
  %4148 = vmatprep.mubr.f32.mxu0 0.0
  %4149 = vmatmul.mubr.f32.gmra.mxu0 %v3791
  %v4150 = vpop.f32.mrf.mxu0
  %v4151 = vadd.f32 0.0, %v4150
  %v4152 = vpop.f32.mrf.mxu0
  %4153 = vmatprep.mubr.f32.mxu0 0.0
  %4154 = vmatmul.mubr.f32.gmra.mxu0 %v3792
  %v4155 = vpop.f32.mrf.mxu0
  %v4156 = vadd.f32 0.0, %v4155
  %v4157 = vpop.f32.mrf.mxu0
  %4158 = vmatprep.mubr.f32.mxu0 0.0
  %4159 = vmatmul.mubr.f32.gmra.mxu0 %v3793
  %v4160 = vpop.f32.mrf.mxu0
  %v4161 = vadd.f32 0.0, %v4160
  %v4162 = vpop.f32.mrf.mxu0
  %4163 = vmatprep.mubr.f32.mxu0 0.0
  %4164 = vmatmul.mubr.f32.gmra.mxu0 %v3794
  %v4165 = vpop.f32.mrf.mxu0
  %v4166 = vadd.f32 0.0, %v4165
  %v4167 = vpop.f32.mrf.mxu0
  %4168 = vmatprep.mubr.f32.mxu0 0.0
  %4169 = vmatmul.mubr.f32.gmra.mxu0 %v3795
  %v4170 = vpop.f32.mrf.mxu0
  %v4171 = vadd.f32 0.0, %v4170
  %v4172 = vpop.f32.mrf.mxu0
  %4173 = vmatprep.mubr.f32.mxu0 0.0
  %4174 = vmatmul.mubr.f32.gmra.mxu0 %v3796
  %v4175 = vpop.f32.mrf.mxu0
  %v4176 = vadd.f32 0.0, %v4175
  %v4177 = vpop.f32.mrf.mxu0
  %4178 = vmatprep.mubr.f32.mxu0 0.0
  %4179 = vmatmul.mubr.f32.gmra.mxu0 %v3797
  %v4180 = vpop.f32.mrf.mxu0
  %v4181 = vadd.f32 0.0, %v4180
  %v4182 = vpop.f32.mrf.mxu0
  %4183 = vmatprep.mubr.f32.mxu0 0.0
  %4184 = vmatmul.mubr.f32.gmra.mxu0 %v3798
  %v4185 = vpop.f32.mrf.mxu0
  %v4186 = vadd.f32 0.0, %v4185
  %v4187 = vpop.f32.mrf.mxu0
  %4188 = vmatprep.mubr.f32.mxu0 0.0
  %4189 = vmatmul.mubr.f32.gmra.mxu0 %v3799
  %v4190 = vpop.f32.mrf.mxu0
  %v4191 = vadd.f32 0.0, %v4190
  %v4192 = vpop.f32.mrf.mxu0
  %4193 = vmatprep.mubr.f32.mxu0 0.0
  %4194 = vmatmul.mubr.f32.gmra.mxu0 %v3800
  %v4195 = vpop.f32.mrf.mxu0
  %v4196 = vadd.f32 0.0, %v4195
  %v4197 = vpop.f32.mrf.mxu0
  %4198 = vmatprep.mubr.f32.mxu0 0.0
  %4199 = vmatmul.mubr.f32.gmra.mxu0 %v3801
  %v4200 = vpop.f32.mrf.mxu0
  %v4201 = vadd.f32 0.0, %v4200
  %v4202 = vpop.f32.mrf.mxu0
  %4203 = vdwg.mxu0
  %v4204 = vadd.f32 %v3674, %v3886
  %v4205 = vadd.f32 %v3675, %v3891
  %v4206 = vadd.f32 %v3676, %v3896
  %v4207 = vadd.f32 %v3677, %v3901
  %v4208 = vadd.f32 %v3678, %v3906
  %v4209 = vadd.f32 %v3679, %v3911
  %v4210 = vadd.f32 %v3680, %v3916
  %v4211 = vadd.f32 %v3681, %v3921
  %v4212 = vadd.f32 %v3682, %v3926
  %v4213 = vadd.f32 %v3683, %v3931
  %v4214 = vadd.f32 %v3684, %v3936
  %v4215 = vadd.f32 %v3685, %v3941
  %v4216 = vadd.f32 %v3686, %v3946
  %v4217 = vadd.f32 %v3687, %v3951
  %v4218 = vadd.f32 %v3688, %v3956
  %v4219 = vadd.f32 %v3689, %v3961
  %v4220 = vadd.f32 %v3690, %v3966
  %v4221 = vadd.f32 %v3691, %v3971
  %v4222 = vadd.f32 %v3692, %v3976
  %v4223 = vadd.f32 %v3693, %v3981
  %v4224 = vadd.f32 %v3694, %v3986
  %v4225 = vadd.f32 %v3695, %v3991
  %v4226 = vadd.f32 %v3696, %v3996
  %v4227 = vadd.f32 %v3697, %v4001
  %v4228 = vadd.f32 %v3698, %v4006
  %v4229 = vadd.f32 %v3699, %v4011
  %v4230 = vadd.f32 %v3700, %v4016
  %v4231 = vadd.f32 %v3701, %v4021
  %v4232 = vadd.f32 %v3702, %v4026
  %v4233 = vadd.f32 %v3703, %v4031
  %v4234 = vadd.f32 %v3704, %v4036
  %v4235 = vadd.f32 %v3705, %v4041
  %v4236 = vadd.f32 %v3706, %v4046
  %v4237 = vadd.f32 %v3707, %v4051
  %v4238 = vadd.f32 %v3708, %v4056
  %v4239 = vadd.f32 %v3709, %v4061
  %v4240 = vadd.f32 %v3710, %v4066
  %v4241 = vadd.f32 %v3711, %v4071
  %v4242 = vadd.f32 %v3712, %v4076
  %v4243 = vadd.f32 %v3713, %v4081
  %v4244 = vadd.f32 %v3714, %v4086
  %v4245 = vadd.f32 %v3715, %v4091
  %v4246 = vadd.f32 %v3716, %v4096
  %v4247 = vadd.f32 %v3717, %v4101
  %v4248 = vadd.f32 %v3718, %v4106
  %v4249 = vadd.f32 %v3719, %v4111
  %v4250 = vadd.f32 %v3720, %v4116
  %v4251 = vadd.f32 %v3721, %v4121
  %v4252 = vadd.f32 %v3722, %v4126
  %v4253 = vadd.f32 %v3723, %v4131
  %v4254 = vadd.f32 %v3724, %v4136
  %v4255 = vadd.f32 %v3725, %v4141
  %v4256 = vadd.f32 %v3726, %v4146
  %v4257 = vadd.f32 %v3727, %v4151
  %v4258 = vadd.f32 %v3728, %v4156
  %v4259 = vadd.f32 %v3729, %v4161
  %v4260 = vadd.f32 %v3730, %v4166
  %v4261 = vadd.f32 %v3731, %v4171
  %v4262 = vadd.f32 %v3732, %v4176
  %v4263 = vadd.f32 %v3733, %v4181
  %v4264 = vadd.f32 %v3734, %v4186
  %v4265 = vadd.f32 %v3735, %v4191
  %v4266 = vadd.f32 %v3736, %v4196
  %v4267 = vadd.f32 %v3737, %v4201
  %v4268 = vld [vmem:[%s3207 + $0x2] sm:$0xff]
  %v4269 = vld [vmem:[%s3207 + $0xa] sm:$0xff]
  %v4270 = vld [vmem:[%s3207 + $0x1a] sm:$0xff]
  %v4271 = vld [vmem:[%s3207 + $0x22] sm:$0xff]
  %v4272 = vld [vmem:[%s3207 + $0x32] sm:$0xff]
  %v4273 = vld [vmem:[%s3207 + $0x3a] sm:$0xff]
  %v4274 = vld [vmem:[%s3207 + $0x4a] sm:$0xff]
  %v4275 = vld [vmem:[%s3207 + $0x52] sm:$0xff]
  %v4276 = vld [vmem:[%s3207 + $0x62] sm:$0xff]
  %v4277 = vld [vmem:[%s3207 + $0x6a] sm:$0xff]
  %v4278 = vld [vmem:[%s3207 + $0x7a] sm:$0xff]
  %v4279 = vld [vmem:[%s3207 + $0x82] sm:$0xff]
  %v4280 = vld [vmem:[%s3207 + $0x92] sm:$0xff]
  %v4281 = vld [vmem:[%s3207 + $0x9a] sm:$0xff]
  %v4282 = vld [vmem:[%s3207 + $0xaa] sm:$0xff]
  %v4283 = vld [vmem:[%s3207 + $0xb2] sm:$0xff]
  %v4284 = vld [vmem:[%s3207 + $0xc2] sm:$0xff]
  %v4285 = vld [vmem:[%s3207 + $0xca] sm:$0xff]
  %v4286 = vld [vmem:[%s3207 + $0xda] sm:$0xff]
  %v4287 = vld [vmem:[%s3207 + $0xe2] sm:$0xff]
  %v4288 = vld [vmem:[%s3207 + $0xf2] sm:$0xff]
  %v4289 = vld [vmem:[%s3207 + $0xfa] sm:$0xff]
  %v4290 = vld [vmem:[%s3207 + $0x10a] sm:$0xff]
  %v4291 = vld [vmem:[%s3207 + $0x112] sm:$0xff]
  %v4292 = vld [vmem:[%s3207 + $0x122] sm:$0xff]
  %v4293 = vld [vmem:[%s3207 + $0x12a] sm:$0xff]
  %v4294 = vld [vmem:[%s3207 + $0x13a] sm:$0xff]
  %v4295 = vld [vmem:[%s3207 + $0x142] sm:$0xff]
  %v4296 = vld [vmem:[%s3207 + $0x152] sm:$0xff]
  %v4297 = vld [vmem:[%s3207 + $0x15a] sm:$0xff]
  %v4298 = vld [vmem:[%s3207 + $0x16a] sm:$0xff]
  %v4299 = vld [vmem:[%s3207 + $0x172] sm:$0xff]
  %v4300 = vld [vmem:[%s3207 + $0x1b2] sm:$0xff]
  %v4301 = vld [vmem:[%s3207 + $0x1ba] sm:$0xff]
  %v4302 = vld [vmem:[%s3207 + $0x1ca] sm:$0xff]
  %v4303 = vld [vmem:[%s3207 + $0x1d2] sm:$0xff]
  %v4304 = vld [vmem:[%s3207 + $0x1e2] sm:$0xff]
  %v4305 = vld [vmem:[%s3207 + $0x1ea] sm:$0xff]
  %v4306 = vld [vmem:[%s3207 + $0x1fa] sm:$0xff]
  %v4307 = vld [vmem:[%s3207 + $0x202] sm:$0xff]
  %v4308 = vld [vmem:[%s3207 + $0x212] sm:$0xff]
  %v4309 = vld [vmem:[%s3207 + $0x21a] sm:$0xff]
  %v4310 = vld [vmem:[%s3207 + $0x22a] sm:$0xff]
  %v4311 = vld [vmem:[%s3207 + $0x232] sm:$0xff]
  %v4312 = vld [vmem:[%s3207 + $0x242] sm:$0xff]
  %v4313 = vld [vmem:[%s3207 + $0x24a] sm:$0xff]
  %v4314 = vld [vmem:[%s3207 + $0x25a] sm:$0xff]
  %v4315 = vld [vmem:[%s3207 + $0x262] sm:$0xff]
  %v4316 = vld [vmem:[%s3207 + $0x272] sm:$0xff]
  %v4317 = vld [vmem:[%s3207 + $0x27a] sm:$0xff]
  %v4318 = vld [vmem:[%s3207 + $0x28a] sm:$0xff]
  %v4319 = vld [vmem:[%s3207 + $0x292] sm:$0xff]
  %v4320 = vld [vmem:[%s3207 + $0x2a2] sm:$0xff]
  %v4321 = vld [vmem:[%s3207 + $0x2aa] sm:$0xff]
  %v4322 = vld [vmem:[%s3207 + $0x2ba] sm:$0xff]
  %v4323 = vld [vmem:[%s3207 + $0x2c2] sm:$0xff]
  %v4324 = vld [vmem:[%s3207 + $0x2d2] sm:$0xff]
  %v4325 = vld [vmem:[%s3207 + $0x2da] sm:$0xff]
  %v4326 = vld [vmem:[%s3207 + $0x2ea] sm:$0xff]
  %v4327 = vld [vmem:[%s3207 + $0x2f2] sm:$0xff]
  %v4328 = vld [vmem:[%s3207 + $0x302] sm:$0xff]
  %v4329 = vld [vmem:[%s3207 + $0x30a] sm:$0xff]
  %v4330 = vld [vmem:[%s3207 + $0x31a] sm:$0xff]
  %v4331 = vld [vmem:[%s3207 + $0x322] sm:$0xff]
  %s4332 = scalar_lea.vmem %s1, 1024
  %v4333 = vld [vmem:[%s4332] sm:$0xff]
  %v4334 = vld [vmem:[%s4332 + $0x8] sm:$0xff]
  %v4335 = vld [vmem:[%s4332 + $0x10] sm:$0xff]
  %v4336 = vld [vmem:[%s4332 + $0x18] sm:$0xff]
  %v4337 = vld [vmem:[%s4332 + $0x20] sm:$0xff]
  %v4338 = vld [vmem:[%s4332 + $0x28] sm:$0xff]
  %v4339 = vld [vmem:[%s4332 + $0x30] sm:$0xff]
  %v4340 = vld [vmem:[%s4332 + $0x38] sm:$0xff]
  %v4341 = vld [vmem:[%s4332 + $0x40] sm:$0xff]
  %v4342 = vld [vmem:[%s4332 + $0x48] sm:$0xff]
  %v4343 = vld [vmem:[%s4332 + $0x50] sm:$0xff]
  %v4344 = vld [vmem:[%s4332 + $0x58] sm:$0xff]
  %v4345 = vld [vmem:[%s4332 + $0x60] sm:$0xff]
  %v4346 = vld [vmem:[%s4332 + $0x68] sm:$0xff]
  %v4347 = vld [vmem:[%s4332 + $0x70] sm:$0xff]
  %v4348 = vld [vmem:[%s4332 + $0x78] sm:$0xff]
  %4349 = vmatprep.subr.mxu0 0.0
  %4350 = vmatpush1.msra.mxu0 %v4348
  %4351 = vmatprep.subr.mxu0 0.0
  %4352 = vmatpush1.msra.mxu0 %v4347
  %4353 = vmatprep.subr.mxu0 0.0
  %4354 = vmatpush1.msra.mxu0 %v4346
  %4355 = vmatprep.subr.mxu0 0.0
  %4356 = vmatpush1.msra.mxu0 %v4345
  %4357 = vmatprep.subr.mxu0 0.0
  %4358 = vmatpush1.msra.mxu0 %v4344
  %4359 = vmatprep.subr.mxu0 0.0
  %4360 = vmatpush1.msra.mxu0 %v4343
  %4361 = vmatprep.subr.mxu0 0.0
  %4362 = vmatpush1.msra.mxu0 %v4342
  %4363 = vmatprep.subr.mxu0 0.0
  %4364 = vmatpush1.msra.mxu0 %v4341
  %4365 = vmatprep.subr.mxu0 0.0
  %4366 = vmatpush1.msra.mxu0 %v4340
  %4367 = vmatprep.subr.mxu0 0.0
  %4368 = vmatpush1.msra.mxu0 %v4339
  %4369 = vmatprep.subr.mxu0 0.0
  %4370 = vmatpush1.msra.mxu0 %v4338
  %4371 = vmatprep.subr.mxu0 0.0
  %4372 = vmatpush1.msra.mxu0 %v4337
  %4373 = vmatprep.subr.mxu0 0.0
  %4374 = vmatpush1.msra.mxu0 %v4336
  %4375 = vmatprep.subr.mxu0 0.0
  %4376 = vmatpush1.msra.mxu0 %v4335
  %4377 = vmatprep.subr.mxu0 0.0
  %4378 = vmatpush1.msra.mxu0 %v4334
  %4379 = vmatprep.subr.mxu0 0.0
  %4380 = vmatpush1.msra.mxu0 %v4333
  %4381 = vmatprep.subr.mxu0 0.0
  %4382 = vmatpush2.msra.mxu0 0.0
  %4383 = vmatprep.subr.mxu0 0.0
  %4384 = vmatpush2.msra.mxu0 0.0
  %4385 = vmatprep.subr.mxu0 0.0
  %4386 = vmatpush2.msra.mxu0 0.0
  %4387 = vmatprep.subr.mxu0 0.0
  %4388 = vmatpush2.msra.mxu0 0.0
  %4389 = vmatprep.subr.mxu0 0.0
  %4390 = vmatpush2.msra.mxu0 0.0
  %4391 = vmatprep.subr.mxu0 0.0
  %4392 = vmatpush2.msra.mxu0 0.0
  %4393 = vmatprep.subr.mxu0 0.0
  %4394 = vmatpush2.msra.mxu0 0.0
  %4395 = vmatprep.subr.mxu0 0.0
  %4396 = vmatpush2.msra.mxu0 0.0
  %4397 = vmatprep.subr.mxu0 0.0
  %4398 = vmatpush2.msra.mxu0 0.0
  %4399 = vmatprep.subr.mxu0 0.0
  %4400 = vmatpush2.msra.mxu0 0.0
  %4401 = vmatprep.subr.mxu0 0.0
  %4402 = vmatpush2.msra.mxu0 0.0
  %4403 = vmatprep.subr.mxu0 0.0
  %4404 = vmatpush2.msra.mxu0 0.0
  %4405 = vmatprep.subr.mxu0 0.0
  %4406 = vmatpush2.msra.mxu0 0.0
  %4407 = vmatprep.subr.mxu0 0.0
  %4408 = vmatpush2.msra.mxu0 0.0
  %4409 = vmatprep.subr.mxu0 0.0
  %4410 = vmatpush2.msra.mxu0 0.0
  %4411 = vmatprep.subr.mxu0 0.0
  %4412 = vmatpush2.msra.mxu0 0.0
  %4413 = vmatprep.mubr.f32.mxu0 0.0
  %4414 = vmatmul.mubr.f32.gmra.mxu0 %v4268
  %v4415 = vpop.f32.mrf.mxu0
  %v4416 = vadd.f32 0.0, %v4415
  %v4417 = vpop.f32.mrf.mxu0
  %4418 = vmatprep.mubr.f32.mxu0 0.0
  %4419 = vmatmul.mubr.f32.gmra.mxu0 %v4269
  %v4420 = vpop.f32.mrf.mxu0
  %v4421 = vadd.f32 0.0, %v4420
  %v4422 = vpop.f32.mrf.mxu0
  %4423 = vmatprep.mubr.f32.mxu0 0.0
  %4424 = vmatmul.mubr.f32.gmra.mxu0 %v4270
  %v4425 = vpop.f32.mrf.mxu0
  %v4426 = vadd.f32 0.0, %v4425
  %v4427 = vpop.f32.mrf.mxu0
  %4428 = vmatprep.mubr.f32.mxu0 0.0
  %4429 = vmatmul.mubr.f32.gmra.mxu0 %v4271
  %v4430 = vpop.f32.mrf.mxu0
  %v4431 = vadd.f32 0.0, %v4430
  %v4432 = vpop.f32.mrf.mxu0
  %4433 = vmatprep.mubr.f32.mxu0 0.0
  %4434 = vmatmul.mubr.f32.gmra.mxu0 %v4272
  %v4435 = vpop.f32.mrf.mxu0
  %v4436 = vadd.f32 0.0, %v4435
  %v4437 = vpop.f32.mrf.mxu0
  %4438 = vmatprep.mubr.f32.mxu0 0.0
  %4439 = vmatmul.mubr.f32.gmra.mxu0 %v4273
  %v4440 = vpop.f32.mrf.mxu0
  %v4441 = vadd.f32 0.0, %v4440
  %v4442 = vpop.f32.mrf.mxu0
  %4443 = vmatprep.mubr.f32.mxu0 0.0
  %4444 = vmatmul.mubr.f32.gmra.mxu0 %v4274
  %v4445 = vpop.f32.mrf.mxu0
  %v4446 = vadd.f32 0.0, %v4445
  %v4447 = vpop.f32.mrf.mxu0
  %4448 = vmatprep.mubr.f32.mxu0 0.0
  %4449 = vmatmul.mubr.f32.gmra.mxu0 %v4275
  %v4450 = vpop.f32.mrf.mxu0
  %v4451 = vadd.f32 0.0, %v4450
  %v4452 = vpop.f32.mrf.mxu0
  %4453 = vmatprep.mubr.f32.mxu0 0.0
  %4454 = vmatmul.mubr.f32.gmra.mxu0 %v4276
  %v4455 = vpop.f32.mrf.mxu0
  %v4456 = vadd.f32 0.0, %v4455
  %v4457 = vpop.f32.mrf.mxu0
  %4458 = vmatprep.mubr.f32.mxu0 0.0
  %4459 = vmatmul.mubr.f32.gmra.mxu0 %v4277
  %v4460 = vpop.f32.mrf.mxu0
  %v4461 = vadd.f32 0.0, %v4460
  %v4462 = vpop.f32.mrf.mxu0
  %4463 = vmatprep.mubr.f32.mxu0 0.0
  %4464 = vmatmul.mubr.f32.gmra.mxu0 %v4278
  %v4465 = vpop.f32.mrf.mxu0
  %v4466 = vadd.f32 0.0, %v4465
  %v4467 = vpop.f32.mrf.mxu0
  %4468 = vmatprep.mubr.f32.mxu0 0.0
  %4469 = vmatmul.mubr.f32.gmra.mxu0 %v4279
  %v4470 = vpop.f32.mrf.mxu0
  %v4471 = vadd.f32 0.0, %v4470
  %v4472 = vpop.f32.mrf.mxu0
  %4473 = vmatprep.mubr.f32.mxu0 0.0
  %4474 = vmatmul.mubr.f32.gmra.mxu0 %v4280
  %v4475 = vpop.f32.mrf.mxu0
  %v4476 = vadd.f32 0.0, %v4475
  %v4477 = vpop.f32.mrf.mxu0
  %4478 = vmatprep.mubr.f32.mxu0 0.0
  %4479 = vmatmul.mubr.f32.gmra.mxu0 %v4281
  %v4480 = vpop.f32.mrf.mxu0
  %v4481 = vadd.f32 0.0, %v4480
  %v4482 = vpop.f32.mrf.mxu0
  %4483 = vmatprep.mubr.f32.mxu0 0.0
  %4484 = vmatmul.mubr.f32.gmra.mxu0 %v4282
  %v4485 = vpop.f32.mrf.mxu0
  %v4486 = vadd.f32 0.0, %v4485
  %v4487 = vpop.f32.mrf.mxu0
  %4488 = vmatprep.mubr.f32.mxu0 0.0
  %4489 = vmatmul.mubr.f32.gmra.mxu0 %v4283
  %v4490 = vpop.f32.mrf.mxu0
  %v4491 = vadd.f32 0.0, %v4490
  %v4492 = vpop.f32.mrf.mxu0
  %4493 = vmatprep.mubr.f32.mxu0 0.0
  %4494 = vmatmul.mubr.f32.gmra.mxu0 %v4284
  %v4495 = vpop.f32.mrf.mxu0
  %v4496 = vadd.f32 0.0, %v4495
  %v4497 = vpop.f32.mrf.mxu0
  %4498 = vmatprep.mubr.f32.mxu0 0.0
  %4499 = vmatmul.mubr.f32.gmra.mxu0 %v4285
  %v4500 = vpop.f32.mrf.mxu0
  %v4501 = vadd.f32 0.0, %v4500
  %v4502 = vpop.f32.mrf.mxu0
  %4503 = vmatprep.mubr.f32.mxu0 0.0
  %4504 = vmatmul.mubr.f32.gmra.mxu0 %v4286
  %v4505 = vpop.f32.mrf.mxu0
  %v4506 = vadd.f32 0.0, %v4505
  %v4507 = vpop.f32.mrf.mxu0
  %4508 = vmatprep.mubr.f32.mxu0 0.0
  %4509 = vmatmul.mubr.f32.gmra.mxu0 %v4287
  %v4510 = vpop.f32.mrf.mxu0
  %v4511 = vadd.f32 0.0, %v4510
  %v4512 = vpop.f32.mrf.mxu0
  %4513 = vmatprep.mubr.f32.mxu0 0.0
  %4514 = vmatmul.mubr.f32.gmra.mxu0 %v4288
  %v4515 = vpop.f32.mrf.mxu0
  %v4516 = vadd.f32 0.0, %v4515
  %v4517 = vpop.f32.mrf.mxu0
  %4518 = vmatprep.mubr.f32.mxu0 0.0
  %4519 = vmatmul.mubr.f32.gmra.mxu0 %v4289
  %v4520 = vpop.f32.mrf.mxu0
  %v4521 = vadd.f32 0.0, %v4520
  %v4522 = vpop.f32.mrf.mxu0
  %4523 = vmatprep.mubr.f32.mxu0 0.0
  %4524 = vmatmul.mubr.f32.gmra.mxu0 %v4290
  %v4525 = vpop.f32.mrf.mxu0
  %v4526 = vadd.f32 0.0, %v4525
  %v4527 = vpop.f32.mrf.mxu0
  %4528 = vmatprep.mubr.f32.mxu0 0.0
  %4529 = vmatmul.mubr.f32.gmra.mxu0 %v4291
  %v4530 = vpop.f32.mrf.mxu0
  %v4531 = vadd.f32 0.0, %v4530
  %v4532 = vpop.f32.mrf.mxu0
  %4533 = vmatprep.mubr.f32.mxu0 0.0
  %4534 = vmatmul.mubr.f32.gmra.mxu0 %v4292
  %v4535 = vpop.f32.mrf.mxu0
  %v4536 = vadd.f32 0.0, %v4535
  %v4537 = vpop.f32.mrf.mxu0
  %4538 = vmatprep.mubr.f32.mxu0 0.0
  %4539 = vmatmul.mubr.f32.gmra.mxu0 %v4293
  %v4540 = vpop.f32.mrf.mxu0
  %v4541 = vadd.f32 0.0, %v4540
  %v4542 = vpop.f32.mrf.mxu0
  %4543 = vmatprep.mubr.f32.mxu0 0.0
  %4544 = vmatmul.mubr.f32.gmra.mxu0 %v4294
  %v4545 = vpop.f32.mrf.mxu0
  %v4546 = vadd.f32 0.0, %v4545
  %v4547 = vpop.f32.mrf.mxu0
  %4548 = vmatprep.mubr.f32.mxu0 0.0
  %4549 = vmatmul.mubr.f32.gmra.mxu0 %v4295
  %v4550 = vpop.f32.mrf.mxu0
  %v4551 = vadd.f32 0.0, %v4550
  %v4552 = vpop.f32.mrf.mxu0
  %4553 = vmatprep.mubr.f32.mxu0 0.0
  %4554 = vmatmul.mubr.f32.gmra.mxu0 %v4296
  %v4555 = vpop.f32.mrf.mxu0
  %v4556 = vadd.f32 0.0, %v4555
  %v4557 = vpop.f32.mrf.mxu0
  %4558 = vmatprep.mubr.f32.mxu0 0.0
  %4559 = vmatmul.mubr.f32.gmra.mxu0 %v4297
  %v4560 = vpop.f32.mrf.mxu0
  %v4561 = vadd.f32 0.0, %v4560
  %v4562 = vpop.f32.mrf.mxu0
  %4563 = vmatprep.mubr.f32.mxu0 0.0
  %4564 = vmatmul.mubr.f32.gmra.mxu0 %v4298
  %v4565 = vpop.f32.mrf.mxu0
  %v4566 = vadd.f32 0.0, %v4565
  %v4567 = vpop.f32.mrf.mxu0
  %4568 = vmatprep.mubr.f32.mxu0 0.0
  %4569 = vmatmul.mubr.f32.gmra.mxu0 %v4299
  %v4570 = vpop.f32.mrf.mxu0
  %v4571 = vadd.f32 0.0, %v4570
  %v4572 = vpop.f32.mrf.mxu0
  %4573 = vmatprep.mubr.f32.mxu0 0.0
  %4574 = vmatmul.mubr.f32.gmra.mxu0 %v4300
  %v4575 = vpop.f32.mrf.mxu0
  %v4576 = vadd.f32 0.0, %v4575
  %v4577 = vpop.f32.mrf.mxu0
  %4578 = vmatprep.mubr.f32.mxu0 0.0
  %4579 = vmatmul.mubr.f32.gmra.mxu0 %v4301
  %v4580 = vpop.f32.mrf.mxu0
  %v4581 = vadd.f32 0.0, %v4580
  %v4582 = vpop.f32.mrf.mxu0
  %4583 = vmatprep.mubr.f32.mxu0 0.0
  %4584 = vmatmul.mubr.f32.gmra.mxu0 %v4302
  %v4585 = vpop.f32.mrf.mxu0
  %v4586 = vadd.f32 0.0, %v4585
  %v4587 = vpop.f32.mrf.mxu0
  %4588 = vmatprep.mubr.f32.mxu0 0.0
  %4589 = vmatmul.mubr.f32.gmra.mxu0 %v4303
  %v4590 = vpop.f32.mrf.mxu0
  %v4591 = vadd.f32 0.0, %v4590
  %v4592 = vpop.f32.mrf.mxu0
  %4593 = vmatprep.mubr.f32.mxu0 0.0
  %4594 = vmatmul.mubr.f32.gmra.mxu0 %v4304
  %v4595 = vpop.f32.mrf.mxu0
  %v4596 = vadd.f32 0.0, %v4595
  %v4597 = vpop.f32.mrf.mxu0
  %4598 = vmatprep.mubr.f32.mxu0 0.0
  %4599 = vmatmul.mubr.f32.gmra.mxu0 %v4305
  %v4600 = vpop.f32.mrf.mxu0
  %v4601 = vadd.f32 0.0, %v4600
  %v4602 = vpop.f32.mrf.mxu0
  %4603 = vmatprep.mubr.f32.mxu0 0.0
  %4604 = vmatmul.mubr.f32.gmra.mxu0 %v4306
  %v4605 = vpop.f32.mrf.mxu0
  %v4606 = vadd.f32 0.0, %v4605
  %v4607 = vpop.f32.mrf.mxu0
  %4608 = vmatprep.mubr.f32.mxu0 0.0
  %4609 = vmatmul.mubr.f32.gmra.mxu0 %v4307
  %v4610 = vpop.f32.mrf.mxu0
  %v4611 = vadd.f32 0.0, %v4610
  %v4612 = vpop.f32.mrf.mxu0
  %4613 = vmatprep.mubr.f32.mxu0 0.0
  %4614 = vmatmul.mubr.f32.gmra.mxu0 %v4308
  %v4615 = vpop.f32.mrf.mxu0
  %v4616 = vadd.f32 0.0, %v4615
  %v4617 = vpop.f32.mrf.mxu0
  %4618 = vmatprep.mubr.f32.mxu0 0.0
  %4619 = vmatmul.mubr.f32.gmra.mxu0 %v4309
  %v4620 = vpop.f32.mrf.mxu0
  %v4621 = vadd.f32 0.0, %v4620
  %v4622 = vpop.f32.mrf.mxu0
  %4623 = vmatprep.mubr.f32.mxu0 0.0
  %4624 = vmatmul.mubr.f32.gmra.mxu0 %v4310
  %v4625 = vpop.f32.mrf.mxu0
  %v4626 = vadd.f32 0.0, %v4625
  %v4627 = vpop.f32.mrf.mxu0
  %4628 = vmatprep.mubr.f32.mxu0 0.0
  %4629 = vmatmul.mubr.f32.gmra.mxu0 %v4311
  %v4630 = vpop.f32.mrf.mxu0
  %v4631 = vadd.f32 0.0, %v4630
  %v4632 = vpop.f32.mrf.mxu0
  %4633 = vmatprep.mubr.f32.mxu0 0.0
  %4634 = vmatmul.mubr.f32.gmra.mxu0 %v4312
  %v4635 = vpop.f32.mrf.mxu0
  %v4636 = vadd.f32 0.0, %v4635
  %v4637 = vpop.f32.mrf.mxu0
  %4638 = vmatprep.mubr.f32.mxu0 0.0
  %4639 = vmatmul.mubr.f32.gmra.mxu0 %v4313
  %v4640 = vpop.f32.mrf.mxu0
  %v4641 = vadd.f32 0.0, %v4640
  %v4642 = vpop.f32.mrf.mxu0
  %4643 = vmatprep.mubr.f32.mxu0 0.0
  %4644 = vmatmul.mubr.f32.gmra.mxu0 %v4314
  %v4645 = vpop.f32.mrf.mxu0
  %v4646 = vadd.f32 0.0, %v4645
  %v4647 = vpop.f32.mrf.mxu0
  %4648 = vmatprep.mubr.f32.mxu0 0.0
  %4649 = vmatmul.mubr.f32.gmra.mxu0 %v4315
  %v4650 = vpop.f32.mrf.mxu0
  %v4651 = vadd.f32 0.0, %v4650
  %v4652 = vpop.f32.mrf.mxu0
  %4653 = vmatprep.mubr.f32.mxu0 0.0
  %4654 = vmatmul.mubr.f32.gmra.mxu0 %v4316
  %v4655 = vpop.f32.mrf.mxu0
  %v4656 = vadd.f32 0.0, %v4655
  %v4657 = vpop.f32.mrf.mxu0
  %4658 = vmatprep.mubr.f32.mxu0 0.0
  %4659 = vmatmul.mubr.f32.gmra.mxu0 %v4317
  %v4660 = vpop.f32.mrf.mxu0
  %v4661 = vadd.f32 0.0, %v4660
  %v4662 = vpop.f32.mrf.mxu0
  %4663 = vmatprep.mubr.f32.mxu0 0.0
  %4664 = vmatmul.mubr.f32.gmra.mxu0 %v4318
  %v4665 = vpop.f32.mrf.mxu0
  %v4666 = vadd.f32 0.0, %v4665
  %v4667 = vpop.f32.mrf.mxu0
  %4668 = vmatprep.mubr.f32.mxu0 0.0
  %4669 = vmatmul.mubr.f32.gmra.mxu0 %v4319
  %v4670 = vpop.f32.mrf.mxu0
  %v4671 = vadd.f32 0.0, %v4670
  %v4672 = vpop.f32.mrf.mxu0
  %4673 = vmatprep.mubr.f32.mxu0 0.0
  %4674 = vmatmul.mubr.f32.gmra.mxu0 %v4320
  %v4675 = vpop.f32.mrf.mxu0
  %v4676 = vadd.f32 0.0, %v4675
  %v4677 = vpop.f32.mrf.mxu0
  %4678 = vmatprep.mubr.f32.mxu0 0.0
  %4679 = vmatmul.mubr.f32.gmra.mxu0 %v4321
  %v4680 = vpop.f32.mrf.mxu0
  %v4681 = vadd.f32 0.0, %v4680
  %v4682 = vpop.f32.mrf.mxu0
  %4683 = vmatprep.mubr.f32.mxu0 0.0
  %4684 = vmatmul.mubr.f32.gmra.mxu0 %v4322
  %v4685 = vpop.f32.mrf.mxu0
  %v4686 = vadd.f32 0.0, %v4685
  %v4687 = vpop.f32.mrf.mxu0
  %4688 = vmatprep.mubr.f32.mxu0 0.0
  %4689 = vmatmul.mubr.f32.gmra.mxu0 %v4323
  %v4690 = vpop.f32.mrf.mxu0
  %v4691 = vadd.f32 0.0, %v4690
  %v4692 = vpop.f32.mrf.mxu0
  %4693 = vmatprep.mubr.f32.mxu0 0.0
  %4694 = vmatmul.mubr.f32.gmra.mxu0 %v4324
  %v4695 = vpop.f32.mrf.mxu0
  %v4696 = vadd.f32 0.0, %v4695
  %v4697 = vpop.f32.mrf.mxu0
  %4698 = vmatprep.mubr.f32.mxu0 0.0
  %4699 = vmatmul.mubr.f32.gmra.mxu0 %v4325
  %v4700 = vpop.f32.mrf.mxu0
  %v4701 = vadd.f32 0.0, %v4700
  %v4702 = vpop.f32.mrf.mxu0
  %4703 = vmatprep.mubr.f32.mxu0 0.0
  %4704 = vmatmul.mubr.f32.gmra.mxu0 %v4326
  %v4705 = vpop.f32.mrf.mxu0
  %v4706 = vadd.f32 0.0, %v4705
  %v4707 = vpop.f32.mrf.mxu0
  %4708 = vmatprep.mubr.f32.mxu0 0.0
  %4709 = vmatmul.mubr.f32.gmra.mxu0 %v4327
  %v4710 = vpop.f32.mrf.mxu0
  %v4711 = vadd.f32 0.0, %v4710
  %v4712 = vpop.f32.mrf.mxu0
  %4713 = vmatprep.mubr.f32.mxu0 0.0
  %4714 = vmatmul.mubr.f32.gmra.mxu0 %v4328
  %v4715 = vpop.f32.mrf.mxu0
  %v4716 = vadd.f32 0.0, %v4715
  %v4717 = vpop.f32.mrf.mxu0
  %4718 = vmatprep.mubr.f32.mxu0 0.0
  %4719 = vmatmul.mubr.f32.gmra.mxu0 %v4329
  %v4720 = vpop.f32.mrf.mxu0
  %v4721 = vadd.f32 0.0, %v4720
  %v4722 = vpop.f32.mrf.mxu0
  %4723 = vmatprep.mubr.f32.mxu0 0.0
  %4724 = vmatmul.mubr.f32.gmra.mxu0 %v4330
  %v4725 = vpop.f32.mrf.mxu0
  %v4726 = vadd.f32 0.0, %v4725
  %v4727 = vpop.f32.mrf.mxu0
  %4728 = vmatprep.mubr.f32.mxu0 0.0
  %4729 = vmatmul.mubr.f32.gmra.mxu0 %v4331
  %v4730 = vpop.f32.mrf.mxu0
  %v4731 = vadd.f32 0.0, %v4730
  %v4732 = vpop.f32.mrf.mxu0
  %4733 = vdwg.mxu0
  %v4734 = vadd.f32 %v4204, %v4416
  %v4735 = vadd.f32 %v4205, %v4421
  %v4736 = vadd.f32 %v4206, %v4426
  %v4737 = vadd.f32 %v4207, %v4431
  %v4738 = vadd.f32 %v4208, %v4436
  %v4739 = vadd.f32 %v4209, %v4441
  %v4740 = vadd.f32 %v4210, %v4446
  %v4741 = vadd.f32 %v4211, %v4451
  %v4742 = vadd.f32 %v4212, %v4456
  %v4743 = vadd.f32 %v4213, %v4461
  %v4744 = vadd.f32 %v4214, %v4466
  %v4745 = vadd.f32 %v4215, %v4471
  %v4746 = vadd.f32 %v4216, %v4476
  %v4747 = vadd.f32 %v4217, %v4481
  %v4748 = vadd.f32 %v4218, %v4486
  %v4749 = vadd.f32 %v4219, %v4491
  %v4750 = vadd.f32 %v4220, %v4496
  %v4751 = vadd.f32 %v4221, %v4501
  %v4752 = vadd.f32 %v4222, %v4506
  %v4753 = vadd.f32 %v4223, %v4511
  %v4754 = vadd.f32 %v4224, %v4516
  %v4755 = vadd.f32 %v4225, %v4521
  %v4756 = vadd.f32 %v4226, %v4526
  %v4757 = vadd.f32 %v4227, %v4531
  %v4758 = vadd.f32 %v4228, %v4536
  %v4759 = vadd.f32 %v4229, %v4541
  %v4760 = vadd.f32 %v4230, %v4546
  %v4761 = vadd.f32 %v4231, %v4551
  %v4762 = vadd.f32 %v4232, %v4556
  %v4763 = vadd.f32 %v4233, %v4561
  %v4764 = vadd.f32 %v4234, %v4566
  %v4765 = vadd.f32 %v4235, %v4571
  %v4766 = vadd.f32 %v4236, %v4576
  %v4767 = vadd.f32 %v4237, %v4581
  %v4768 = vadd.f32 %v4238, %v4586
  %v4769 = vadd.f32 %v4239, %v4591
  %v4770 = vadd.f32 %v4240, %v4596
  %v4771 = vadd.f32 %v4241, %v4601
  %v4772 = vadd.f32 %v4242, %v4606
  %v4773 = vadd.f32 %v4243, %v4611
  %v4774 = vadd.f32 %v4244, %v4616
  %v4775 = vadd.f32 %v4245, %v4621
  %v4776 = vadd.f32 %v4246, %v4626
  %v4777 = vadd.f32 %v4247, %v4631
  %v4778 = vadd.f32 %v4248, %v4636
  %v4779 = vadd.f32 %v4249, %v4641
  %v4780 = vadd.f32 %v4250, %v4646
  %v4781 = vadd.f32 %v4251, %v4651
  %v4782 = vadd.f32 %v4252, %v4656
  %v4783 = vadd.f32 %v4253, %v4661
  %v4784 = vadd.f32 %v4254, %v4666
  %v4785 = vadd.f32 %v4255, %v4671
  %v4786 = vadd.f32 %v4256, %v4676
  %v4787 = vadd.f32 %v4257, %v4681
  %v4788 = vadd.f32 %v4258, %v4686
  %v4789 = vadd.f32 %v4259, %v4691
  %v4790 = vadd.f32 %v4260, %v4696
  %v4791 = vadd.f32 %v4261, %v4701
  %v4792 = vadd.f32 %v4262, %v4706
  %v4793 = vadd.f32 %v4263, %v4711
  %v4794 = vadd.f32 %v4264, %v4716
  %v4795 = vadd.f32 %v4265, %v4721
  %v4796 = vadd.f32 %v4266, %v4726
  %v4797 = vadd.f32 %v4267, %v4731
  %v4798 = vmul.f32 %v4734, 0.01
  %v4799 = vmul.f32 %v4735, 0.01
  %v4800 = vmul.f32 %v4736, 0.01
  %v4801 = vmul.f32 %v4737, 0.01
  %v4802 = vmul.f32 %v4738, 0.01
  %v4803 = vmul.f32 %v4739, 0.01
  %v4804 = vmul.f32 %v4740, 0.01
  %v4805 = vmul.f32 %v4741, 0.01
  %v4806 = vmul.f32 %v4742, 0.01
  %v4807 = vmul.f32 %v4743, 0.01
  %v4808 = vmul.f32 %v4744, 0.01
  %v4809 = vmul.f32 %v4745, 0.01
  %v4810 = vmul.f32 %v4746, 0.01
  %v4811 = vmul.f32 %v4747, 0.01
  %v4812 = vmul.f32 %v4748, 0.01
  %v4813 = vmul.f32 %v4749, 0.01
  %v4814 = vmul.f32 %v4750, 0.01
  %v4815 = vmul.f32 %v4751, 0.01
  %v4816 = vmul.f32 %v4752, 0.01
  %v4817 = vmul.f32 %v4753, 0.01
  %v4818 = vmul.f32 %v4754, 0.01
  %v4819 = vmul.f32 %v4755, 0.01
  %v4820 = vmul.f32 %v4756, 0.01
  %v4821 = vmul.f32 %v4757, 0.01
  %v4822 = vmul.f32 %v4758, 0.01
  %v4823 = vmul.f32 %v4759, 0.01
  %v4824 = vmul.f32 %v4760, 0.01
  %v4825 = vmul.f32 %v4761, 0.01
  %v4826 = vmul.f32 %v4762, 0.01
  %v4827 = vmul.f32 %v4763, 0.01
  %v4828 = vmul.f32 %v4764, 0.01
  %v4829 = vmul.f32 %v4765, 0.01
  %v4830 = vmul.f32 %v4766, 0.01
  %v4831 = vmul.f32 %v4767, 0.01
  %v4832 = vmul.f32 %v4768, 0.01
  %v4833 = vmul.f32 %v4769, 0.01
  %v4834 = vmul.f32 %v4770, 0.01
  %v4835 = vmul.f32 %v4771, 0.01
  %v4836 = vmul.f32 %v4772, 0.01
  %v4837 = vmul.f32 %v4773, 0.01
  %v4838 = vmul.f32 %v4774, 0.01
  %v4839 = vmul.f32 %v4775, 0.01
  %v4840 = vmul.f32 %v4776, 0.01
  %v4841 = vmul.f32 %v4777, 0.01
  %v4842 = vmul.f32 %v4778, 0.01
  %v4843 = vmul.f32 %v4779, 0.01
  %v4844 = vmul.f32 %v4780, 0.01
  %v4845 = vmul.f32 %v4781, 0.01
  %v4846 = vmul.f32 %v4782, 0.01
  %v4847 = vmul.f32 %v4783, 0.01
  %v4848 = vmul.f32 %v4784, 0.01
  %v4849 = vmul.f32 %v4785, 0.01
  %v4850 = vmul.f32 %v4786, 0.01
  %v4851 = vmul.f32 %v4787, 0.01
  %v4852 = vmul.f32 %v4788, 0.01
  %v4853 = vmul.f32 %v4789, 0.01
  %v4854 = vmul.f32 %v4790, 0.01
  %v4855 = vmul.f32 %v4791, 0.01
  %v4856 = vmul.f32 %v4792, 0.01
  %v4857 = vmul.f32 %v4793, 0.01
  %v4858 = vmul.f32 %v4794, 0.01
  %v4859 = vmul.f32 %v4795, 0.01
  %v4860 = vmul.f32 %v4796, 0.01
  %v4861 = vmul.f32 %v4797, 0.01
  %v4862 = vmax.f32 %v4734, %v4798
  %v4863 = vmax.f32 %v4735, %v4799
  %v4864 = vmax.f32 %v4736, %v4800
  %v4865 = vmax.f32 %v4737, %v4801
  %v4866 = vmax.f32 %v4738, %v4802
  %v4867 = vmax.f32 %v4739, %v4803
  %v4868 = vmax.f32 %v4740, %v4804
  %v4869 = vmax.f32 %v4741, %v4805
  %v4870 = vmax.f32 %v4742, %v4806
  %v4871 = vmax.f32 %v4743, %v4807
  %v4872 = vmax.f32 %v4744, %v4808
  %v4873 = vmax.f32 %v4745, %v4809
  %v4874 = vmax.f32 %v4746, %v4810
  %v4875 = vmax.f32 %v4747, %v4811
  %v4876 = vmax.f32 %v4748, %v4812
  %v4877 = vmax.f32 %v4749, %v4813
  %v4878 = vmax.f32 %v4750, %v4814
  %v4879 = vmax.f32 %v4751, %v4815
  %v4880 = vmax.f32 %v4752, %v4816
  %v4881 = vmax.f32 %v4753, %v4817
  %v4882 = vmax.f32 %v4754, %v4818
  %v4883 = vmax.f32 %v4755, %v4819
  %v4884 = vmax.f32 %v4756, %v4820
  %v4885 = vmax.f32 %v4757, %v4821
  %v4886 = vmax.f32 %v4758, %v4822
  %v4887 = vmax.f32 %v4759, %v4823
  %v4888 = vmax.f32 %v4760, %v4824
  %v4889 = vmax.f32 %v4761, %v4825
  %v4890 = vmax.f32 %v4762, %v4826
  %v4891 = vmax.f32 %v4763, %v4827
  %v4892 = vmax.f32 %v4764, %v4828
  %v4893 = vmax.f32 %v4765, %v4829
  %v4894 = vmax.f32 %v4766, %v4830
  %v4895 = vmax.f32 %v4767, %v4831
  %v4896 = vmax.f32 %v4768, %v4832
  %v4897 = vmax.f32 %v4769, %v4833
  %v4898 = vmax.f32 %v4770, %v4834
  %v4899 = vmax.f32 %v4771, %v4835
  %v4900 = vmax.f32 %v4772, %v4836
  %v4901 = vmax.f32 %v4773, %v4837
  %v4902 = vmax.f32 %v4774, %v4838
  %v4903 = vmax.f32 %v4775, %v4839
  %v4904 = vmax.f32 %v4776, %v4840
  %v4905 = vmax.f32 %v4777, %v4841
  %v4906 = vmax.f32 %v4778, %v4842
  %v4907 = vmax.f32 %v4779, %v4843
  %v4908 = vmax.f32 %v4780, %v4844
  %v4909 = vmax.f32 %v4781, %v4845
  %v4910 = vmax.f32 %v4782, %v4846
  %v4911 = vmax.f32 %v4783, %v4847
  %v4912 = vmax.f32 %v4784, %v4848
  %v4913 = vmax.f32 %v4785, %v4849
  %v4914 = vmax.f32 %v4786, %v4850
  %v4915 = vmax.f32 %v4787, %v4851
  %v4916 = vmax.f32 %v4788, %v4852
  %v4917 = vmax.f32 %v4789, %v4853
  %v4918 = vmax.f32 %v4790, %v4854
  %v4919 = vmax.f32 %v4791, %v4855
  %v4920 = vmax.f32 %v4792, %v4856
  %v4921 = vmax.f32 %v4793, %v4857
  %v4922 = vmax.f32 %v4794, %v4858
  %v4923 = vmax.f32 %v4795, %v4859
  %v4924 = vmax.f32 %v4796, %v4860
  %v4925 = vmax.f32 %v4797, %v4861
  %4926 = vst [vmem:[#allocation2] sm:$0xff] 0.0
  %4927 = vst [vmem:[#allocation2 + $0x8] sm:$0xff] 0.0
  %4928 = vst [vmem:[#allocation2 + $0x10] sm:$0x3] 0.0
  %4929 = vst [vmem:[#allocation2 + $0x1b0] sm:$0xff] 0.0
  %4930 = vst [vmem:[#allocation2 + $0x1b8] sm:$0xff] 0.0
  %4931 = vst [vmem:[#allocation2 + $0x1c0] sm:$0x3] 0.0
  %s4932 = scalar_lea.vmem [#allocation2], 408
  %4933 = vst [vmem:[%s4932] sm:$0xff] 0.0
  %4934 = vst [vmem:[%s4932 + $0x8] sm:$0xff] 0.0
  %4935 = vst [vmem:[%s4932 + $0x10] sm:$0x3] 0.0
  %4936 = vst [vmem:[%s4932 + $0x1b0] sm:$0xff] 0.0
  %4937 = vst [vmem:[%s4932 + $0x1b8] sm:$0xff] 0.0
  %4938 = vst [vmem:[%s4932 + $0x1c0] sm:$0x3] 0.0
  %4939 = vst [vmem:[#allocation2] sm:$0x1] 0.0
  %4940 = vst [vmem:[#allocation2 + $0x18] sm:$0x1] 0.0
  %4941 = vst [vmem:[#allocation2 + $0x30] sm:$0x1] 0.0
  %4942 = vst [vmem:[#allocation2 + $0x48] sm:$0x1] 0.0
  %4943 = vst [vmem:[#allocation2 + $0x60] sm:$0x1] 0.0
  %4944 = vst [vmem:[#allocation2 + $0x78] sm:$0x1] 0.0
  %4945 = vst [vmem:[#allocation2 + $0x90] sm:$0x1] 0.0
  %4946 = vst [vmem:[#allocation2 + $0xa8] sm:$0x1] 0.0
  %4947 = vst [vmem:[#allocation2 + $0xc0] sm:$0x1] 0.0
  %4948 = vst [vmem:[#allocation2 + $0xd8] sm:$0x1] 0.0
  %4949 = vst [vmem:[#allocation2 + $0xf0] sm:$0x1] 0.0
  %4950 = vst [vmem:[#allocation2 + $0x108] sm:$0x1] 0.0
  %4951 = vst [vmem:[#allocation2 + $0x120] sm:$0x1] 0.0
  %4952 = vst [vmem:[#allocation2 + $0x138] sm:$0x1] 0.0
  %4953 = vst [vmem:[#allocation2 + $0x150] sm:$0x1] 0.0
  %4954 = vst [vmem:[#allocation2 + $0x168] sm:$0x1] 0.0
  %4955 = vst [vmem:[#allocation2 + $0x180] sm:$0x1] 0.0
  %4956 = vst [vmem:[#allocation2 + $0x198] sm:$0x1] 0.0
  %4957 = vst [vmem:[#allocation2 + $0x1b0] sm:$0x1] 0.0
  %4958 = vst [vmem:[#allocation2 + $0x1c8] sm:$0x1] 0.0
  %4959 = vst [vmem:[#allocation2 + $0x1e0] sm:$0x1] 0.0
  %4960 = vst [vmem:[#allocation2 + $0x1f8] sm:$0x1] 0.0
  %4961 = vst [vmem:[#allocation2 + $0x210] sm:$0x1] 0.0
  %4962 = vst [vmem:[#allocation2 + $0x228] sm:$0x1] 0.0
  %4963 = vst [vmem:[#allocation2 + $0x240] sm:$0x1] 0.0
  %4964 = vst [vmem:[#allocation2 + $0x258] sm:$0x1] 0.0
  %4965 = vst [vmem:[#allocation2 + $0x270] sm:$0x1] 0.0
  %4966 = vst [vmem:[#allocation2 + $0x288] sm:$0x1] 0.0
  %4967 = vst [vmem:[#allocation2 + $0x2a0] sm:$0x1] 0.0
  %4968 = vst [vmem:[#allocation2 + $0x2b8] sm:$0x1] 0.0
  %4969 = vst [vmem:[#allocation2 + $0x2d0] sm:$0x1] 0.0
  %4970 = vst [vmem:[#allocation2 + $0x2e8] sm:$0x1] 0.0
  %4971 = vst [vmem:[#allocation2 + $0x300] sm:$0x1] 0.0
  %4972 = vst [vmem:[#allocation2 + $0x318] sm:$0x1] 0.0
  %4973 = vst [vmem:[#allocation2 + $0x330] sm:$0x1] 0.0
  %4974 = vst [vmem:[#allocation2 + $0x348] sm:$0x1] 0.0
  %4975 = vst [vmem:[#allocation2 + $0x11] sm:$0x1] 0.0
  %4976 = vst [vmem:[#allocation2 + $0x29] sm:$0x1] 0.0
  %4977 = vst [vmem:[#allocation2 + $0x41] sm:$0x1] 0.0
  %4978 = vst [vmem:[#allocation2 + $0x59] sm:$0x1] 0.0
  %4979 = vst [vmem:[#allocation2 + $0x71] sm:$0x1] 0.0
  %4980 = vst [vmem:[#allocation2 + $0x89] sm:$0x1] 0.0
  %4981 = vst [vmem:[#allocation2 + $0xa1] sm:$0x1] 0.0
  %4982 = vst [vmem:[#allocation2 + $0xb9] sm:$0x1] 0.0
  %4983 = vst [vmem:[#allocation2 + $0xd1] sm:$0x1] 0.0
  %4984 = vst [vmem:[#allocation2 + $0xe9] sm:$0x1] 0.0
  %4985 = vst [vmem:[#allocation2 + $0x101] sm:$0x1] 0.0
  %4986 = vst [vmem:[#allocation2 + $0x119] sm:$0x1] 0.0
  %4987 = vst [vmem:[#allocation2 + $0x131] sm:$0x1] 0.0
  %4988 = vst [vmem:[#allocation2 + $0x149] sm:$0x1] 0.0
  %4989 = vst [vmem:[#allocation2 + $0x161] sm:$0x1] 0.0
  %4990 = vst [vmem:[#allocation2 + $0x179] sm:$0x1] 0.0
  %4991 = vst [vmem:[#allocation2 + $0x191] sm:$0x1] 0.0
  %4992 = vst [vmem:[#allocation2 + $0x1a9] sm:$0x1] 0.0
  %4993 = vst [vmem:[#allocation2 + $0x1c1] sm:$0x1] 0.0
  %4994 = vst [vmem:[#allocation2 + $0x1d9] sm:$0x1] 0.0
  %4995 = vst [vmem:[#allocation2 + $0x1f1] sm:$0x1] 0.0
  %4996 = vst [vmem:[#allocation2 + $0x209] sm:$0x1] 0.0
  %4997 = vst [vmem:[#allocation2 + $0x221] sm:$0x1] 0.0
  %4998 = vst [vmem:[#allocation2 + $0x239] sm:$0x1] 0.0
  %4999 = vst [vmem:[#allocation2 + $0x251] sm:$0x1] 0.0
  %5000 = vst [vmem:[#allocation2 + $0x269] sm:$0x1] 0.0
  %5001 = vst [vmem:[#allocation2 + $0x281] sm:$0x1] 0.0
  %5002 = vst [vmem:[#allocation2 + $0x299] sm:$0x1] 0.0
  %5003 = vst [vmem:[#allocation2 + $0x2b1] sm:$0x1] 0.0
  %5004 = vst [vmem:[#allocation2 + $0x2c9] sm:$0x1] 0.0
  %5005 = vst [vmem:[#allocation2 + $0x2e1] sm:$0x1] 0.0
  %5006 = vst [vmem:[#allocation2 + $0x2f9] sm:$0x1] 0.0
  %5007 = vst [vmem:[#allocation2 + $0x311] sm:$0x1] 0.0
  %5008 = vst [vmem:[#allocation2 + $0x329] sm:$0x1] 0.0
  %5009 = vst [vmem:[#allocation2 + $0x341] sm:$0x1] 0.0
  %5010 = vst [vmem:[#allocation2 + $0x359] sm:$0x1] 0.0
  %s5011 = scalar_lea.vmem [#allocation2], 24
  %5012 = vst [vmem:[%s5011 + $0x1] sm:$0xff] %v4862
  %5013 = vst [vmem:[%s5011 + $0x9] sm:$0xff] %v4863
  %5014 = vst [vmem:[%s5011 + $0x19] sm:$0xff] %v4864
  %5015 = vst [vmem:[%s5011 + $0x21] sm:$0xff] %v4865
  %5016 = vst [vmem:[%s5011 + $0x31] sm:$0xff] %v4866
  %5017 = vst [vmem:[%s5011 + $0x39] sm:$0xff] %v4867
  %5018 = vst [vmem:[%s5011 + $0x49] sm:$0xff] %v4868
  %5019 = vst [vmem:[%s5011 + $0x51] sm:$0xff] %v4869
  %5020 = vst [vmem:[%s5011 + $0x61] sm:$0xff] %v4870
  %5021 = vst [vmem:[%s5011 + $0x69] sm:$0xff] %v4871
  %5022 = vst [vmem:[%s5011 + $0x79] sm:$0xff] %v4872
  %5023 = vst [vmem:[%s5011 + $0x81] sm:$0xff] %v4873
  %5024 = vst [vmem:[%s5011 + $0x91] sm:$0xff] %v4874
  %5025 = vst [vmem:[%s5011 + $0x99] sm:$0xff] %v4875
  %5026 = vst [vmem:[%s5011 + $0xa9] sm:$0xff] %v4876
  %5027 = vst [vmem:[%s5011 + $0xb1] sm:$0xff] %v4877
  %5028 = vst [vmem:[%s5011 + $0xc1] sm:$0xff] %v4878
  %5029 = vst [vmem:[%s5011 + $0xc9] sm:$0xff] %v4879
  %5030 = vst [vmem:[%s5011 + $0xd9] sm:$0xff] %v4880
  %5031 = vst [vmem:[%s5011 + $0xe1] sm:$0xff] %v4881
  %5032 = vst [vmem:[%s5011 + $0xf1] sm:$0xff] %v4882
  %5033 = vst [vmem:[%s5011 + $0xf9] sm:$0xff] %v4883
  %5034 = vst [vmem:[%s5011 + $0x109] sm:$0xff] %v4884
  %5035 = vst [vmem:[%s5011 + $0x111] sm:$0xff] %v4885
  %5036 = vst [vmem:[%s5011 + $0x121] sm:$0xff] %v4886
  %5037 = vst [vmem:[%s5011 + $0x129] sm:$0xff] %v4887
  %5038 = vst [vmem:[%s5011 + $0x139] sm:$0xff] %v4888
  %5039 = vst [vmem:[%s5011 + $0x141] sm:$0xff] %v4889
  %5040 = vst [vmem:[%s5011 + $0x151] sm:$0xff] %v4890
  %5041 = vst [vmem:[%s5011 + $0x159] sm:$0xff] %v4891
  %5042 = vst [vmem:[%s5011 + $0x169] sm:$0xff] %v4892
  %5043 = vst [vmem:[%s5011 + $0x171] sm:$0xff] %v4893
  %5044 = vst [vmem:[%s5011 + $0x1b1] sm:$0xff] %v4894
  %5045 = vst [vmem:[%s5011 + $0x1b9] sm:$0xff] %v4895
  %5046 = vst [vmem:[%s5011 + $0x1c9] sm:$0xff] %v4896
  %5047 = vst [vmem:[%s5011 + $0x1d1] sm:$0xff] %v4897
  %5048 = vst [vmem:[%s5011 + $0x1e1] sm:$0xff] %v4898
  %5049 = vst [vmem:[%s5011 + $0x1e9] sm:$0xff] %v4899
  %5050 = vst [vmem:[%s5011 + $0x1f9] sm:$0xff] %v4900
  %5051 = vst [vmem:[%s5011 + $0x201] sm:$0xff] %v4901
  %5052 = vst [vmem:[%s5011 + $0x211] sm:$0xff] %v4902
  %5053 = vst [vmem:[%s5011 + $0x219] sm:$0xff] %v4903
  %5054 = vst [vmem:[%s5011 + $0x229] sm:$0xff] %v4904
  %5055 = vst [vmem:[%s5011 + $0x231] sm:$0xff] %v4905
  %5056 = vst [vmem:[%s5011 + $0x241] sm:$0xff] %v4906
  %5057 = vst [vmem:[%s5011 + $0x249] sm:$0xff] %v4907
  %5058 = vst [vmem:[%s5011 + $0x259] sm:$0xff] %v4908
  %5059 = vst [vmem:[%s5011 + $0x261] sm:$0xff] %v4909
  %5060 = vst [vmem:[%s5011 + $0x271] sm:$0xff] %v4910
  %5061 = vst [vmem:[%s5011 + $0x279] sm:$0xff] %v4911
  %5062 = vst [vmem:[%s5011 + $0x289] sm:$0xff] %v4912
  %5063 = vst [vmem:[%s5011 + $0x291] sm:$0xff] %v4913
  %5064 = vst [vmem:[%s5011 + $0x2a1] sm:$0xff] %v4914
  %5065 = vst [vmem:[%s5011 + $0x2a9] sm:$0xff] %v4915
  %5066 = vst [vmem:[%s5011 + $0x2b9] sm:$0xff] %v4916
  %5067 = vst [vmem:[%s5011 + $0x2c1] sm:$0xff] %v4917
  %5068 = vst [vmem:[%s5011 + $0x2d1] sm:$0xff] %v4918
  %5069 = vst [vmem:[%s5011 + $0x2d9] sm:$0xff] %v4919
  %5070 = vst [vmem:[%s5011 + $0x2e9] sm:$0xff] %v4920
  %5071 = vst [vmem:[%s5011 + $0x2f1] sm:$0xff] %v4921
  %5072 = vst [vmem:[%s5011 + $0x301] sm:$0xff] %v4922
  %5073 = vst [vmem:[%s5011 + $0x309] sm:$0xff] %v4923
  %5074 = vst [vmem:[%s5011 + $0x319] sm:$0xff] %v4924
  %5075 = vst [vmem:[%s5011 + $0x321] sm:$0xff] %v4925
  %v5076 = vld [vmem:[%s1616 + $0x1] sm:$0xff]
  %v5077 = vld [vmem:[%s1616 + $0x9] sm:$0xff]
  %v5078 = vld [vmem:[%s1616 + $0x19] sm:$0xff]
  %v5079 = vld [vmem:[%s1616 + $0x21] sm:$0xff]
  %v5080 = vld [vmem:[%s1616 + $0x31] sm:$0xff]
  %v5081 = vld [vmem:[%s1616 + $0x39] sm:$0xff]
  %v5082 = vld [vmem:[%s1616 + $0x49] sm:$0xff]
  %v5083 = vld [vmem:[%s1616 + $0x51] sm:$0xff]
  %v5084 = vld [vmem:[%s1616 + $0x61] sm:$0xff]
  %v5085 = vld [vmem:[%s1616 + $0x69] sm:$0xff]
  %v5086 = vld [vmem:[%s1616 + $0x79] sm:$0xff]
  %v5087 = vld [vmem:[%s1616 + $0x81] sm:$0xff]
  %v5088 = vld [vmem:[%s1616 + $0x91] sm:$0xff]
  %v5089 = vld [vmem:[%s1616 + $0x99] sm:$0xff]
  %v5090 = vld [vmem:[%s1616 + $0xa9] sm:$0xff]
  %v5091 = vld [vmem:[%s1616 + $0xb1] sm:$0xff]
  %v5092 = vld [vmem:[%s1616 + $0xc1] sm:$0xff]
  %v5093 = vld [vmem:[%s1616 + $0xc9] sm:$0xff]
  %v5094 = vld [vmem:[%s1616 + $0xd9] sm:$0xff]
  %v5095 = vld [vmem:[%s1616 + $0xe1] sm:$0xff]
  %v5096 = vld [vmem:[%s1616 + $0xf1] sm:$0xff]
  %v5097 = vld [vmem:[%s1616 + $0xf9] sm:$0xff]
  %v5098 = vld [vmem:[%s1616 + $0x109] sm:$0xff]
  %v5099 = vld [vmem:[%s1616 + $0x111] sm:$0xff]
  %v5100 = vld [vmem:[%s1616 + $0x121] sm:$0xff]
  %v5101 = vld [vmem:[%s1616 + $0x129] sm:$0xff]
  %v5102 = vld [vmem:[%s1616 + $0x139] sm:$0xff]
  %v5103 = vld [vmem:[%s1616 + $0x141] sm:$0xff]
  %v5104 = vld [vmem:[%s1616 + $0x151] sm:$0xff]
  %v5105 = vld [vmem:[%s1616 + $0x159] sm:$0xff]
  %v5106 = vld [vmem:[%s1616 + $0x169] sm:$0xff]
  %v5107 = vld [vmem:[%s1616 + $0x171] sm:$0xff]
  %v5108 = vld [vmem:[%s1616 + $0x1b1] sm:$0xff]
  %v5109 = vld [vmem:[%s1616 + $0x1b9] sm:$0xff]
  %v5110 = vld [vmem:[%s1616 + $0x1c9] sm:$0xff]
  %v5111 = vld [vmem:[%s1616 + $0x1d1] sm:$0xff]
  %v5112 = vld [vmem:[%s1616 + $0x1e1] sm:$0xff]
  %v5113 = vld [vmem:[%s1616 + $0x1e9] sm:$0xff]
  %v5114 = vld [vmem:[%s1616 + $0x1f9] sm:$0xff]
  %v5115 = vld [vmem:[%s1616 + $0x201] sm:$0xff]
  %v5116 = vld [vmem:[%s1616 + $0x211] sm:$0xff]
  %v5117 = vld [vmem:[%s1616 + $0x219] sm:$0xff]
  %v5118 = vld [vmem:[%s1616 + $0x229] sm:$0xff]
  %v5119 = vld [vmem:[%s1616 + $0x231] sm:$0xff]
  %v5120 = vld [vmem:[%s1616 + $0x241] sm:$0xff]
  %v5121 = vld [vmem:[%s1616 + $0x249] sm:$0xff]
  %v5122 = vld [vmem:[%s1616 + $0x259] sm:$0xff]
  %v5123 = vld [vmem:[%s1616 + $0x261] sm:$0xff]
  %v5124 = vld [vmem:[%s1616 + $0x271] sm:$0xff]
  %v5125 = vld [vmem:[%s1616 + $0x279] sm:$0xff]
  %v5126 = vld [vmem:[%s1616 + $0x289] sm:$0xff]
  %v5127 = vld [vmem:[%s1616 + $0x291] sm:$0xff]
  %v5128 = vld [vmem:[%s1616 + $0x2a1] sm:$0xff]
  %v5129 = vld [vmem:[%s1616 + $0x2a9] sm:$0xff]
  %v5130 = vld [vmem:[%s1616 + $0x2b9] sm:$0xff]
  %v5131 = vld [vmem:[%s1616 + $0x2c1] sm:$0xff]
  %v5132 = vld [vmem:[%s1616 + $0x2d1] sm:$0xff]
  %v5133 = vld [vmem:[%s1616 + $0x2d9] sm:$0xff]
  %v5134 = vld [vmem:[%s1616 + $0x2e9] sm:$0xff]
  %v5135 = vld [vmem:[%s1616 + $0x2f1] sm:$0xff]
  %v5136 = vld [vmem:[%s1616 + $0x301] sm:$0xff]
  %v5137 = vld [vmem:[%s1616 + $0x309] sm:$0xff]
  %v5138 = vld [vmem:[%s1616 + $0x319] sm:$0xff]
  %v5139 = vld [vmem:[%s1616 + $0x321] sm:$0xff]
  %v5140 = vld [vmem:[%s4] sm:$0x1]
  %v5142 = vlaneseq
  %v5143 = vshrl.u32 %v5142, 7
  %v5144 = vsub.s32 0, %v5143
  %v5145 = vrot.slane %v5140, %v5144
  %v5147 = vadd.f32 %v5076, %v5145
  %v5148 = vadd.f32 %v5077, %v5145
  %v5149 = vadd.f32 %v5078, %v5145
  %v5150 = vadd.f32 %v5079, %v5145
  %v5151 = vadd.f32 %v5080, %v5145
  %v5152 = vadd.f32 %v5081, %v5145
  %v5153 = vadd.f32 %v5082, %v5145
  %v5154 = vadd.f32 %v5083, %v5145
  %v5155 = vadd.f32 %v5084, %v5145
  %v5156 = vadd.f32 %v5085, %v5145
  %v5157 = vadd.f32 %v5086, %v5145
  %v5158 = vadd.f32 %v5087, %v5145
  %v5159 = vadd.f32 %v5088, %v5145
  %v5160 = vadd.f32 %v5089, %v5145
  %v5161 = vadd.f32 %v5090, %v5145
  %v5162 = vadd.f32 %v5091, %v5145
  %v5163 = vadd.f32 %v5092, %v5145
  %v5164 = vadd.f32 %v5093, %v5145
  %v5165 = vadd.f32 %v5094, %v5145
  %v5166 = vadd.f32 %v5095, %v5145
  %v5167 = vadd.f32 %v5096, %v5145
  %v5168 = vadd.f32 %v5097, %v5145
  %v5169 = vadd.f32 %v5098, %v5145
  %v5170 = vadd.f32 %v5099, %v5145
  %v5171 = vadd.f32 %v5100, %v5145
  %v5172 = vadd.f32 %v5101, %v5145
  %v5173 = vadd.f32 %v5102, %v5145
  %v5174 = vadd.f32 %v5103, %v5145
  %v5175 = vadd.f32 %v5104, %v5145
  %v5176 = vadd.f32 %v5105, %v5145
  %v5177 = vadd.f32 %v5106, %v5145
  %v5178 = vadd.f32 %v5107, %v5145
  %v5179 = vadd.f32 %v5108, %v5145
  %v5180 = vadd.f32 %v5109, %v5145
  %v5181 = vadd.f32 %v5110, %v5145
  %v5182 = vadd.f32 %v5111, %v5145
  %v5183 = vadd.f32 %v5112, %v5145
  %v5184 = vadd.f32 %v5113, %v5145
  %v5185 = vadd.f32 %v5114, %v5145
  %v5186 = vadd.f32 %v5115, %v5145
  %v5187 = vadd.f32 %v5116, %v5145
  %v5188 = vadd.f32 %v5117, %v5145
  %v5189 = vadd.f32 %v5118, %v5145
  %v5190 = vadd.f32 %v5119, %v5145
  %v5191 = vadd.f32 %v5120, %v5145
  %v5192 = vadd.f32 %v5121, %v5145
  %v5193 = vadd.f32 %v5122, %v5145
  %v5194 = vadd.f32 %v5123, %v5145
  %v5195 = vadd.f32 %v5124, %v5145
  %v5196 = vadd.f32 %v5125, %v5145
  %v5197 = vadd.f32 %v5126, %v5145
  %v5198 = vadd.f32 %v5127, %v5145
  %v5199 = vadd.f32 %v5128, %v5145
  %v5200 = vadd.f32 %v5129, %v5145
  %v5201 = vadd.f32 %v5130, %v5145
  %v5202 = vadd.f32 %v5131, %v5145
  %v5203 = vadd.f32 %v5132, %v5145
  %v5204 = vadd.f32 %v5133, %v5145
  %v5205 = vadd.f32 %v5134, %v5145
  %v5206 = vadd.f32 %v5135, %v5145
  %v5207 = vadd.f32 %v5136, %v5145
  %v5208 = vadd.f32 %v5137, %v5145
  %v5209 = vadd.f32 %v5138, %v5145
  %v5210 = vadd.f32 %v5139, %v5145
  %v5211 = vld [vmem:[#allocation2] sm:$0xff]
  %v5212 = vld [vmem:[#allocation2 + $0x8] sm:$0xff]
  %v5213 = vld [vmem:[#allocation2 + $0x18] sm:$0xff]
  %v5214 = vld [vmem:[#allocation2 + $0x20] sm:$0xff]
  %v5215 = vld [vmem:[#allocation2 + $0x30] sm:$0xff]
  %v5216 = vld [vmem:[#allocation2 + $0x38] sm:$0xff]
  %v5217 = vld [vmem:[#allocation2 + $0x48] sm:$0xff]
  %v5218 = vld [vmem:[#allocation2 + $0x50] sm:$0xff]
  %v5219 = vld [vmem:[#allocation2 + $0x60] sm:$0xff]
  %v5220 = vld [vmem:[#allocation2 + $0x68] sm:$0xff]
  %v5221 = vld [vmem:[#allocation2 + $0x78] sm:$0xff]
  %v5222 = vld [vmem:[#allocation2 + $0x80] sm:$0xff]
  %v5223 = vld [vmem:[#allocation2 + $0x90] sm:$0xff]
  %v5224 = vld [vmem:[#allocation2 + $0x98] sm:$0xff]
  %v5225 = vld [vmem:[#allocation2 + $0xa8] sm:$0xff]
  %v5226 = vld [vmem:[#allocation2 + $0xb0] sm:$0xff]
  %v5227 = vld [vmem:[#allocation2 + $0xc0] sm:$0xff]
  %v5228 = vld [vmem:[#allocation2 + $0xc8] sm:$0xff]
  %v5229 = vld [vmem:[#allocation2 + $0xd8] sm:$0xff]
  %v5230 = vld [vmem:[#allocation2 + $0xe0] sm:$0xff]
  %v5231 = vld [vmem:[#allocation2 + $0xf0] sm:$0xff]
  %v5232 = vld [vmem:[#allocation2 + $0xf8] sm:$0xff]
  %v5233 = vld [vmem:[#allocation2 + $0x108] sm:$0xff]
  %v5234 = vld [vmem:[#allocation2 + $0x110] sm:$0xff]
  %v5235 = vld [vmem:[#allocation2 + $0x120] sm:$0xff]
  %v5236 = vld [vmem:[#allocation2 + $0x128] sm:$0xff]
  %v5237 = vld [vmem:[#allocation2 + $0x138] sm:$0xff]
  %v5238 = vld [vmem:[#allocation2 + $0x140] sm:$0xff]
  %v5239 = vld [vmem:[#allocation2 + $0x150] sm:$0xff]
  %v5240 = vld [vmem:[#allocation2 + $0x158] sm:$0xff]
  %v5241 = vld [vmem:[#allocation2 + $0x168] sm:$0xff]
  %v5242 = vld [vmem:[#allocation2 + $0x170] sm:$0xff]
  %v5243 = vld [vmem:[#allocation2 + $0x1b0] sm:$0xff]
  %v5244 = vld [vmem:[#allocation2 + $0x1b8] sm:$0xff]
  %v5245 = vld [vmem:[#allocation2 + $0x1c8] sm:$0xff]
  %v5246 = vld [vmem:[#allocation2 + $0x1d0] sm:$0xff]
  %v5247 = vld [vmem:[#allocation2 + $0x1e0] sm:$0xff]
  %v5248 = vld [vmem:[#allocation2 + $0x1e8] sm:$0xff]
  %v5249 = vld [vmem:[#allocation2 + $0x1f8] sm:$0xff]
  %v5250 = vld [vmem:[#allocation2 + $0x200] sm:$0xff]
  %v5251 = vld [vmem:[#allocation2 + $0x210] sm:$0xff]
  %v5252 = vld [vmem:[#allocation2 + $0x218] sm:$0xff]
  %v5253 = vld [vmem:[#allocation2 + $0x228] sm:$0xff]
  %v5254 = vld [vmem:[#allocation2 + $0x230] sm:$0xff]
  %v5255 = vld [vmem:[#allocation2 + $0x240] sm:$0xff]
  %v5256 = vld [vmem:[#allocation2 + $0x248] sm:$0xff]
  %v5257 = vld [vmem:[#allocation2 + $0x258] sm:$0xff]
  %v5258 = vld [vmem:[#allocation2 + $0x260] sm:$0xff]
  %v5259 = vld [vmem:[#allocation2 + $0x270] sm:$0xff]
  %v5260 = vld [vmem:[#allocation2 + $0x278] sm:$0xff]
  %v5261 = vld [vmem:[#allocation2 + $0x288] sm:$0xff]
  %v5262 = vld [vmem:[#allocation2 + $0x290] sm:$0xff]
  %v5263 = vld [vmem:[#allocation2 + $0x2a0] sm:$0xff]
  %v5264 = vld [vmem:[#allocation2 + $0x2a8] sm:$0xff]
  %v5265 = vld [vmem:[#allocation2 + $0x2b8] sm:$0xff]
  %v5266 = vld [vmem:[#allocation2 + $0x2c0] sm:$0xff]
  %v5267 = vld [vmem:[#allocation2 + $0x2d0] sm:$0xff]
  %v5268 = vld [vmem:[#allocation2 + $0x2d8] sm:$0xff]
  %v5269 = vld [vmem:[#allocation2 + $0x2e8] sm:$0xff]
  %v5270 = vld [vmem:[#allocation2 + $0x2f0] sm:$0xff]
  %v5271 = vld [vmem:[#allocation2 + $0x300] sm:$0xff]
  %v5272 = vld [vmem:[#allocation2 + $0x308] sm:$0xff]
  %v5273 = vld [vmem:[#allocation2 + $0x318] sm:$0xff]
  %v5274 = vld [vmem:[#allocation2 + $0x320] sm:$0xff]
  %v5275 = vld [vmem:[%s3] sm:$0xff]
  %v5276 = vld [vmem:[%s3 + $0x8] sm:$0xff]
  %v5277 = vld [vmem:[%s3 + $0x10] sm:$0xff]
  %v5278 = vld [vmem:[%s3 + $0x18] sm:$0xff]
  %v5279 = vld [vmem:[%s3 + $0x20] sm:$0xff]
  %v5280 = vld [vmem:[%s3 + $0x28] sm:$0xff]
  %v5281 = vld [vmem:[%s3 + $0x30] sm:$0xff]
  %v5282 = vld [vmem:[%s3 + $0x38] sm:$0xff]
  %v5283 = vld [vmem:[%s3 + $0x40] sm:$0xff]
  %v5284 = vld [vmem:[%s3 + $0x48] sm:$0xff]
  %v5285 = vld [vmem:[%s3 + $0x50] sm:$0xff]
  %v5286 = vld [vmem:[%s3 + $0x58] sm:$0xff]
  %v5287 = vld [vmem:[%s3 + $0x60] sm:$0xff]
  %v5288 = vld [vmem:[%s3 + $0x68] sm:$0xff]
  %v5289 = vld [vmem:[%s3 + $0x70] sm:$0xff]
  %v5290 = vld [vmem:[%s3 + $0x78] sm:$0xff]
  %5291 = vmatprep.subr.mxu0 0.0
  %5292 = vmatpush1.msra.mxu0 %v5290
  %5293 = vmatprep.subr.mxu0 0.0
  %5294 = vmatpush1.msra.mxu0 %v5289
  %5295 = vmatprep.subr.mxu0 0.0
  %5296 = vmatpush1.msra.mxu0 %v5288
  %5297 = vmatprep.subr.mxu0 0.0
  %5298 = vmatpush1.msra.mxu0 %v5287
  %5299 = vmatprep.subr.mxu0 0.0
  %5300 = vmatpush1.msra.mxu0 %v5286
  %5301 = vmatprep.subr.mxu0 0.0
  %5302 = vmatpush1.msra.mxu0 %v5285
  %5303 = vmatprep.subr.mxu0 0.0
  %5304 = vmatpush1.msra.mxu0 %v5284
  %5305 = vmatprep.subr.mxu0 0.0
  %5306 = vmatpush1.msra.mxu0 %v5283
  %5307 = vmatprep.subr.mxu0 0.0
  %5308 = vmatpush1.msra.mxu0 %v5282
  %5309 = vmatprep.subr.mxu0 0.0
  %5310 = vmatpush1.msra.mxu0 %v5281
  %5311 = vmatprep.subr.mxu0 0.0
  %5312 = vmatpush1.msra.mxu0 %v5280
  %5313 = vmatprep.subr.mxu0 0.0
  %5314 = vmatpush1.msra.mxu0 %v5279
  %5315 = vmatprep.subr.mxu0 0.0
  %5316 = vmatpush1.msra.mxu0 %v5278
  %5317 = vmatprep.subr.mxu0 0.0
  %5318 = vmatpush1.msra.mxu0 %v5277
  %5319 = vmatprep.subr.mxu0 0.0
  %5320 = vmatpush1.msra.mxu0 %v5276
  %5321 = vmatprep.subr.mxu0 0.0
  %5322 = vmatpush1.msra.mxu0 %v5275
  %5323 = vmatprep.subr.mxu0 0.0
  %5324 = vmatpush2.msra.mxu0 0.0
  %5325 = vmatprep.subr.mxu0 0.0
  %5326 = vmatpush2.msra.mxu0 0.0
  %5327 = vmatprep.subr.mxu0 0.0
  %5328 = vmatpush2.msra.mxu0 0.0
  %5329 = vmatprep.subr.mxu0 0.0
  %5330 = vmatpush2.msra.mxu0 0.0
  %5331 = vmatprep.subr.mxu0 0.0
  %5332 = vmatpush2.msra.mxu0 0.0
  %5333 = vmatprep.subr.mxu0 0.0
  %5334 = vmatpush2.msra.mxu0 0.0
  %5335 = vmatprep.subr.mxu0 0.0
  %5336 = vmatpush2.msra.mxu0 0.0
  %5337 = vmatprep.subr.mxu0 0.0
  %5338 = vmatpush2.msra.mxu0 0.0
  %5339 = vmatprep.subr.mxu0 0.0
  %5340 = vmatpush2.msra.mxu0 0.0
  %5341 = vmatprep.subr.mxu0 0.0
  %5342 = vmatpush2.msra.mxu0 0.0
  %5343 = vmatprep.subr.mxu0 0.0
  %5344 = vmatpush2.msra.mxu0 0.0
  %5345 = vmatprep.subr.mxu0 0.0
  %5346 = vmatpush2.msra.mxu0 0.0
  %5347 = vmatprep.subr.mxu0 0.0
  %5348 = vmatpush2.msra.mxu0 0.0
  %5349 = vmatprep.subr.mxu0 0.0
  %5350 = vmatpush2.msra.mxu0 0.0
  %5351 = vmatprep.subr.mxu0 0.0
  %5352 = vmatpush2.msra.mxu0 0.0
  %5353 = vmatprep.subr.mxu0 0.0
  %5354 = vmatpush2.msra.mxu0 0.0
  %5355 = vmatprep.mubr.f32.mxu0 0.0
  %5356 = vmatmul.mubr.f32.gmra.mxu0 %v5211
  %v5357 = vpop.f32.mrf.mxu0
  %v5358 = vadd.f32 0.0, %v5357
  %v5359 = vpop.f32.mrf.mxu0
  %5360 = vmatprep.mubr.f32.mxu0 0.0
  %5361 = vmatmul.mubr.f32.gmra.mxu0 %v5212
  %v5362 = vpop.f32.mrf.mxu0
  %v5363 = vadd.f32 0.0, %v5362
  %v5364 = vpop.f32.mrf.mxu0
  %5365 = vmatprep.mubr.f32.mxu0 0.0
  %5366 = vmatmul.mubr.f32.gmra.mxu0 %v5213
  %v5367 = vpop.f32.mrf.mxu0
  %v5368 = vadd.f32 0.0, %v5367
  %v5369 = vpop.f32.mrf.mxu0
  %5370 = vmatprep.mubr.f32.mxu0 0.0
  %5371 = vmatmul.mubr.f32.gmra.mxu0 %v5214
  %v5372 = vpop.f32.mrf.mxu0
  %v5373 = vadd.f32 0.0, %v5372
  %v5374 = vpop.f32.mrf.mxu0
  %5375 = vmatprep.mubr.f32.mxu0 0.0
  %5376 = vmatmul.mubr.f32.gmra.mxu0 %v5215
  %v5377 = vpop.f32.mrf.mxu0
  %v5378 = vadd.f32 0.0, %v5377
  %v5379 = vpop.f32.mrf.mxu0
  %5380 = vmatprep.mubr.f32.mxu0 0.0
  %5381 = vmatmul.mubr.f32.gmra.mxu0 %v5216
  %v5382 = vpop.f32.mrf.mxu0
  %v5383 = vadd.f32 0.0, %v5382
  %v5384 = vpop.f32.mrf.mxu0
  %5385 = vmatprep.mubr.f32.mxu0 0.0
  %5386 = vmatmul.mubr.f32.gmra.mxu0 %v5217
  %v5387 = vpop.f32.mrf.mxu0
  %v5388 = vadd.f32 0.0, %v5387
  %v5389 = vpop.f32.mrf.mxu0
  %5390 = vmatprep.mubr.f32.mxu0 0.0
  %5391 = vmatmul.mubr.f32.gmra.mxu0 %v5218
  %v5392 = vpop.f32.mrf.mxu0
  %v5393 = vadd.f32 0.0, %v5392
  %v5394 = vpop.f32.mrf.mxu0
  %5395 = vmatprep.mubr.f32.mxu0 0.0
  %5396 = vmatmul.mubr.f32.gmra.mxu0 %v5219
  %v5397 = vpop.f32.mrf.mxu0
  %v5398 = vadd.f32 0.0, %v5397
  %v5399 = vpop.f32.mrf.mxu0
  %5400 = vmatprep.mubr.f32.mxu0 0.0
  %5401 = vmatmul.mubr.f32.gmra.mxu0 %v5220
  %v5402 = vpop.f32.mrf.mxu0
  %v5403 = vadd.f32 0.0, %v5402
  %v5404 = vpop.f32.mrf.mxu0
  %5405 = vmatprep.mubr.f32.mxu0 0.0
  %5406 = vmatmul.mubr.f32.gmra.mxu0 %v5221
  %v5407 = vpop.f32.mrf.mxu0
  %v5408 = vadd.f32 0.0, %v5407
  %v5409 = vpop.f32.mrf.mxu0
  %5410 = vmatprep.mubr.f32.mxu0 0.0
  %5411 = vmatmul.mubr.f32.gmra.mxu0 %v5222
  %v5412 = vpop.f32.mrf.mxu0
  %v5413 = vadd.f32 0.0, %v5412
  %v5414 = vpop.f32.mrf.mxu0
  %5415 = vmatprep.mubr.f32.mxu0 0.0
  %5416 = vmatmul.mubr.f32.gmra.mxu0 %v5223
  %v5417 = vpop.f32.mrf.mxu0
  %v5418 = vadd.f32 0.0, %v5417
  %v5419 = vpop.f32.mrf.mxu0
  %5420 = vmatprep.mubr.f32.mxu0 0.0
  %5421 = vmatmul.mubr.f32.gmra.mxu0 %v5224
  %v5422 = vpop.f32.mrf.mxu0
  %v5423 = vadd.f32 0.0, %v5422
  %v5424 = vpop.f32.mrf.mxu0
  %5425 = vmatprep.mubr.f32.mxu0 0.0
  %5426 = vmatmul.mubr.f32.gmra.mxu0 %v5225
  %v5427 = vpop.f32.mrf.mxu0
  %v5428 = vadd.f32 0.0, %v5427
  %v5429 = vpop.f32.mrf.mxu0
  %5430 = vmatprep.mubr.f32.mxu0 0.0
  %5431 = vmatmul.mubr.f32.gmra.mxu0 %v5226
  %v5432 = vpop.f32.mrf.mxu0
  %v5433 = vadd.f32 0.0, %v5432
  %v5434 = vpop.f32.mrf.mxu0
  %5435 = vmatprep.mubr.f32.mxu0 0.0
  %5436 = vmatmul.mubr.f32.gmra.mxu0 %v5227
  %v5437 = vpop.f32.mrf.mxu0
  %v5438 = vadd.f32 0.0, %v5437
  %v5439 = vpop.f32.mrf.mxu0
  %5440 = vmatprep.mubr.f32.mxu0 0.0
  %5441 = vmatmul.mubr.f32.gmra.mxu0 %v5228
  %v5442 = vpop.f32.mrf.mxu0
  %v5443 = vadd.f32 0.0, %v5442
  %v5444 = vpop.f32.mrf.mxu0
  %5445 = vmatprep.mubr.f32.mxu0 0.0
  %5446 = vmatmul.mubr.f32.gmra.mxu0 %v5229
  %v5447 = vpop.f32.mrf.mxu0
  %v5448 = vadd.f32 0.0, %v5447
  %v5449 = vpop.f32.mrf.mxu0
  %5450 = vmatprep.mubr.f32.mxu0 0.0
  %5451 = vmatmul.mubr.f32.gmra.mxu0 %v5230
  %v5452 = vpop.f32.mrf.mxu0
  %v5453 = vadd.f32 0.0, %v5452
  %v5454 = vpop.f32.mrf.mxu0
  %5455 = vmatprep.mubr.f32.mxu0 0.0
  %5456 = vmatmul.mubr.f32.gmra.mxu0 %v5231
  %v5457 = vpop.f32.mrf.mxu0
  %v5458 = vadd.f32 0.0, %v5457
  %v5459 = vpop.f32.mrf.mxu0
  %5460 = vmatprep.mubr.f32.mxu0 0.0
  %5461 = vmatmul.mubr.f32.gmra.mxu0 %v5232
  %v5462 = vpop.f32.mrf.mxu0
  %v5463 = vadd.f32 0.0, %v5462
  %v5464 = vpop.f32.mrf.mxu0
  %5465 = vmatprep.mubr.f32.mxu0 0.0
  %5466 = vmatmul.mubr.f32.gmra.mxu0 %v5233
  %v5467 = vpop.f32.mrf.mxu0
  %v5468 = vadd.f32 0.0, %v5467
  %v5469 = vpop.f32.mrf.mxu0
  %5470 = vmatprep.mubr.f32.mxu0 0.0
  %5471 = vmatmul.mubr.f32.gmra.mxu0 %v5234
  %v5472 = vpop.f32.mrf.mxu0
  %v5473 = vadd.f32 0.0, %v5472
  %v5474 = vpop.f32.mrf.mxu0
  %5475 = vmatprep.mubr.f32.mxu0 0.0
  %5476 = vmatmul.mubr.f32.gmra.mxu0 %v5235
  %v5477 = vpop.f32.mrf.mxu0
  %v5478 = vadd.f32 0.0, %v5477
  %v5479 = vpop.f32.mrf.mxu0
  %5480 = vmatprep.mubr.f32.mxu0 0.0
  %5481 = vmatmul.mubr.f32.gmra.mxu0 %v5236
  %v5482 = vpop.f32.mrf.mxu0
  %v5483 = vadd.f32 0.0, %v5482
  %v5484 = vpop.f32.mrf.mxu0
  %5485 = vmatprep.mubr.f32.mxu0 0.0
  %5486 = vmatmul.mubr.f32.gmra.mxu0 %v5237
  %v5487 = vpop.f32.mrf.mxu0
  %v5488 = vadd.f32 0.0, %v5487
  %v5489 = vpop.f32.mrf.mxu0
  %5490 = vmatprep.mubr.f32.mxu0 0.0
  %5491 = vmatmul.mubr.f32.gmra.mxu0 %v5238
  %v5492 = vpop.f32.mrf.mxu0
  %v5493 = vadd.f32 0.0, %v5492
  %v5494 = vpop.f32.mrf.mxu0
  %5495 = vmatprep.mubr.f32.mxu0 0.0
  %5496 = vmatmul.mubr.f32.gmra.mxu0 %v5239
  %v5497 = vpop.f32.mrf.mxu0
  %v5498 = vadd.f32 0.0, %v5497
  %v5499 = vpop.f32.mrf.mxu0
  %5500 = vmatprep.mubr.f32.mxu0 0.0
  %5501 = vmatmul.mubr.f32.gmra.mxu0 %v5240
  %v5502 = vpop.f32.mrf.mxu0
  %v5503 = vadd.f32 0.0, %v5502
  %v5504 = vpop.f32.mrf.mxu0
  %5505 = vmatprep.mubr.f32.mxu0 0.0
  %5506 = vmatmul.mubr.f32.gmra.mxu0 %v5241
  %v5507 = vpop.f32.mrf.mxu0
  %v5508 = vadd.f32 0.0, %v5507
  %v5509 = vpop.f32.mrf.mxu0
  %5510 = vmatprep.mubr.f32.mxu0 0.0
  %5511 = vmatmul.mubr.f32.gmra.mxu0 %v5242
  %v5512 = vpop.f32.mrf.mxu0
  %v5513 = vadd.f32 0.0, %v5512
  %v5514 = vpop.f32.mrf.mxu0
  %5515 = vmatprep.mubr.f32.mxu0 0.0
  %5516 = vmatmul.mubr.f32.gmra.mxu0 %v5243
  %v5517 = vpop.f32.mrf.mxu0
  %v5518 = vadd.f32 0.0, %v5517
  %v5519 = vpop.f32.mrf.mxu0
  %5520 = vmatprep.mubr.f32.mxu0 0.0
  %5521 = vmatmul.mubr.f32.gmra.mxu0 %v5244
  %v5522 = vpop.f32.mrf.mxu0
  %v5523 = vadd.f32 0.0, %v5522
  %v5524 = vpop.f32.mrf.mxu0
  %5525 = vmatprep.mubr.f32.mxu0 0.0
  %5526 = vmatmul.mubr.f32.gmra.mxu0 %v5245
  %v5527 = vpop.f32.mrf.mxu0
  %v5528 = vadd.f32 0.0, %v5527
  %v5529 = vpop.f32.mrf.mxu0
  %5530 = vmatprep.mubr.f32.mxu0 0.0
  %5531 = vmatmul.mubr.f32.gmra.mxu0 %v5246
  %v5532 = vpop.f32.mrf.mxu0
  %v5533 = vadd.f32 0.0, %v5532
  %v5534 = vpop.f32.mrf.mxu0
  %5535 = vmatprep.mubr.f32.mxu0 0.0
  %5536 = vmatmul.mubr.f32.gmra.mxu0 %v5247
  %v5537 = vpop.f32.mrf.mxu0
  %v5538 = vadd.f32 0.0, %v5537
  %v5539 = vpop.f32.mrf.mxu0
  %5540 = vmatprep.mubr.f32.mxu0 0.0
  %5541 = vmatmul.mubr.f32.gmra.mxu0 %v5248
  %v5542 = vpop.f32.mrf.mxu0
  %v5543 = vadd.f32 0.0, %v5542
  %v5544 = vpop.f32.mrf.mxu0
  %5545 = vmatprep.mubr.f32.mxu0 0.0
  %5546 = vmatmul.mubr.f32.gmra.mxu0 %v5249
  %v5547 = vpop.f32.mrf.mxu0
  %v5548 = vadd.f32 0.0, %v5547
  %v5549 = vpop.f32.mrf.mxu0
  %5550 = vmatprep.mubr.f32.mxu0 0.0
  %5551 = vmatmul.mubr.f32.gmra.mxu0 %v5250
  %v5552 = vpop.f32.mrf.mxu0
  %v5553 = vadd.f32 0.0, %v5552
  %v5554 = vpop.f32.mrf.mxu0
  %5555 = vmatprep.mubr.f32.mxu0 0.0
  %5556 = vmatmul.mubr.f32.gmra.mxu0 %v5251
  %v5557 = vpop.f32.mrf.mxu0
  %v5558 = vadd.f32 0.0, %v5557
  %v5559 = vpop.f32.mrf.mxu0
  %5560 = vmatprep.mubr.f32.mxu0 0.0
  %5561 = vmatmul.mubr.f32.gmra.mxu0 %v5252
  %v5562 = vpop.f32.mrf.mxu0
  %v5563 = vadd.f32 0.0, %v5562
  %v5564 = vpop.f32.mrf.mxu0
  %5565 = vmatprep.mubr.f32.mxu0 0.0
  %5566 = vmatmul.mubr.f32.gmra.mxu0 %v5253
  %v5567 = vpop.f32.mrf.mxu0
  %v5568 = vadd.f32 0.0, %v5567
  %v5569 = vpop.f32.mrf.mxu0
  %5570 = vmatprep.mubr.f32.mxu0 0.0
  %5571 = vmatmul.mubr.f32.gmra.mxu0 %v5254
  %v5572 = vpop.f32.mrf.mxu0
  %v5573 = vadd.f32 0.0, %v5572
  %v5574 = vpop.f32.mrf.mxu0
  %5575 = vmatprep.mubr.f32.mxu0 0.0
  %5576 = vmatmul.mubr.f32.gmra.mxu0 %v5255
  %v5577 = vpop.f32.mrf.mxu0
  %v5578 = vadd.f32 0.0, %v5577
  %v5579 = vpop.f32.mrf.mxu0
  %5580 = vmatprep.mubr.f32.mxu0 0.0
  %5581 = vmatmul.mubr.f32.gmra.mxu0 %v5256
  %v5582 = vpop.f32.mrf.mxu0
  %v5583 = vadd.f32 0.0, %v5582
  %v5584 = vpop.f32.mrf.mxu0
  %5585 = vmatprep.mubr.f32.mxu0 0.0
  %5586 = vmatmul.mubr.f32.gmra.mxu0 %v5257
  %v5587 = vpop.f32.mrf.mxu0
  %v5588 = vadd.f32 0.0, %v5587
  %v5589 = vpop.f32.mrf.mxu0
  %5590 = vmatprep.mubr.f32.mxu0 0.0
  %5591 = vmatmul.mubr.f32.gmra.mxu0 %v5258
  %v5592 = vpop.f32.mrf.mxu0
  %v5593 = vadd.f32 0.0, %v5592
  %v5594 = vpop.f32.mrf.mxu0
  %5595 = vmatprep.mubr.f32.mxu0 0.0
  %5596 = vmatmul.mubr.f32.gmra.mxu0 %v5259
  %v5597 = vpop.f32.mrf.mxu0
  %v5598 = vadd.f32 0.0, %v5597
  %v5599 = vpop.f32.mrf.mxu0
  %5600 = vmatprep.mubr.f32.mxu0 0.0
  %5601 = vmatmul.mubr.f32.gmra.mxu0 %v5260
  %v5602 = vpop.f32.mrf.mxu0
  %v5603 = vadd.f32 0.0, %v5602
  %v5604 = vpop.f32.mrf.mxu0
  %5605 = vmatprep.mubr.f32.mxu0 0.0
  %5606 = vmatmul.mubr.f32.gmra.mxu0 %v5261
  %v5607 = vpop.f32.mrf.mxu0
  %v5608 = vadd.f32 0.0, %v5607
  %v5609 = vpop.f32.mrf.mxu0
  %5610 = vmatprep.mubr.f32.mxu0 0.0
  %5611 = vmatmul.mubr.f32.gmra.mxu0 %v5262
  %v5612 = vpop.f32.mrf.mxu0
  %v5613 = vadd.f32 0.0, %v5612
  %v5614 = vpop.f32.mrf.mxu0
  %5615 = vmatprep.mubr.f32.mxu0 0.0
  %5616 = vmatmul.mubr.f32.gmra.mxu0 %v5263
  %v5617 = vpop.f32.mrf.mxu0
  %v5618 = vadd.f32 0.0, %v5617
  %v5619 = vpop.f32.mrf.mxu0
  %5620 = vmatprep.mubr.f32.mxu0 0.0
  %5621 = vmatmul.mubr.f32.gmra.mxu0 %v5264
  %v5622 = vpop.f32.mrf.mxu0
  %v5623 = vadd.f32 0.0, %v5622
  %v5624 = vpop.f32.mrf.mxu0
  %5625 = vmatprep.mubr.f32.mxu0 0.0
  %5626 = vmatmul.mubr.f32.gmra.mxu0 %v5265
  %v5627 = vpop.f32.mrf.mxu0
  %v5628 = vadd.f32 0.0, %v5627
  %v5629 = vpop.f32.mrf.mxu0
  %5630 = vmatprep.mubr.f32.mxu0 0.0
  %5631 = vmatmul.mubr.f32.gmra.mxu0 %v5266
  %v5632 = vpop.f32.mrf.mxu0
  %v5633 = vadd.f32 0.0, %v5632
  %v5634 = vpop.f32.mrf.mxu0
  %5635 = vmatprep.mubr.f32.mxu0 0.0
  %5636 = vmatmul.mubr.f32.gmra.mxu0 %v5267
  %v5637 = vpop.f32.mrf.mxu0
  %v5638 = vadd.f32 0.0, %v5637
  %v5639 = vpop.f32.mrf.mxu0
  %5640 = vmatprep.mubr.f32.mxu0 0.0
  %5641 = vmatmul.mubr.f32.gmra.mxu0 %v5268
  %v5642 = vpop.f32.mrf.mxu0
  %v5643 = vadd.f32 0.0, %v5642
  %v5644 = vpop.f32.mrf.mxu0
  %5645 = vmatprep.mubr.f32.mxu0 0.0
  %5646 = vmatmul.mubr.f32.gmra.mxu0 %v5269
  %v5647 = vpop.f32.mrf.mxu0
  %v5648 = vadd.f32 0.0, %v5647
  %v5649 = vpop.f32.mrf.mxu0
  %5650 = vmatprep.mubr.f32.mxu0 0.0
  %5651 = vmatmul.mubr.f32.gmra.mxu0 %v5270
  %v5652 = vpop.f32.mrf.mxu0
  %v5653 = vadd.f32 0.0, %v5652
  %v5654 = vpop.f32.mrf.mxu0
  %5655 = vmatprep.mubr.f32.mxu0 0.0
  %5656 = vmatmul.mubr.f32.gmra.mxu0 %v5271
  %v5657 = vpop.f32.mrf.mxu0
  %v5658 = vadd.f32 0.0, %v5657
  %v5659 = vpop.f32.mrf.mxu0
  %5660 = vmatprep.mubr.f32.mxu0 0.0
  %5661 = vmatmul.mubr.f32.gmra.mxu0 %v5272
  %v5662 = vpop.f32.mrf.mxu0
  %v5663 = vadd.f32 0.0, %v5662
  %v5664 = vpop.f32.mrf.mxu0
  %5665 = vmatprep.mubr.f32.mxu0 0.0
  %5666 = vmatmul.mubr.f32.gmra.mxu0 %v5273
  %v5667 = vpop.f32.mrf.mxu0
  %v5668 = vadd.f32 0.0, %v5667
  %v5669 = vpop.f32.mrf.mxu0
  %5670 = vmatprep.mubr.f32.mxu0 0.0
  %5671 = vmatmul.mubr.f32.gmra.mxu0 %v5274
  %v5672 = vpop.f32.mrf.mxu0
  %v5673 = vadd.f32 0.0, %v5672
  %v5674 = vpop.f32.mrf.mxu0
  %5675 = vdwg.mxu0
  %v5676 = vadd.f32 %v5147, %v5358
  %v5677 = vadd.f32 %v5148, %v5363
  %v5678 = vadd.f32 %v5149, %v5368
  %v5679 = vadd.f32 %v5150, %v5373
  %v5680 = vadd.f32 %v5151, %v5378
  %v5681 = vadd.f32 %v5152, %v5383
  %v5682 = vadd.f32 %v5153, %v5388
  %v5683 = vadd.f32 %v5154, %v5393
  %v5684 = vadd.f32 %v5155, %v5398
  %v5685 = vadd.f32 %v5156, %v5403
  %v5686 = vadd.f32 %v5157, %v5408
  %v5687 = vadd.f32 %v5158, %v5413
  %v5688 = vadd.f32 %v5159, %v5418
  %v5689 = vadd.f32 %v5160, %v5423
  %v5690 = vadd.f32 %v5161, %v5428
  %v5691 = vadd.f32 %v5162, %v5433
  %v5692 = vadd.f32 %v5163, %v5438
  %v5693 = vadd.f32 %v5164, %v5443
  %v5694 = vadd.f32 %v5165, %v5448
  %v5695 = vadd.f32 %v5166, %v5453
  %v5696 = vadd.f32 %v5167, %v5458
  %v5697 = vadd.f32 %v5168, %v5463
  %v5698 = vadd.f32 %v5169, %v5468
  %v5699 = vadd.f32 %v5170, %v5473
  %v5700 = vadd.f32 %v5171, %v5478
  %v5701 = vadd.f32 %v5172, %v5483
  %v5702 = vadd.f32 %v5173, %v5488
  %v5703 = vadd.f32 %v5174, %v5493
  %v5704 = vadd.f32 %v5175, %v5498
  %v5705 = vadd.f32 %v5176, %v5503
  %v5706 = vadd.f32 %v5177, %v5508
  %v5707 = vadd.f32 %v5178, %v5513
  %v5708 = vadd.f32 %v5179, %v5518
  %v5709 = vadd.f32 %v5180, %v5523
  %v5710 = vadd.f32 %v5181, %v5528
  %v5711 = vadd.f32 %v5182, %v5533
  %v5712 = vadd.f32 %v5183, %v5538
  %v5713 = vadd.f32 %v5184, %v5543
  %v5714 = vadd.f32 %v5185, %v5548
  %v5715 = vadd.f32 %v5186, %v5553
  %v5716 = vadd.f32 %v5187, %v5558
  %v5717 = vadd.f32 %v5188, %v5563
  %v5718 = vadd.f32 %v5189, %v5568
  %v5719 = vadd.f32 %v5190, %v5573
  %v5720 = vadd.f32 %v5191, %v5578
  %v5721 = vadd.f32 %v5192, %v5583
  %v5722 = vadd.f32 %v5193, %v5588
  %v5723 = vadd.f32 %v5194, %v5593
  %v5724 = vadd.f32 %v5195, %v5598
  %v5725 = vadd.f32 %v5196, %v5603
  %v5726 = vadd.f32 %v5197, %v5608
  %v5727 = vadd.f32 %v5198, %v5613
  %v5728 = vadd.f32 %v5199, %v5618
  %v5729 = vadd.f32 %v5200, %v5623
  %v5730 = vadd.f32 %v5201, %v5628
  %v5731 = vadd.f32 %v5202, %v5633
  %v5732 = vadd.f32 %v5203, %v5638
  %v5733 = vadd.f32 %v5204, %v5643
  %v5734 = vadd.f32 %v5205, %v5648
  %v5735 = vadd.f32 %v5206, %v5653
  %v5736 = vadd.f32 %v5207, %v5658
  %v5737 = vadd.f32 %v5208, %v5663
  %v5738 = vadd.f32 %v5209, %v5668
  %v5739 = vadd.f32 %v5210, %v5673
  %v5740 = vld [vmem:[#allocation2 + $0x1] sm:$0xff]
  %v5741 = vld [vmem:[#allocation2 + $0x9] sm:$0xff]
  %v5742 = vld [vmem:[#allocation2 + $0x19] sm:$0xff]
  %v5743 = vld [vmem:[#allocation2 + $0x21] sm:$0xff]
  %v5744 = vld [vmem:[#allocation2 + $0x31] sm:$0xff]
  %v5745 = vld [vmem:[#allocation2 + $0x39] sm:$0xff]
  %v5746 = vld [vmem:[#allocation2 + $0x49] sm:$0xff]
  %v5747 = vld [vmem:[#allocation2 + $0x51] sm:$0xff]
  %v5748 = vld [vmem:[#allocation2 + $0x61] sm:$0xff]
  %v5749 = vld [vmem:[#allocation2 + $0x69] sm:$0xff]
  %v5750 = vld [vmem:[#allocation2 + $0x79] sm:$0xff]
  %v5751 = vld [vmem:[#allocation2 + $0x81] sm:$0xff]
  %v5752 = vld [vmem:[#allocation2 + $0x91] sm:$0xff]
  %v5753 = vld [vmem:[#allocation2 + $0x99] sm:$0xff]
  %v5754 = vld [vmem:[#allocation2 + $0xa9] sm:$0xff]
  %v5755 = vld [vmem:[#allocation2 + $0xb1] sm:$0xff]
  %v5756 = vld [vmem:[#allocation2 + $0xc1] sm:$0xff]
  %v5757 = vld [vmem:[#allocation2 + $0xc9] sm:$0xff]
  %v5758 = vld [vmem:[#allocation2 + $0xd9] sm:$0xff]
  %v5759 = vld [vmem:[#allocation2 + $0xe1] sm:$0xff]
  %v5760 = vld [vmem:[#allocation2 + $0xf1] sm:$0xff]
  %v5761 = vld [vmem:[#allocation2 + $0xf9] sm:$0xff]
  %v5762 = vld [vmem:[#allocation2 + $0x109] sm:$0xff]
  %v5763 = vld [vmem:[#allocation2 + $0x111] sm:$0xff]
  %v5764 = vld [vmem:[#allocation2 + $0x121] sm:$0xff]
  %v5765 = vld [vmem:[#allocation2 + $0x129] sm:$0xff]
  %v5766 = vld [vmem:[#allocation2 + $0x139] sm:$0xff]
  %v5767 = vld [vmem:[#allocation2 + $0x141] sm:$0xff]
  %v5768 = vld [vmem:[#allocation2 + $0x151] sm:$0xff]
  %v5769 = vld [vmem:[#allocation2 + $0x159] sm:$0xff]
  %v5770 = vld [vmem:[#allocation2 + $0x169] sm:$0xff]
  %v5771 = vld [vmem:[#allocation2 + $0x171] sm:$0xff]
  %v5772 = vld [vmem:[#allocation2 + $0x1b1] sm:$0xff]
  %v5773 = vld [vmem:[#allocation2 + $0x1b9] sm:$0xff]
  %v5774 = vld [vmem:[#allocation2 + $0x1c9] sm:$0xff]
  %v5775 = vld [vmem:[#allocation2 + $0x1d1] sm:$0xff]
  %v5776 = vld [vmem:[#allocation2 + $0x1e1] sm:$0xff]
  %v5777 = vld [vmem:[#allocation2 + $0x1e9] sm:$0xff]
  %v5778 = vld [vmem:[#allocation2 + $0x1f9] sm:$0xff]
  %v5779 = vld [vmem:[#allocation2 + $0x201] sm:$0xff]
  %v5780 = vld [vmem:[#allocation2 + $0x211] sm:$0xff]
  %v5781 = vld [vmem:[#allocation2 + $0x219] sm:$0xff]
  %v5782 = vld [vmem:[#allocation2 + $0x229] sm:$0xff]
  %v5783 = vld [vmem:[#allocation2 + $0x231] sm:$0xff]
  %v5784 = vld [vmem:[#allocation2 + $0x241] sm:$0xff]
  %v5785 = vld [vmem:[#allocation2 + $0x249] sm:$0xff]
  %v5786 = vld [vmem:[#allocation2 + $0x259] sm:$0xff]
  %v5787 = vld [vmem:[#allocation2 + $0x261] sm:$0xff]
  %v5788 = vld [vmem:[#allocation2 + $0x271] sm:$0xff]
  %v5789 = vld [vmem:[#allocation2 + $0x279] sm:$0xff]
  %v5790 = vld [vmem:[#allocation2 + $0x289] sm:$0xff]
  %v5791 = vld [vmem:[#allocation2 + $0x291] sm:$0xff]
  %v5792 = vld [vmem:[#allocation2 + $0x2a1] sm:$0xff]
  %v5793 = vld [vmem:[#allocation2 + $0x2a9] sm:$0xff]
  %v5794 = vld [vmem:[#allocation2 + $0x2b9] sm:$0xff]
  %v5795 = vld [vmem:[#allocation2 + $0x2c1] sm:$0xff]
  %v5796 = vld [vmem:[#allocation2 + $0x2d1] sm:$0xff]
  %v5797 = vld [vmem:[#allocation2 + $0x2d9] sm:$0xff]
  %v5798 = vld [vmem:[#allocation2 + $0x2e9] sm:$0xff]
  %v5799 = vld [vmem:[#allocation2 + $0x2f1] sm:$0xff]
  %v5800 = vld [vmem:[#allocation2 + $0x301] sm:$0xff]
  %v5801 = vld [vmem:[#allocation2 + $0x309] sm:$0xff]
  %v5802 = vld [vmem:[#allocation2 + $0x319] sm:$0xff]
  %v5803 = vld [vmem:[#allocation2 + $0x321] sm:$0xff]
  %s5804 = scalar_lea.vmem %s3, 128
  %v5805 = vld [vmem:[%s5804] sm:$0xff]
  %v5806 = vld [vmem:[%s5804 + $0x8] sm:$0xff]
  %v5807 = vld [vmem:[%s5804 + $0x10] sm:$0xff]
  %v5808 = vld [vmem:[%s5804 + $0x18] sm:$0xff]
  %v5809 = vld [vmem:[%s5804 + $0x20] sm:$0xff]
  %v5810 = vld [vmem:[%s5804 + $0x28] sm:$0xff]
  %v5811 = vld [vmem:[%s5804 + $0x30] sm:$0xff]
  %v5812 = vld [vmem:[%s5804 + $0x38] sm:$0xff]
  %v5813 = vld [vmem:[%s5804 + $0x40] sm:$0xff]
  %v5814 = vld [vmem:[%s5804 + $0x48] sm:$0xff]
  %v5815 = vld [vmem:[%s5804 + $0x50] sm:$0xff]
  %v5816 = vld [vmem:[%s5804 + $0x58] sm:$0xff]
  %v5817 = vld [vmem:[%s5804 + $0x60] sm:$0xff]
  %v5818 = vld [vmem:[%s5804 + $0x68] sm:$0xff]
  %v5819 = vld [vmem:[%s5804 + $0x70] sm:$0xff]
  %v5820 = vld [vmem:[%s5804 + $0x78] sm:$0xff]
  %5821 = vmatprep.subr.mxu0 0.0
  %5822 = vmatpush1.msra.mxu0 %v5820
  %5823 = vmatprep.subr.mxu0 0.0
  %5824 = vmatpush1.msra.mxu0 %v5819
  %5825 = vmatprep.subr.mxu0 0.0
  %5826 = vmatpush1.msra.mxu0 %v5818
  %5827 = vmatprep.subr.mxu0 0.0
  %5828 = vmatpush1.msra.mxu0 %v5817
  %5829 = vmatprep.subr.mxu0 0.0
  %5830 = vmatpush1.msra.mxu0 %v5816
  %5831 = vmatprep.subr.mxu0 0.0
  %5832 = vmatpush1.msra.mxu0 %v5815
  %5833 = vmatprep.subr.mxu0 0.0
  %5834 = vmatpush1.msra.mxu0 %v5814
  %5835 = vmatprep.subr.mxu0 0.0
  %5836 = vmatpush1.msra.mxu0 %v5813
  %5837 = vmatprep.subr.mxu0 0.0
  %5838 = vmatpush1.msra.mxu0 %v5812
  %5839 = vmatprep.subr.mxu0 0.0
  %5840 = vmatpush1.msra.mxu0 %v5811
  %5841 = vmatprep.subr.mxu0 0.0
  %5842 = vmatpush1.msra.mxu0 %v5810
  %5843 = vmatprep.subr.mxu0 0.0
  %5844 = vmatpush1.msra.mxu0 %v5809
  %5845 = vmatprep.subr.mxu0 0.0
  %5846 = vmatpush1.msra.mxu0 %v5808
  %5847 = vmatprep.subr.mxu0 0.0
  %5848 = vmatpush1.msra.mxu0 %v5807
  %5849 = vmatprep.subr.mxu0 0.0
  %5850 = vmatpush1.msra.mxu0 %v5806
  %5851 = vmatprep.subr.mxu0 0.0
  %5852 = vmatpush1.msra.mxu0 %v5805
  %5853 = vmatprep.subr.mxu0 0.0
  %5854 = vmatpush2.msra.mxu0 0.0
  %5855 = vmatprep.subr.mxu0 0.0
  %5856 = vmatpush2.msra.mxu0 0.0
  %5857 = vmatprep.subr.mxu0 0.0
  %5858 = vmatpush2.msra.mxu0 0.0
  %5859 = vmatprep.subr.mxu0 0.0
  %5860 = vmatpush2.msra.mxu0 0.0
  %5861 = vmatprep.subr.mxu0 0.0
  %5862 = vmatpush2.msra.mxu0 0.0
  %5863 = vmatprep.subr.mxu0 0.0
  %5864 = vmatpush2.msra.mxu0 0.0
  %5865 = vmatprep.subr.mxu0 0.0
  %5866 = vmatpush2.msra.mxu0 0.0
  %5867 = vmatprep.subr.mxu0 0.0
  %5868 = vmatpush2.msra.mxu0 0.0
  %5869 = vmatprep.subr.mxu0 0.0
  %5870 = vmatpush2.msra.mxu0 0.0
  %5871 = vmatprep.subr.mxu0 0.0
  %5872 = vmatpush2.msra.mxu0 0.0
  %5873 = vmatprep.subr.mxu0 0.0
  %5874 = vmatpush2.msra.mxu0 0.0
  %5875 = vmatprep.subr.mxu0 0.0
  %5876 = vmatpush2.msra.mxu0 0.0
  %5877 = vmatprep.subr.mxu0 0.0
  %5878 = vmatpush2.msra.mxu0 0.0
  %5879 = vmatprep.subr.mxu0 0.0
  %5880 = vmatpush2.msra.mxu0 0.0
  %5881 = vmatprep.subr.mxu0 0.0
  %5882 = vmatpush2.msra.mxu0 0.0
  %5883 = vmatprep.subr.mxu0 0.0
  %5884 = vmatpush2.msra.mxu0 0.0
  %5885 = vmatprep.mubr.f32.mxu0 0.0
  %5886 = vmatmul.mubr.f32.gmra.mxu0 %v5740
  %v5887 = vpop.f32.mrf.mxu0
  %v5888 = vadd.f32 0.0, %v5887
  %v5889 = vpop.f32.mrf.mxu0
  %5890 = vmatprep.mubr.f32.mxu0 0.0
  %5891 = vmatmul.mubr.f32.gmra.mxu0 %v5741
  %v5892 = vpop.f32.mrf.mxu0
  %v5893 = vadd.f32 0.0, %v5892
  %v5894 = vpop.f32.mrf.mxu0
  %5895 = vmatprep.mubr.f32.mxu0 0.0
  %5896 = vmatmul.mubr.f32.gmra.mxu0 %v5742
  %v5897 = vpop.f32.mrf.mxu0
  %v5898 = vadd.f32 0.0, %v5897
  %v5899 = vpop.f32.mrf.mxu0
  %5900 = vmatprep.mubr.f32.mxu0 0.0
  %5901 = vmatmul.mubr.f32.gmra.mxu0 %v5743
  %v5902 = vpop.f32.mrf.mxu0
  %v5903 = vadd.f32 0.0, %v5902
  %v5904 = vpop.f32.mrf.mxu0
  %5905 = vmatprep.mubr.f32.mxu0 0.0
  %5906 = vmatmul.mubr.f32.gmra.mxu0 %v5744
  %v5907 = vpop.f32.mrf.mxu0
  %v5908 = vadd.f32 0.0, %v5907
  %v5909 = vpop.f32.mrf.mxu0
  %5910 = vmatprep.mubr.f32.mxu0 0.0
  %5911 = vmatmul.mubr.f32.gmra.mxu0 %v5745
  %v5912 = vpop.f32.mrf.mxu0
  %v5913 = vadd.f32 0.0, %v5912
  %v5914 = vpop.f32.mrf.mxu0
  %5915 = vmatprep.mubr.f32.mxu0 0.0
  %5916 = vmatmul.mubr.f32.gmra.mxu0 %v5746
  %v5917 = vpop.f32.mrf.mxu0
  %v5918 = vadd.f32 0.0, %v5917
  %v5919 = vpop.f32.mrf.mxu0
  %5920 = vmatprep.mubr.f32.mxu0 0.0
  %5921 = vmatmul.mubr.f32.gmra.mxu0 %v5747
  %v5922 = vpop.f32.mrf.mxu0
  %v5923 = vadd.f32 0.0, %v5922
  %v5924 = vpop.f32.mrf.mxu0
  %5925 = vmatprep.mubr.f32.mxu0 0.0
  %5926 = vmatmul.mubr.f32.gmra.mxu0 %v5748
  %v5927 = vpop.f32.mrf.mxu0
  %v5928 = vadd.f32 0.0, %v5927
  %v5929 = vpop.f32.mrf.mxu0
  %5930 = vmatprep.mubr.f32.mxu0 0.0
  %5931 = vmatmul.mubr.f32.gmra.mxu0 %v5749
  %v5932 = vpop.f32.mrf.mxu0
  %v5933 = vadd.f32 0.0, %v5932
  %v5934 = vpop.f32.mrf.mxu0
  %5935 = vmatprep.mubr.f32.mxu0 0.0
  %5936 = vmatmul.mubr.f32.gmra.mxu0 %v5750
  %v5937 = vpop.f32.mrf.mxu0
  %v5938 = vadd.f32 0.0, %v5937
  %v5939 = vpop.f32.mrf.mxu0
  %5940 = vmatprep.mubr.f32.mxu0 0.0
  %5941 = vmatmul.mubr.f32.gmra.mxu0 %v5751
  %v5942 = vpop.f32.mrf.mxu0
  %v5943 = vadd.f32 0.0, %v5942
  %v5944 = vpop.f32.mrf.mxu0
  %5945 = vmatprep.mubr.f32.mxu0 0.0
  %5946 = vmatmul.mubr.f32.gmra.mxu0 %v5752
  %v5947 = vpop.f32.mrf.mxu0
  %v5948 = vadd.f32 0.0, %v5947
  %v5949 = vpop.f32.mrf.mxu0
  %5950 = vmatprep.mubr.f32.mxu0 0.0
  %5951 = vmatmul.mubr.f32.gmra.mxu0 %v5753
  %v5952 = vpop.f32.mrf.mxu0
  %v5953 = vadd.f32 0.0, %v5952
  %v5954 = vpop.f32.mrf.mxu0
  %5955 = vmatprep.mubr.f32.mxu0 0.0
  %5956 = vmatmul.mubr.f32.gmra.mxu0 %v5754
  %v5957 = vpop.f32.mrf.mxu0
  %v5958 = vadd.f32 0.0, %v5957
  %v5959 = vpop.f32.mrf.mxu0
  %5960 = vmatprep.mubr.f32.mxu0 0.0
  %5961 = vmatmul.mubr.f32.gmra.mxu0 %v5755
  %v5962 = vpop.f32.mrf.mxu0
  %v5963 = vadd.f32 0.0, %v5962
  %v5964 = vpop.f32.mrf.mxu0
  %5965 = vmatprep.mubr.f32.mxu0 0.0
  %5966 = vmatmul.mubr.f32.gmra.mxu0 %v5756
  %v5967 = vpop.f32.mrf.mxu0
  %v5968 = vadd.f32 0.0, %v5967
  %v5969 = vpop.f32.mrf.mxu0
  %5970 = vmatprep.mubr.f32.mxu0 0.0
  %5971 = vmatmul.mubr.f32.gmra.mxu0 %v5757
  %v5972 = vpop.f32.mrf.mxu0
  %v5973 = vadd.f32 0.0, %v5972
  %v5974 = vpop.f32.mrf.mxu0
  %5975 = vmatprep.mubr.f32.mxu0 0.0
  %5976 = vmatmul.mubr.f32.gmra.mxu0 %v5758
  %v5977 = vpop.f32.mrf.mxu0
  %v5978 = vadd.f32 0.0, %v5977
  %v5979 = vpop.f32.mrf.mxu0
  %5980 = vmatprep.mubr.f32.mxu0 0.0
  %5981 = vmatmul.mubr.f32.gmra.mxu0 %v5759
  %v5982 = vpop.f32.mrf.mxu0
  %v5983 = vadd.f32 0.0, %v5982
  %v5984 = vpop.f32.mrf.mxu0
  %5985 = vmatprep.mubr.f32.mxu0 0.0
  %5986 = vmatmul.mubr.f32.gmra.mxu0 %v5760
  %v5987 = vpop.f32.mrf.mxu0
  %v5988 = vadd.f32 0.0, %v5987
  %v5989 = vpop.f32.mrf.mxu0
  %5990 = vmatprep.mubr.f32.mxu0 0.0
  %5991 = vmatmul.mubr.f32.gmra.mxu0 %v5761
  %v5992 = vpop.f32.mrf.mxu0
  %v5993 = vadd.f32 0.0, %v5992
  %v5994 = vpop.f32.mrf.mxu0
  %5995 = vmatprep.mubr.f32.mxu0 0.0
  %5996 = vmatmul.mubr.f32.gmra.mxu0 %v5762
  %v5997 = vpop.f32.mrf.mxu0
  %v5998 = vadd.f32 0.0, %v5997
  %v5999 = vpop.f32.mrf.mxu0
  %6000 = vmatprep.mubr.f32.mxu0 0.0
  %6001 = vmatmul.mubr.f32.gmra.mxu0 %v5763
  %v6002 = vpop.f32.mrf.mxu0
  %v6003 = vadd.f32 0.0, %v6002
  %v6004 = vpop.f32.mrf.mxu0
  %6005 = vmatprep.mubr.f32.mxu0 0.0
  %6006 = vmatmul.mubr.f32.gmra.mxu0 %v5764
  %v6007 = vpop.f32.mrf.mxu0
  %v6008 = vadd.f32 0.0, %v6007
  %v6009 = vpop.f32.mrf.mxu0
  %6010 = vmatprep.mubr.f32.mxu0 0.0
  %6011 = vmatmul.mubr.f32.gmra.mxu0 %v5765
  %v6012 = vpop.f32.mrf.mxu0
  %v6013 = vadd.f32 0.0, %v6012
  %v6014 = vpop.f32.mrf.mxu0
  %6015 = vmatprep.mubr.f32.mxu0 0.0
  %6016 = vmatmul.mubr.f32.gmra.mxu0 %v5766
  %v6017 = vpop.f32.mrf.mxu0
  %v6018 = vadd.f32 0.0, %v6017
  %v6019 = vpop.f32.mrf.mxu0
  %6020 = vmatprep.mubr.f32.mxu0 0.0
  %6021 = vmatmul.mubr.f32.gmra.mxu0 %v5767
  %v6022 = vpop.f32.mrf.mxu0
  %v6023 = vadd.f32 0.0, %v6022
  %v6024 = vpop.f32.mrf.mxu0
  %6025 = vmatprep.mubr.f32.mxu0 0.0
  %6026 = vmatmul.mubr.f32.gmra.mxu0 %v5768
  %v6027 = vpop.f32.mrf.mxu0
  %v6028 = vadd.f32 0.0, %v6027
  %v6029 = vpop.f32.mrf.mxu0
  %6030 = vmatprep.mubr.f32.mxu0 0.0
  %6031 = vmatmul.mubr.f32.gmra.mxu0 %v5769
  %v6032 = vpop.f32.mrf.mxu0
  %v6033 = vadd.f32 0.0, %v6032
  %v6034 = vpop.f32.mrf.mxu0
  %6035 = vmatprep.mubr.f32.mxu0 0.0
  %6036 = vmatmul.mubr.f32.gmra.mxu0 %v5770
  %v6037 = vpop.f32.mrf.mxu0
  %v6038 = vadd.f32 0.0, %v6037
  %v6039 = vpop.f32.mrf.mxu0
  %6040 = vmatprep.mubr.f32.mxu0 0.0
  %6041 = vmatmul.mubr.f32.gmra.mxu0 %v5771
  %v6042 = vpop.f32.mrf.mxu0
  %v6043 = vadd.f32 0.0, %v6042
  %v6044 = vpop.f32.mrf.mxu0
  %6045 = vmatprep.mubr.f32.mxu0 0.0
  %6046 = vmatmul.mubr.f32.gmra.mxu0 %v5772
  %v6047 = vpop.f32.mrf.mxu0
  %v6048 = vadd.f32 0.0, %v6047
  %v6049 = vpop.f32.mrf.mxu0
  %6050 = vmatprep.mubr.f32.mxu0 0.0
  %6051 = vmatmul.mubr.f32.gmra.mxu0 %v5773
  %v6052 = vpop.f32.mrf.mxu0
  %v6053 = vadd.f32 0.0, %v6052
  %v6054 = vpop.f32.mrf.mxu0
  %6055 = vmatprep.mubr.f32.mxu0 0.0
  %6056 = vmatmul.mubr.f32.gmra.mxu0 %v5774
  %v6057 = vpop.f32.mrf.mxu0
  %v6058 = vadd.f32 0.0, %v6057
  %v6059 = vpop.f32.mrf.mxu0
  %6060 = vmatprep.mubr.f32.mxu0 0.0
  %6061 = vmatmul.mubr.f32.gmra.mxu0 %v5775
  %v6062 = vpop.f32.mrf.mxu0
  %v6063 = vadd.f32 0.0, %v6062
  %v6064 = vpop.f32.mrf.mxu0
  %6065 = vmatprep.mubr.f32.mxu0 0.0
  %6066 = vmatmul.mubr.f32.gmra.mxu0 %v5776
  %v6067 = vpop.f32.mrf.mxu0
  %v6068 = vadd.f32 0.0, %v6067
  %v6069 = vpop.f32.mrf.mxu0
  %6070 = vmatprep.mubr.f32.mxu0 0.0
  %6071 = vmatmul.mubr.f32.gmra.mxu0 %v5777
  %v6072 = vpop.f32.mrf.mxu0
  %v6073 = vadd.f32 0.0, %v6072
  %v6074 = vpop.f32.mrf.mxu0
  %6075 = vmatprep.mubr.f32.mxu0 0.0
  %6076 = vmatmul.mubr.f32.gmra.mxu0 %v5778
  %v6077 = vpop.f32.mrf.mxu0
  %v6078 = vadd.f32 0.0, %v6077
  %v6079 = vpop.f32.mrf.mxu0
  %6080 = vmatprep.mubr.f32.mxu0 0.0
  %6081 = vmatmul.mubr.f32.gmra.mxu0 %v5779
  %v6082 = vpop.f32.mrf.mxu0
  %v6083 = vadd.f32 0.0, %v6082
  %v6084 = vpop.f32.mrf.mxu0
  %6085 = vmatprep.mubr.f32.mxu0 0.0
  %6086 = vmatmul.mubr.f32.gmra.mxu0 %v5780
  %v6087 = vpop.f32.mrf.mxu0
  %v6088 = vadd.f32 0.0, %v6087
  %v6089 = vpop.f32.mrf.mxu0
  %6090 = vmatprep.mubr.f32.mxu0 0.0
  %6091 = vmatmul.mubr.f32.gmra.mxu0 %v5781
  %v6092 = vpop.f32.mrf.mxu0
  %v6093 = vadd.f32 0.0, %v6092
  %v6094 = vpop.f32.mrf.mxu0
  %6095 = vmatprep.mubr.f32.mxu0 0.0
  %6096 = vmatmul.mubr.f32.gmra.mxu0 %v5782
  %v6097 = vpop.f32.mrf.mxu0
  %v6098 = vadd.f32 0.0, %v6097
  %v6099 = vpop.f32.mrf.mxu0
  %6100 = vmatprep.mubr.f32.mxu0 0.0
  %6101 = vmatmul.mubr.f32.gmra.mxu0 %v5783
  %v6102 = vpop.f32.mrf.mxu0
  %v6103 = vadd.f32 0.0, %v6102
  %v6104 = vpop.f32.mrf.mxu0
  %6105 = vmatprep.mubr.f32.mxu0 0.0
  %6106 = vmatmul.mubr.f32.gmra.mxu0 %v5784
  %v6107 = vpop.f32.mrf.mxu0
  %v6108 = vadd.f32 0.0, %v6107
  %v6109 = vpop.f32.mrf.mxu0
  %6110 = vmatprep.mubr.f32.mxu0 0.0
  %6111 = vmatmul.mubr.f32.gmra.mxu0 %v5785
  %v6112 = vpop.f32.mrf.mxu0
  %v6113 = vadd.f32 0.0, %v6112
  %v6114 = vpop.f32.mrf.mxu0
  %6115 = vmatprep.mubr.f32.mxu0 0.0
  %6116 = vmatmul.mubr.f32.gmra.mxu0 %v5786
  %v6117 = vpop.f32.mrf.mxu0
  %v6118 = vadd.f32 0.0, %v6117
  %v6119 = vpop.f32.mrf.mxu0
  %6120 = vmatprep.mubr.f32.mxu0 0.0
  %6121 = vmatmul.mubr.f32.gmra.mxu0 %v5787
  %v6122 = vpop.f32.mrf.mxu0
  %v6123 = vadd.f32 0.0, %v6122
  %v6124 = vpop.f32.mrf.mxu0
  %6125 = vmatprep.mubr.f32.mxu0 0.0
  %6126 = vmatmul.mubr.f32.gmra.mxu0 %v5788
  %v6127 = vpop.f32.mrf.mxu0
  %v6128 = vadd.f32 0.0, %v6127
  %v6129 = vpop.f32.mrf.mxu0
  %6130 = vmatprep.mubr.f32.mxu0 0.0
  %6131 = vmatmul.mubr.f32.gmra.mxu0 %v5789
  %v6132 = vpop.f32.mrf.mxu0
  %v6133 = vadd.f32 0.0, %v6132
  %v6134 = vpop.f32.mrf.mxu0
  %6135 = vmatprep.mubr.f32.mxu0 0.0
  %6136 = vmatmul.mubr.f32.gmra.mxu0 %v5790
  %v6137 = vpop.f32.mrf.mxu0
  %v6138 = vadd.f32 0.0, %v6137
  %v6139 = vpop.f32.mrf.mxu0
  %6140 = vmatprep.mubr.f32.mxu0 0.0
  %6141 = vmatmul.mubr.f32.gmra.mxu0 %v5791
  %v6142 = vpop.f32.mrf.mxu0
  %v6143 = vadd.f32 0.0, %v6142
  %v6144 = vpop.f32.mrf.mxu0
  %6145 = vmatprep.mubr.f32.mxu0 0.0
  %6146 = vmatmul.mubr.f32.gmra.mxu0 %v5792
  %v6147 = vpop.f32.mrf.mxu0
  %v6148 = vadd.f32 0.0, %v6147
  %v6149 = vpop.f32.mrf.mxu0
  %6150 = vmatprep.mubr.f32.mxu0 0.0
  %6151 = vmatmul.mubr.f32.gmra.mxu0 %v5793
  %v6152 = vpop.f32.mrf.mxu0
  %v6153 = vadd.f32 0.0, %v6152
  %v6154 = vpop.f32.mrf.mxu0
  %6155 = vmatprep.mubr.f32.mxu0 0.0
  %6156 = vmatmul.mubr.f32.gmra.mxu0 %v5794
  %v6157 = vpop.f32.mrf.mxu0
  %v6158 = vadd.f32 0.0, %v6157
  %v6159 = vpop.f32.mrf.mxu0
  %6160 = vmatprep.mubr.f32.mxu0 0.0
  %6161 = vmatmul.mubr.f32.gmra.mxu0 %v5795
  %v6162 = vpop.f32.mrf.mxu0
  %v6163 = vadd.f32 0.0, %v6162
  %v6164 = vpop.f32.mrf.mxu0
  %6165 = vmatprep.mubr.f32.mxu0 0.0
  %6166 = vmatmul.mubr.f32.gmra.mxu0 %v5796
  %v6167 = vpop.f32.mrf.mxu0
  %v6168 = vadd.f32 0.0, %v6167
  %v6169 = vpop.f32.mrf.mxu0
  %6170 = vmatprep.mubr.f32.mxu0 0.0
  %6171 = vmatmul.mubr.f32.gmra.mxu0 %v5797
  %v6172 = vpop.f32.mrf.mxu0
  %v6173 = vadd.f32 0.0, %v6172
  %v6174 = vpop.f32.mrf.mxu0
  %6175 = vmatprep.mubr.f32.mxu0 0.0
  %6176 = vmatmul.mubr.f32.gmra.mxu0 %v5798
  %v6177 = vpop.f32.mrf.mxu0
  %v6178 = vadd.f32 0.0, %v6177
  %v6179 = vpop.f32.mrf.mxu0
  %6180 = vmatprep.mubr.f32.mxu0 0.0
  %6181 = vmatmul.mubr.f32.gmra.mxu0 %v5799
  %v6182 = vpop.f32.mrf.mxu0
  %v6183 = vadd.f32 0.0, %v6182
  %v6184 = vpop.f32.mrf.mxu0
  %6185 = vmatprep.mubr.f32.mxu0 0.0
  %6186 = vmatmul.mubr.f32.gmra.mxu0 %v5800
  %v6187 = vpop.f32.mrf.mxu0
  %v6188 = vadd.f32 0.0, %v6187
  %v6189 = vpop.f32.mrf.mxu0
  %6190 = vmatprep.mubr.f32.mxu0 0.0
  %6191 = vmatmul.mubr.f32.gmra.mxu0 %v5801
  %v6192 = vpop.f32.mrf.mxu0
  %v6193 = vadd.f32 0.0, %v6192
  %v6194 = vpop.f32.mrf.mxu0
  %6195 = vmatprep.mubr.f32.mxu0 0.0
  %6196 = vmatmul.mubr.f32.gmra.mxu0 %v5802
  %v6197 = vpop.f32.mrf.mxu0
  %v6198 = vadd.f32 0.0, %v6197
  %v6199 = vpop.f32.mrf.mxu0
  %6200 = vmatprep.mubr.f32.mxu0 0.0
  %6201 = vmatmul.mubr.f32.gmra.mxu0 %v5803
  %v6202 = vpop.f32.mrf.mxu0
  %v6203 = vadd.f32 0.0, %v6202
  %v6204 = vpop.f32.mrf.mxu0
  %6205 = vdwg.mxu0
  %v6206 = vadd.f32 %v5676, %v5888
  %v6207 = vadd.f32 %v5677, %v5893
  %v6208 = vadd.f32 %v5678, %v5898
  %v6209 = vadd.f32 %v5679, %v5903
  %v6210 = vadd.f32 %v5680, %v5908
  %v6211 = vadd.f32 %v5681, %v5913
  %v6212 = vadd.f32 %v5682, %v5918
  %v6213 = vadd.f32 %v5683, %v5923
  %v6214 = vadd.f32 %v5684, %v5928
  %v6215 = vadd.f32 %v5685, %v5933
  %v6216 = vadd.f32 %v5686, %v5938
  %v6217 = vadd.f32 %v5687, %v5943
  %v6218 = vadd.f32 %v5688, %v5948
  %v6219 = vadd.f32 %v5689, %v5953
  %v6220 = vadd.f32 %v5690, %v5958
  %v6221 = vadd.f32 %v5691, %v5963
  %v6222 = vadd.f32 %v5692, %v5968
  %v6223 = vadd.f32 %v5693, %v5973
  %v6224 = vadd.f32 %v5694, %v5978
  %v6225 = vadd.f32 %v5695, %v5983
  %v6226 = vadd.f32 %v5696, %v5988
  %v6227 = vadd.f32 %v5697, %v5993
  %v6228 = vadd.f32 %v5698, %v5998
  %v6229 = vadd.f32 %v5699, %v6003
  %v6230 = vadd.f32 %v5700, %v6008
  %v6231 = vadd.f32 %v5701, %v6013
  %v6232 = vadd.f32 %v5702, %v6018
  %v6233 = vadd.f32 %v5703, %v6023
  %v6234 = vadd.f32 %v5704, %v6028
  %v6235 = vadd.f32 %v5705, %v6033
  %v6236 = vadd.f32 %v5706, %v6038
  %v6237 = vadd.f32 %v5707, %v6043
  %v6238 = vadd.f32 %v5708, %v6048
  %v6239 = vadd.f32 %v5709, %v6053
  %v6240 = vadd.f32 %v5710, %v6058
  %v6241 = vadd.f32 %v5711, %v6063
  %v6242 = vadd.f32 %v5712, %v6068
  %v6243 = vadd.f32 %v5713, %v6073
  %v6244 = vadd.f32 %v5714, %v6078
  %v6245 = vadd.f32 %v5715, %v6083
  %v6246 = vadd.f32 %v5716, %v6088
  %v6247 = vadd.f32 %v5717, %v6093
  %v6248 = vadd.f32 %v5718, %v6098
  %v6249 = vadd.f32 %v5719, %v6103
  %v6250 = vadd.f32 %v5720, %v6108
  %v6251 = vadd.f32 %v5721, %v6113
  %v6252 = vadd.f32 %v5722, %v6118
  %v6253 = vadd.f32 %v5723, %v6123
  %v6254 = vadd.f32 %v5724, %v6128
  %v6255 = vadd.f32 %v5725, %v6133
  %v6256 = vadd.f32 %v5726, %v6138
  %v6257 = vadd.f32 %v5727, %v6143
  %v6258 = vadd.f32 %v5728, %v6148
  %v6259 = vadd.f32 %v5729, %v6153
  %v6260 = vadd.f32 %v5730, %v6158
  %v6261 = vadd.f32 %v5731, %v6163
  %v6262 = vadd.f32 %v5732, %v6168
  %v6263 = vadd.f32 %v5733, %v6173
  %v6264 = vadd.f32 %v5734, %v6178
  %v6265 = vadd.f32 %v5735, %v6183
  %v6266 = vadd.f32 %v5736, %v6188
  %v6267 = vadd.f32 %v5737, %v6193
  %v6268 = vadd.f32 %v5738, %v6198
  %v6269 = vadd.f32 %v5739, %v6203
  %v6270 = vld [vmem:[#allocation2 + $0x2] sm:$0xff]
  %v6271 = vld [vmem:[#allocation2 + $0xa] sm:$0xff]
  %v6272 = vld [vmem:[#allocation2 + $0x1a] sm:$0xff]
  %v6273 = vld [vmem:[#allocation2 + $0x22] sm:$0xff]
  %v6274 = vld [vmem:[#allocation2 + $0x32] sm:$0xff]
  %v6275 = vld [vmem:[#allocation2 + $0x3a] sm:$0xff]
  %v6276 = vld [vmem:[#allocation2 + $0x4a] sm:$0xff]
  %v6277 = vld [vmem:[#allocation2 + $0x52] sm:$0xff]
  %v6278 = vld [vmem:[#allocation2 + $0x62] sm:$0xff]
  %v6279 = vld [vmem:[#allocation2 + $0x6a] sm:$0xff]
  %v6280 = vld [vmem:[#allocation2 + $0x7a] sm:$0xff]
  %v6281 = vld [vmem:[#allocation2 + $0x82] sm:$0xff]
  %v6282 = vld [vmem:[#allocation2 + $0x92] sm:$0xff]
  %v6283 = vld [vmem:[#allocation2 + $0x9a] sm:$0xff]
  %v6284 = vld [vmem:[#allocation2 + $0xaa] sm:$0xff]
  %v6285 = vld [vmem:[#allocation2 + $0xb2] sm:$0xff]
  %v6286 = vld [vmem:[#allocation2 + $0xc2] sm:$0xff]
  %v6287 = vld [vmem:[#allocation2 + $0xca] sm:$0xff]
  %v6288 = vld [vmem:[#allocation2 + $0xda] sm:$0xff]
  %v6289 = vld [vmem:[#allocation2 + $0xe2] sm:$0xff]
  %v6290 = vld [vmem:[#allocation2 + $0xf2] sm:$0xff]
  %v6291 = vld [vmem:[#allocation2 + $0xfa] sm:$0xff]
  %v6292 = vld [vmem:[#allocation2 + $0x10a] sm:$0xff]
  %v6293 = vld [vmem:[#allocation2 + $0x112] sm:$0xff]
  %v6294 = vld [vmem:[#allocation2 + $0x122] sm:$0xff]
  %v6295 = vld [vmem:[#allocation2 + $0x12a] sm:$0xff]
  %v6296 = vld [vmem:[#allocation2 + $0x13a] sm:$0xff]
  %v6297 = vld [vmem:[#allocation2 + $0x142] sm:$0xff]
  %v6298 = vld [vmem:[#allocation2 + $0x152] sm:$0xff]
  %v6299 = vld [vmem:[#allocation2 + $0x15a] sm:$0xff]
  %v6300 = vld [vmem:[#allocation2 + $0x16a] sm:$0xff]
  %v6301 = vld [vmem:[#allocation2 + $0x172] sm:$0xff]
  %v6302 = vld [vmem:[#allocation2 + $0x1b2] sm:$0xff]
  %v6303 = vld [vmem:[#allocation2 + $0x1ba] sm:$0xff]
  %v6304 = vld [vmem:[#allocation2 + $0x1ca] sm:$0xff]
  %v6305 = vld [vmem:[#allocation2 + $0x1d2] sm:$0xff]
  %v6306 = vld [vmem:[#allocation2 + $0x1e2] sm:$0xff]
  %v6307 = vld [vmem:[#allocation2 + $0x1ea] sm:$0xff]
  %v6308 = vld [vmem:[#allocation2 + $0x1fa] sm:$0xff]
  %v6309 = vld [vmem:[#allocation2 + $0x202] sm:$0xff]
  %v6310 = vld [vmem:[#allocation2 + $0x212] sm:$0xff]
  %v6311 = vld [vmem:[#allocation2 + $0x21a] sm:$0xff]
  %v6312 = vld [vmem:[#allocation2 + $0x22a] sm:$0xff]
  %v6313 = vld [vmem:[#allocation2 + $0x232] sm:$0xff]
  %v6314 = vld [vmem:[#allocation2 + $0x242] sm:$0xff]
  %v6315 = vld [vmem:[#allocation2 + $0x24a] sm:$0xff]
  %v6316 = vld [vmem:[#allocation2 + $0x25a] sm:$0xff]
  %v6317 = vld [vmem:[#allocation2 + $0x262] sm:$0xff]
  %v6318 = vld [vmem:[#allocation2 + $0x272] sm:$0xff]
  %v6319 = vld [vmem:[#allocation2 + $0x27a] sm:$0xff]
  %v6320 = vld [vmem:[#allocation2 + $0x28a] sm:$0xff]
  %v6321 = vld [vmem:[#allocation2 + $0x292] sm:$0xff]
  %v6322 = vld [vmem:[#allocation2 + $0x2a2] sm:$0xff]
  %v6323 = vld [vmem:[#allocation2 + $0x2aa] sm:$0xff]
  %v6324 = vld [vmem:[#allocation2 + $0x2ba] sm:$0xff]
  %v6325 = vld [vmem:[#allocation2 + $0x2c2] sm:$0xff]
  %v6326 = vld [vmem:[#allocation2 + $0x2d2] sm:$0xff]
  %v6327 = vld [vmem:[#allocation2 + $0x2da] sm:$0xff]
  %v6328 = vld [vmem:[#allocation2 + $0x2ea] sm:$0xff]
  %v6329 = vld [vmem:[#allocation2 + $0x2f2] sm:$0xff]
  %v6330 = vld [vmem:[#allocation2 + $0x302] sm:$0xff]
  %v6331 = vld [vmem:[#allocation2 + $0x30a] sm:$0xff]
  %v6332 = vld [vmem:[#allocation2 + $0x31a] sm:$0xff]
  %v6333 = vld [vmem:[#allocation2 + $0x322] sm:$0xff]
  %s6334 = scalar_lea.vmem %s3, 256
  %v6335 = vld [vmem:[%s6334] sm:$0xff]
  %v6336 = vld [vmem:[%s6334 + $0x8] sm:$0xff]
  %v6337 = vld [vmem:[%s6334 + $0x10] sm:$0xff]
  %v6338 = vld [vmem:[%s6334 + $0x18] sm:$0xff]
  %v6339 = vld [vmem:[%s6334 + $0x20] sm:$0xff]
  %v6340 = vld [vmem:[%s6334 + $0x28] sm:$0xff]
  %v6341 = vld [vmem:[%s6334 + $0x30] sm:$0xff]
  %v6342 = vld [vmem:[%s6334 + $0x38] sm:$0xff]
  %v6343 = vld [vmem:[%s6334 + $0x40] sm:$0xff]
  %v6344 = vld [vmem:[%s6334 + $0x48] sm:$0xff]
  %v6345 = vld [vmem:[%s6334 + $0x50] sm:$0xff]
  %v6346 = vld [vmem:[%s6334 + $0x58] sm:$0xff]
  %v6347 = vld [vmem:[%s6334 + $0x60] sm:$0xff]
  %v6348 = vld [vmem:[%s6334 + $0x68] sm:$0xff]
  %v6349 = vld [vmem:[%s6334 + $0x70] sm:$0xff]
  %v6350 = vld [vmem:[%s6334 + $0x78] sm:$0xff]
  %6351 = vmatprep.subr.mxu0 0.0
  %6352 = vmatpush1.msra.mxu0 %v6350
  %6353 = vmatprep.subr.mxu0 0.0
  %6354 = vmatpush1.msra.mxu0 %v6349
  %6355 = vmatprep.subr.mxu0 0.0
  %6356 = vmatpush1.msra.mxu0 %v6348
  %6357 = vmatprep.subr.mxu0 0.0
  %6358 = vmatpush1.msra.mxu0 %v6347
  %6359 = vmatprep.subr.mxu0 0.0
  %6360 = vmatpush1.msra.mxu0 %v6346
  %6361 = vmatprep.subr.mxu0 0.0
  %6362 = vmatpush1.msra.mxu0 %v6345
  %6363 = vmatprep.subr.mxu0 0.0
  %6364 = vmatpush1.msra.mxu0 %v6344
  %6365 = vmatprep.subr.mxu0 0.0
  %6366 = vmatpush1.msra.mxu0 %v6343
  %6367 = vmatprep.subr.mxu0 0.0
  %6368 = vmatpush1.msra.mxu0 %v6342
  %6369 = vmatprep.subr.mxu0 0.0
  %6370 = vmatpush1.msra.mxu0 %v6341
  %6371 = vmatprep.subr.mxu0 0.0
  %6372 = vmatpush1.msra.mxu0 %v6340
  %6373 = vmatprep.subr.mxu0 0.0
  %6374 = vmatpush1.msra.mxu0 %v6339
  %6375 = vmatprep.subr.mxu0 0.0
  %6376 = vmatpush1.msra.mxu0 %v6338
  %6377 = vmatprep.subr.mxu0 0.0
  %6378 = vmatpush1.msra.mxu0 %v6337
  %6379 = vmatprep.subr.mxu0 0.0
  %6380 = vmatpush1.msra.mxu0 %v6336
  %6381 = vmatprep.subr.mxu0 0.0
  %6382 = vmatpush1.msra.mxu0 %v6335
  %6383 = vmatprep.subr.mxu0 0.0
  %6384 = vmatpush2.msra.mxu0 0.0
  %6385 = vmatprep.subr.mxu0 0.0
  %6386 = vmatpush2.msra.mxu0 0.0
  %6387 = vmatprep.subr.mxu0 0.0
  %6388 = vmatpush2.msra.mxu0 0.0
  %6389 = vmatprep.subr.mxu0 0.0
  %6390 = vmatpush2.msra.mxu0 0.0
  %6391 = vmatprep.subr.mxu0 0.0
  %6392 = vmatpush2.msra.mxu0 0.0
  %6393 = vmatprep.subr.mxu0 0.0
  %6394 = vmatpush2.msra.mxu0 0.0
  %6395 = vmatprep.subr.mxu0 0.0
  %6396 = vmatpush2.msra.mxu0 0.0
  %6397 = vmatprep.subr.mxu0 0.0
  %6398 = vmatpush2.msra.mxu0 0.0
  %6399 = vmatprep.subr.mxu0 0.0
  %6400 = vmatpush2.msra.mxu0 0.0
  %6401 = vmatprep.subr.mxu0 0.0
  %6402 = vmatpush2.msra.mxu0 0.0
  %6403 = vmatprep.subr.mxu0 0.0
  %6404 = vmatpush2.msra.mxu0 0.0
  %6405 = vmatprep.subr.mxu0 0.0
  %6406 = vmatpush2.msra.mxu0 0.0
  %6407 = vmatprep.subr.mxu0 0.0
  %6408 = vmatpush2.msra.mxu0 0.0
  %6409 = vmatprep.subr.mxu0 0.0
  %6410 = vmatpush2.msra.mxu0 0.0
  %6411 = vmatprep.subr.mxu0 0.0
  %6412 = vmatpush2.msra.mxu0 0.0
  %6413 = vmatprep.subr.mxu0 0.0
  %6414 = vmatpush2.msra.mxu0 0.0
  %6415 = vmatprep.mubr.f32.mxu0 0.0
  %6416 = vmatmul.mubr.f32.gmra.mxu0 %v6270
  %v6417 = vpop.f32.mrf.mxu0
  %v6418 = vadd.f32 0.0, %v6417
  %v6419 = vpop.f32.mrf.mxu0
  %6420 = vmatprep.mubr.f32.mxu0 0.0
  %6421 = vmatmul.mubr.f32.gmra.mxu0 %v6271
  %v6422 = vpop.f32.mrf.mxu0
  %v6423 = vadd.f32 0.0, %v6422
  %v6424 = vpop.f32.mrf.mxu0
  %6425 = vmatprep.mubr.f32.mxu0 0.0
  %6426 = vmatmul.mubr.f32.gmra.mxu0 %v6272
  %v6427 = vpop.f32.mrf.mxu0
  %v6428 = vadd.f32 0.0, %v6427
  %v6429 = vpop.f32.mrf.mxu0
  %6430 = vmatprep.mubr.f32.mxu0 0.0
  %6431 = vmatmul.mubr.f32.gmra.mxu0 %v6273
  %v6432 = vpop.f32.mrf.mxu0
  %v6433 = vadd.f32 0.0, %v6432
  %v6434 = vpop.f32.mrf.mxu0
  %6435 = vmatprep.mubr.f32.mxu0 0.0
  %6436 = vmatmul.mubr.f32.gmra.mxu0 %v6274
  %v6437 = vpop.f32.mrf.mxu0
  %v6438 = vadd.f32 0.0, %v6437
  %v6439 = vpop.f32.mrf.mxu0
  %6440 = vmatprep.mubr.f32.mxu0 0.0
  %6441 = vmatmul.mubr.f32.gmra.mxu0 %v6275
  %v6442 = vpop.f32.mrf.mxu0
  %v6443 = vadd.f32 0.0, %v6442
  %v6444 = vpop.f32.mrf.mxu0
  %6445 = vmatprep.mubr.f32.mxu0 0.0
  %6446 = vmatmul.mubr.f32.gmra.mxu0 %v6276
  %v6447 = vpop.f32.mrf.mxu0
  %v6448 = vadd.f32 0.0, %v6447
  %v6449 = vpop.f32.mrf.mxu0
  %6450 = vmatprep.mubr.f32.mxu0 0.0
  %6451 = vmatmul.mubr.f32.gmra.mxu0 %v6277
  %v6452 = vpop.f32.mrf.mxu0
  %v6453 = vadd.f32 0.0, %v6452
  %v6454 = vpop.f32.mrf.mxu0
  %6455 = vmatprep.mubr.f32.mxu0 0.0
  %6456 = vmatmul.mubr.f32.gmra.mxu0 %v6278
  %v6457 = vpop.f32.mrf.mxu0
  %v6458 = vadd.f32 0.0, %v6457
  %v6459 = vpop.f32.mrf.mxu0
  %6460 = vmatprep.mubr.f32.mxu0 0.0
  %6461 = vmatmul.mubr.f32.gmra.mxu0 %v6279
  %v6462 = vpop.f32.mrf.mxu0
  %v6463 = vadd.f32 0.0, %v6462
  %v6464 = vpop.f32.mrf.mxu0
  %6465 = vmatprep.mubr.f32.mxu0 0.0
  %6466 = vmatmul.mubr.f32.gmra.mxu0 %v6280
  %v6467 = vpop.f32.mrf.mxu0
  %v6468 = vadd.f32 0.0, %v6467
  %v6469 = vpop.f32.mrf.mxu0
  %6470 = vmatprep.mubr.f32.mxu0 0.0
  %6471 = vmatmul.mubr.f32.gmra.mxu0 %v6281
  %v6472 = vpop.f32.mrf.mxu0
  %v6473 = vadd.f32 0.0, %v6472
  %v6474 = vpop.f32.mrf.mxu0
  %6475 = vmatprep.mubr.f32.mxu0 0.0
  %6476 = vmatmul.mubr.f32.gmra.mxu0 %v6282
  %v6477 = vpop.f32.mrf.mxu0
  %v6478 = vadd.f32 0.0, %v6477
  %v6479 = vpop.f32.mrf.mxu0
  %6480 = vmatprep.mubr.f32.mxu0 0.0
  %6481 = vmatmul.mubr.f32.gmra.mxu0 %v6283
  %v6482 = vpop.f32.mrf.mxu0
  %v6483 = vadd.f32 0.0, %v6482
  %v6484 = vpop.f32.mrf.mxu0
  %6485 = vmatprep.mubr.f32.mxu0 0.0
  %6486 = vmatmul.mubr.f32.gmra.mxu0 %v6284
  %v6487 = vpop.f32.mrf.mxu0
  %v6488 = vadd.f32 0.0, %v6487
  %v6489 = vpop.f32.mrf.mxu0
  %6490 = vmatprep.mubr.f32.mxu0 0.0
  %6491 = vmatmul.mubr.f32.gmra.mxu0 %v6285
  %v6492 = vpop.f32.mrf.mxu0
  %v6493 = vadd.f32 0.0, %v6492
  %v6494 = vpop.f32.mrf.mxu0
  %6495 = vmatprep.mubr.f32.mxu0 0.0
  %6496 = vmatmul.mubr.f32.gmra.mxu0 %v6286
  %v6497 = vpop.f32.mrf.mxu0
  %v6498 = vadd.f32 0.0, %v6497
  %v6499 = vpop.f32.mrf.mxu0
  %6500 = vmatprep.mubr.f32.mxu0 0.0
  %6501 = vmatmul.mubr.f32.gmra.mxu0 %v6287
  %v6502 = vpop.f32.mrf.mxu0
  %v6503 = vadd.f32 0.0, %v6502
  %v6504 = vpop.f32.mrf.mxu0
  %6505 = vmatprep.mubr.f32.mxu0 0.0
  %6506 = vmatmul.mubr.f32.gmra.mxu0 %v6288
  %v6507 = vpop.f32.mrf.mxu0
  %v6508 = vadd.f32 0.0, %v6507
  %v6509 = vpop.f32.mrf.mxu0
  %6510 = vmatprep.mubr.f32.mxu0 0.0
  %6511 = vmatmul.mubr.f32.gmra.mxu0 %v6289
  %v6512 = vpop.f32.mrf.mxu0
  %v6513 = vadd.f32 0.0, %v6512
  %v6514 = vpop.f32.mrf.mxu0
  %6515 = vmatprep.mubr.f32.mxu0 0.0
  %6516 = vmatmul.mubr.f32.gmra.mxu0 %v6290
  %v6517 = vpop.f32.mrf.mxu0
  %v6518 = vadd.f32 0.0, %v6517
  %v6519 = vpop.f32.mrf.mxu0
  %6520 = vmatprep.mubr.f32.mxu0 0.0
  %6521 = vmatmul.mubr.f32.gmra.mxu0 %v6291
  %v6522 = vpop.f32.mrf.mxu0
  %v6523 = vadd.f32 0.0, %v6522
  %v6524 = vpop.f32.mrf.mxu0
  %6525 = vmatprep.mubr.f32.mxu0 0.0
  %6526 = vmatmul.mubr.f32.gmra.mxu0 %v6292
  %v6527 = vpop.f32.mrf.mxu0
  %v6528 = vadd.f32 0.0, %v6527
  %v6529 = vpop.f32.mrf.mxu0
  %6530 = vmatprep.mubr.f32.mxu0 0.0
  %6531 = vmatmul.mubr.f32.gmra.mxu0 %v6293
  %v6532 = vpop.f32.mrf.mxu0
  %v6533 = vadd.f32 0.0, %v6532
  %v6534 = vpop.f32.mrf.mxu0
  %6535 = vmatprep.mubr.f32.mxu0 0.0
  %6536 = vmatmul.mubr.f32.gmra.mxu0 %v6294
  %v6537 = vpop.f32.mrf.mxu0
  %v6538 = vadd.f32 0.0, %v6537
  %v6539 = vpop.f32.mrf.mxu0
  %6540 = vmatprep.mubr.f32.mxu0 0.0
  %6541 = vmatmul.mubr.f32.gmra.mxu0 %v6295
  %v6542 = vpop.f32.mrf.mxu0
  %v6543 = vadd.f32 0.0, %v6542
  %v6544 = vpop.f32.mrf.mxu0
  %6545 = vmatprep.mubr.f32.mxu0 0.0
  %6546 = vmatmul.mubr.f32.gmra.mxu0 %v6296
  %v6547 = vpop.f32.mrf.mxu0
  %v6548 = vadd.f32 0.0, %v6547
  %v6549 = vpop.f32.mrf.mxu0
  %6550 = vmatprep.mubr.f32.mxu0 0.0
  %6551 = vmatmul.mubr.f32.gmra.mxu0 %v6297
  %v6552 = vpop.f32.mrf.mxu0
  %v6553 = vadd.f32 0.0, %v6552
  %v6554 = vpop.f32.mrf.mxu0
  %6555 = vmatprep.mubr.f32.mxu0 0.0
  %6556 = vmatmul.mubr.f32.gmra.mxu0 %v6298
  %v6557 = vpop.f32.mrf.mxu0
  %v6558 = vadd.f32 0.0, %v6557
  %v6559 = vpop.f32.mrf.mxu0
  %6560 = vmatprep.mubr.f32.mxu0 0.0
  %6561 = vmatmul.mubr.f32.gmra.mxu0 %v6299
  %v6562 = vpop.f32.mrf.mxu0
  %v6563 = vadd.f32 0.0, %v6562
  %v6564 = vpop.f32.mrf.mxu0
  %6565 = vmatprep.mubr.f32.mxu0 0.0
  %6566 = vmatmul.mubr.f32.gmra.mxu0 %v6300
  %v6567 = vpop.f32.mrf.mxu0
  %v6568 = vadd.f32 0.0, %v6567
  %v6569 = vpop.f32.mrf.mxu0
  %6570 = vmatprep.mubr.f32.mxu0 0.0
  %6571 = vmatmul.mubr.f32.gmra.mxu0 %v6301
  %v6572 = vpop.f32.mrf.mxu0
  %v6573 = vadd.f32 0.0, %v6572
  %v6574 = vpop.f32.mrf.mxu0
  %6575 = vmatprep.mubr.f32.mxu0 0.0
  %6576 = vmatmul.mubr.f32.gmra.mxu0 %v6302
  %v6577 = vpop.f32.mrf.mxu0
  %v6578 = vadd.f32 0.0, %v6577
  %v6579 = vpop.f32.mrf.mxu0
  %6580 = vmatprep.mubr.f32.mxu0 0.0
  %6581 = vmatmul.mubr.f32.gmra.mxu0 %v6303
  %v6582 = vpop.f32.mrf.mxu0
  %v6583 = vadd.f32 0.0, %v6582
  %v6584 = vpop.f32.mrf.mxu0
  %6585 = vmatprep.mubr.f32.mxu0 0.0
  %6586 = vmatmul.mubr.f32.gmra.mxu0 %v6304
  %v6587 = vpop.f32.mrf.mxu0
  %v6588 = vadd.f32 0.0, %v6587
  %v6589 = vpop.f32.mrf.mxu0
  %6590 = vmatprep.mubr.f32.mxu0 0.0
  %6591 = vmatmul.mubr.f32.gmra.mxu0 %v6305
  %v6592 = vpop.f32.mrf.mxu0
  %v6593 = vadd.f32 0.0, %v6592
  %v6594 = vpop.f32.mrf.mxu0
  %6595 = vmatprep.mubr.f32.mxu0 0.0
  %6596 = vmatmul.mubr.f32.gmra.mxu0 %v6306
  %v6597 = vpop.f32.mrf.mxu0
  %v6598 = vadd.f32 0.0, %v6597
  %v6599 = vpop.f32.mrf.mxu0
  %6600 = vmatprep.mubr.f32.mxu0 0.0
  %6601 = vmatmul.mubr.f32.gmra.mxu0 %v6307
  %v6602 = vpop.f32.mrf.mxu0
  %v6603 = vadd.f32 0.0, %v6602
  %v6604 = vpop.f32.mrf.mxu0
  %6605 = vmatprep.mubr.f32.mxu0 0.0
  %6606 = vmatmul.mubr.f32.gmra.mxu0 %v6308
  %v6607 = vpop.f32.mrf.mxu0
  %v6608 = vadd.f32 0.0, %v6607
  %v6609 = vpop.f32.mrf.mxu0
  %6610 = vmatprep.mubr.f32.mxu0 0.0
  %6611 = vmatmul.mubr.f32.gmra.mxu0 %v6309
  %v6612 = vpop.f32.mrf.mxu0
  %v6613 = vadd.f32 0.0, %v6612
  %v6614 = vpop.f32.mrf.mxu0
  %6615 = vmatprep.mubr.f32.mxu0 0.0
  %6616 = vmatmul.mubr.f32.gmra.mxu0 %v6310
  %v6617 = vpop.f32.mrf.mxu0
  %v6618 = vadd.f32 0.0, %v6617
  %v6619 = vpop.f32.mrf.mxu0
  %6620 = vmatprep.mubr.f32.mxu0 0.0
  %6621 = vmatmul.mubr.f32.gmra.mxu0 %v6311
  %v6622 = vpop.f32.mrf.mxu0
  %v6623 = vadd.f32 0.0, %v6622
  %v6624 = vpop.f32.mrf.mxu0
  %6625 = vmatprep.mubr.f32.mxu0 0.0
  %6626 = vmatmul.mubr.f32.gmra.mxu0 %v6312
  %v6627 = vpop.f32.mrf.mxu0
  %v6628 = vadd.f32 0.0, %v6627
  %v6629 = vpop.f32.mrf.mxu0
  %6630 = vmatprep.mubr.f32.mxu0 0.0
  %6631 = vmatmul.mubr.f32.gmra.mxu0 %v6313
  %v6632 = vpop.f32.mrf.mxu0
  %v6633 = vadd.f32 0.0, %v6632
  %v6634 = vpop.f32.mrf.mxu0
  %6635 = vmatprep.mubr.f32.mxu0 0.0
  %6636 = vmatmul.mubr.f32.gmra.mxu0 %v6314
  %v6637 = vpop.f32.mrf.mxu0
  %v6638 = vadd.f32 0.0, %v6637
  %v6639 = vpop.f32.mrf.mxu0
  %6640 = vmatprep.mubr.f32.mxu0 0.0
  %6641 = vmatmul.mubr.f32.gmra.mxu0 %v6315
  %v6642 = vpop.f32.mrf.mxu0
  %v6643 = vadd.f32 0.0, %v6642
  %v6644 = vpop.f32.mrf.mxu0
  %6645 = vmatprep.mubr.f32.mxu0 0.0
  %6646 = vmatmul.mubr.f32.gmra.mxu0 %v6316
  %v6647 = vpop.f32.mrf.mxu0
  %v6648 = vadd.f32 0.0, %v6647
  %v6649 = vpop.f32.mrf.mxu0
  %6650 = vmatprep.mubr.f32.mxu0 0.0
  %6651 = vmatmul.mubr.f32.gmra.mxu0 %v6317
  %v6652 = vpop.f32.mrf.mxu0
  %v6653 = vadd.f32 0.0, %v6652
  %v6654 = vpop.f32.mrf.mxu0
  %6655 = vmatprep.mubr.f32.mxu0 0.0
  %6656 = vmatmul.mubr.f32.gmra.mxu0 %v6318
  %v6657 = vpop.f32.mrf.mxu0
  %v6658 = vadd.f32 0.0, %v6657
  %v6659 = vpop.f32.mrf.mxu0
  %6660 = vmatprep.mubr.f32.mxu0 0.0
  %6661 = vmatmul.mubr.f32.gmra.mxu0 %v6319
  %v6662 = vpop.f32.mrf.mxu0
  %v6663 = vadd.f32 0.0, %v6662
  %v6664 = vpop.f32.mrf.mxu0
  %6665 = vmatprep.mubr.f32.mxu0 0.0
  %6666 = vmatmul.mubr.f32.gmra.mxu0 %v6320
  %v6667 = vpop.f32.mrf.mxu0
  %v6668 = vadd.f32 0.0, %v6667
  %v6669 = vpop.f32.mrf.mxu0
  %6670 = vmatprep.mubr.f32.mxu0 0.0
  %6671 = vmatmul.mubr.f32.gmra.mxu0 %v6321
  %v6672 = vpop.f32.mrf.mxu0
  %v6673 = vadd.f32 0.0, %v6672
  %v6674 = vpop.f32.mrf.mxu0
  %6675 = vmatprep.mubr.f32.mxu0 0.0
  %6676 = vmatmul.mubr.f32.gmra.mxu0 %v6322
  %v6677 = vpop.f32.mrf.mxu0
  %v6678 = vadd.f32 0.0, %v6677
  %v6679 = vpop.f32.mrf.mxu0
  %6680 = vmatprep.mubr.f32.mxu0 0.0
  %6681 = vmatmul.mubr.f32.gmra.mxu0 %v6323
  %v6682 = vpop.f32.mrf.mxu0
  %v6683 = vadd.f32 0.0, %v6682
  %v6684 = vpop.f32.mrf.mxu0
  %6685 = vmatprep.mubr.f32.mxu0 0.0
  %6686 = vmatmul.mubr.f32.gmra.mxu0 %v6324
  %v6687 = vpop.f32.mrf.mxu0
  %v6688 = vadd.f32 0.0, %v6687
  %v6689 = vpop.f32.mrf.mxu0
  %6690 = vmatprep.mubr.f32.mxu0 0.0
  %6691 = vmatmul.mubr.f32.gmra.mxu0 %v6325
  %v6692 = vpop.f32.mrf.mxu0
  %v6693 = vadd.f32 0.0, %v6692
  %v6694 = vpop.f32.mrf.mxu0
  %6695 = vmatprep.mubr.f32.mxu0 0.0
  %6696 = vmatmul.mubr.f32.gmra.mxu0 %v6326
  %v6697 = vpop.f32.mrf.mxu0
  %v6698 = vadd.f32 0.0, %v6697
  %v6699 = vpop.f32.mrf.mxu0
  %6700 = vmatprep.mubr.f32.mxu0 0.0
  %6701 = vmatmul.mubr.f32.gmra.mxu0 %v6327
  %v6702 = vpop.f32.mrf.mxu0
  %v6703 = vadd.f32 0.0, %v6702
  %v6704 = vpop.f32.mrf.mxu0
  %6705 = vmatprep.mubr.f32.mxu0 0.0
  %6706 = vmatmul.mubr.f32.gmra.mxu0 %v6328
  %v6707 = vpop.f32.mrf.mxu0
  %v6708 = vadd.f32 0.0, %v6707
  %v6709 = vpop.f32.mrf.mxu0
  %6710 = vmatprep.mubr.f32.mxu0 0.0
  %6711 = vmatmul.mubr.f32.gmra.mxu0 %v6329
  %v6712 = vpop.f32.mrf.mxu0
  %v6713 = vadd.f32 0.0, %v6712
  %v6714 = vpop.f32.mrf.mxu0
  %6715 = vmatprep.mubr.f32.mxu0 0.0
  %6716 = vmatmul.mubr.f32.gmra.mxu0 %v6330
  %v6717 = vpop.f32.mrf.mxu0
  %v6718 = vadd.f32 0.0, %v6717
  %v6719 = vpop.f32.mrf.mxu0
  %6720 = vmatprep.mubr.f32.mxu0 0.0
  %6721 = vmatmul.mubr.f32.gmra.mxu0 %v6331
  %v6722 = vpop.f32.mrf.mxu0
  %v6723 = vadd.f32 0.0, %v6722
  %v6724 = vpop.f32.mrf.mxu0
  %6725 = vmatprep.mubr.f32.mxu0 0.0
  %6726 = vmatmul.mubr.f32.gmra.mxu0 %v6332
  %v6727 = vpop.f32.mrf.mxu0
  %v6728 = vadd.f32 0.0, %v6727
  %v6729 = vpop.f32.mrf.mxu0
  %6730 = vmatprep.mubr.f32.mxu0 0.0
  %6731 = vmatmul.mubr.f32.gmra.mxu0 %v6333
  %v6732 = vpop.f32.mrf.mxu0
  %v6733 = vadd.f32 0.0, %v6732
  %v6734 = vpop.f32.mrf.mxu0
  %6735 = vdwg.mxu0
  %v6736 = vadd.f32 %v6206, %v6418
  %v6737 = vadd.f32 %v6207, %v6423
  %v6738 = vadd.f32 %v6208, %v6428
  %v6739 = vadd.f32 %v6209, %v6433
  %v6740 = vadd.f32 %v6210, %v6438
  %v6741 = vadd.f32 %v6211, %v6443
  %v6742 = vadd.f32 %v6212, %v6448
  %v6743 = vadd.f32 %v6213, %v6453
  %v6744 = vadd.f32 %v6214, %v6458
  %v6745 = vadd.f32 %v6215, %v6463
  %v6746 = vadd.f32 %v6216, %v6468
  %v6747 = vadd.f32 %v6217, %v6473
  %v6748 = vadd.f32 %v6218, %v6478
  %v6749 = vadd.f32 %v6219, %v6483
  %v6750 = vadd.f32 %v6220, %v6488
  %v6751 = vadd.f32 %v6221, %v6493
  %v6752 = vadd.f32 %v6222, %v6498
  %v6753 = vadd.f32 %v6223, %v6503
  %v6754 = vadd.f32 %v6224, %v6508
  %v6755 = vadd.f32 %v6225, %v6513
  %v6756 = vadd.f32 %v6226, %v6518
  %v6757 = vadd.f32 %v6227, %v6523
  %v6758 = vadd.f32 %v6228, %v6528
  %v6759 = vadd.f32 %v6229, %v6533
  %v6760 = vadd.f32 %v6230, %v6538
  %v6761 = vadd.f32 %v6231, %v6543
  %v6762 = vadd.f32 %v6232, %v6548
  %v6763 = vadd.f32 %v6233, %v6553
  %v6764 = vadd.f32 %v6234, %v6558
  %v6765 = vadd.f32 %v6235, %v6563
  %v6766 = vadd.f32 %v6236, %v6568
  %v6767 = vadd.f32 %v6237, %v6573
  %v6768 = vadd.f32 %v6238, %v6578
  %v6769 = vadd.f32 %v6239, %v6583
  %v6770 = vadd.f32 %v6240, %v6588
  %v6771 = vadd.f32 %v6241, %v6593
  %v6772 = vadd.f32 %v6242, %v6598
  %v6773 = vadd.f32 %v6243, %v6603
  %v6774 = vadd.f32 %v6244, %v6608
  %v6775 = vadd.f32 %v6245, %v6613
  %v6776 = vadd.f32 %v6246, %v6618
  %v6777 = vadd.f32 %v6247, %v6623
  %v6778 = vadd.f32 %v6248, %v6628
  %v6779 = vadd.f32 %v6249, %v6633
  %v6780 = vadd.f32 %v6250, %v6638
  %v6781 = vadd.f32 %v6251, %v6643
  %v6782 = vadd.f32 %v6252, %v6648
  %v6783 = vadd.f32 %v6253, %v6653
  %v6784 = vadd.f32 %v6254, %v6658
  %v6785 = vadd.f32 %v6255, %v6663
  %v6786 = vadd.f32 %v6256, %v6668
  %v6787 = vadd.f32 %v6257, %v6673
  %v6788 = vadd.f32 %v6258, %v6678
  %v6789 = vadd.f32 %v6259, %v6683
  %v6790 = vadd.f32 %v6260, %v6688
  %v6791 = vadd.f32 %v6261, %v6693
  %v6792 = vadd.f32 %v6262, %v6698
  %v6793 = vadd.f32 %v6263, %v6703
  %v6794 = vadd.f32 %v6264, %v6708
  %v6795 = vadd.f32 %v6265, %v6713
  %v6796 = vadd.f32 %v6266, %v6718
  %v6797 = vadd.f32 %v6267, %v6723
  %v6798 = vadd.f32 %v6268, %v6728
  %v6799 = vadd.f32 %v6269, %v6733
  %v6800 = vld [vmem:[%s5011] sm:$0xff]
  %v6801 = vld [vmem:[%s5011 + $0x8] sm:$0xff]
  %v6802 = vld [vmem:[%s5011 + $0x18] sm:$0xff]
  %v6803 = vld [vmem:[%s5011 + $0x20] sm:$0xff]
  %v6804 = vld [vmem:[%s5011 + $0x30] sm:$0xff]
  %v6805 = vld [vmem:[%s5011 + $0x38] sm:$0xff]
  %v6806 = vld [vmem:[%s5011 + $0x48] sm:$0xff]
  %v6807 = vld [vmem:[%s5011 + $0x50] sm:$0xff]
  %v6808 = vld [vmem:[%s5011 + $0x60] sm:$0xff]
  %v6809 = vld [vmem:[%s5011 + $0x68] sm:$0xff]
  %v6810 = vld [vmem:[%s5011 + $0x78] sm:$0xff]
  %v6811 = vld [vmem:[%s5011 + $0x80] sm:$0xff]
  %v6812 = vld [vmem:[%s5011 + $0x90] sm:$0xff]
  %v6813 = vld [vmem:[%s5011 + $0x98] sm:$0xff]
  %v6814 = vld [vmem:[%s5011 + $0xa8] sm:$0xff]
  %v6815 = vld [vmem:[%s5011 + $0xb0] sm:$0xff]
  %v6816 = vld [vmem:[%s5011 + $0xc0] sm:$0xff]
  %v6817 = vld [vmem:[%s5011 + $0xc8] sm:$0xff]
  %v6818 = vld [vmem:[%s5011 + $0xd8] sm:$0xff]
  %v6819 = vld [vmem:[%s5011 + $0xe0] sm:$0xff]
  %v6820 = vld [vmem:[%s5011 + $0xf0] sm:$0xff]
  %v6821 = vld [vmem:[%s5011 + $0xf8] sm:$0xff]
  %v6822 = vld [vmem:[%s5011 + $0x108] sm:$0xff]
  %v6823 = vld [vmem:[%s5011 + $0x110] sm:$0xff]
  %v6824 = vld [vmem:[%s5011 + $0x120] sm:$0xff]
  %v6825 = vld [vmem:[%s5011 + $0x128] sm:$0xff]
  %v6826 = vld [vmem:[%s5011 + $0x138] sm:$0xff]
  %v6827 = vld [vmem:[%s5011 + $0x140] sm:$0xff]
  %v6828 = vld [vmem:[%s5011 + $0x150] sm:$0xff]
  %v6829 = vld [vmem:[%s5011 + $0x158] sm:$0xff]
  %v6830 = vld [vmem:[%s5011 + $0x168] sm:$0xff]
  %v6831 = vld [vmem:[%s5011 + $0x170] sm:$0xff]
  %v6832 = vld [vmem:[%s5011 + $0x1b0] sm:$0xff]
  %v6833 = vld [vmem:[%s5011 + $0x1b8] sm:$0xff]
  %v6834 = vld [vmem:[%s5011 + $0x1c8] sm:$0xff]
  %v6835 = vld [vmem:[%s5011 + $0x1d0] sm:$0xff]
  %v6836 = vld [vmem:[%s5011 + $0x1e0] sm:$0xff]
  %v6837 = vld [vmem:[%s5011 + $0x1e8] sm:$0xff]
  %v6838 = vld [vmem:[%s5011 + $0x1f8] sm:$0xff]
  %v6839 = vld [vmem:[%s5011 + $0x200] sm:$0xff]
  %v6840 = vld [vmem:[%s5011 + $0x210] sm:$0xff]
  %v6841 = vld [vmem:[%s5011 + $0x218] sm:$0xff]
  %v6842 = vld [vmem:[%s5011 + $0x228] sm:$0xff]
  %v6843 = vld [vmem:[%s5011 + $0x230] sm:$0xff]
  %v6844 = vld [vmem:[%s5011 + $0x240] sm:$0xff]
  %v6845 = vld [vmem:[%s5011 + $0x248] sm:$0xff]
  %v6846 = vld [vmem:[%s5011 + $0x258] sm:$0xff]
  %v6847 = vld [vmem:[%s5011 + $0x260] sm:$0xff]
  %v6848 = vld [vmem:[%s5011 + $0x270] sm:$0xff]
  %v6849 = vld [vmem:[%s5011 + $0x278] sm:$0xff]
  %v6850 = vld [vmem:[%s5011 + $0x288] sm:$0xff]
  %v6851 = vld [vmem:[%s5011 + $0x290] sm:$0xff]
  %v6852 = vld [vmem:[%s5011 + $0x2a0] sm:$0xff]
  %v6853 = vld [vmem:[%s5011 + $0x2a8] sm:$0xff]
  %v6854 = vld [vmem:[%s5011 + $0x2b8] sm:$0xff]
  %v6855 = vld [vmem:[%s5011 + $0x2c0] sm:$0xff]
  %v6856 = vld [vmem:[%s5011 + $0x2d0] sm:$0xff]
  %v6857 = vld [vmem:[%s5011 + $0x2d8] sm:$0xff]
  %v6858 = vld [vmem:[%s5011 + $0x2e8] sm:$0xff]
  %v6859 = vld [vmem:[%s5011 + $0x2f0] sm:$0xff]
  %v6860 = vld [vmem:[%s5011 + $0x300] sm:$0xff]
  %v6861 = vld [vmem:[%s5011 + $0x308] sm:$0xff]
  %v6862 = vld [vmem:[%s5011 + $0x318] sm:$0xff]
  %v6863 = vld [vmem:[%s5011 + $0x320] sm:$0xff]
  %s6864 = scalar_lea.vmem %s3, 384
  %v6865 = vld [vmem:[%s6864] sm:$0xff]
  %v6866 = vld [vmem:[%s6864 + $0x8] sm:$0xff]
  %v6867 = vld [vmem:[%s6864 + $0x10] sm:$0xff]
  %v6868 = vld [vmem:[%s6864 + $0x18] sm:$0xff]
  %v6869 = vld [vmem:[%s6864 + $0x20] sm:$0xff]
  %v6870 = vld [vmem:[%s6864 + $0x28] sm:$0xff]
  %v6871 = vld [vmem:[%s6864 + $0x30] sm:$0xff]
  %v6872 = vld [vmem:[%s6864 + $0x38] sm:$0xff]
  %v6873 = vld [vmem:[%s6864 + $0x40] sm:$0xff]
  %v6874 = vld [vmem:[%s6864 + $0x48] sm:$0xff]
  %v6875 = vld [vmem:[%s6864 + $0x50] sm:$0xff]
  %v6876 = vld [vmem:[%s6864 + $0x58] sm:$0xff]
  %v6877 = vld [vmem:[%s6864 + $0x60] sm:$0xff]
  %v6878 = vld [vmem:[%s6864 + $0x68] sm:$0xff]
  %v6879 = vld [vmem:[%s6864 + $0x70] sm:$0xff]
  %v6880 = vld [vmem:[%s6864 + $0x78] sm:$0xff]
  %6881 = vmatprep.subr.mxu0 0.0
  %6882 = vmatpush1.msra.mxu0 %v6880
  %6883 = vmatprep.subr.mxu0 0.0
  %6884 = vmatpush1.msra.mxu0 %v6879
  %6885 = vmatprep.subr.mxu0 0.0
  %6886 = vmatpush1.msra.mxu0 %v6878
  %6887 = vmatprep.subr.mxu0 0.0
  %6888 = vmatpush1.msra.mxu0 %v6877
  %6889 = vmatprep.subr.mxu0 0.0
  %6890 = vmatpush1.msra.mxu0 %v6876
  %6891 = vmatprep.subr.mxu0 0.0
  %6892 = vmatpush1.msra.mxu0 %v6875
  %6893 = vmatprep.subr.mxu0 0.0
  %6894 = vmatpush1.msra.mxu0 %v6874
  %6895 = vmatprep.subr.mxu0 0.0
  %6896 = vmatpush1.msra.mxu0 %v6873
  %6897 = vmatprep.subr.mxu0 0.0
  %6898 = vmatpush1.msra.mxu0 %v6872
  %6899 = vmatprep.subr.mxu0 0.0
  %6900 = vmatpush1.msra.mxu0 %v6871
  %6901 = vmatprep.subr.mxu0 0.0
  %6902 = vmatpush1.msra.mxu0 %v6870
  %6903 = vmatprep.subr.mxu0 0.0
  %6904 = vmatpush1.msra.mxu0 %v6869
  %6905 = vmatprep.subr.mxu0 0.0
  %6906 = vmatpush1.msra.mxu0 %v6868
  %6907 = vmatprep.subr.mxu0 0.0
  %6908 = vmatpush1.msra.mxu0 %v6867
  %6909 = vmatprep.subr.mxu0 0.0
  %6910 = vmatpush1.msra.mxu0 %v6866
  %6911 = vmatprep.subr.mxu0 0.0
  %6912 = vmatpush1.msra.mxu0 %v6865
  %6913 = vmatprep.subr.mxu0 0.0
  %6914 = vmatpush2.msra.mxu0 0.0
  %6915 = vmatprep.subr.mxu0 0.0
  %6916 = vmatpush2.msra.mxu0 0.0
  %6917 = vmatprep.subr.mxu0 0.0
  %6918 = vmatpush2.msra.mxu0 0.0
  %6919 = vmatprep.subr.mxu0 0.0
  %6920 = vmatpush2.msra.mxu0 0.0
  %6921 = vmatprep.subr.mxu0 0.0
  %6922 = vmatpush2.msra.mxu0 0.0
  %6923 = vmatprep.subr.mxu0 0.0
  %6924 = vmatpush2.msra.mxu0 0.0
  %6925 = vmatprep.subr.mxu0 0.0
  %6926 = vmatpush2.msra.mxu0 0.0
  %6927 = vmatprep.subr.mxu0 0.0
  %6928 = vmatpush2.msra.mxu0 0.0
  %6929 = vmatprep.subr.mxu0 0.0
  %6930 = vmatpush2.msra.mxu0 0.0
  %6931 = vmatprep.subr.mxu0 0.0
  %6932 = vmatpush2.msra.mxu0 0.0
  %6933 = vmatprep.subr.mxu0 0.0
  %6934 = vmatpush2.msra.mxu0 0.0
  %6935 = vmatprep.subr.mxu0 0.0
  %6936 = vmatpush2.msra.mxu0 0.0
  %6937 = vmatprep.subr.mxu0 0.0
  %6938 = vmatpush2.msra.mxu0 0.0
  %6939 = vmatprep.subr.mxu0 0.0
  %6940 = vmatpush2.msra.mxu0 0.0
  %6941 = vmatprep.subr.mxu0 0.0
  %6942 = vmatpush2.msra.mxu0 0.0
  %6943 = vmatprep.subr.mxu0 0.0
  %6944 = vmatpush2.msra.mxu0 0.0
  %6945 = vmatprep.mubr.f32.mxu0 0.0
  %6946 = vmatmul.mubr.f32.gmra.mxu0 %v6800
  %v6947 = vpop.f32.mrf.mxu0
  %v6948 = vadd.f32 0.0, %v6947
  %v6949 = vpop.f32.mrf.mxu0
  %6950 = vmatprep.mubr.f32.mxu0 0.0
  %6951 = vmatmul.mubr.f32.gmra.mxu0 %v6801
  %v6952 = vpop.f32.mrf.mxu0
  %v6953 = vadd.f32 0.0, %v6952
  %v6954 = vpop.f32.mrf.mxu0
  %6955 = vmatprep.mubr.f32.mxu0 0.0
  %6956 = vmatmul.mubr.f32.gmra.mxu0 %v6802
  %v6957 = vpop.f32.mrf.mxu0
  %v6958 = vadd.f32 0.0, %v6957
  %v6959 = vpop.f32.mrf.mxu0
  %6960 = vmatprep.mubr.f32.mxu0 0.0
  %6961 = vmatmul.mubr.f32.gmra.mxu0 %v6803
  %v6962 = vpop.f32.mrf.mxu0
  %v6963 = vadd.f32 0.0, %v6962
  %v6964 = vpop.f32.mrf.mxu0
  %6965 = vmatprep.mubr.f32.mxu0 0.0
  %6966 = vmatmul.mubr.f32.gmra.mxu0 %v6804
  %v6967 = vpop.f32.mrf.mxu0
  %v6968 = vadd.f32 0.0, %v6967
  %v6969 = vpop.f32.mrf.mxu0
  %6970 = vmatprep.mubr.f32.mxu0 0.0
  %6971 = vmatmul.mubr.f32.gmra.mxu0 %v6805
  %v6972 = vpop.f32.mrf.mxu0
  %v6973 = vadd.f32 0.0, %v6972
  %v6974 = vpop.f32.mrf.mxu0
  %6975 = vmatprep.mubr.f32.mxu0 0.0
  %6976 = vmatmul.mubr.f32.gmra.mxu0 %v6806
  %v6977 = vpop.f32.mrf.mxu0
  %v6978 = vadd.f32 0.0, %v6977
  %v6979 = vpop.f32.mrf.mxu0
  %6980 = vmatprep.mubr.f32.mxu0 0.0
  %6981 = vmatmul.mubr.f32.gmra.mxu0 %v6807
  %v6982 = vpop.f32.mrf.mxu0
  %v6983 = vadd.f32 0.0, %v6982
  %v6984 = vpop.f32.mrf.mxu0
  %6985 = vmatprep.mubr.f32.mxu0 0.0
  %6986 = vmatmul.mubr.f32.gmra.mxu0 %v6808
  %v6987 = vpop.f32.mrf.mxu0
  %v6988 = vadd.f32 0.0, %v6987
  %v6989 = vpop.f32.mrf.mxu0
  %6990 = vmatprep.mubr.f32.mxu0 0.0
  %6991 = vmatmul.mubr.f32.gmra.mxu0 %v6809
  %v6992 = vpop.f32.mrf.mxu0
  %v6993 = vadd.f32 0.0, %v6992
  %v6994 = vpop.f32.mrf.mxu0
  %6995 = vmatprep.mubr.f32.mxu0 0.0
  %6996 = vmatmul.mubr.f32.gmra.mxu0 %v6810
  %v6997 = vpop.f32.mrf.mxu0
  %v6998 = vadd.f32 0.0, %v6997
  %v6999 = vpop.f32.mrf.mxu0
  %7000 = vmatprep.mubr.f32.mxu0 0.0
  %7001 = vmatmul.mubr.f32.gmra.mxu0 %v6811
  %v7002 = vpop.f32.mrf.mxu0
  %v7003 = vadd.f32 0.0, %v7002
  %v7004 = vpop.f32.mrf.mxu0
  %7005 = vmatprep.mubr.f32.mxu0 0.0
  %7006 = vmatmul.mubr.f32.gmra.mxu0 %v6812
  %v7007 = vpop.f32.mrf.mxu0
  %v7008 = vadd.f32 0.0, %v7007
  %v7009 = vpop.f32.mrf.mxu0
  %7010 = vmatprep.mubr.f32.mxu0 0.0
  %7011 = vmatmul.mubr.f32.gmra.mxu0 %v6813
  %v7012 = vpop.f32.mrf.mxu0
  %v7013 = vadd.f32 0.0, %v7012
  %v7014 = vpop.f32.mrf.mxu0
  %7015 = vmatprep.mubr.f32.mxu0 0.0
  %7016 = vmatmul.mubr.f32.gmra.mxu0 %v6814
  %v7017 = vpop.f32.mrf.mxu0
  %v7018 = vadd.f32 0.0, %v7017
  %v7019 = vpop.f32.mrf.mxu0
  %7020 = vmatprep.mubr.f32.mxu0 0.0
  %7021 = vmatmul.mubr.f32.gmra.mxu0 %v6815
  %v7022 = vpop.f32.mrf.mxu0
  %v7023 = vadd.f32 0.0, %v7022
  %v7024 = vpop.f32.mrf.mxu0
  %7025 = vmatprep.mubr.f32.mxu0 0.0
  %7026 = vmatmul.mubr.f32.gmra.mxu0 %v6816
  %v7027 = vpop.f32.mrf.mxu0
  %v7028 = vadd.f32 0.0, %v7027
  %v7029 = vpop.f32.mrf.mxu0
  %7030 = vmatprep.mubr.f32.mxu0 0.0
  %7031 = vmatmul.mubr.f32.gmra.mxu0 %v6817
  %v7032 = vpop.f32.mrf.mxu0
  %v7033 = vadd.f32 0.0, %v7032
  %v7034 = vpop.f32.mrf.mxu0
  %7035 = vmatprep.mubr.f32.mxu0 0.0
  %7036 = vmatmul.mubr.f32.gmra.mxu0 %v6818
  %v7037 = vpop.f32.mrf.mxu0
  %v7038 = vadd.f32 0.0, %v7037
  %v7039 = vpop.f32.mrf.mxu0
  %7040 = vmatprep.mubr.f32.mxu0 0.0
  %7041 = vmatmul.mubr.f32.gmra.mxu0 %v6819
  %v7042 = vpop.f32.mrf.mxu0
  %v7043 = vadd.f32 0.0, %v7042
  %v7044 = vpop.f32.mrf.mxu0
  %7045 = vmatprep.mubr.f32.mxu0 0.0
  %7046 = vmatmul.mubr.f32.gmra.mxu0 %v6820
  %v7047 = vpop.f32.mrf.mxu0
  %v7048 = vadd.f32 0.0, %v7047
  %v7049 = vpop.f32.mrf.mxu0
  %7050 = vmatprep.mubr.f32.mxu0 0.0
  %7051 = vmatmul.mubr.f32.gmra.mxu0 %v6821
  %v7052 = vpop.f32.mrf.mxu0
  %v7053 = vadd.f32 0.0, %v7052
  %v7054 = vpop.f32.mrf.mxu0
  %7055 = vmatprep.mubr.f32.mxu0 0.0
  %7056 = vmatmul.mubr.f32.gmra.mxu0 %v6822
  %v7057 = vpop.f32.mrf.mxu0
  %v7058 = vadd.f32 0.0, %v7057
  %v7059 = vpop.f32.mrf.mxu0
  %7060 = vmatprep.mubr.f32.mxu0 0.0
  %7061 = vmatmul.mubr.f32.gmra.mxu0 %v6823
  %v7062 = vpop.f32.mrf.mxu0
  %v7063 = vadd.f32 0.0, %v7062
  %v7064 = vpop.f32.mrf.mxu0
  %7065 = vmatprep.mubr.f32.mxu0 0.0
  %7066 = vmatmul.mubr.f32.gmra.mxu0 %v6824
  %v7067 = vpop.f32.mrf.mxu0
  %v7068 = vadd.f32 0.0, %v7067
  %v7069 = vpop.f32.mrf.mxu0
  %7070 = vmatprep.mubr.f32.mxu0 0.0
  %7071 = vmatmul.mubr.f32.gmra.mxu0 %v6825
  %v7072 = vpop.f32.mrf.mxu0
  %v7073 = vadd.f32 0.0, %v7072
  %v7074 = vpop.f32.mrf.mxu0
  %7075 = vmatprep.mubr.f32.mxu0 0.0
  %7076 = vmatmul.mubr.f32.gmra.mxu0 %v6826
  %v7077 = vpop.f32.mrf.mxu0
  %v7078 = vadd.f32 0.0, %v7077
  %v7079 = vpop.f32.mrf.mxu0
  %7080 = vmatprep.mubr.f32.mxu0 0.0
  %7081 = vmatmul.mubr.f32.gmra.mxu0 %v6827
  %v7082 = vpop.f32.mrf.mxu0
  %v7083 = vadd.f32 0.0, %v7082
  %v7084 = vpop.f32.mrf.mxu0
  %7085 = vmatprep.mubr.f32.mxu0 0.0
  %7086 = vmatmul.mubr.f32.gmra.mxu0 %v6828
  %v7087 = vpop.f32.mrf.mxu0
  %v7088 = vadd.f32 0.0, %v7087
  %v7089 = vpop.f32.mrf.mxu0
  %7090 = vmatprep.mubr.f32.mxu0 0.0
  %7091 = vmatmul.mubr.f32.gmra.mxu0 %v6829
  %v7092 = vpop.f32.mrf.mxu0
  %v7093 = vadd.f32 0.0, %v7092
  %v7094 = vpop.f32.mrf.mxu0
  %7095 = vmatprep.mubr.f32.mxu0 0.0
  %7096 = vmatmul.mubr.f32.gmra.mxu0 %v6830
  %v7097 = vpop.f32.mrf.mxu0
  %v7098 = vadd.f32 0.0, %v7097
  %v7099 = vpop.f32.mrf.mxu0
  %7100 = vmatprep.mubr.f32.mxu0 0.0
  %7101 = vmatmul.mubr.f32.gmra.mxu0 %v6831
  %v7102 = vpop.f32.mrf.mxu0
  %v7103 = vadd.f32 0.0, %v7102
  %v7104 = vpop.f32.mrf.mxu0
  %7105 = vmatprep.mubr.f32.mxu0 0.0
  %7106 = vmatmul.mubr.f32.gmra.mxu0 %v6832
  %v7107 = vpop.f32.mrf.mxu0
  %v7108 = vadd.f32 0.0, %v7107
  %v7109 = vpop.f32.mrf.mxu0
  %7110 = vmatprep.mubr.f32.mxu0 0.0
  %7111 = vmatmul.mubr.f32.gmra.mxu0 %v6833
  %v7112 = vpop.f32.mrf.mxu0
  %v7113 = vadd.f32 0.0, %v7112
  %v7114 = vpop.f32.mrf.mxu0
  %7115 = vmatprep.mubr.f32.mxu0 0.0
  %7116 = vmatmul.mubr.f32.gmra.mxu0 %v6834
  %v7117 = vpop.f32.mrf.mxu0
  %v7118 = vadd.f32 0.0, %v7117
  %v7119 = vpop.f32.mrf.mxu0
  %7120 = vmatprep.mubr.f32.mxu0 0.0
  %7121 = vmatmul.mubr.f32.gmra.mxu0 %v6835
  %v7122 = vpop.f32.mrf.mxu0
  %v7123 = vadd.f32 0.0, %v7122
  %v7124 = vpop.f32.mrf.mxu0
  %7125 = vmatprep.mubr.f32.mxu0 0.0
  %7126 = vmatmul.mubr.f32.gmra.mxu0 %v6836
  %v7127 = vpop.f32.mrf.mxu0
  %v7128 = vadd.f32 0.0, %v7127
  %v7129 = vpop.f32.mrf.mxu0
  %7130 = vmatprep.mubr.f32.mxu0 0.0
  %7131 = vmatmul.mubr.f32.gmra.mxu0 %v6837
  %v7132 = vpop.f32.mrf.mxu0
  %v7133 = vadd.f32 0.0, %v7132
  %v7134 = vpop.f32.mrf.mxu0
  %7135 = vmatprep.mubr.f32.mxu0 0.0
  %7136 = vmatmul.mubr.f32.gmra.mxu0 %v6838
  %v7137 = vpop.f32.mrf.mxu0
  %v7138 = vadd.f32 0.0, %v7137
  %v7139 = vpop.f32.mrf.mxu0
  %7140 = vmatprep.mubr.f32.mxu0 0.0
  %7141 = vmatmul.mubr.f32.gmra.mxu0 %v6839
  %v7142 = vpop.f32.mrf.mxu0
  %v7143 = vadd.f32 0.0, %v7142
  %v7144 = vpop.f32.mrf.mxu0
  %7145 = vmatprep.mubr.f32.mxu0 0.0
  %7146 = vmatmul.mubr.f32.gmra.mxu0 %v6840
  %v7147 = vpop.f32.mrf.mxu0
  %v7148 = vadd.f32 0.0, %v7147
  %v7149 = vpop.f32.mrf.mxu0
  %7150 = vmatprep.mubr.f32.mxu0 0.0
  %7151 = vmatmul.mubr.f32.gmra.mxu0 %v6841
  %v7152 = vpop.f32.mrf.mxu0
  %v7153 = vadd.f32 0.0, %v7152
  %v7154 = vpop.f32.mrf.mxu0
  %7155 = vmatprep.mubr.f32.mxu0 0.0
  %7156 = vmatmul.mubr.f32.gmra.mxu0 %v6842
  %v7157 = vpop.f32.mrf.mxu0
  %v7158 = vadd.f32 0.0, %v7157
  %v7159 = vpop.f32.mrf.mxu0
  %7160 = vmatprep.mubr.f32.mxu0 0.0
  %7161 = vmatmul.mubr.f32.gmra.mxu0 %v6843
  %v7162 = vpop.f32.mrf.mxu0
  %v7163 = vadd.f32 0.0, %v7162
  %v7164 = vpop.f32.mrf.mxu0
  %7165 = vmatprep.mubr.f32.mxu0 0.0
  %7166 = vmatmul.mubr.f32.gmra.mxu0 %v6844
  %v7167 = vpop.f32.mrf.mxu0
  %v7168 = vadd.f32 0.0, %v7167
  %v7169 = vpop.f32.mrf.mxu0
  %7170 = vmatprep.mubr.f32.mxu0 0.0
  %7171 = vmatmul.mubr.f32.gmra.mxu0 %v6845
  %v7172 = vpop.f32.mrf.mxu0
  %v7173 = vadd.f32 0.0, %v7172
  %v7174 = vpop.f32.mrf.mxu0
  %7175 = vmatprep.mubr.f32.mxu0 0.0
  %7176 = vmatmul.mubr.f32.gmra.mxu0 %v6846
  %v7177 = vpop.f32.mrf.mxu0
  %v7178 = vadd.f32 0.0, %v7177
  %v7179 = vpop.f32.mrf.mxu0
  %7180 = vmatprep.mubr.f32.mxu0 0.0
  %7181 = vmatmul.mubr.f32.gmra.mxu0 %v6847
  %v7182 = vpop.f32.mrf.mxu0
  %v7183 = vadd.f32 0.0, %v7182
  %v7184 = vpop.f32.mrf.mxu0
  %7185 = vmatprep.mubr.f32.mxu0 0.0
  %7186 = vmatmul.mubr.f32.gmra.mxu0 %v6848
  %v7187 = vpop.f32.mrf.mxu0
  %v7188 = vadd.f32 0.0, %v7187
  %v7189 = vpop.f32.mrf.mxu0
  %7190 = vmatprep.mubr.f32.mxu0 0.0
  %7191 = vmatmul.mubr.f32.gmra.mxu0 %v6849
  %v7192 = vpop.f32.mrf.mxu0
  %v7193 = vadd.f32 0.0, %v7192
  %v7194 = vpop.f32.mrf.mxu0
  %7195 = vmatprep.mubr.f32.mxu0 0.0
  %7196 = vmatmul.mubr.f32.gmra.mxu0 %v6850
  %v7197 = vpop.f32.mrf.mxu0
  %v7198 = vadd.f32 0.0, %v7197
  %v7199 = vpop.f32.mrf.mxu0
  %7200 = vmatprep.mubr.f32.mxu0 0.0
  %7201 = vmatmul.mubr.f32.gmra.mxu0 %v6851
  %v7202 = vpop.f32.mrf.mxu0
  %v7203 = vadd.f32 0.0, %v7202
  %v7204 = vpop.f32.mrf.mxu0
  %7205 = vmatprep.mubr.f32.mxu0 0.0
  %7206 = vmatmul.mubr.f32.gmra.mxu0 %v6852
  %v7207 = vpop.f32.mrf.mxu0
  %v7208 = vadd.f32 0.0, %v7207
  %v7209 = vpop.f32.mrf.mxu0
  %7210 = vmatprep.mubr.f32.mxu0 0.0
  %7211 = vmatmul.mubr.f32.gmra.mxu0 %v6853
  %v7212 = vpop.f32.mrf.mxu0
  %v7213 = vadd.f32 0.0, %v7212
  %v7214 = vpop.f32.mrf.mxu0
  %7215 = vmatprep.mubr.f32.mxu0 0.0
  %7216 = vmatmul.mubr.f32.gmra.mxu0 %v6854
  %v7217 = vpop.f32.mrf.mxu0
  %v7218 = vadd.f32 0.0, %v7217
  %v7219 = vpop.f32.mrf.mxu0
  %7220 = vmatprep.mubr.f32.mxu0 0.0
  %7221 = vmatmul.mubr.f32.gmra.mxu0 %v6855
  %v7222 = vpop.f32.mrf.mxu0
  %v7223 = vadd.f32 0.0, %v7222
  %v7224 = vpop.f32.mrf.mxu0
  %7225 = vmatprep.mubr.f32.mxu0 0.0
  %7226 = vmatmul.mubr.f32.gmra.mxu0 %v6856
  %v7227 = vpop.f32.mrf.mxu0
  %v7228 = vadd.f32 0.0, %v7227
  %v7229 = vpop.f32.mrf.mxu0
  %7230 = vmatprep.mubr.f32.mxu0 0.0
  %7231 = vmatmul.mubr.f32.gmra.mxu0 %v6857
  %v7232 = vpop.f32.mrf.mxu0
  %v7233 = vadd.f32 0.0, %v7232
  %v7234 = vpop.f32.mrf.mxu0
  %7235 = vmatprep.mubr.f32.mxu0 0.0
  %7236 = vmatmul.mubr.f32.gmra.mxu0 %v6858
  %v7237 = vpop.f32.mrf.mxu0
  %v7238 = vadd.f32 0.0, %v7237
  %v7239 = vpop.f32.mrf.mxu0
  %7240 = vmatprep.mubr.f32.mxu0 0.0
  %7241 = vmatmul.mubr.f32.gmra.mxu0 %v6859
  %v7242 = vpop.f32.mrf.mxu0
  %v7243 = vadd.f32 0.0, %v7242
  %v7244 = vpop.f32.mrf.mxu0
  %7245 = vmatprep.mubr.f32.mxu0 0.0
  %7246 = vmatmul.mubr.f32.gmra.mxu0 %v6860
  %v7247 = vpop.f32.mrf.mxu0
  %v7248 = vadd.f32 0.0, %v7247
  %v7249 = vpop.f32.mrf.mxu0
  %7250 = vmatprep.mubr.f32.mxu0 0.0
  %7251 = vmatmul.mubr.f32.gmra.mxu0 %v6861
  %v7252 = vpop.f32.mrf.mxu0
  %v7253 = vadd.f32 0.0, %v7252
  %v7254 = vpop.f32.mrf.mxu0
  %7255 = vmatprep.mubr.f32.mxu0 0.0
  %7256 = vmatmul.mubr.f32.gmra.mxu0 %v6862
  %v7257 = vpop.f32.mrf.mxu0
  %v7258 = vadd.f32 0.0, %v7257
  %v7259 = vpop.f32.mrf.mxu0
  %7260 = vmatprep.mubr.f32.mxu0 0.0
  %7261 = vmatmul.mubr.f32.gmra.mxu0 %v6863
  %v7262 = vpop.f32.mrf.mxu0
  %v7263 = vadd.f32 0.0, %v7262
  %v7264 = vpop.f32.mrf.mxu0
  %7265 = vdwg.mxu0
  %v7266 = vadd.f32 %v6736, %v6948
  %v7267 = vadd.f32 %v6737, %v6953
  %v7268 = vadd.f32 %v6738, %v6958
  %v7269 = vadd.f32 %v6739, %v6963
  %v7270 = vadd.f32 %v6740, %v6968
  %v7271 = vadd.f32 %v6741, %v6973
  %v7272 = vadd.f32 %v6742, %v6978
  %v7273 = vadd.f32 %v6743, %v6983
  %v7274 = vadd.f32 %v6744, %v6988
  %v7275 = vadd.f32 %v6745, %v6993
  %v7276 = vadd.f32 %v6746, %v6998
  %v7277 = vadd.f32 %v6747, %v7003
  %v7278 = vadd.f32 %v6748, %v7008
  %v7279 = vadd.f32 %v6749, %v7013
  %v7280 = vadd.f32 %v6750, %v7018
  %v7281 = vadd.f32 %v6751, %v7023
  %v7282 = vadd.f32 %v6752, %v7028
  %v7283 = vadd.f32 %v6753, %v7033
  %v7284 = vadd.f32 %v6754, %v7038
  %v7285 = vadd.f32 %v6755, %v7043
  %v7286 = vadd.f32 %v6756, %v7048
  %v7287 = vadd.f32 %v6757, %v7053
  %v7288 = vadd.f32 %v6758, %v7058
  %v7289 = vadd.f32 %v6759, %v7063
  %v7290 = vadd.f32 %v6760, %v7068
  %v7291 = vadd.f32 %v6761, %v7073
  %v7292 = vadd.f32 %v6762, %v7078
  %v7293 = vadd.f32 %v6763, %v7083
  %v7294 = vadd.f32 %v6764, %v7088
  %v7295 = vadd.f32 %v6765, %v7093
  %v7296 = vadd.f32 %v6766, %v7098
  %v7297 = vadd.f32 %v6767, %v7103
  %v7298 = vadd.f32 %v6768, %v7108
  %v7299 = vadd.f32 %v6769, %v7113
  %v7300 = vadd.f32 %v6770, %v7118
  %v7301 = vadd.f32 %v6771, %v7123
  %v7302 = vadd.f32 %v6772, %v7128
  %v7303 = vadd.f32 %v6773, %v7133
  %v7304 = vadd.f32 %v6774, %v7138
  %v7305 = vadd.f32 %v6775, %v7143
  %v7306 = vadd.f32 %v6776, %v7148
  %v7307 = vadd.f32 %v6777, %v7153
  %v7308 = vadd.f32 %v6778, %v7158
  %v7309 = vadd.f32 %v6779, %v7163
  %v7310 = vadd.f32 %v6780, %v7168
  %v7311 = vadd.f32 %v6781, %v7173
  %v7312 = vadd.f32 %v6782, %v7178
  %v7313 = vadd.f32 %v6783, %v7183
  %v7314 = vadd.f32 %v6784, %v7188
  %v7315 = vadd.f32 %v6785, %v7193
  %v7316 = vadd.f32 %v6786, %v7198
  %v7317 = vadd.f32 %v6787, %v7203
  %v7318 = vadd.f32 %v6788, %v7208
  %v7319 = vadd.f32 %v6789, %v7213
  %v7320 = vadd.f32 %v6790, %v7218
  %v7321 = vadd.f32 %v6791, %v7223
  %v7322 = vadd.f32 %v6792, %v7228
  %v7323 = vadd.f32 %v6793, %v7233
  %v7324 = vadd.f32 %v6794, %v7238
  %v7325 = vadd.f32 %v6795, %v7243
  %v7326 = vadd.f32 %v6796, %v7248
  %v7327 = vadd.f32 %v6797, %v7253
  %v7328 = vadd.f32 %v6798, %v7258
  %v7329 = vadd.f32 %v6799, %v7263
  %v7330 = vld [vmem:[%s5011 + $0x1] sm:$0xff]
  %v7331 = vld [vmem:[%s5011 + $0x9] sm:$0xff]
  %v7332 = vld [vmem:[%s5011 + $0x19] sm:$0xff]
  %v7333 = vld [vmem:[%s5011 + $0x21] sm:$0xff]
  %v7334 = vld [vmem:[%s5011 + $0x31] sm:$0xff]
  %v7335 = vld [vmem:[%s5011 + $0x39] sm:$0xff]
  %v7336 = vld [vmem:[%s5011 + $0x49] sm:$0xff]
  %v7337 = vld [vmem:[%s5011 + $0x51] sm:$0xff]
  %v7338 = vld [vmem:[%s5011 + $0x61] sm:$0xff]
  %v7339 = vld [vmem:[%s5011 + $0x69] sm:$0xff]
  %v7340 = vld [vmem:[%s5011 + $0x79] sm:$0xff]
  %v7341 = vld [vmem:[%s5011 + $0x81] sm:$0xff]
  %v7342 = vld [vmem:[%s5011 + $0x91] sm:$0xff]
  %v7343 = vld [vmem:[%s5011 + $0x99] sm:$0xff]
  %v7344 = vld [vmem:[%s5011 + $0xa9] sm:$0xff]
  %v7345 = vld [vmem:[%s5011 + $0xb1] sm:$0xff]
  %v7346 = vld [vmem:[%s5011 + $0xc1] sm:$0xff]
  %v7347 = vld [vmem:[%s5011 + $0xc9] sm:$0xff]
  %v7348 = vld [vmem:[%s5011 + $0xd9] sm:$0xff]
  %v7349 = vld [vmem:[%s5011 + $0xe1] sm:$0xff]
  %v7350 = vld [vmem:[%s5011 + $0xf1] sm:$0xff]
  %v7351 = vld [vmem:[%s5011 + $0xf9] sm:$0xff]
  %v7352 = vld [vmem:[%s5011 + $0x109] sm:$0xff]
  %v7353 = vld [vmem:[%s5011 + $0x111] sm:$0xff]
  %v7354 = vld [vmem:[%s5011 + $0x121] sm:$0xff]
  %v7355 = vld [vmem:[%s5011 + $0x129] sm:$0xff]
  %v7356 = vld [vmem:[%s5011 + $0x139] sm:$0xff]
  %v7357 = vld [vmem:[%s5011 + $0x141] sm:$0xff]
  %v7358 = vld [vmem:[%s5011 + $0x151] sm:$0xff]
  %v7359 = vld [vmem:[%s5011 + $0x159] sm:$0xff]
  %v7360 = vld [vmem:[%s5011 + $0x169] sm:$0xff]
  %v7361 = vld [vmem:[%s5011 + $0x171] sm:$0xff]
  %v7362 = vld [vmem:[%s5011 + $0x1b1] sm:$0xff]
  %v7363 = vld [vmem:[%s5011 + $0x1b9] sm:$0xff]
  %v7364 = vld [vmem:[%s5011 + $0x1c9] sm:$0xff]
  %v7365 = vld [vmem:[%s5011 + $0x1d1] sm:$0xff]
  %v7366 = vld [vmem:[%s5011 + $0x1e1] sm:$0xff]
  %v7367 = vld [vmem:[%s5011 + $0x1e9] sm:$0xff]
  %v7368 = vld [vmem:[%s5011 + $0x1f9] sm:$0xff]
  %v7369 = vld [vmem:[%s5011 + $0x201] sm:$0xff]
  %v7370 = vld [vmem:[%s5011 + $0x211] sm:$0xff]
  %v7371 = vld [vmem:[%s5011 + $0x219] sm:$0xff]
  %v7372 = vld [vmem:[%s5011 + $0x229] sm:$0xff]
  %v7373 = vld [vmem:[%s5011 + $0x231] sm:$0xff]
  %v7374 = vld [vmem:[%s5011 + $0x241] sm:$0xff]
  %v7375 = vld [vmem:[%s5011 + $0x249] sm:$0xff]
  %v7376 = vld [vmem:[%s5011 + $0x259] sm:$0xff]
  %v7377 = vld [vmem:[%s5011 + $0x261] sm:$0xff]
  %v7378 = vld [vmem:[%s5011 + $0x271] sm:$0xff]
  %v7379 = vld [vmem:[%s5011 + $0x279] sm:$0xff]
  %v7380 = vld [vmem:[%s5011 + $0x289] sm:$0xff]
  %v7381 = vld [vmem:[%s5011 + $0x291] sm:$0xff]
  %v7382 = vld [vmem:[%s5011 + $0x2a1] sm:$0xff]
  %v7383 = vld [vmem:[%s5011 + $0x2a9] sm:$0xff]
  %v7384 = vld [vmem:[%s5011 + $0x2b9] sm:$0xff]
  %v7385 = vld [vmem:[%s5011 + $0x2c1] sm:$0xff]
  %v7386 = vld [vmem:[%s5011 + $0x2d1] sm:$0xff]
  %v7387 = vld [vmem:[%s5011 + $0x2d9] sm:$0xff]
  %v7388 = vld [vmem:[%s5011 + $0x2e9] sm:$0xff]
  %v7389 = vld [vmem:[%s5011 + $0x2f1] sm:$0xff]
  %v7390 = vld [vmem:[%s5011 + $0x301] sm:$0xff]
  %v7391 = vld [vmem:[%s5011 + $0x309] sm:$0xff]
  %v7392 = vld [vmem:[%s5011 + $0x319] sm:$0xff]
  %v7393 = vld [vmem:[%s5011 + $0x321] sm:$0xff]
  %s7394 = scalar_lea.vmem %s3, 512
  %v7395 = vld [vmem:[%s7394] sm:$0xff]
  %v7396 = vld [vmem:[%s7394 + $0x8] sm:$0xff]
  %v7397 = vld [vmem:[%s7394 + $0x10] sm:$0xff]
  %v7398 = vld [vmem:[%s7394 + $0x18] sm:$0xff]
  %v7399 = vld [vmem:[%s7394 + $0x20] sm:$0xff]
  %v7400 = vld [vmem:[%s7394 + $0x28] sm:$0xff]
  %v7401 = vld [vmem:[%s7394 + $0x30] sm:$0xff]
  %v7402 = vld [vmem:[%s7394 + $0x38] sm:$0xff]
  %v7403 = vld [vmem:[%s7394 + $0x40] sm:$0xff]
  %v7404 = vld [vmem:[%s7394 + $0x48] sm:$0xff]
  %v7405 = vld [vmem:[%s7394 + $0x50] sm:$0xff]
  %v7406 = vld [vmem:[%s7394 + $0x58] sm:$0xff]
  %v7407 = vld [vmem:[%s7394 + $0x60] sm:$0xff]
  %v7408 = vld [vmem:[%s7394 + $0x68] sm:$0xff]
  %v7409 = vld [vmem:[%s7394 + $0x70] sm:$0xff]
  %v7410 = vld [vmem:[%s7394 + $0x78] sm:$0xff]
  %7411 = vmatprep.subr.mxu0 0.0
  %7412 = vmatpush1.msra.mxu0 %v7410
  %7413 = vmatprep.subr.mxu0 0.0
  %7414 = vmatpush1.msra.mxu0 %v7409
  %7415 = vmatprep.subr.mxu0 0.0
  %7416 = vmatpush1.msra.mxu0 %v7408
  %7417 = vmatprep.subr.mxu0 0.0
  %7418 = vmatpush1.msra.mxu0 %v7407
  %7419 = vmatprep.subr.mxu0 0.0
  %7420 = vmatpush1.msra.mxu0 %v7406
  %7421 = vmatprep.subr.mxu0 0.0
  %7422 = vmatpush1.msra.mxu0 %v7405
  %7423 = vmatprep.subr.mxu0 0.0
  %7424 = vmatpush1.msra.mxu0 %v7404
  %7425 = vmatprep.subr.mxu0 0.0
  %7426 = vmatpush1.msra.mxu0 %v7403
  %7427 = vmatprep.subr.mxu0 0.0
  %7428 = vmatpush1.msra.mxu0 %v7402
  %7429 = vmatprep.subr.mxu0 0.0
  %7430 = vmatpush1.msra.mxu0 %v7401
  %7431 = vmatprep.subr.mxu0 0.0
  %7432 = vmatpush1.msra.mxu0 %v7400
  %7433 = vmatprep.subr.mxu0 0.0
  %7434 = vmatpush1.msra.mxu0 %v7399
  %7435 = vmatprep.subr.mxu0 0.0
  %7436 = vmatpush1.msra.mxu0 %v7398
  %7437 = vmatprep.subr.mxu0 0.0
  %7438 = vmatpush1.msra.mxu0 %v7397
  %7439 = vmatprep.subr.mxu0 0.0
  %7440 = vmatpush1.msra.mxu0 %v7396
  %7441 = vmatprep.subr.mxu0 0.0
  %7442 = vmatpush1.msra.mxu0 %v7395
  %7443 = vmatprep.subr.mxu0 0.0
  %7444 = vmatpush2.msra.mxu0 0.0
  %7445 = vmatprep.subr.mxu0 0.0
  %7446 = vmatpush2.msra.mxu0 0.0
  %7447 = vmatprep.subr.mxu0 0.0
  %7448 = vmatpush2.msra.mxu0 0.0
  %7449 = vmatprep.subr.mxu0 0.0
  %7450 = vmatpush2.msra.mxu0 0.0
  %7451 = vmatprep.subr.mxu0 0.0
  %7452 = vmatpush2.msra.mxu0 0.0
  %7453 = vmatprep.subr.mxu0 0.0
  %7454 = vmatpush2.msra.mxu0 0.0
  %7455 = vmatprep.subr.mxu0 0.0
  %7456 = vmatpush2.msra.mxu0 0.0
  %7457 = vmatprep.subr.mxu0 0.0
  %7458 = vmatpush2.msra.mxu0 0.0
  %7459 = vmatprep.subr.mxu0 0.0
  %7460 = vmatpush2.msra.mxu0 0.0
  %7461 = vmatprep.subr.mxu0 0.0
  %7462 = vmatpush2.msra.mxu0 0.0
  %7463 = vmatprep.subr.mxu0 0.0
  %7464 = vmatpush2.msra.mxu0 0.0
  %7465 = vmatprep.subr.mxu0 0.0
  %7466 = vmatpush2.msra.mxu0 0.0
  %7467 = vmatprep.subr.mxu0 0.0
  %7468 = vmatpush2.msra.mxu0 0.0
  %7469 = vmatprep.subr.mxu0 0.0
  %7470 = vmatpush2.msra.mxu0 0.0
  %7471 = vmatprep.subr.mxu0 0.0
  %7472 = vmatpush2.msra.mxu0 0.0
  %7473 = vmatprep.subr.mxu0 0.0
  %7474 = vmatpush2.msra.mxu0 0.0
  %7475 = vmatprep.mubr.f32.mxu0 0.0
  %7476 = vmatmul.mubr.f32.gmra.mxu0 %v7330
  %v7477 = vpop.f32.mrf.mxu0
  %v7478 = vadd.f32 0.0, %v7477
  %v7479 = vpop.f32.mrf.mxu0
  %7480 = vmatprep.mubr.f32.mxu0 0.0
  %7481 = vmatmul.mubr.f32.gmra.mxu0 %v7331
  %v7482 = vpop.f32.mrf.mxu0
  %v7483 = vadd.f32 0.0, %v7482
  %v7484 = vpop.f32.mrf.mxu0
  %7485 = vmatprep.mubr.f32.mxu0 0.0
  %7486 = vmatmul.mubr.f32.gmra.mxu0 %v7332
  %v7487 = vpop.f32.mrf.mxu0
  %v7488 = vadd.f32 0.0, %v7487
  %v7489 = vpop.f32.mrf.mxu0
  %7490 = vmatprep.mubr.f32.mxu0 0.0
  %7491 = vmatmul.mubr.f32.gmra.mxu0 %v7333
  %v7492 = vpop.f32.mrf.mxu0
  %v7493 = vadd.f32 0.0, %v7492
  %v7494 = vpop.f32.mrf.mxu0
  %7495 = vmatprep.mubr.f32.mxu0 0.0
  %7496 = vmatmul.mubr.f32.gmra.mxu0 %v7334
  %v7497 = vpop.f32.mrf.mxu0
  %v7498 = vadd.f32 0.0, %v7497
  %v7499 = vpop.f32.mrf.mxu0
  %7500 = vmatprep.mubr.f32.mxu0 0.0
  %7501 = vmatmul.mubr.f32.gmra.mxu0 %v7335
  %v7502 = vpop.f32.mrf.mxu0
  %v7503 = vadd.f32 0.0, %v7502
  %v7504 = vpop.f32.mrf.mxu0
  %7505 = vmatprep.mubr.f32.mxu0 0.0
  %7506 = vmatmul.mubr.f32.gmra.mxu0 %v7336
  %v7507 = vpop.f32.mrf.mxu0
  %v7508 = vadd.f32 0.0, %v7507
  %v7509 = vpop.f32.mrf.mxu0
  %7510 = vmatprep.mubr.f32.mxu0 0.0
  %7511 = vmatmul.mubr.f32.gmra.mxu0 %v7337
  %v7512 = vpop.f32.mrf.mxu0
  %v7513 = vadd.f32 0.0, %v7512
  %v7514 = vpop.f32.mrf.mxu0
  %7515 = vmatprep.mubr.f32.mxu0 0.0
  %7516 = vmatmul.mubr.f32.gmra.mxu0 %v7338
  %v7517 = vpop.f32.mrf.mxu0
  %v7518 = vadd.f32 0.0, %v7517
  %v7519 = vpop.f32.mrf.mxu0
  %7520 = vmatprep.mubr.f32.mxu0 0.0
  %7521 = vmatmul.mubr.f32.gmra.mxu0 %v7339
  %v7522 = vpop.f32.mrf.mxu0
  %v7523 = vadd.f32 0.0, %v7522
  %v7524 = vpop.f32.mrf.mxu0
  %7525 = vmatprep.mubr.f32.mxu0 0.0
  %7526 = vmatmul.mubr.f32.gmra.mxu0 %v7340
  %v7527 = vpop.f32.mrf.mxu0
  %v7528 = vadd.f32 0.0, %v7527
  %v7529 = vpop.f32.mrf.mxu0
  %7530 = vmatprep.mubr.f32.mxu0 0.0
  %7531 = vmatmul.mubr.f32.gmra.mxu0 %v7341
  %v7532 = vpop.f32.mrf.mxu0
  %v7533 = vadd.f32 0.0, %v7532
  %v7534 = vpop.f32.mrf.mxu0
  %7535 = vmatprep.mubr.f32.mxu0 0.0
  %7536 = vmatmul.mubr.f32.gmra.mxu0 %v7342
  %v7537 = vpop.f32.mrf.mxu0
  %v7538 = vadd.f32 0.0, %v7537
  %v7539 = vpop.f32.mrf.mxu0
  %7540 = vmatprep.mubr.f32.mxu0 0.0
  %7541 = vmatmul.mubr.f32.gmra.mxu0 %v7343
  %v7542 = vpop.f32.mrf.mxu0
  %v7543 = vadd.f32 0.0, %v7542
  %v7544 = vpop.f32.mrf.mxu0
  %7545 = vmatprep.mubr.f32.mxu0 0.0
  %7546 = vmatmul.mubr.f32.gmra.mxu0 %v7344
  %v7547 = vpop.f32.mrf.mxu0
  %v7548 = vadd.f32 0.0, %v7547
  %v7549 = vpop.f32.mrf.mxu0
  %7550 = vmatprep.mubr.f32.mxu0 0.0
  %7551 = vmatmul.mubr.f32.gmra.mxu0 %v7345
  %v7552 = vpop.f32.mrf.mxu0
  %v7553 = vadd.f32 0.0, %v7552
  %v7554 = vpop.f32.mrf.mxu0
  %7555 = vmatprep.mubr.f32.mxu0 0.0
  %7556 = vmatmul.mubr.f32.gmra.mxu0 %v7346
  %v7557 = vpop.f32.mrf.mxu0
  %v7558 = vadd.f32 0.0, %v7557
  %v7559 = vpop.f32.mrf.mxu0
  %7560 = vmatprep.mubr.f32.mxu0 0.0
  %7561 = vmatmul.mubr.f32.gmra.mxu0 %v7347
  %v7562 = vpop.f32.mrf.mxu0
  %v7563 = vadd.f32 0.0, %v7562
  %v7564 = vpop.f32.mrf.mxu0
  %7565 = vmatprep.mubr.f32.mxu0 0.0
  %7566 = vmatmul.mubr.f32.gmra.mxu0 %v7348
  %v7567 = vpop.f32.mrf.mxu0
  %v7568 = vadd.f32 0.0, %v7567
  %v7569 = vpop.f32.mrf.mxu0
  %7570 = vmatprep.mubr.f32.mxu0 0.0
  %7571 = vmatmul.mubr.f32.gmra.mxu0 %v7349
  %v7572 = vpop.f32.mrf.mxu0
  %v7573 = vadd.f32 0.0, %v7572
  %v7574 = vpop.f32.mrf.mxu0
  %7575 = vmatprep.mubr.f32.mxu0 0.0
  %7576 = vmatmul.mubr.f32.gmra.mxu0 %v7350
  %v7577 = vpop.f32.mrf.mxu0
  %v7578 = vadd.f32 0.0, %v7577
  %v7579 = vpop.f32.mrf.mxu0
  %7580 = vmatprep.mubr.f32.mxu0 0.0
  %7581 = vmatmul.mubr.f32.gmra.mxu0 %v7351
  %v7582 = vpop.f32.mrf.mxu0
  %v7583 = vadd.f32 0.0, %v7582
  %v7584 = vpop.f32.mrf.mxu0
  %7585 = vmatprep.mubr.f32.mxu0 0.0
  %7586 = vmatmul.mubr.f32.gmra.mxu0 %v7352
  %v7587 = vpop.f32.mrf.mxu0
  %v7588 = vadd.f32 0.0, %v7587
  %v7589 = vpop.f32.mrf.mxu0
  %7590 = vmatprep.mubr.f32.mxu0 0.0
  %7591 = vmatmul.mubr.f32.gmra.mxu0 %v7353
  %v7592 = vpop.f32.mrf.mxu0
  %v7593 = vadd.f32 0.0, %v7592
  %v7594 = vpop.f32.mrf.mxu0
  %7595 = vmatprep.mubr.f32.mxu0 0.0
  %7596 = vmatmul.mubr.f32.gmra.mxu0 %v7354
  %v7597 = vpop.f32.mrf.mxu0
  %v7598 = vadd.f32 0.0, %v7597
  %v7599 = vpop.f32.mrf.mxu0
  %7600 = vmatprep.mubr.f32.mxu0 0.0
  %7601 = vmatmul.mubr.f32.gmra.mxu0 %v7355
  %v7602 = vpop.f32.mrf.mxu0
  %v7603 = vadd.f32 0.0, %v7602
  %v7604 = vpop.f32.mrf.mxu0
  %7605 = vmatprep.mubr.f32.mxu0 0.0
  %7606 = vmatmul.mubr.f32.gmra.mxu0 %v7356
  %v7607 = vpop.f32.mrf.mxu0
  %v7608 = vadd.f32 0.0, %v7607
  %v7609 = vpop.f32.mrf.mxu0
  %7610 = vmatprep.mubr.f32.mxu0 0.0
  %7611 = vmatmul.mubr.f32.gmra.mxu0 %v7357
  %v7612 = vpop.f32.mrf.mxu0
  %v7613 = vadd.f32 0.0, %v7612
  %v7614 = vpop.f32.mrf.mxu0
  %7615 = vmatprep.mubr.f32.mxu0 0.0
  %7616 = vmatmul.mubr.f32.gmra.mxu0 %v7358
  %v7617 = vpop.f32.mrf.mxu0
  %v7618 = vadd.f32 0.0, %v7617
  %v7619 = vpop.f32.mrf.mxu0
  %7620 = vmatprep.mubr.f32.mxu0 0.0
  %7621 = vmatmul.mubr.f32.gmra.mxu0 %v7359
  %v7622 = vpop.f32.mrf.mxu0
  %v7623 = vadd.f32 0.0, %v7622
  %v7624 = vpop.f32.mrf.mxu0
  %7625 = vmatprep.mubr.f32.mxu0 0.0
  %7626 = vmatmul.mubr.f32.gmra.mxu0 %v7360
  %v7627 = vpop.f32.mrf.mxu0
  %v7628 = vadd.f32 0.0, %v7627
  %v7629 = vpop.f32.mrf.mxu0
  %7630 = vmatprep.mubr.f32.mxu0 0.0
  %7631 = vmatmul.mubr.f32.gmra.mxu0 %v7361
  %v7632 = vpop.f32.mrf.mxu0
  %v7633 = vadd.f32 0.0, %v7632
  %v7634 = vpop.f32.mrf.mxu0
  %7635 = vmatprep.mubr.f32.mxu0 0.0
  %7636 = vmatmul.mubr.f32.gmra.mxu0 %v7362
  %v7637 = vpop.f32.mrf.mxu0
  %v7638 = vadd.f32 0.0, %v7637
  %v7639 = vpop.f32.mrf.mxu0
  %7640 = vmatprep.mubr.f32.mxu0 0.0
  %7641 = vmatmul.mubr.f32.gmra.mxu0 %v7363
  %v7642 = vpop.f32.mrf.mxu0
  %v7643 = vadd.f32 0.0, %v7642
  %v7644 = vpop.f32.mrf.mxu0
  %7645 = vmatprep.mubr.f32.mxu0 0.0
  %7646 = vmatmul.mubr.f32.gmra.mxu0 %v7364
  %v7647 = vpop.f32.mrf.mxu0
  %v7648 = vadd.f32 0.0, %v7647
  %v7649 = vpop.f32.mrf.mxu0
  %7650 = vmatprep.mubr.f32.mxu0 0.0
  %7651 = vmatmul.mubr.f32.gmra.mxu0 %v7365
  %v7652 = vpop.f32.mrf.mxu0
  %v7653 = vadd.f32 0.0, %v7652
  %v7654 = vpop.f32.mrf.mxu0
  %7655 = vmatprep.mubr.f32.mxu0 0.0
  %7656 = vmatmul.mubr.f32.gmra.mxu0 %v7366
  %v7657 = vpop.f32.mrf.mxu0
  %v7658 = vadd.f32 0.0, %v7657
  %v7659 = vpop.f32.mrf.mxu0
  %7660 = vmatprep.mubr.f32.mxu0 0.0
  %7661 = vmatmul.mubr.f32.gmra.mxu0 %v7367
  %v7662 = vpop.f32.mrf.mxu0
  %v7663 = vadd.f32 0.0, %v7662
  %v7664 = vpop.f32.mrf.mxu0
  %7665 = vmatprep.mubr.f32.mxu0 0.0
  %7666 = vmatmul.mubr.f32.gmra.mxu0 %v7368
  %v7667 = vpop.f32.mrf.mxu0
  %v7668 = vadd.f32 0.0, %v7667
  %v7669 = vpop.f32.mrf.mxu0
  %7670 = vmatprep.mubr.f32.mxu0 0.0
  %7671 = vmatmul.mubr.f32.gmra.mxu0 %v7369
  %v7672 = vpop.f32.mrf.mxu0
  %v7673 = vadd.f32 0.0, %v7672
  %v7674 = vpop.f32.mrf.mxu0
  %7675 = vmatprep.mubr.f32.mxu0 0.0
  %7676 = vmatmul.mubr.f32.gmra.mxu0 %v7370
  %v7677 = vpop.f32.mrf.mxu0
  %v7678 = vadd.f32 0.0, %v7677
  %v7679 = vpop.f32.mrf.mxu0
  %7680 = vmatprep.mubr.f32.mxu0 0.0
  %7681 = vmatmul.mubr.f32.gmra.mxu0 %v7371
  %v7682 = vpop.f32.mrf.mxu0
  %v7683 = vadd.f32 0.0, %v7682
  %v7684 = vpop.f32.mrf.mxu0
  %7685 = vmatprep.mubr.f32.mxu0 0.0
  %7686 = vmatmul.mubr.f32.gmra.mxu0 %v7372
  %v7687 = vpop.f32.mrf.mxu0
  %v7688 = vadd.f32 0.0, %v7687
  %v7689 = vpop.f32.mrf.mxu0
  %7690 = vmatprep.mubr.f32.mxu0 0.0
  %7691 = vmatmul.mubr.f32.gmra.mxu0 %v7373
  %v7692 = vpop.f32.mrf.mxu0
  %v7693 = vadd.f32 0.0, %v7692
  %v7694 = vpop.f32.mrf.mxu0
  %7695 = vmatprep.mubr.f32.mxu0 0.0
  %7696 = vmatmul.mubr.f32.gmra.mxu0 %v7374
  %v7697 = vpop.f32.mrf.mxu0
  %v7698 = vadd.f32 0.0, %v7697
  %v7699 = vpop.f32.mrf.mxu0
  %7700 = vmatprep.mubr.f32.mxu0 0.0
  %7701 = vmatmul.mubr.f32.gmra.mxu0 %v7375
  %v7702 = vpop.f32.mrf.mxu0
  %v7703 = vadd.f32 0.0, %v7702
  %v7704 = vpop.f32.mrf.mxu0
  %7705 = vmatprep.mubr.f32.mxu0 0.0
  %7706 = vmatmul.mubr.f32.gmra.mxu0 %v7376
  %v7707 = vpop.f32.mrf.mxu0
  %v7708 = vadd.f32 0.0, %v7707
  %v7709 = vpop.f32.mrf.mxu0
  %7710 = vmatprep.mubr.f32.mxu0 0.0
  %7711 = vmatmul.mubr.f32.gmra.mxu0 %v7377
  %v7712 = vpop.f32.mrf.mxu0
  %v7713 = vadd.f32 0.0, %v7712
  %v7714 = vpop.f32.mrf.mxu0
  %7715 = vmatprep.mubr.f32.mxu0 0.0
  %7716 = vmatmul.mubr.f32.gmra.mxu0 %v7378
  %v7717 = vpop.f32.mrf.mxu0
  %v7718 = vadd.f32 0.0, %v7717
  %v7719 = vpop.f32.mrf.mxu0
  %7720 = vmatprep.mubr.f32.mxu0 0.0
  %7721 = vmatmul.mubr.f32.gmra.mxu0 %v7379
  %v7722 = vpop.f32.mrf.mxu0
  %v7723 = vadd.f32 0.0, %v7722
  %v7724 = vpop.f32.mrf.mxu0
  %7725 = vmatprep.mubr.f32.mxu0 0.0
  %7726 = vmatmul.mubr.f32.gmra.mxu0 %v7380
  %v7727 = vpop.f32.mrf.mxu0
  %v7728 = vadd.f32 0.0, %v7727
  %v7729 = vpop.f32.mrf.mxu0
  %7730 = vmatprep.mubr.f32.mxu0 0.0
  %7731 = vmatmul.mubr.f32.gmra.mxu0 %v7381
  %v7732 = vpop.f32.mrf.mxu0
  %v7733 = vadd.f32 0.0, %v7732
  %v7734 = vpop.f32.mrf.mxu0
  %7735 = vmatprep.mubr.f32.mxu0 0.0
  %7736 = vmatmul.mubr.f32.gmra.mxu0 %v7382
  %v7737 = vpop.f32.mrf.mxu0
  %v7738 = vadd.f32 0.0, %v7737
  %v7739 = vpop.f32.mrf.mxu0
  %7740 = vmatprep.mubr.f32.mxu0 0.0
  %7741 = vmatmul.mubr.f32.gmra.mxu0 %v7383
  %v7742 = vpop.f32.mrf.mxu0
  %v7743 = vadd.f32 0.0, %v7742
  %v7744 = vpop.f32.mrf.mxu0
  %7745 = vmatprep.mubr.f32.mxu0 0.0
  %7746 = vmatmul.mubr.f32.gmra.mxu0 %v7384
  %v7747 = vpop.f32.mrf.mxu0
  %v7748 = vadd.f32 0.0, %v7747
  %v7749 = vpop.f32.mrf.mxu0
  %7750 = vmatprep.mubr.f32.mxu0 0.0
  %7751 = vmatmul.mubr.f32.gmra.mxu0 %v7385
  %v7752 = vpop.f32.mrf.mxu0
  %v7753 = vadd.f32 0.0, %v7752
  %v7754 = vpop.f32.mrf.mxu0
  %7755 = vmatprep.mubr.f32.mxu0 0.0
  %7756 = vmatmul.mubr.f32.gmra.mxu0 %v7386
  %v7757 = vpop.f32.mrf.mxu0
  %v7758 = vadd.f32 0.0, %v7757
  %v7759 = vpop.f32.mrf.mxu0
  %7760 = vmatprep.mubr.f32.mxu0 0.0
  %7761 = vmatmul.mubr.f32.gmra.mxu0 %v7387
  %v7762 = vpop.f32.mrf.mxu0
  %v7763 = vadd.f32 0.0, %v7762
  %v7764 = vpop.f32.mrf.mxu0
  %7765 = vmatprep.mubr.f32.mxu0 0.0
  %7766 = vmatmul.mubr.f32.gmra.mxu0 %v7388
  %v7767 = vpop.f32.mrf.mxu0
  %v7768 = vadd.f32 0.0, %v7767
  %v7769 = vpop.f32.mrf.mxu0
  %7770 = vmatprep.mubr.f32.mxu0 0.0
  %7771 = vmatmul.mubr.f32.gmra.mxu0 %v7389
  %v7772 = vpop.f32.mrf.mxu0
  %v7773 = vadd.f32 0.0, %v7772
  %v7774 = vpop.f32.mrf.mxu0
  %7775 = vmatprep.mubr.f32.mxu0 0.0
  %7776 = vmatmul.mubr.f32.gmra.mxu0 %v7390
  %v7777 = vpop.f32.mrf.mxu0
  %v7778 = vadd.f32 0.0, %v7777
  %v7779 = vpop.f32.mrf.mxu0
  %7780 = vmatprep.mubr.f32.mxu0 0.0
  %7781 = vmatmul.mubr.f32.gmra.mxu0 %v7391
  %v7782 = vpop.f32.mrf.mxu0
  %v7783 = vadd.f32 0.0, %v7782
  %v7784 = vpop.f32.mrf.mxu0
  %7785 = vmatprep.mubr.f32.mxu0 0.0
  %7786 = vmatmul.mubr.f32.gmra.mxu0 %v7392
  %v7787 = vpop.f32.mrf.mxu0
  %v7788 = vadd.f32 0.0, %v7787
  %v7789 = vpop.f32.mrf.mxu0
  %7790 = vmatprep.mubr.f32.mxu0 0.0
  %7791 = vmatmul.mubr.f32.gmra.mxu0 %v7393
  %v7792 = vpop.f32.mrf.mxu0
  %v7793 = vadd.f32 0.0, %v7792
  %v7794 = vpop.f32.mrf.mxu0
  %7795 = vdwg.mxu0
  %v7796 = vadd.f32 %v7266, %v7478
  %v7797 = vadd.f32 %v7267, %v7483
  %v7798 = vadd.f32 %v7268, %v7488
  %v7799 = vadd.f32 %v7269, %v7493
  %v7800 = vadd.f32 %v7270, %v7498
  %v7801 = vadd.f32 %v7271, %v7503
  %v7802 = vadd.f32 %v7272, %v7508
  %v7803 = vadd.f32 %v7273, %v7513
  %v7804 = vadd.f32 %v7274, %v7518
  %v7805 = vadd.f32 %v7275, %v7523
  %v7806 = vadd.f32 %v7276, %v7528
  %v7807 = vadd.f32 %v7277, %v7533
  %v7808 = vadd.f32 %v7278, %v7538
  %v7809 = vadd.f32 %v7279, %v7543
  %v7810 = vadd.f32 %v7280, %v7548
  %v7811 = vadd.f32 %v7281, %v7553
  %v7812 = vadd.f32 %v7282, %v7558
  %v7813 = vadd.f32 %v7283, %v7563
  %v7814 = vadd.f32 %v7284, %v7568
  %v7815 = vadd.f32 %v7285, %v7573
  %v7816 = vadd.f32 %v7286, %v7578
  %v7817 = vadd.f32 %v7287, %v7583
  %v7818 = vadd.f32 %v7288, %v7588
  %v7819 = vadd.f32 %v7289, %v7593
  %v7820 = vadd.f32 %v7290, %v7598
  %v7821 = vadd.f32 %v7291, %v7603
  %v7822 = vadd.f32 %v7292, %v7608
  %v7823 = vadd.f32 %v7293, %v7613
  %v7824 = vadd.f32 %v7294, %v7618
  %v7825 = vadd.f32 %v7295, %v7623
  %v7826 = vadd.f32 %v7296, %v7628
  %v7827 = vadd.f32 %v7297, %v7633
  %v7828 = vadd.f32 %v7298, %v7638
  %v7829 = vadd.f32 %v7299, %v7643
  %v7830 = vadd.f32 %v7300, %v7648
  %v7831 = vadd.f32 %v7301, %v7653
  %v7832 = vadd.f32 %v7302, %v7658
  %v7833 = vadd.f32 %v7303, %v7663
  %v7834 = vadd.f32 %v7304, %v7668
  %v7835 = vadd.f32 %v7305, %v7673
  %v7836 = vadd.f32 %v7306, %v7678
  %v7837 = vadd.f32 %v7307, %v7683
  %v7838 = vadd.f32 %v7308, %v7688
  %v7839 = vadd.f32 %v7309, %v7693
  %v7840 = vadd.f32 %v7310, %v7698
  %v7841 = vadd.f32 %v7311, %v7703
  %v7842 = vadd.f32 %v7312, %v7708
  %v7843 = vadd.f32 %v7313, %v7713
  %v7844 = vadd.f32 %v7314, %v7718
  %v7845 = vadd.f32 %v7315, %v7723
  %v7846 = vadd.f32 %v7316, %v7728
  %v7847 = vadd.f32 %v7317, %v7733
  %v7848 = vadd.f32 %v7318, %v7738
  %v7849 = vadd.f32 %v7319, %v7743
  %v7850 = vadd.f32 %v7320, %v7748
  %v7851 = vadd.f32 %v7321, %v7753
  %v7852 = vadd.f32 %v7322, %v7758
  %v7853 = vadd.f32 %v7323, %v7763
  %v7854 = vadd.f32 %v7324, %v7768
  %v7855 = vadd.f32 %v7325, %v7773
  %v7856 = vadd.f32 %v7326, %v7778
  %v7857 = vadd.f32 %v7327, %v7783
  %v7858 = vadd.f32 %v7328, %v7788
  %v7859 = vadd.f32 %v7329, %v7793
  %v7860 = vld [vmem:[%s5011 + $0x2] sm:$0xff]
  %v7861 = vld [vmem:[%s5011 + $0xa] sm:$0xff]
  %v7862 = vld [vmem:[%s5011 + $0x1a] sm:$0xff]
  %v7863 = vld [vmem:[%s5011 + $0x22] sm:$0xff]
  %v7864 = vld [vmem:[%s5011 + $0x32] sm:$0xff]
  %v7865 = vld [vmem:[%s5011 + $0x3a] sm:$0xff]
  %v7866 = vld [vmem:[%s5011 + $0x4a] sm:$0xff]
  %v7867 = vld [vmem:[%s5011 + $0x52] sm:$0xff]
  %v7868 = vld [vmem:[%s5011 + $0x62] sm:$0xff]
  %v7869 = vld [vmem:[%s5011 + $0x6a] sm:$0xff]
  %v7870 = vld [vmem:[%s5011 + $0x7a] sm:$0xff]
  %v7871 = vld [vmem:[%s5011 + $0x82] sm:$0xff]
  %v7872 = vld [vmem:[%s5011 + $0x92] sm:$0xff]
  %v7873 = vld [vmem:[%s5011 + $0x9a] sm:$0xff]
  %v7874 = vld [vmem:[%s5011 + $0xaa] sm:$0xff]
  %v7875 = vld [vmem:[%s5011 + $0xb2] sm:$0xff]
  %v7876 = vld [vmem:[%s5011 + $0xc2] sm:$0xff]
  %v7877 = vld [vmem:[%s5011 + $0xca] sm:$0xff]
  %v7878 = vld [vmem:[%s5011 + $0xda] sm:$0xff]
  %v7879 = vld [vmem:[%s5011 + $0xe2] sm:$0xff]
  %v7880 = vld [vmem:[%s5011 + $0xf2] sm:$0xff]
  %v7881 = vld [vmem:[%s5011 + $0xfa] sm:$0xff]
  %v7882 = vld [vmem:[%s5011 + $0x10a] sm:$0xff]
  %v7883 = vld [vmem:[%s5011 + $0x112] sm:$0xff]
  %v7884 = vld [vmem:[%s5011 + $0x122] sm:$0xff]
  %v7885 = vld [vmem:[%s5011 + $0x12a] sm:$0xff]
  %v7886 = vld [vmem:[%s5011 + $0x13a] sm:$0xff]
  %v7887 = vld [vmem:[%s5011 + $0x142] sm:$0xff]
  %v7888 = vld [vmem:[%s5011 + $0x152] sm:$0xff]
  %v7889 = vld [vmem:[%s5011 + $0x15a] sm:$0xff]
  %v7890 = vld [vmem:[%s5011 + $0x16a] sm:$0xff]
  %v7891 = vld [vmem:[%s5011 + $0x172] sm:$0xff]
  %v7892 = vld [vmem:[%s5011 + $0x1b2] sm:$0xff]
  %v7893 = vld [vmem:[%s5011 + $0x1ba] sm:$0xff]
  %v7894 = vld [vmem:[%s5011 + $0x1ca] sm:$0xff]
  %v7895 = vld [vmem:[%s5011 + $0x1d2] sm:$0xff]
  %v7896 = vld [vmem:[%s5011 + $0x1e2] sm:$0xff]
  %v7897 = vld [vmem:[%s5011 + $0x1ea] sm:$0xff]
  %v7898 = vld [vmem:[%s5011 + $0x1fa] sm:$0xff]
  %v7899 = vld [vmem:[%s5011 + $0x202] sm:$0xff]
  %v7900 = vld [vmem:[%s5011 + $0x212] sm:$0xff]
  %v7901 = vld [vmem:[%s5011 + $0x21a] sm:$0xff]
  %v7902 = vld [vmem:[%s5011 + $0x22a] sm:$0xff]
  %v7903 = vld [vmem:[%s5011 + $0x232] sm:$0xff]
  %v7904 = vld [vmem:[%s5011 + $0x242] sm:$0xff]
  %v7905 = vld [vmem:[%s5011 + $0x24a] sm:$0xff]
  %v7906 = vld [vmem:[%s5011 + $0x25a] sm:$0xff]
  %v7907 = vld [vmem:[%s5011 + $0x262] sm:$0xff]
  %v7908 = vld [vmem:[%s5011 + $0x272] sm:$0xff]
  %v7909 = vld [vmem:[%s5011 + $0x27a] sm:$0xff]
  %v7910 = vld [vmem:[%s5011 + $0x28a] sm:$0xff]
  %v7911 = vld [vmem:[%s5011 + $0x292] sm:$0xff]
  %v7912 = vld [vmem:[%s5011 + $0x2a2] sm:$0xff]
  %v7913 = vld [vmem:[%s5011 + $0x2aa] sm:$0xff]
  %v7914 = vld [vmem:[%s5011 + $0x2ba] sm:$0xff]
  %v7915 = vld [vmem:[%s5011 + $0x2c2] sm:$0xff]
  %v7916 = vld [vmem:[%s5011 + $0x2d2] sm:$0xff]
  %v7917 = vld [vmem:[%s5011 + $0x2da] sm:$0xff]
  %v7918 = vld [vmem:[%s5011 + $0x2ea] sm:$0xff]
  %v7919 = vld [vmem:[%s5011 + $0x2f2] sm:$0xff]
  %v7920 = vld [vmem:[%s5011 + $0x302] sm:$0xff]
  %v7921 = vld [vmem:[%s5011 + $0x30a] sm:$0xff]
  %v7922 = vld [vmem:[%s5011 + $0x31a] sm:$0xff]
  %v7923 = vld [vmem:[%s5011 + $0x322] sm:$0xff]
  %s7924 = scalar_lea.vmem %s3, 640
  %v7925 = vld [vmem:[%s7924] sm:$0xff]
  %v7926 = vld [vmem:[%s7924 + $0x8] sm:$0xff]
  %v7927 = vld [vmem:[%s7924 + $0x10] sm:$0xff]
  %v7928 = vld [vmem:[%s7924 + $0x18] sm:$0xff]
  %v7929 = vld [vmem:[%s7924 + $0x20] sm:$0xff]
  %v7930 = vld [vmem:[%s7924 + $0x28] sm:$0xff]
  %v7931 = vld [vmem:[%s7924 + $0x30] sm:$0xff]
  %v7932 = vld [vmem:[%s7924 + $0x38] sm:$0xff]
  %v7933 = vld [vmem:[%s7924 + $0x40] sm:$0xff]
  %v7934 = vld [vmem:[%s7924 + $0x48] sm:$0xff]
  %v7935 = vld [vmem:[%s7924 + $0x50] sm:$0xff]
  %v7936 = vld [vmem:[%s7924 + $0x58] sm:$0xff]
  %v7937 = vld [vmem:[%s7924 + $0x60] sm:$0xff]
  %v7938 = vld [vmem:[%s7924 + $0x68] sm:$0xff]
  %v7939 = vld [vmem:[%s7924 + $0x70] sm:$0xff]
  %v7940 = vld [vmem:[%s7924 + $0x78] sm:$0xff]
  %7941 = vmatprep.subr.mxu0 0.0
  %7942 = vmatpush1.msra.mxu0 %v7940
  %7943 = vmatprep.subr.mxu0 0.0
  %7944 = vmatpush1.msra.mxu0 %v7939
  %7945 = vmatprep.subr.mxu0 0.0
  %7946 = vmatpush1.msra.mxu0 %v7938
  %7947 = vmatprep.subr.mxu0 0.0
  %7948 = vmatpush1.msra.mxu0 %v7937
  %7949 = vmatprep.subr.mxu0 0.0
  %7950 = vmatpush1.msra.mxu0 %v7936
  %7951 = vmatprep.subr.mxu0 0.0
  %7952 = vmatpush1.msra.mxu0 %v7935
  %7953 = vmatprep.subr.mxu0 0.0
  %7954 = vmatpush1.msra.mxu0 %v7934
  %7955 = vmatprep.subr.mxu0 0.0
  %7956 = vmatpush1.msra.mxu0 %v7933
  %7957 = vmatprep.subr.mxu0 0.0
  %7958 = vmatpush1.msra.mxu0 %v7932
  %7959 = vmatprep.subr.mxu0 0.0
  %7960 = vmatpush1.msra.mxu0 %v7931
  %7961 = vmatprep.subr.mxu0 0.0
  %7962 = vmatpush1.msra.mxu0 %v7930
  %7963 = vmatprep.subr.mxu0 0.0
  %7964 = vmatpush1.msra.mxu0 %v7929
  %7965 = vmatprep.subr.mxu0 0.0
  %7966 = vmatpush1.msra.mxu0 %v7928
  %7967 = vmatprep.subr.mxu0 0.0
  %7968 = vmatpush1.msra.mxu0 %v7927
  %7969 = vmatprep.subr.mxu0 0.0
  %7970 = vmatpush1.msra.mxu0 %v7926
  %7971 = vmatprep.subr.mxu0 0.0
  %7972 = vmatpush1.msra.mxu0 %v7925
  %7973 = vmatprep.subr.mxu0 0.0
  %7974 = vmatpush2.msra.mxu0 0.0
  %7975 = vmatprep.subr.mxu0 0.0
  %7976 = vmatpush2.msra.mxu0 0.0
  %7977 = vmatprep.subr.mxu0 0.0
  %7978 = vmatpush2.msra.mxu0 0.0
  %7979 = vmatprep.subr.mxu0 0.0
  %7980 = vmatpush2.msra.mxu0 0.0
  %7981 = vmatprep.subr.mxu0 0.0
  %7982 = vmatpush2.msra.mxu0 0.0
  %7983 = vmatprep.subr.mxu0 0.0
  %7984 = vmatpush2.msra.mxu0 0.0
  %7985 = vmatprep.subr.mxu0 0.0
  %7986 = vmatpush2.msra.mxu0 0.0
  %7987 = vmatprep.subr.mxu0 0.0
  %7988 = vmatpush2.msra.mxu0 0.0
  %7989 = vmatprep.subr.mxu0 0.0
  %7990 = vmatpush2.msra.mxu0 0.0
  %7991 = vmatprep.subr.mxu0 0.0
  %7992 = vmatpush2.msra.mxu0 0.0
  %7993 = vmatprep.subr.mxu0 0.0
  %7994 = vmatpush2.msra.mxu0 0.0
  %7995 = vmatprep.subr.mxu0 0.0
  %7996 = vmatpush2.msra.mxu0 0.0
  %7997 = vmatprep.subr.mxu0 0.0
  %7998 = vmatpush2.msra.mxu0 0.0
  %7999 = vmatprep.subr.mxu0 0.0
  %8000 = vmatpush2.msra.mxu0 0.0
  %8001 = vmatprep.subr.mxu0 0.0
  %8002 = vmatpush2.msra.mxu0 0.0
  %8003 = vmatprep.subr.mxu0 0.0
  %8004 = vmatpush2.msra.mxu0 0.0
  %8005 = vmatprep.mubr.f32.mxu0 0.0
  %8006 = vmatmul.mubr.f32.gmra.mxu0 %v7860
  %v8007 = vpop.f32.mrf.mxu0
  %v8008 = vadd.f32 0.0, %v8007
  %v8009 = vpop.f32.mrf.mxu0
  %8010 = vmatprep.mubr.f32.mxu0 0.0
  %8011 = vmatmul.mubr.f32.gmra.mxu0 %v7861
  %v8012 = vpop.f32.mrf.mxu0
  %v8013 = vadd.f32 0.0, %v8012
  %v8014 = vpop.f32.mrf.mxu0
  %8015 = vmatprep.mubr.f32.mxu0 0.0
  %8016 = vmatmul.mubr.f32.gmra.mxu0 %v7862
  %v8017 = vpop.f32.mrf.mxu0
  %v8018 = vadd.f32 0.0, %v8017
  %v8019 = vpop.f32.mrf.mxu0
  %8020 = vmatprep.mubr.f32.mxu0 0.0
  %8021 = vmatmul.mubr.f32.gmra.mxu0 %v7863
  %v8022 = vpop.f32.mrf.mxu0
  %v8023 = vadd.f32 0.0, %v8022
  %v8024 = vpop.f32.mrf.mxu0
  %8025 = vmatprep.mubr.f32.mxu0 0.0
  %8026 = vmatmul.mubr.f32.gmra.mxu0 %v7864
  %v8027 = vpop.f32.mrf.mxu0
  %v8028 = vadd.f32 0.0, %v8027
  %v8029 = vpop.f32.mrf.mxu0
  %8030 = vmatprep.mubr.f32.mxu0 0.0
  %8031 = vmatmul.mubr.f32.gmra.mxu0 %v7865
  %v8032 = vpop.f32.mrf.mxu0
  %v8033 = vadd.f32 0.0, %v8032
  %v8034 = vpop.f32.mrf.mxu0
  %8035 = vmatprep.mubr.f32.mxu0 0.0
  %8036 = vmatmul.mubr.f32.gmra.mxu0 %v7866
  %v8037 = vpop.f32.mrf.mxu0
  %v8038 = vadd.f32 0.0, %v8037
  %v8039 = vpop.f32.mrf.mxu0
  %8040 = vmatprep.mubr.f32.mxu0 0.0
  %8041 = vmatmul.mubr.f32.gmra.mxu0 %v7867
  %v8042 = vpop.f32.mrf.mxu0
  %v8043 = vadd.f32 0.0, %v8042
  %v8044 = vpop.f32.mrf.mxu0
  %8045 = vmatprep.mubr.f32.mxu0 0.0
  %8046 = vmatmul.mubr.f32.gmra.mxu0 %v7868
  %v8047 = vpop.f32.mrf.mxu0
  %v8048 = vadd.f32 0.0, %v8047
  %v8049 = vpop.f32.mrf.mxu0
  %8050 = vmatprep.mubr.f32.mxu0 0.0
  %8051 = vmatmul.mubr.f32.gmra.mxu0 %v7869
  %v8052 = vpop.f32.mrf.mxu0
  %v8053 = vadd.f32 0.0, %v8052
  %v8054 = vpop.f32.mrf.mxu0
  %8055 = vmatprep.mubr.f32.mxu0 0.0
  %8056 = vmatmul.mubr.f32.gmra.mxu0 %v7870
  %v8057 = vpop.f32.mrf.mxu0
  %v8058 = vadd.f32 0.0, %v8057
  %v8059 = vpop.f32.mrf.mxu0
  %8060 = vmatprep.mubr.f32.mxu0 0.0
  %8061 = vmatmul.mubr.f32.gmra.mxu0 %v7871
  %v8062 = vpop.f32.mrf.mxu0
  %v8063 = vadd.f32 0.0, %v8062
  %v8064 = vpop.f32.mrf.mxu0
  %8065 = vmatprep.mubr.f32.mxu0 0.0
  %8066 = vmatmul.mubr.f32.gmra.mxu0 %v7872
  %v8067 = vpop.f32.mrf.mxu0
  %v8068 = vadd.f32 0.0, %v8067
  %v8069 = vpop.f32.mrf.mxu0
  %8070 = vmatprep.mubr.f32.mxu0 0.0
  %8071 = vmatmul.mubr.f32.gmra.mxu0 %v7873
  %v8072 = vpop.f32.mrf.mxu0
  %v8073 = vadd.f32 0.0, %v8072
  %v8074 = vpop.f32.mrf.mxu0
  %8075 = vmatprep.mubr.f32.mxu0 0.0
  %8076 = vmatmul.mubr.f32.gmra.mxu0 %v7874
  %v8077 = vpop.f32.mrf.mxu0
  %v8078 = vadd.f32 0.0, %v8077
  %v8079 = vpop.f32.mrf.mxu0
  %8080 = vmatprep.mubr.f32.mxu0 0.0
  %8081 = vmatmul.mubr.f32.gmra.mxu0 %v7875
  %v8082 = vpop.f32.mrf.mxu0
  %v8083 = vadd.f32 0.0, %v8082
  %v8084 = vpop.f32.mrf.mxu0
  %8085 = vmatprep.mubr.f32.mxu0 0.0
  %8086 = vmatmul.mubr.f32.gmra.mxu0 %v7876
  %v8087 = vpop.f32.mrf.mxu0
  %v8088 = vadd.f32 0.0, %v8087
  %v8089 = vpop.f32.mrf.mxu0
  %8090 = vmatprep.mubr.f32.mxu0 0.0
  %8091 = vmatmul.mubr.f32.gmra.mxu0 %v7877
  %v8092 = vpop.f32.mrf.mxu0
  %v8093 = vadd.f32 0.0, %v8092
  %v8094 = vpop.f32.mrf.mxu0
  %8095 = vmatprep.mubr.f32.mxu0 0.0
  %8096 = vmatmul.mubr.f32.gmra.mxu0 %v7878
  %v8097 = vpop.f32.mrf.mxu0
  %v8098 = vadd.f32 0.0, %v8097
  %v8099 = vpop.f32.mrf.mxu0
  %8100 = vmatprep.mubr.f32.mxu0 0.0
  %8101 = vmatmul.mubr.f32.gmra.mxu0 %v7879
  %v8102 = vpop.f32.mrf.mxu0
  %v8103 = vadd.f32 0.0, %v8102
  %v8104 = vpop.f32.mrf.mxu0
  %8105 = vmatprep.mubr.f32.mxu0 0.0
  %8106 = vmatmul.mubr.f32.gmra.mxu0 %v7880
  %v8107 = vpop.f32.mrf.mxu0
  %v8108 = vadd.f32 0.0, %v8107
  %v8109 = vpop.f32.mrf.mxu0
  %8110 = vmatprep.mubr.f32.mxu0 0.0
  %8111 = vmatmul.mubr.f32.gmra.mxu0 %v7881
  %v8112 = vpop.f32.mrf.mxu0
  %v8113 = vadd.f32 0.0, %v8112
  %v8114 = vpop.f32.mrf.mxu0
  %8115 = vmatprep.mubr.f32.mxu0 0.0
  %8116 = vmatmul.mubr.f32.gmra.mxu0 %v7882
  %v8117 = vpop.f32.mrf.mxu0
  %v8118 = vadd.f32 0.0, %v8117
  %v8119 = vpop.f32.mrf.mxu0
  %8120 = vmatprep.mubr.f32.mxu0 0.0
  %8121 = vmatmul.mubr.f32.gmra.mxu0 %v7883
  %v8122 = vpop.f32.mrf.mxu0
  %v8123 = vadd.f32 0.0, %v8122
  %v8124 = vpop.f32.mrf.mxu0
  %8125 = vmatprep.mubr.f32.mxu0 0.0
  %8126 = vmatmul.mubr.f32.gmra.mxu0 %v7884
  %v8127 = vpop.f32.mrf.mxu0
  %v8128 = vadd.f32 0.0, %v8127
  %v8129 = vpop.f32.mrf.mxu0
  %8130 = vmatprep.mubr.f32.mxu0 0.0
  %8131 = vmatmul.mubr.f32.gmra.mxu0 %v7885
  %v8132 = vpop.f32.mrf.mxu0
  %v8133 = vadd.f32 0.0, %v8132
  %v8134 = vpop.f32.mrf.mxu0
  %8135 = vmatprep.mubr.f32.mxu0 0.0
  %8136 = vmatmul.mubr.f32.gmra.mxu0 %v7886
  %v8137 = vpop.f32.mrf.mxu0
  %v8138 = vadd.f32 0.0, %v8137
  %v8139 = vpop.f32.mrf.mxu0
  %8140 = vmatprep.mubr.f32.mxu0 0.0
  %8141 = vmatmul.mubr.f32.gmra.mxu0 %v7887
  %v8142 = vpop.f32.mrf.mxu0
  %v8143 = vadd.f32 0.0, %v8142
  %v8144 = vpop.f32.mrf.mxu0
  %8145 = vmatprep.mubr.f32.mxu0 0.0
  %8146 = vmatmul.mubr.f32.gmra.mxu0 %v7888
  %v8147 = vpop.f32.mrf.mxu0
  %v8148 = vadd.f32 0.0, %v8147
  %v8149 = vpop.f32.mrf.mxu0
  %8150 = vmatprep.mubr.f32.mxu0 0.0
  %8151 = vmatmul.mubr.f32.gmra.mxu0 %v7889
  %v8152 = vpop.f32.mrf.mxu0
  %v8153 = vadd.f32 0.0, %v8152
  %v8154 = vpop.f32.mrf.mxu0
  %8155 = vmatprep.mubr.f32.mxu0 0.0
  %8156 = vmatmul.mubr.f32.gmra.mxu0 %v7890
  %v8157 = vpop.f32.mrf.mxu0
  %v8158 = vadd.f32 0.0, %v8157
  %v8159 = vpop.f32.mrf.mxu0
  %8160 = vmatprep.mubr.f32.mxu0 0.0
  %8161 = vmatmul.mubr.f32.gmra.mxu0 %v7891
  %v8162 = vpop.f32.mrf.mxu0
  %v8163 = vadd.f32 0.0, %v8162
  %v8164 = vpop.f32.mrf.mxu0
  %8165 = vmatprep.mubr.f32.mxu0 0.0
  %8166 = vmatmul.mubr.f32.gmra.mxu0 %v7892
  %v8167 = vpop.f32.mrf.mxu0
  %v8168 = vadd.f32 0.0, %v8167
  %v8169 = vpop.f32.mrf.mxu0
  %8170 = vmatprep.mubr.f32.mxu0 0.0
  %8171 = vmatmul.mubr.f32.gmra.mxu0 %v7893
  %v8172 = vpop.f32.mrf.mxu0
  %v8173 = vadd.f32 0.0, %v8172
  %v8174 = vpop.f32.mrf.mxu0
  %8175 = vmatprep.mubr.f32.mxu0 0.0
  %8176 = vmatmul.mubr.f32.gmra.mxu0 %v7894
  %v8177 = vpop.f32.mrf.mxu0
  %v8178 = vadd.f32 0.0, %v8177
  %v8179 = vpop.f32.mrf.mxu0
  %8180 = vmatprep.mubr.f32.mxu0 0.0
  %8181 = vmatmul.mubr.f32.gmra.mxu0 %v7895
  %v8182 = vpop.f32.mrf.mxu0
  %v8183 = vadd.f32 0.0, %v8182
  %v8184 = vpop.f32.mrf.mxu0
  %8185 = vmatprep.mubr.f32.mxu0 0.0
  %8186 = vmatmul.mubr.f32.gmra.mxu0 %v7896
  %v8187 = vpop.f32.mrf.mxu0
  %v8188 = vadd.f32 0.0, %v8187
  %v8189 = vpop.f32.mrf.mxu0
  %8190 = vmatprep.mubr.f32.mxu0 0.0
  %8191 = vmatmul.mubr.f32.gmra.mxu0 %v7897
  %v8192 = vpop.f32.mrf.mxu0
  %v8193 = vadd.f32 0.0, %v8192
  %v8194 = vpop.f32.mrf.mxu0
  %8195 = vmatprep.mubr.f32.mxu0 0.0
  %8196 = vmatmul.mubr.f32.gmra.mxu0 %v7898
  %v8197 = vpop.f32.mrf.mxu0
  %v8198 = vadd.f32 0.0, %v8197
  %v8199 = vpop.f32.mrf.mxu0
  %8200 = vmatprep.mubr.f32.mxu0 0.0
  %8201 = vmatmul.mubr.f32.gmra.mxu0 %v7899
  %v8202 = vpop.f32.mrf.mxu0
  %v8203 = vadd.f32 0.0, %v8202
  %v8204 = vpop.f32.mrf.mxu0
  %8205 = vmatprep.mubr.f32.mxu0 0.0
  %8206 = vmatmul.mubr.f32.gmra.mxu0 %v7900
  %v8207 = vpop.f32.mrf.mxu0
  %v8208 = vadd.f32 0.0, %v8207
  %v8209 = vpop.f32.mrf.mxu0
  %8210 = vmatprep.mubr.f32.mxu0 0.0
  %8211 = vmatmul.mubr.f32.gmra.mxu0 %v7901
  %v8212 = vpop.f32.mrf.mxu0
  %v8213 = vadd.f32 0.0, %v8212
  %v8214 = vpop.f32.mrf.mxu0
  %8215 = vmatprep.mubr.f32.mxu0 0.0
  %8216 = vmatmul.mubr.f32.gmra.mxu0 %v7902
  %v8217 = vpop.f32.mrf.mxu0
  %v8218 = vadd.f32 0.0, %v8217
  %v8219 = vpop.f32.mrf.mxu0
  %8220 = vmatprep.mubr.f32.mxu0 0.0
  %8221 = vmatmul.mubr.f32.gmra.mxu0 %v7903
  %v8222 = vpop.f32.mrf.mxu0
  %v8223 = vadd.f32 0.0, %v8222
  %v8224 = vpop.f32.mrf.mxu0
  %8225 = vmatprep.mubr.f32.mxu0 0.0
  %8226 = vmatmul.mubr.f32.gmra.mxu0 %v7904
  %v8227 = vpop.f32.mrf.mxu0
  %v8228 = vadd.f32 0.0, %v8227
  %v8229 = vpop.f32.mrf.mxu0
  %8230 = vmatprep.mubr.f32.mxu0 0.0
  %8231 = vmatmul.mubr.f32.gmra.mxu0 %v7905
  %v8232 = vpop.f32.mrf.mxu0
  %v8233 = vadd.f32 0.0, %v8232
  %v8234 = vpop.f32.mrf.mxu0
  %8235 = vmatprep.mubr.f32.mxu0 0.0
  %8236 = vmatmul.mubr.f32.gmra.mxu0 %v7906
  %v8237 = vpop.f32.mrf.mxu0
  %v8238 = vadd.f32 0.0, %v8237
  %v8239 = vpop.f32.mrf.mxu0
  %8240 = vmatprep.mubr.f32.mxu0 0.0
  %8241 = vmatmul.mubr.f32.gmra.mxu0 %v7907
  %v8242 = vpop.f32.mrf.mxu0
  %v8243 = vadd.f32 0.0, %v8242
  %v8244 = vpop.f32.mrf.mxu0
  %8245 = vmatprep.mubr.f32.mxu0 0.0
  %8246 = vmatmul.mubr.f32.gmra.mxu0 %v7908
  %v8247 = vpop.f32.mrf.mxu0
  %v8248 = vadd.f32 0.0, %v8247
  %v8249 = vpop.f32.mrf.mxu0
  %8250 = vmatprep.mubr.f32.mxu0 0.0
  %8251 = vmatmul.mubr.f32.gmra.mxu0 %v7909
  %v8252 = vpop.f32.mrf.mxu0
  %v8253 = vadd.f32 0.0, %v8252
  %v8254 = vpop.f32.mrf.mxu0
  %8255 = vmatprep.mubr.f32.mxu0 0.0
  %8256 = vmatmul.mubr.f32.gmra.mxu0 %v7910
  %v8257 = vpop.f32.mrf.mxu0
  %v8258 = vadd.f32 0.0, %v8257
  %v8259 = vpop.f32.mrf.mxu0
  %8260 = vmatprep.mubr.f32.mxu0 0.0
  %8261 = vmatmul.mubr.f32.gmra.mxu0 %v7911
  %v8262 = vpop.f32.mrf.mxu0
  %v8263 = vadd.f32 0.0, %v8262
  %v8264 = vpop.f32.mrf.mxu0
  %8265 = vmatprep.mubr.f32.mxu0 0.0
  %8266 = vmatmul.mubr.f32.gmra.mxu0 %v7912
  %v8267 = vpop.f32.mrf.mxu0
  %v8268 = vadd.f32 0.0, %v8267
  %v8269 = vpop.f32.mrf.mxu0
  %8270 = vmatprep.mubr.f32.mxu0 0.0
  %8271 = vmatmul.mubr.f32.gmra.mxu0 %v7913
  %v8272 = vpop.f32.mrf.mxu0
  %v8273 = vadd.f32 0.0, %v8272
  %v8274 = vpop.f32.mrf.mxu0
  %8275 = vmatprep.mubr.f32.mxu0 0.0
  %8276 = vmatmul.mubr.f32.gmra.mxu0 %v7914
  %v8277 = vpop.f32.mrf.mxu0
  %v8278 = vadd.f32 0.0, %v8277
  %v8279 = vpop.f32.mrf.mxu0
  %8280 = vmatprep.mubr.f32.mxu0 0.0
  %8281 = vmatmul.mubr.f32.gmra.mxu0 %v7915
  %v8282 = vpop.f32.mrf.mxu0
  %v8283 = vadd.f32 0.0, %v8282
  %v8284 = vpop.f32.mrf.mxu0
  %8285 = vmatprep.mubr.f32.mxu0 0.0
  %8286 = vmatmul.mubr.f32.gmra.mxu0 %v7916
  %v8287 = vpop.f32.mrf.mxu0
  %v8288 = vadd.f32 0.0, %v8287
  %v8289 = vpop.f32.mrf.mxu0
  %8290 = vmatprep.mubr.f32.mxu0 0.0
  %8291 = vmatmul.mubr.f32.gmra.mxu0 %v7917
  %v8292 = vpop.f32.mrf.mxu0
  %v8293 = vadd.f32 0.0, %v8292
  %v8294 = vpop.f32.mrf.mxu0
  %8295 = vmatprep.mubr.f32.mxu0 0.0
  %8296 = vmatmul.mubr.f32.gmra.mxu0 %v7918
  %v8297 = vpop.f32.mrf.mxu0
  %v8298 = vadd.f32 0.0, %v8297
  %v8299 = vpop.f32.mrf.mxu0
  %8300 = vmatprep.mubr.f32.mxu0 0.0
  %8301 = vmatmul.mubr.f32.gmra.mxu0 %v7919
  %v8302 = vpop.f32.mrf.mxu0
  %v8303 = vadd.f32 0.0, %v8302
  %v8304 = vpop.f32.mrf.mxu0
  %8305 = vmatprep.mubr.f32.mxu0 0.0
  %8306 = vmatmul.mubr.f32.gmra.mxu0 %v7920
  %v8307 = vpop.f32.mrf.mxu0
  %v8308 = vadd.f32 0.0, %v8307
  %v8309 = vpop.f32.mrf.mxu0
  %8310 = vmatprep.mubr.f32.mxu0 0.0
  %8311 = vmatmul.mubr.f32.gmra.mxu0 %v7921
  %v8312 = vpop.f32.mrf.mxu0
  %v8313 = vadd.f32 0.0, %v8312
  %v8314 = vpop.f32.mrf.mxu0
  %8315 = vmatprep.mubr.f32.mxu0 0.0
  %8316 = vmatmul.mubr.f32.gmra.mxu0 %v7922
  %v8317 = vpop.f32.mrf.mxu0
  %v8318 = vadd.f32 0.0, %v8317
  %v8319 = vpop.f32.mrf.mxu0
  %8320 = vmatprep.mubr.f32.mxu0 0.0
  %8321 = vmatmul.mubr.f32.gmra.mxu0 %v7923
  %v8322 = vpop.f32.mrf.mxu0
  %v8323 = vadd.f32 0.0, %v8322
  %v8324 = vpop.f32.mrf.mxu0
  %8325 = vdwg.mxu0
  %v8326 = vadd.f32 %v7796, %v8008
  %v8327 = vadd.f32 %v7797, %v8013
  %v8328 = vadd.f32 %v7798, %v8018
  %v8329 = vadd.f32 %v7799, %v8023
  %v8330 = vadd.f32 %v7800, %v8028
  %v8331 = vadd.f32 %v7801, %v8033
  %v8332 = vadd.f32 %v7802, %v8038
  %v8333 = vadd.f32 %v7803, %v8043
  %v8334 = vadd.f32 %v7804, %v8048
  %v8335 = vadd.f32 %v7805, %v8053
  %v8336 = vadd.f32 %v7806, %v8058
  %v8337 = vadd.f32 %v7807, %v8063
  %v8338 = vadd.f32 %v7808, %v8068
  %v8339 = vadd.f32 %v7809, %v8073
  %v8340 = vadd.f32 %v7810, %v8078
  %v8341 = vadd.f32 %v7811, %v8083
  %v8342 = vadd.f32 %v7812, %v8088
  %v8343 = vadd.f32 %v7813, %v8093
  %v8344 = vadd.f32 %v7814, %v8098
  %v8345 = vadd.f32 %v7815, %v8103
  %v8346 = vadd.f32 %v7816, %v8108
  %v8347 = vadd.f32 %v7817, %v8113
  %v8348 = vadd.f32 %v7818, %v8118
  %v8349 = vadd.f32 %v7819, %v8123
  %v8350 = vadd.f32 %v7820, %v8128
  %v8351 = vadd.f32 %v7821, %v8133
  %v8352 = vadd.f32 %v7822, %v8138
  %v8353 = vadd.f32 %v7823, %v8143
  %v8354 = vadd.f32 %v7824, %v8148
  %v8355 = vadd.f32 %v7825, %v8153
  %v8356 = vadd.f32 %v7826, %v8158
  %v8357 = vadd.f32 %v7827, %v8163
  %v8358 = vadd.f32 %v7828, %v8168
  %v8359 = vadd.f32 %v7829, %v8173
  %v8360 = vadd.f32 %v7830, %v8178
  %v8361 = vadd.f32 %v7831, %v8183
  %v8362 = vadd.f32 %v7832, %v8188
  %v8363 = vadd.f32 %v7833, %v8193
  %v8364 = vadd.f32 %v7834, %v8198
  %v8365 = vadd.f32 %v7835, %v8203
  %v8366 = vadd.f32 %v7836, %v8208
  %v8367 = vadd.f32 %v7837, %v8213
  %v8368 = vadd.f32 %v7838, %v8218
  %v8369 = vadd.f32 %v7839, %v8223
  %v8370 = vadd.f32 %v7840, %v8228
  %v8371 = vadd.f32 %v7841, %v8233
  %v8372 = vadd.f32 %v7842, %v8238
  %v8373 = vadd.f32 %v7843, %v8243
  %v8374 = vadd.f32 %v7844, %v8248
  %v8375 = vadd.f32 %v7845, %v8253
  %v8376 = vadd.f32 %v7846, %v8258
  %v8377 = vadd.f32 %v7847, %v8263
  %v8378 = vadd.f32 %v7848, %v8268
  %v8379 = vadd.f32 %v7849, %v8273
  %v8380 = vadd.f32 %v7850, %v8278
  %v8381 = vadd.f32 %v7851, %v8283
  %v8382 = vadd.f32 %v7852, %v8288
  %v8383 = vadd.f32 %v7853, %v8293
  %v8384 = vadd.f32 %v7854, %v8298
  %v8385 = vadd.f32 %v7855, %v8303
  %v8386 = vadd.f32 %v7856, %v8308
  %v8387 = vadd.f32 %v7857, %v8313
  %v8388 = vadd.f32 %v7858, %v8318
  %v8389 = vadd.f32 %v7859, %v8323
  %s8390 = scalar_lea.vmem [#allocation2], 48
  %v8391 = vld [vmem:[%s8390] sm:$0xff]
  %v8392 = vld [vmem:[%s8390 + $0x8] sm:$0xff]
  %v8393 = vld [vmem:[%s8390 + $0x18] sm:$0xff]
  %v8394 = vld [vmem:[%s8390 + $0x20] sm:$0xff]
  %v8395 = vld [vmem:[%s8390 + $0x30] sm:$0xff]
  %v8396 = vld [vmem:[%s8390 + $0x38] sm:$0xff]
  %v8397 = vld [vmem:[%s8390 + $0x48] sm:$0xff]
  %v8398 = vld [vmem:[%s8390 + $0x50] sm:$0xff]
  %v8399 = vld [vmem:[%s8390 + $0x60] sm:$0xff]
  %v8400 = vld [vmem:[%s8390 + $0x68] sm:$0xff]
  %v8401 = vld [vmem:[%s8390 + $0x78] sm:$0xff]
  %v8402 = vld [vmem:[%s8390 + $0x80] sm:$0xff]
  %v8403 = vld [vmem:[%s8390 + $0x90] sm:$0xff]
  %v8404 = vld [vmem:[%s8390 + $0x98] sm:$0xff]
  %v8405 = vld [vmem:[%s8390 + $0xa8] sm:$0xff]
  %v8406 = vld [vmem:[%s8390 + $0xb0] sm:$0xff]
  %v8407 = vld [vmem:[%s8390 + $0xc0] sm:$0xff]
  %v8408 = vld [vmem:[%s8390 + $0xc8] sm:$0xff]
  %v8409 = vld [vmem:[%s8390 + $0xd8] sm:$0xff]
  %v8410 = vld [vmem:[%s8390 + $0xe0] sm:$0xff]
  %v8411 = vld [vmem:[%s8390 + $0xf0] sm:$0xff]
  %v8412 = vld [vmem:[%s8390 + $0xf8] sm:$0xff]
  %v8413 = vld [vmem:[%s8390 + $0x108] sm:$0xff]
  %v8414 = vld [vmem:[%s8390 + $0x110] sm:$0xff]
  %v8415 = vld [vmem:[%s8390 + $0x120] sm:$0xff]
  %v8416 = vld [vmem:[%s8390 + $0x128] sm:$0xff]
  %v8417 = vld [vmem:[%s8390 + $0x138] sm:$0xff]
  %v8418 = vld [vmem:[%s8390 + $0x140] sm:$0xff]
  %v8419 = vld [vmem:[%s8390 + $0x150] sm:$0xff]
  %v8420 = vld [vmem:[%s8390 + $0x158] sm:$0xff]
  %v8421 = vld [vmem:[%s8390 + $0x168] sm:$0xff]
  %v8422 = vld [vmem:[%s8390 + $0x170] sm:$0xff]
  %v8423 = vld [vmem:[%s8390 + $0x1b0] sm:$0xff]
  %v8424 = vld [vmem:[%s8390 + $0x1b8] sm:$0xff]
  %v8425 = vld [vmem:[%s8390 + $0x1c8] sm:$0xff]
  %v8426 = vld [vmem:[%s8390 + $0x1d0] sm:$0xff]
  %v8427 = vld [vmem:[%s8390 + $0x1e0] sm:$0xff]
  %v8428 = vld [vmem:[%s8390 + $0x1e8] sm:$0xff]
  %v8429 = vld [vmem:[%s8390 + $0x1f8] sm:$0xff]
  %v8430 = vld [vmem:[%s8390 + $0x200] sm:$0xff]
  %v8431 = vld [vmem:[%s8390 + $0x210] sm:$0xff]
  %v8432 = vld [vmem:[%s8390 + $0x218] sm:$0xff]
  %v8433 = vld [vmem:[%s8390 + $0x228] sm:$0xff]
  %v8434 = vld [vmem:[%s8390 + $0x230] sm:$0xff]
  %v8435 = vld [vmem:[%s8390 + $0x240] sm:$0xff]
  %v8436 = vld [vmem:[%s8390 + $0x248] sm:$0xff]
  %v8437 = vld [vmem:[%s8390 + $0x258] sm:$0xff]
  %v8438 = vld [vmem:[%s8390 + $0x260] sm:$0xff]
  %v8439 = vld [vmem:[%s8390 + $0x270] sm:$0xff]
  %v8440 = vld [vmem:[%s8390 + $0x278] sm:$0xff]
  %v8441 = vld [vmem:[%s8390 + $0x288] sm:$0xff]
  %v8442 = vld [vmem:[%s8390 + $0x290] sm:$0xff]
  %v8443 = vld [vmem:[%s8390 + $0x2a0] sm:$0xff]
  %v8444 = vld [vmem:[%s8390 + $0x2a8] sm:$0xff]
  %v8445 = vld [vmem:[%s8390 + $0x2b8] sm:$0xff]
  %v8446 = vld [vmem:[%s8390 + $0x2c0] sm:$0xff]
  %v8447 = vld [vmem:[%s8390 + $0x2d0] sm:$0xff]
  %v8448 = vld [vmem:[%s8390 + $0x2d8] sm:$0xff]
  %v8449 = vld [vmem:[%s8390 + $0x2e8] sm:$0xff]
  %v8450 = vld [vmem:[%s8390 + $0x2f0] sm:$0xff]
  %v8451 = vld [vmem:[%s8390 + $0x300] sm:$0xff]
  %v8452 = vld [vmem:[%s8390 + $0x308] sm:$0xff]
  %v8453 = vld [vmem:[%s8390 + $0x318] sm:$0xff]
  %v8454 = vld [vmem:[%s8390 + $0x320] sm:$0xff]
  %s8455 = scalar_lea.vmem %s3, 768
  %v8456 = vld [vmem:[%s8455] sm:$0xff]
  %v8457 = vld [vmem:[%s8455 + $0x8] sm:$0xff]
  %v8458 = vld [vmem:[%s8455 + $0x10] sm:$0xff]
  %v8459 = vld [vmem:[%s8455 + $0x18] sm:$0xff]
  %v8460 = vld [vmem:[%s8455 + $0x20] sm:$0xff]
  %v8461 = vld [vmem:[%s8455 + $0x28] sm:$0xff]
  %v8462 = vld [vmem:[%s8455 + $0x30] sm:$0xff]
  %v8463 = vld [vmem:[%s8455 + $0x38] sm:$0xff]
  %v8464 = vld [vmem:[%s8455 + $0x40] sm:$0xff]
  %v8465 = vld [vmem:[%s8455 + $0x48] sm:$0xff]
  %v8466 = vld [vmem:[%s8455 + $0x50] sm:$0xff]
  %v8467 = vld [vmem:[%s8455 + $0x58] sm:$0xff]
  %v8468 = vld [vmem:[%s8455 + $0x60] sm:$0xff]
  %v8469 = vld [vmem:[%s8455 + $0x68] sm:$0xff]
  %v8470 = vld [vmem:[%s8455 + $0x70] sm:$0xff]
  %v8471 = vld [vmem:[%s8455 + $0x78] sm:$0xff]
  %8472 = vmatprep.subr.mxu0 0.0
  %8473 = vmatpush1.msra.mxu0 %v8471
  %8474 = vmatprep.subr.mxu0 0.0
  %8475 = vmatpush1.msra.mxu0 %v8470
  %8476 = vmatprep.subr.mxu0 0.0
  %8477 = vmatpush1.msra.mxu0 %v8469
  %8478 = vmatprep.subr.mxu0 0.0
  %8479 = vmatpush1.msra.mxu0 %v8468
  %8480 = vmatprep.subr.mxu0 0.0
  %8481 = vmatpush1.msra.mxu0 %v8467
  %8482 = vmatprep.subr.mxu0 0.0
  %8483 = vmatpush1.msra.mxu0 %v8466
  %8484 = vmatprep.subr.mxu0 0.0
  %8485 = vmatpush1.msra.mxu0 %v8465
  %8486 = vmatprep.subr.mxu0 0.0
  %8487 = vmatpush1.msra.mxu0 %v8464
  %8488 = vmatprep.subr.mxu0 0.0
  %8489 = vmatpush1.msra.mxu0 %v8463
  %8490 = vmatprep.subr.mxu0 0.0
  %8491 = vmatpush1.msra.mxu0 %v8462
  %8492 = vmatprep.subr.mxu0 0.0
  %8493 = vmatpush1.msra.mxu0 %v8461
  %8494 = vmatprep.subr.mxu0 0.0
  %8495 = vmatpush1.msra.mxu0 %v8460
  %8496 = vmatprep.subr.mxu0 0.0
  %8497 = vmatpush1.msra.mxu0 %v8459
  %8498 = vmatprep.subr.mxu0 0.0
  %8499 = vmatpush1.msra.mxu0 %v8458
  %8500 = vmatprep.subr.mxu0 0.0
  %8501 = vmatpush1.msra.mxu0 %v8457
  %8502 = vmatprep.subr.mxu0 0.0
  %8503 = vmatpush1.msra.mxu0 %v8456
  %8504 = vmatprep.subr.mxu0 0.0
  %8505 = vmatpush2.msra.mxu0 0.0
  %8506 = vmatprep.subr.mxu0 0.0
  %8507 = vmatpush2.msra.mxu0 0.0
  %8508 = vmatprep.subr.mxu0 0.0
  %8509 = vmatpush2.msra.mxu0 0.0
  %8510 = vmatprep.subr.mxu0 0.0
  %8511 = vmatpush2.msra.mxu0 0.0
  %8512 = vmatprep.subr.mxu0 0.0
  %8513 = vmatpush2.msra.mxu0 0.0
  %8514 = vmatprep.subr.mxu0 0.0
  %8515 = vmatpush2.msra.mxu0 0.0
  %8516 = vmatprep.subr.mxu0 0.0
  %8517 = vmatpush2.msra.mxu0 0.0
  %8518 = vmatprep.subr.mxu0 0.0
  %8519 = vmatpush2.msra.mxu0 0.0
  %8520 = vmatprep.subr.mxu0 0.0
  %8521 = vmatpush2.msra.mxu0 0.0
  %8522 = vmatprep.subr.mxu0 0.0
  %8523 = vmatpush2.msra.mxu0 0.0
  %8524 = vmatprep.subr.mxu0 0.0
  %8525 = vmatpush2.msra.mxu0 0.0
  %8526 = vmatprep.subr.mxu0 0.0
  %8527 = vmatpush2.msra.mxu0 0.0
  %8528 = vmatprep.subr.mxu0 0.0
  %8529 = vmatpush2.msra.mxu0 0.0
  %8530 = vmatprep.subr.mxu0 0.0
  %8531 = vmatpush2.msra.mxu0 0.0
  %8532 = vmatprep.subr.mxu0 0.0
  %8533 = vmatpush2.msra.mxu0 0.0
  %8534 = vmatprep.subr.mxu0 0.0
  %8535 = vmatpush2.msra.mxu0 0.0
  %8536 = vmatprep.mubr.f32.mxu0 0.0
  %8537 = vmatmul.mubr.f32.gmra.mxu0 %v8391
  %v8538 = vpop.f32.mrf.mxu0
  %v8539 = vadd.f32 0.0, %v8538
  %v8540 = vpop.f32.mrf.mxu0
  %8541 = vmatprep.mubr.f32.mxu0 0.0
  %8542 = vmatmul.mubr.f32.gmra.mxu0 %v8392
  %v8543 = vpop.f32.mrf.mxu0
  %v8544 = vadd.f32 0.0, %v8543
  %v8545 = vpop.f32.mrf.mxu0
  %8546 = vmatprep.mubr.f32.mxu0 0.0
  %8547 = vmatmul.mubr.f32.gmra.mxu0 %v8393
  %v8548 = vpop.f32.mrf.mxu0
  %v8549 = vadd.f32 0.0, %v8548
  %v8550 = vpop.f32.mrf.mxu0
  %8551 = vmatprep.mubr.f32.mxu0 0.0
  %8552 = vmatmul.mubr.f32.gmra.mxu0 %v8394
  %v8553 = vpop.f32.mrf.mxu0
  %v8554 = vadd.f32 0.0, %v8553
  %v8555 = vpop.f32.mrf.mxu0
  %8556 = vmatprep.mubr.f32.mxu0 0.0
  %8557 = vmatmul.mubr.f32.gmra.mxu0 %v8395
  %v8558 = vpop.f32.mrf.mxu0
  %v8559 = vadd.f32 0.0, %v8558
  %v8560 = vpop.f32.mrf.mxu0
  %8561 = vmatprep.mubr.f32.mxu0 0.0
  %8562 = vmatmul.mubr.f32.gmra.mxu0 %v8396
  %v8563 = vpop.f32.mrf.mxu0
  %v8564 = vadd.f32 0.0, %v8563
  %v8565 = vpop.f32.mrf.mxu0
  %8566 = vmatprep.mubr.f32.mxu0 0.0
  %8567 = vmatmul.mubr.f32.gmra.mxu0 %v8397
  %v8568 = vpop.f32.mrf.mxu0
  %v8569 = vadd.f32 0.0, %v8568
  %v8570 = vpop.f32.mrf.mxu0
  %8571 = vmatprep.mubr.f32.mxu0 0.0
  %8572 = vmatmul.mubr.f32.gmra.mxu0 %v8398
  %v8573 = vpop.f32.mrf.mxu0
  %v8574 = vadd.f32 0.0, %v8573
  %v8575 = vpop.f32.mrf.mxu0
  %8576 = vmatprep.mubr.f32.mxu0 0.0
  %8577 = vmatmul.mubr.f32.gmra.mxu0 %v8399
  %v8578 = vpop.f32.mrf.mxu0
  %v8579 = vadd.f32 0.0, %v8578
  %v8580 = vpop.f32.mrf.mxu0
  %8581 = vmatprep.mubr.f32.mxu0 0.0
  %8582 = vmatmul.mubr.f32.gmra.mxu0 %v8400
  %v8583 = vpop.f32.mrf.mxu0
  %v8584 = vadd.f32 0.0, %v8583
  %v8585 = vpop.f32.mrf.mxu0
  %8586 = vmatprep.mubr.f32.mxu0 0.0
  %8587 = vmatmul.mubr.f32.gmra.mxu0 %v8401
  %v8588 = vpop.f32.mrf.mxu0
  %v8589 = vadd.f32 0.0, %v8588
  %v8590 = vpop.f32.mrf.mxu0
  %8591 = vmatprep.mubr.f32.mxu0 0.0
  %8592 = vmatmul.mubr.f32.gmra.mxu0 %v8402
  %v8593 = vpop.f32.mrf.mxu0
  %v8594 = vadd.f32 0.0, %v8593
  %v8595 = vpop.f32.mrf.mxu0
  %8596 = vmatprep.mubr.f32.mxu0 0.0
  %8597 = vmatmul.mubr.f32.gmra.mxu0 %v8403
  %v8598 = vpop.f32.mrf.mxu0
  %v8599 = vadd.f32 0.0, %v8598
  %v8600 = vpop.f32.mrf.mxu0
  %8601 = vmatprep.mubr.f32.mxu0 0.0
  %8602 = vmatmul.mubr.f32.gmra.mxu0 %v8404
  %v8603 = vpop.f32.mrf.mxu0
  %v8604 = vadd.f32 0.0, %v8603
  %v8605 = vpop.f32.mrf.mxu0
  %8606 = vmatprep.mubr.f32.mxu0 0.0
  %8607 = vmatmul.mubr.f32.gmra.mxu0 %v8405
  %v8608 = vpop.f32.mrf.mxu0
  %v8609 = vadd.f32 0.0, %v8608
  %v8610 = vpop.f32.mrf.mxu0
  %8611 = vmatprep.mubr.f32.mxu0 0.0
  %8612 = vmatmul.mubr.f32.gmra.mxu0 %v8406
  %v8613 = vpop.f32.mrf.mxu0
  %v8614 = vadd.f32 0.0, %v8613
  %v8615 = vpop.f32.mrf.mxu0
  %8616 = vmatprep.mubr.f32.mxu0 0.0
  %8617 = vmatmul.mubr.f32.gmra.mxu0 %v8407
  %v8618 = vpop.f32.mrf.mxu0
  %v8619 = vadd.f32 0.0, %v8618
  %v8620 = vpop.f32.mrf.mxu0
  %8621 = vmatprep.mubr.f32.mxu0 0.0
  %8622 = vmatmul.mubr.f32.gmra.mxu0 %v8408
  %v8623 = vpop.f32.mrf.mxu0
  %v8624 = vadd.f32 0.0, %v8623
  %v8625 = vpop.f32.mrf.mxu0
  %8626 = vmatprep.mubr.f32.mxu0 0.0
  %8627 = vmatmul.mubr.f32.gmra.mxu0 %v8409
  %v8628 = vpop.f32.mrf.mxu0
  %v8629 = vadd.f32 0.0, %v8628
  %v8630 = vpop.f32.mrf.mxu0
  %8631 = vmatprep.mubr.f32.mxu0 0.0
  %8632 = vmatmul.mubr.f32.gmra.mxu0 %v8410
  %v8633 = vpop.f32.mrf.mxu0
  %v8634 = vadd.f32 0.0, %v8633
  %v8635 = vpop.f32.mrf.mxu0
  %8636 = vmatprep.mubr.f32.mxu0 0.0
  %8637 = vmatmul.mubr.f32.gmra.mxu0 %v8411
  %v8638 = vpop.f32.mrf.mxu0
  %v8639 = vadd.f32 0.0, %v8638
  %v8640 = vpop.f32.mrf.mxu0
  %8641 = vmatprep.mubr.f32.mxu0 0.0
  %8642 = vmatmul.mubr.f32.gmra.mxu0 %v8412
  %v8643 = vpop.f32.mrf.mxu0
  %v8644 = vadd.f32 0.0, %v8643
  %v8645 = vpop.f32.mrf.mxu0
  %8646 = vmatprep.mubr.f32.mxu0 0.0
  %8647 = vmatmul.mubr.f32.gmra.mxu0 %v8413
  %v8648 = vpop.f32.mrf.mxu0
  %v8649 = vadd.f32 0.0, %v8648
  %v8650 = vpop.f32.mrf.mxu0
  %8651 = vmatprep.mubr.f32.mxu0 0.0
  %8652 = vmatmul.mubr.f32.gmra.mxu0 %v8414
  %v8653 = vpop.f32.mrf.mxu0
  %v8654 = vadd.f32 0.0, %v8653
  %v8655 = vpop.f32.mrf.mxu0
  %8656 = vmatprep.mubr.f32.mxu0 0.0
  %8657 = vmatmul.mubr.f32.gmra.mxu0 %v8415
  %v8658 = vpop.f32.mrf.mxu0
  %v8659 = vadd.f32 0.0, %v8658
  %v8660 = vpop.f32.mrf.mxu0
  %8661 = vmatprep.mubr.f32.mxu0 0.0
  %8662 = vmatmul.mubr.f32.gmra.mxu0 %v8416
  %v8663 = vpop.f32.mrf.mxu0
  %v8664 = vadd.f32 0.0, %v8663
  %v8665 = vpop.f32.mrf.mxu0
  %8666 = vmatprep.mubr.f32.mxu0 0.0
  %8667 = vmatmul.mubr.f32.gmra.mxu0 %v8417
  %v8668 = vpop.f32.mrf.mxu0
  %v8669 = vadd.f32 0.0, %v8668
  %v8670 = vpop.f32.mrf.mxu0
  %8671 = vmatprep.mubr.f32.mxu0 0.0
  %8672 = vmatmul.mubr.f32.gmra.mxu0 %v8418
  %v8673 = vpop.f32.mrf.mxu0
  %v8674 = vadd.f32 0.0, %v8673
  %v8675 = vpop.f32.mrf.mxu0
  %8676 = vmatprep.mubr.f32.mxu0 0.0
  %8677 = vmatmul.mubr.f32.gmra.mxu0 %v8419
  %v8678 = vpop.f32.mrf.mxu0
  %v8679 = vadd.f32 0.0, %v8678
  %v8680 = vpop.f32.mrf.mxu0
  %8681 = vmatprep.mubr.f32.mxu0 0.0
  %8682 = vmatmul.mubr.f32.gmra.mxu0 %v8420
  %v8683 = vpop.f32.mrf.mxu0
  %v8684 = vadd.f32 0.0, %v8683
  %v8685 = vpop.f32.mrf.mxu0
  %8686 = vmatprep.mubr.f32.mxu0 0.0
  %8687 = vmatmul.mubr.f32.gmra.mxu0 %v8421
  %v8688 = vpop.f32.mrf.mxu0
  %v8689 = vadd.f32 0.0, %v8688
  %v8690 = vpop.f32.mrf.mxu0
  %8691 = vmatprep.mubr.f32.mxu0 0.0
  %8692 = vmatmul.mubr.f32.gmra.mxu0 %v8422
  %v8693 = vpop.f32.mrf.mxu0
  %v8694 = vadd.f32 0.0, %v8693
  %v8695 = vpop.f32.mrf.mxu0
  %8696 = vmatprep.mubr.f32.mxu0 0.0
  %8697 = vmatmul.mubr.f32.gmra.mxu0 %v8423
  %v8698 = vpop.f32.mrf.mxu0
  %v8699 = vadd.f32 0.0, %v8698
  %v8700 = vpop.f32.mrf.mxu0
  %8701 = vmatprep.mubr.f32.mxu0 0.0
  %8702 = vmatmul.mubr.f32.gmra.mxu0 %v8424
  %v8703 = vpop.f32.mrf.mxu0
  %v8704 = vadd.f32 0.0, %v8703
  %v8705 = vpop.f32.mrf.mxu0
  %8706 = vmatprep.mubr.f32.mxu0 0.0
  %8707 = vmatmul.mubr.f32.gmra.mxu0 %v8425
  %v8708 = vpop.f32.mrf.mxu0
  %v8709 = vadd.f32 0.0, %v8708
  %v8710 = vpop.f32.mrf.mxu0
  %8711 = vmatprep.mubr.f32.mxu0 0.0
  %8712 = vmatmul.mubr.f32.gmra.mxu0 %v8426
  %v8713 = vpop.f32.mrf.mxu0
  %v8714 = vadd.f32 0.0, %v8713
  %v8715 = vpop.f32.mrf.mxu0
  %8716 = vmatprep.mubr.f32.mxu0 0.0
  %8717 = vmatmul.mubr.f32.gmra.mxu0 %v8427
  %v8718 = vpop.f32.mrf.mxu0
  %v8719 = vadd.f32 0.0, %v8718
  %v8720 = vpop.f32.mrf.mxu0
  %8721 = vmatprep.mubr.f32.mxu0 0.0
  %8722 = vmatmul.mubr.f32.gmra.mxu0 %v8428
  %v8723 = vpop.f32.mrf.mxu0
  %v8724 = vadd.f32 0.0, %v8723
  %v8725 = vpop.f32.mrf.mxu0
  %8726 = vmatprep.mubr.f32.mxu0 0.0
  %8727 = vmatmul.mubr.f32.gmra.mxu0 %v8429
  %v8728 = vpop.f32.mrf.mxu0
  %v8729 = vadd.f32 0.0, %v8728
  %v8730 = vpop.f32.mrf.mxu0
  %8731 = vmatprep.mubr.f32.mxu0 0.0
  %8732 = vmatmul.mubr.f32.gmra.mxu0 %v8430
  %v8733 = vpop.f32.mrf.mxu0
  %v8734 = vadd.f32 0.0, %v8733
  %v8735 = vpop.f32.mrf.mxu0
  %8736 = vmatprep.mubr.f32.mxu0 0.0
  %8737 = vmatmul.mubr.f32.gmra.mxu0 %v8431
  %v8738 = vpop.f32.mrf.mxu0
  %v8739 = vadd.f32 0.0, %v8738
  %v8740 = vpop.f32.mrf.mxu0
  %8741 = vmatprep.mubr.f32.mxu0 0.0
  %8742 = vmatmul.mubr.f32.gmra.mxu0 %v8432
  %v8743 = vpop.f32.mrf.mxu0
  %v8744 = vadd.f32 0.0, %v8743
  %v8745 = vpop.f32.mrf.mxu0
  %8746 = vmatprep.mubr.f32.mxu0 0.0
  %8747 = vmatmul.mubr.f32.gmra.mxu0 %v8433
  %v8748 = vpop.f32.mrf.mxu0
  %v8749 = vadd.f32 0.0, %v8748
  %v8750 = vpop.f32.mrf.mxu0
  %8751 = vmatprep.mubr.f32.mxu0 0.0
  %8752 = vmatmul.mubr.f32.gmra.mxu0 %v8434
  %v8753 = vpop.f32.mrf.mxu0
  %v8754 = vadd.f32 0.0, %v8753
  %v8755 = vpop.f32.mrf.mxu0
  %8756 = vmatprep.mubr.f32.mxu0 0.0
  %8757 = vmatmul.mubr.f32.gmra.mxu0 %v8435
  %v8758 = vpop.f32.mrf.mxu0
  %v8759 = vadd.f32 0.0, %v8758
  %v8760 = vpop.f32.mrf.mxu0
  %8761 = vmatprep.mubr.f32.mxu0 0.0
  %8762 = vmatmul.mubr.f32.gmra.mxu0 %v8436
  %v8763 = vpop.f32.mrf.mxu0
  %v8764 = vadd.f32 0.0, %v8763
  %v8765 = vpop.f32.mrf.mxu0
  %8766 = vmatprep.mubr.f32.mxu0 0.0
  %8767 = vmatmul.mubr.f32.gmra.mxu0 %v8437
  %v8768 = vpop.f32.mrf.mxu0
  %v8769 = vadd.f32 0.0, %v8768
  %v8770 = vpop.f32.mrf.mxu0
  %8771 = vmatprep.mubr.f32.mxu0 0.0
  %8772 = vmatmul.mubr.f32.gmra.mxu0 %v8438
  %v8773 = vpop.f32.mrf.mxu0
  %v8774 = vadd.f32 0.0, %v8773
  %v8775 = vpop.f32.mrf.mxu0
  %8776 = vmatprep.mubr.f32.mxu0 0.0
  %8777 = vmatmul.mubr.f32.gmra.mxu0 %v8439
  %v8778 = vpop.f32.mrf.mxu0
  %v8779 = vadd.f32 0.0, %v8778
  %v8780 = vpop.f32.mrf.mxu0
  %8781 = vmatprep.mubr.f32.mxu0 0.0
  %8782 = vmatmul.mubr.f32.gmra.mxu0 %v8440
  %v8783 = vpop.f32.mrf.mxu0
  %v8784 = vadd.f32 0.0, %v8783
  %v8785 = vpop.f32.mrf.mxu0
  %8786 = vmatprep.mubr.f32.mxu0 0.0
  %8787 = vmatmul.mubr.f32.gmra.mxu0 %v8441
  %v8788 = vpop.f32.mrf.mxu0
  %v8789 = vadd.f32 0.0, %v8788
  %v8790 = vpop.f32.mrf.mxu0
  %8791 = vmatprep.mubr.f32.mxu0 0.0
  %8792 = vmatmul.mubr.f32.gmra.mxu0 %v8442
  %v8793 = vpop.f32.mrf.mxu0
  %v8794 = vadd.f32 0.0, %v8793
  %v8795 = vpop.f32.mrf.mxu0
  %8796 = vmatprep.mubr.f32.mxu0 0.0
  %8797 = vmatmul.mubr.f32.gmra.mxu0 %v8443
  %v8798 = vpop.f32.mrf.mxu0
  %v8799 = vadd.f32 0.0, %v8798
  %v8800 = vpop.f32.mrf.mxu0
  %8801 = vmatprep.mubr.f32.mxu0 0.0
  %8802 = vmatmul.mubr.f32.gmra.mxu0 %v8444
  %v8803 = vpop.f32.mrf.mxu0
  %v8804 = vadd.f32 0.0, %v8803
  %v8805 = vpop.f32.mrf.mxu0
  %8806 = vmatprep.mubr.f32.mxu0 0.0
  %8807 = vmatmul.mubr.f32.gmra.mxu0 %v8445
  %v8808 = vpop.f32.mrf.mxu0
  %v8809 = vadd.f32 0.0, %v8808
  %v8810 = vpop.f32.mrf.mxu0
  %8811 = vmatprep.mubr.f32.mxu0 0.0
  %8812 = vmatmul.mubr.f32.gmra.mxu0 %v8446
  %v8813 = vpop.f32.mrf.mxu0
  %v8814 = vadd.f32 0.0, %v8813
  %v8815 = vpop.f32.mrf.mxu0
  %8816 = vmatprep.mubr.f32.mxu0 0.0
  %8817 = vmatmul.mubr.f32.gmra.mxu0 %v8447
  %v8818 = vpop.f32.mrf.mxu0
  %v8819 = vadd.f32 0.0, %v8818
  %v8820 = vpop.f32.mrf.mxu0
  %8821 = vmatprep.mubr.f32.mxu0 0.0
  %8822 = vmatmul.mubr.f32.gmra.mxu0 %v8448
  %v8823 = vpop.f32.mrf.mxu0
  %v8824 = vadd.f32 0.0, %v8823
  %v8825 = vpop.f32.mrf.mxu0
  %8826 = vmatprep.mubr.f32.mxu0 0.0
  %8827 = vmatmul.mubr.f32.gmra.mxu0 %v8449
  %v8828 = vpop.f32.mrf.mxu0
  %v8829 = vadd.f32 0.0, %v8828
  %v8830 = vpop.f32.mrf.mxu0
  %8831 = vmatprep.mubr.f32.mxu0 0.0
  %8832 = vmatmul.mubr.f32.gmra.mxu0 %v8450
  %v8833 = vpop.f32.mrf.mxu0
  %v8834 = vadd.f32 0.0, %v8833
  %v8835 = vpop.f32.mrf.mxu0
  %8836 = vmatprep.mubr.f32.mxu0 0.0
  %8837 = vmatmul.mubr.f32.gmra.mxu0 %v8451
  %v8838 = vpop.f32.mrf.mxu0
  %v8839 = vadd.f32 0.0, %v8838
  %v8840 = vpop.f32.mrf.mxu0
  %8841 = vmatprep.mubr.f32.mxu0 0.0
  %8842 = vmatmul.mubr.f32.gmra.mxu0 %v8452
  %v8843 = vpop.f32.mrf.mxu0
  %v8844 = vadd.f32 0.0, %v8843
  %v8845 = vpop.f32.mrf.mxu0
  %8846 = vmatprep.mubr.f32.mxu0 0.0
  %8847 = vmatmul.mubr.f32.gmra.mxu0 %v8453
  %v8848 = vpop.f32.mrf.mxu0
  %v8849 = vadd.f32 0.0, %v8848
  %v8850 = vpop.f32.mrf.mxu0
  %8851 = vmatprep.mubr.f32.mxu0 0.0
  %8852 = vmatmul.mubr.f32.gmra.mxu0 %v8454
  %v8853 = vpop.f32.mrf.mxu0
  %v8854 = vadd.f32 0.0, %v8853
  %v8855 = vpop.f32.mrf.mxu0
  %8856 = vdwg.mxu0
  %v8857 = vadd.f32 %v8326, %v8539
  %v8858 = vadd.f32 %v8327, %v8544
  %v8859 = vadd.f32 %v8328, %v8549
  %v8860 = vadd.f32 %v8329, %v8554
  %v8861 = vadd.f32 %v8330, %v8559
  %v8862 = vadd.f32 %v8331, %v8564
  %v8863 = vadd.f32 %v8332, %v8569
  %v8864 = vadd.f32 %v8333, %v8574
  %v8865 = vadd.f32 %v8334, %v8579
  %v8866 = vadd.f32 %v8335, %v8584
  %v8867 = vadd.f32 %v8336, %v8589
  %v8868 = vadd.f32 %v8337, %v8594
  %v8869 = vadd.f32 %v8338, %v8599
  %v8870 = vadd.f32 %v8339, %v8604
  %v8871 = vadd.f32 %v8340, %v8609
  %v8872 = vadd.f32 %v8341, %v8614
  %v8873 = vadd.f32 %v8342, %v8619
  %v8874 = vadd.f32 %v8343, %v8624
  %v8875 = vadd.f32 %v8344, %v8629
  %v8876 = vadd.f32 %v8345, %v8634
  %v8877 = vadd.f32 %v8346, %v8639
  %v8878 = vadd.f32 %v8347, %v8644
  %v8879 = vadd.f32 %v8348, %v8649
  %v8880 = vadd.f32 %v8349, %v8654
  %v8881 = vadd.f32 %v8350, %v8659
  %v8882 = vadd.f32 %v8351, %v8664
  %v8883 = vadd.f32 %v8352, %v8669
  %v8884 = vadd.f32 %v8353, %v8674
  %v8885 = vadd.f32 %v8354, %v8679
  %v8886 = vadd.f32 %v8355, %v8684
  %v8887 = vadd.f32 %v8356, %v8689
  %v8888 = vadd.f32 %v8357, %v8694
  %v8889 = vadd.f32 %v8358, %v8699
  %v8890 = vadd.f32 %v8359, %v8704
  %v8891 = vadd.f32 %v8360, %v8709
  %v8892 = vadd.f32 %v8361, %v8714
  %v8893 = vadd.f32 %v8362, %v8719
  %v8894 = vadd.f32 %v8363, %v8724
  %v8895 = vadd.f32 %v8364, %v8729
  %v8896 = vadd.f32 %v8365, %v8734
  %v8897 = vadd.f32 %v8366, %v8739
  %v8898 = vadd.f32 %v8367, %v8744
  %v8899 = vadd.f32 %v8368, %v8749
  %v8900 = vadd.f32 %v8369, %v8754
  %v8901 = vadd.f32 %v8370, %v8759
  %v8902 = vadd.f32 %v8371, %v8764
  %v8903 = vadd.f32 %v8372, %v8769
  %v8904 = vadd.f32 %v8373, %v8774
  %v8905 = vadd.f32 %v8374, %v8779
  %v8906 = vadd.f32 %v8375, %v8784
  %v8907 = vadd.f32 %v8376, %v8789
  %v8908 = vadd.f32 %v8377, %v8794
  %v8909 = vadd.f32 %v8378, %v8799
  %v8910 = vadd.f32 %v8379, %v8804
  %v8911 = vadd.f32 %v8380, %v8809
  %v8912 = vadd.f32 %v8381, %v8814
  %v8913 = vadd.f32 %v8382, %v8819
  %v8914 = vadd.f32 %v8383, %v8824
  %v8915 = vadd.f32 %v8384, %v8829
  %v8916 = vadd.f32 %v8385, %v8834
  %v8917 = vadd.f32 %v8386, %v8839
  %v8918 = vadd.f32 %v8387, %v8844
  %v8919 = vadd.f32 %v8388, %v8849
  %v8920 = vadd.f32 %v8389, %v8854
  %v8921 = vld [vmem:[%s8390 + $0x1] sm:$0xff]
  %v8922 = vld [vmem:[%s8390 + $0x9] sm:$0xff]
  %v8923 = vld [vmem:[%s8390 + $0x19] sm:$0xff]
  %v8924 = vld [vmem:[%s8390 + $0x21] sm:$0xff]
  %v8925 = vld [vmem:[%s8390 + $0x31] sm:$0xff]
  %v8926 = vld [vmem:[%s8390 + $0x39] sm:$0xff]
  %v8927 = vld [vmem:[%s8390 + $0x49] sm:$0xff]
  %v8928 = vld [vmem:[%s8390 + $0x51] sm:$0xff]
  %v8929 = vld [vmem:[%s8390 + $0x61] sm:$0xff]
  %v8930 = vld [vmem:[%s8390 + $0x69] sm:$0xff]
  %v8931 = vld [vmem:[%s8390 + $0x79] sm:$0xff]
  %v8932 = vld [vmem:[%s8390 + $0x81] sm:$0xff]
  %v8933 = vld [vmem:[%s8390 + $0x91] sm:$0xff]
  %v8934 = vld [vmem:[%s8390 + $0x99] sm:$0xff]
  %v8935 = vld [vmem:[%s8390 + $0xa9] sm:$0xff]
  %v8936 = vld [vmem:[%s8390 + $0xb1] sm:$0xff]
  %v8937 = vld [vmem:[%s8390 + $0xc1] sm:$0xff]
  %v8938 = vld [vmem:[%s8390 + $0xc9] sm:$0xff]
  %v8939 = vld [vmem:[%s8390 + $0xd9] sm:$0xff]
  %v8940 = vld [vmem:[%s8390 + $0xe1] sm:$0xff]
  %v8941 = vld [vmem:[%s8390 + $0xf1] sm:$0xff]
  %v8942 = vld [vmem:[%s8390 + $0xf9] sm:$0xff]
  %v8943 = vld [vmem:[%s8390 + $0x109] sm:$0xff]
  %v8944 = vld [vmem:[%s8390 + $0x111] sm:$0xff]
  %v8945 = vld [vmem:[%s8390 + $0x121] sm:$0xff]
  %v8946 = vld [vmem:[%s8390 + $0x129] sm:$0xff]
  %v8947 = vld [vmem:[%s8390 + $0x139] sm:$0xff]
  %v8948 = vld [vmem:[%s8390 + $0x141] sm:$0xff]
  %v8949 = vld [vmem:[%s8390 + $0x151] sm:$0xff]
  %v8950 = vld [vmem:[%s8390 + $0x159] sm:$0xff]
  %v8951 = vld [vmem:[%s8390 + $0x169] sm:$0xff]
  %v8952 = vld [vmem:[%s8390 + $0x171] sm:$0xff]
  %v8953 = vld [vmem:[%s8390 + $0x1b1] sm:$0xff]
  %v8954 = vld [vmem:[%s8390 + $0x1b9] sm:$0xff]
  %v8955 = vld [vmem:[%s8390 + $0x1c9] sm:$0xff]
  %v8956 = vld [vmem:[%s8390 + $0x1d1] sm:$0xff]
  %v8957 = vld [vmem:[%s8390 + $0x1e1] sm:$0xff]
  %v8958 = vld [vmem:[%s8390 + $0x1e9] sm:$0xff]
  %v8959 = vld [vmem:[%s8390 + $0x1f9] sm:$0xff]
  %v8960 = vld [vmem:[%s8390 + $0x201] sm:$0xff]
  %v8961 = vld [vmem:[%s8390 + $0x211] sm:$0xff]
  %v8962 = vld [vmem:[%s8390 + $0x219] sm:$0xff]
  %v8963 = vld [vmem:[%s8390 + $0x229] sm:$0xff]
  %v8964 = vld [vmem:[%s8390 + $0x231] sm:$0xff]
  %v8965 = vld [vmem:[%s8390 + $0x241] sm:$0xff]
  %v8966 = vld [vmem:[%s8390 + $0x249] sm:$0xff]
  %v8967 = vld [vmem:[%s8390 + $0x259] sm:$0xff]
  %v8968 = vld [vmem:[%s8390 + $0x261] sm:$0xff]
  %v8969 = vld [vmem:[%s8390 + $0x271] sm:$0xff]
  %v8970 = vld [vmem:[%s8390 + $0x279] sm:$0xff]
  %v8971 = vld [vmem:[%s8390 + $0x289] sm:$0xff]
  %v8972 = vld [vmem:[%s8390 + $0x291] sm:$0xff]
  %v8973 = vld [vmem:[%s8390 + $0x2a1] sm:$0xff]
  %v8974 = vld [vmem:[%s8390 + $0x2a9] sm:$0xff]
  %v8975 = vld [vmem:[%s8390 + $0x2b9] sm:$0xff]
  %v8976 = vld [vmem:[%s8390 + $0x2c1] sm:$0xff]
  %v8977 = vld [vmem:[%s8390 + $0x2d1] sm:$0xff]
  %v8978 = vld [vmem:[%s8390 + $0x2d9] sm:$0xff]
  %v8979 = vld [vmem:[%s8390 + $0x2e9] sm:$0xff]
  %v8980 = vld [vmem:[%s8390 + $0x2f1] sm:$0xff]
  %v8981 = vld [vmem:[%s8390 + $0x301] sm:$0xff]
  %v8982 = vld [vmem:[%s8390 + $0x309] sm:$0xff]
  %v8983 = vld [vmem:[%s8390 + $0x319] sm:$0xff]
  %v8984 = vld [vmem:[%s8390 + $0x321] sm:$0xff]
  %s8985 = scalar_lea.vmem %s3, 896
  %v8986 = vld [vmem:[%s8985] sm:$0xff]
  %v8987 = vld [vmem:[%s8985 + $0x8] sm:$0xff]
  %v8988 = vld [vmem:[%s8985 + $0x10] sm:$0xff]
  %v8989 = vld [vmem:[%s8985 + $0x18] sm:$0xff]
  %v8990 = vld [vmem:[%s8985 + $0x20] sm:$0xff]
  %v8991 = vld [vmem:[%s8985 + $0x28] sm:$0xff]
  %v8992 = vld [vmem:[%s8985 + $0x30] sm:$0xff]
  %v8993 = vld [vmem:[%s8985 + $0x38] sm:$0xff]
  %v8994 = vld [vmem:[%s8985 + $0x40] sm:$0xff]
  %v8995 = vld [vmem:[%s8985 + $0x48] sm:$0xff]
  %v8996 = vld [vmem:[%s8985 + $0x50] sm:$0xff]
  %v8997 = vld [vmem:[%s8985 + $0x58] sm:$0xff]
  %v8998 = vld [vmem:[%s8985 + $0x60] sm:$0xff]
  %v8999 = vld [vmem:[%s8985 + $0x68] sm:$0xff]
  %v9000 = vld [vmem:[%s8985 + $0x70] sm:$0xff]
  %v9001 = vld [vmem:[%s8985 + $0x78] sm:$0xff]
  %9002 = vmatprep.subr.mxu0 0.0
  %9003 = vmatpush1.msra.mxu0 %v9001
  %9004 = vmatprep.subr.mxu0 0.0
  %9005 = vmatpush1.msra.mxu0 %v9000
  %9006 = vmatprep.subr.mxu0 0.0
  %9007 = vmatpush1.msra.mxu0 %v8999
  %9008 = vmatprep.subr.mxu0 0.0
  %9009 = vmatpush1.msra.mxu0 %v8998
  %9010 = vmatprep.subr.mxu0 0.0
  %9011 = vmatpush1.msra.mxu0 %v8997
  %9012 = vmatprep.subr.mxu0 0.0
  %9013 = vmatpush1.msra.mxu0 %v8996
  %9014 = vmatprep.subr.mxu0 0.0
  %9015 = vmatpush1.msra.mxu0 %v8995
  %9016 = vmatprep.subr.mxu0 0.0
  %9017 = vmatpush1.msra.mxu0 %v8994
  %9018 = vmatprep.subr.mxu0 0.0
  %9019 = vmatpush1.msra.mxu0 %v8993
  %9020 = vmatprep.subr.mxu0 0.0
  %9021 = vmatpush1.msra.mxu0 %v8992
  %9022 = vmatprep.subr.mxu0 0.0
  %9023 = vmatpush1.msra.mxu0 %v8991
  %9024 = vmatprep.subr.mxu0 0.0
  %9025 = vmatpush1.msra.mxu0 %v8990
  %9026 = vmatprep.subr.mxu0 0.0
  %9027 = vmatpush1.msra.mxu0 %v8989
  %9028 = vmatprep.subr.mxu0 0.0
  %9029 = vmatpush1.msra.mxu0 %v8988
  %9030 = vmatprep.subr.mxu0 0.0
  %9031 = vmatpush1.msra.mxu0 %v8987
  %9032 = vmatprep.subr.mxu0 0.0
  %9033 = vmatpush1.msra.mxu0 %v8986
  %9034 = vmatprep.subr.mxu0 0.0
  %9035 = vmatpush2.msra.mxu0 0.0
  %9036 = vmatprep.subr.mxu0 0.0
  %9037 = vmatpush2.msra.mxu0 0.0
  %9038 = vmatprep.subr.mxu0 0.0
  %9039 = vmatpush2.msra.mxu0 0.0
  %9040 = vmatprep.subr.mxu0 0.0
  %9041 = vmatpush2.msra.mxu0 0.0
  %9042 = vmatprep.subr.mxu0 0.0
  %9043 = vmatpush2.msra.mxu0 0.0
  %9044 = vmatprep.subr.mxu0 0.0
  %9045 = vmatpush2.msra.mxu0 0.0
  %9046 = vmatprep.subr.mxu0 0.0
  %9047 = vmatpush2.msra.mxu0 0.0
  %9048 = vmatprep.subr.mxu0 0.0
  %9049 = vmatpush2.msra.mxu0 0.0
  %9050 = vmatprep.subr.mxu0 0.0
  %9051 = vmatpush2.msra.mxu0 0.0
  %9052 = vmatprep.subr.mxu0 0.0
  %9053 = vmatpush2.msra.mxu0 0.0
  %9054 = vmatprep.subr.mxu0 0.0
  %9055 = vmatpush2.msra.mxu0 0.0
  %9056 = vmatprep.subr.mxu0 0.0
  %9057 = vmatpush2.msra.mxu0 0.0
  %9058 = vmatprep.subr.mxu0 0.0
  %9059 = vmatpush2.msra.mxu0 0.0
  %9060 = vmatprep.subr.mxu0 0.0
  %9061 = vmatpush2.msra.mxu0 0.0
  %9062 = vmatprep.subr.mxu0 0.0
  %9063 = vmatpush2.msra.mxu0 0.0
  %9064 = vmatprep.subr.mxu0 0.0
  %9065 = vmatpush2.msra.mxu0 0.0
  %9066 = vmatprep.mubr.f32.mxu0 0.0
  %9067 = vmatmul.mubr.f32.gmra.mxu0 %v8921
  %v9068 = vpop.f32.mrf.mxu0
  %v9069 = vadd.f32 0.0, %v9068
  %v9070 = vpop.f32.mrf.mxu0
  %9071 = vmatprep.mubr.f32.mxu0 0.0
  %9072 = vmatmul.mubr.f32.gmra.mxu0 %v8922
  %v9073 = vpop.f32.mrf.mxu0
  %v9074 = vadd.f32 0.0, %v9073
  %v9075 = vpop.f32.mrf.mxu0
  %9076 = vmatprep.mubr.f32.mxu0 0.0
  %9077 = vmatmul.mubr.f32.gmra.mxu0 %v8923
  %v9078 = vpop.f32.mrf.mxu0
  %v9079 = vadd.f32 0.0, %v9078
  %v9080 = vpop.f32.mrf.mxu0
  %9081 = vmatprep.mubr.f32.mxu0 0.0
  %9082 = vmatmul.mubr.f32.gmra.mxu0 %v8924
  %v9083 = vpop.f32.mrf.mxu0
  %v9084 = vadd.f32 0.0, %v9083
  %v9085 = vpop.f32.mrf.mxu0
  %9086 = vmatprep.mubr.f32.mxu0 0.0
  %9087 = vmatmul.mubr.f32.gmra.mxu0 %v8925
  %v9088 = vpop.f32.mrf.mxu0
  %v9089 = vadd.f32 0.0, %v9088
  %v9090 = vpop.f32.mrf.mxu0
  %9091 = vmatprep.mubr.f32.mxu0 0.0
  %9092 = vmatmul.mubr.f32.gmra.mxu0 %v8926
  %v9093 = vpop.f32.mrf.mxu0
  %v9094 = vadd.f32 0.0, %v9093
  %v9095 = vpop.f32.mrf.mxu0
  %9096 = vmatprep.mubr.f32.mxu0 0.0
  %9097 = vmatmul.mubr.f32.gmra.mxu0 %v8927
  %v9098 = vpop.f32.mrf.mxu0
  %v9099 = vadd.f32 0.0, %v9098
  %v9100 = vpop.f32.mrf.mxu0
  %9101 = vmatprep.mubr.f32.mxu0 0.0
  %9102 = vmatmul.mubr.f32.gmra.mxu0 %v8928
  %v9103 = vpop.f32.mrf.mxu0
  %v9104 = vadd.f32 0.0, %v9103
  %v9105 = vpop.f32.mrf.mxu0
  %9106 = vmatprep.mubr.f32.mxu0 0.0
  %9107 = vmatmul.mubr.f32.gmra.mxu0 %v8929
  %v9108 = vpop.f32.mrf.mxu0
  %v9109 = vadd.f32 0.0, %v9108
  %v9110 = vpop.f32.mrf.mxu0
  %9111 = vmatprep.mubr.f32.mxu0 0.0
  %9112 = vmatmul.mubr.f32.gmra.mxu0 %v8930
  %v9113 = vpop.f32.mrf.mxu0
  %v9114 = vadd.f32 0.0, %v9113
  %v9115 = vpop.f32.mrf.mxu0
  %9116 = vmatprep.mubr.f32.mxu0 0.0
  %9117 = vmatmul.mubr.f32.gmra.mxu0 %v8931
  %v9118 = vpop.f32.mrf.mxu0
  %v9119 = vadd.f32 0.0, %v9118
  %v9120 = vpop.f32.mrf.mxu0
  %9121 = vmatprep.mubr.f32.mxu0 0.0
  %9122 = vmatmul.mubr.f32.gmra.mxu0 %v8932
  %v9123 = vpop.f32.mrf.mxu0
  %v9124 = vadd.f32 0.0, %v9123
  %v9125 = vpop.f32.mrf.mxu0
  %9126 = vmatprep.mubr.f32.mxu0 0.0
  %9127 = vmatmul.mubr.f32.gmra.mxu0 %v8933
  %v9128 = vpop.f32.mrf.mxu0
  %v9129 = vadd.f32 0.0, %v9128
  %v9130 = vpop.f32.mrf.mxu0
  %9131 = vmatprep.mubr.f32.mxu0 0.0
  %9132 = vmatmul.mubr.f32.gmra.mxu0 %v8934
  %v9133 = vpop.f32.mrf.mxu0
  %v9134 = vadd.f32 0.0, %v9133
  %v9135 = vpop.f32.mrf.mxu0
  %9136 = vmatprep.mubr.f32.mxu0 0.0
  %9137 = vmatmul.mubr.f32.gmra.mxu0 %v8935
  %v9138 = vpop.f32.mrf.mxu0
  %v9139 = vadd.f32 0.0, %v9138
  %v9140 = vpop.f32.mrf.mxu0
  %9141 = vmatprep.mubr.f32.mxu0 0.0
  %9142 = vmatmul.mubr.f32.gmra.mxu0 %v8936
  %v9143 = vpop.f32.mrf.mxu0
  %v9144 = vadd.f32 0.0, %v9143
  %v9145 = vpop.f32.mrf.mxu0
  %9146 = vmatprep.mubr.f32.mxu0 0.0
  %9147 = vmatmul.mubr.f32.gmra.mxu0 %v8937
  %v9148 = vpop.f32.mrf.mxu0
  %v9149 = vadd.f32 0.0, %v9148
  %v9150 = vpop.f32.mrf.mxu0
  %9151 = vmatprep.mubr.f32.mxu0 0.0
  %9152 = vmatmul.mubr.f32.gmra.mxu0 %v8938
  %v9153 = vpop.f32.mrf.mxu0
  %v9154 = vadd.f32 0.0, %v9153
  %v9155 = vpop.f32.mrf.mxu0
  %9156 = vmatprep.mubr.f32.mxu0 0.0
  %9157 = vmatmul.mubr.f32.gmra.mxu0 %v8939
  %v9158 = vpop.f32.mrf.mxu0
  %v9159 = vadd.f32 0.0, %v9158
  %v9160 = vpop.f32.mrf.mxu0
  %9161 = vmatprep.mubr.f32.mxu0 0.0
  %9162 = vmatmul.mubr.f32.gmra.mxu0 %v8940
  %v9163 = vpop.f32.mrf.mxu0
  %v9164 = vadd.f32 0.0, %v9163
  %v9165 = vpop.f32.mrf.mxu0
  %9166 = vmatprep.mubr.f32.mxu0 0.0
  %9167 = vmatmul.mubr.f32.gmra.mxu0 %v8941
  %v9168 = vpop.f32.mrf.mxu0
  %v9169 = vadd.f32 0.0, %v9168
  %v9170 = vpop.f32.mrf.mxu0
  %9171 = vmatprep.mubr.f32.mxu0 0.0
  %9172 = vmatmul.mubr.f32.gmra.mxu0 %v8942
  %v9173 = vpop.f32.mrf.mxu0
  %v9174 = vadd.f32 0.0, %v9173
  %v9175 = vpop.f32.mrf.mxu0
  %9176 = vmatprep.mubr.f32.mxu0 0.0
  %9177 = vmatmul.mubr.f32.gmra.mxu0 %v8943
  %v9178 = vpop.f32.mrf.mxu0
  %v9179 = vadd.f32 0.0, %v9178
  %v9180 = vpop.f32.mrf.mxu0
  %9181 = vmatprep.mubr.f32.mxu0 0.0
  %9182 = vmatmul.mubr.f32.gmra.mxu0 %v8944
  %v9183 = vpop.f32.mrf.mxu0
  %v9184 = vadd.f32 0.0, %v9183
  %v9185 = vpop.f32.mrf.mxu0
  %9186 = vmatprep.mubr.f32.mxu0 0.0
  %9187 = vmatmul.mubr.f32.gmra.mxu0 %v8945
  %v9188 = vpop.f32.mrf.mxu0
  %v9189 = vadd.f32 0.0, %v9188
  %v9190 = vpop.f32.mrf.mxu0
  %9191 = vmatprep.mubr.f32.mxu0 0.0
  %9192 = vmatmul.mubr.f32.gmra.mxu0 %v8946
  %v9193 = vpop.f32.mrf.mxu0
  %v9194 = vadd.f32 0.0, %v9193
  %v9195 = vpop.f32.mrf.mxu0
  %9196 = vmatprep.mubr.f32.mxu0 0.0
  %9197 = vmatmul.mubr.f32.gmra.mxu0 %v8947
  %v9198 = vpop.f32.mrf.mxu0
  %v9199 = vadd.f32 0.0, %v9198
  %v9200 = vpop.f32.mrf.mxu0
  %9201 = vmatprep.mubr.f32.mxu0 0.0
  %9202 = vmatmul.mubr.f32.gmra.mxu0 %v8948
  %v9203 = vpop.f32.mrf.mxu0
  %v9204 = vadd.f32 0.0, %v9203
  %v9205 = vpop.f32.mrf.mxu0
  %9206 = vmatprep.mubr.f32.mxu0 0.0
  %9207 = vmatmul.mubr.f32.gmra.mxu0 %v8949
  %v9208 = vpop.f32.mrf.mxu0
  %v9209 = vadd.f32 0.0, %v9208
  %v9210 = vpop.f32.mrf.mxu0
  %9211 = vmatprep.mubr.f32.mxu0 0.0
  %9212 = vmatmul.mubr.f32.gmra.mxu0 %v8950
  %v9213 = vpop.f32.mrf.mxu0
  %v9214 = vadd.f32 0.0, %v9213
  %v9215 = vpop.f32.mrf.mxu0
  %9216 = vmatprep.mubr.f32.mxu0 0.0
  %9217 = vmatmul.mubr.f32.gmra.mxu0 %v8951
  %v9218 = vpop.f32.mrf.mxu0
  %v9219 = vadd.f32 0.0, %v9218
  %v9220 = vpop.f32.mrf.mxu0
  %9221 = vmatprep.mubr.f32.mxu0 0.0
  %9222 = vmatmul.mubr.f32.gmra.mxu0 %v8952
  %v9223 = vpop.f32.mrf.mxu0
  %v9224 = vadd.f32 0.0, %v9223
  %v9225 = vpop.f32.mrf.mxu0
  %9226 = vmatprep.mubr.f32.mxu0 0.0
  %9227 = vmatmul.mubr.f32.gmra.mxu0 %v8953
  %v9228 = vpop.f32.mrf.mxu0
  %v9229 = vadd.f32 0.0, %v9228
  %v9230 = vpop.f32.mrf.mxu0
  %9231 = vmatprep.mubr.f32.mxu0 0.0
  %9232 = vmatmul.mubr.f32.gmra.mxu0 %v8954
  %v9233 = vpop.f32.mrf.mxu0
  %v9234 = vadd.f32 0.0, %v9233
  %v9235 = vpop.f32.mrf.mxu0
  %9236 = vmatprep.mubr.f32.mxu0 0.0
  %9237 = vmatmul.mubr.f32.gmra.mxu0 %v8955
  %v9238 = vpop.f32.mrf.mxu0
  %v9239 = vadd.f32 0.0, %v9238
  %v9240 = vpop.f32.mrf.mxu0
  %9241 = vmatprep.mubr.f32.mxu0 0.0
  %9242 = vmatmul.mubr.f32.gmra.mxu0 %v8956
  %v9243 = vpop.f32.mrf.mxu0
  %v9244 = vadd.f32 0.0, %v9243
  %v9245 = vpop.f32.mrf.mxu0
  %9246 = vmatprep.mubr.f32.mxu0 0.0
  %9247 = vmatmul.mubr.f32.gmra.mxu0 %v8957
  %v9248 = vpop.f32.mrf.mxu0
  %v9249 = vadd.f32 0.0, %v9248
  %v9250 = vpop.f32.mrf.mxu0
  %9251 = vmatprep.mubr.f32.mxu0 0.0
  %9252 = vmatmul.mubr.f32.gmra.mxu0 %v8958
  %v9253 = vpop.f32.mrf.mxu0
  %v9254 = vadd.f32 0.0, %v9253
  %v9255 = vpop.f32.mrf.mxu0
  %9256 = vmatprep.mubr.f32.mxu0 0.0
  %9257 = vmatmul.mubr.f32.gmra.mxu0 %v8959
  %v9258 = vpop.f32.mrf.mxu0
  %v9259 = vadd.f32 0.0, %v9258
  %v9260 = vpop.f32.mrf.mxu0
  %9261 = vmatprep.mubr.f32.mxu0 0.0
  %9262 = vmatmul.mubr.f32.gmra.mxu0 %v8960
  %v9263 = vpop.f32.mrf.mxu0
  %v9264 = vadd.f32 0.0, %v9263
  %v9265 = vpop.f32.mrf.mxu0
  %9266 = vmatprep.mubr.f32.mxu0 0.0
  %9267 = vmatmul.mubr.f32.gmra.mxu0 %v8961
  %v9268 = vpop.f32.mrf.mxu0
  %v9269 = vadd.f32 0.0, %v9268
  %v9270 = vpop.f32.mrf.mxu0
  %9271 = vmatprep.mubr.f32.mxu0 0.0
  %9272 = vmatmul.mubr.f32.gmra.mxu0 %v8962
  %v9273 = vpop.f32.mrf.mxu0
  %v9274 = vadd.f32 0.0, %v9273
  %v9275 = vpop.f32.mrf.mxu0
  %9276 = vmatprep.mubr.f32.mxu0 0.0
  %9277 = vmatmul.mubr.f32.gmra.mxu0 %v8963
  %v9278 = vpop.f32.mrf.mxu0
  %v9279 = vadd.f32 0.0, %v9278
  %v9280 = vpop.f32.mrf.mxu0
  %9281 = vmatprep.mubr.f32.mxu0 0.0
  %9282 = vmatmul.mubr.f32.gmra.mxu0 %v8964
  %v9283 = vpop.f32.mrf.mxu0
  %v9284 = vadd.f32 0.0, %v9283
  %v9285 = vpop.f32.mrf.mxu0
  %9286 = vmatprep.mubr.f32.mxu0 0.0
  %9287 = vmatmul.mubr.f32.gmra.mxu0 %v8965
  %v9288 = vpop.f32.mrf.mxu0
  %v9289 = vadd.f32 0.0, %v9288
  %v9290 = vpop.f32.mrf.mxu0
  %9291 = vmatprep.mubr.f32.mxu0 0.0
  %9292 = vmatmul.mubr.f32.gmra.mxu0 %v8966
  %v9293 = vpop.f32.mrf.mxu0
  %v9294 = vadd.f32 0.0, %v9293
  %v9295 = vpop.f32.mrf.mxu0
  %9296 = vmatprep.mubr.f32.mxu0 0.0
  %9297 = vmatmul.mubr.f32.gmra.mxu0 %v8967
  %v9298 = vpop.f32.mrf.mxu0
  %v9299 = vadd.f32 0.0, %v9298
  %v9300 = vpop.f32.mrf.mxu0
  %9301 = vmatprep.mubr.f32.mxu0 0.0
  %9302 = vmatmul.mubr.f32.gmra.mxu0 %v8968
  %v9303 = vpop.f32.mrf.mxu0
  %v9304 = vadd.f32 0.0, %v9303
  %v9305 = vpop.f32.mrf.mxu0
  %9306 = vmatprep.mubr.f32.mxu0 0.0
  %9307 = vmatmul.mubr.f32.gmra.mxu0 %v8969
  %v9308 = vpop.f32.mrf.mxu0
  %v9309 = vadd.f32 0.0, %v9308
  %v9310 = vpop.f32.mrf.mxu0
  %9311 = vmatprep.mubr.f32.mxu0 0.0
  %9312 = vmatmul.mubr.f32.gmra.mxu0 %v8970
  %v9313 = vpop.f32.mrf.mxu0
  %v9314 = vadd.f32 0.0, %v9313
  %v9315 = vpop.f32.mrf.mxu0
  %9316 = vmatprep.mubr.f32.mxu0 0.0
  %9317 = vmatmul.mubr.f32.gmra.mxu0 %v8971
  %v9318 = vpop.f32.mrf.mxu0
  %v9319 = vadd.f32 0.0, %v9318
  %v9320 = vpop.f32.mrf.mxu0
  %9321 = vmatprep.mubr.f32.mxu0 0.0
  %9322 = vmatmul.mubr.f32.gmra.mxu0 %v8972
  %v9323 = vpop.f32.mrf.mxu0
  %v9324 = vadd.f32 0.0, %v9323
  %v9325 = vpop.f32.mrf.mxu0
  %9326 = vmatprep.mubr.f32.mxu0 0.0
  %9327 = vmatmul.mubr.f32.gmra.mxu0 %v8973
  %v9328 = vpop.f32.mrf.mxu0
  %v9329 = vadd.f32 0.0, %v9328
  %v9330 = vpop.f32.mrf.mxu0
  %9331 = vmatprep.mubr.f32.mxu0 0.0
  %9332 = vmatmul.mubr.f32.gmra.mxu0 %v8974
  %v9333 = vpop.f32.mrf.mxu0
  %v9334 = vadd.f32 0.0, %v9333
  %v9335 = vpop.f32.mrf.mxu0
  %9336 = vmatprep.mubr.f32.mxu0 0.0
  %9337 = vmatmul.mubr.f32.gmra.mxu0 %v8975
  %v9338 = vpop.f32.mrf.mxu0
  %v9339 = vadd.f32 0.0, %v9338
  %v9340 = vpop.f32.mrf.mxu0
  %9341 = vmatprep.mubr.f32.mxu0 0.0
  %9342 = vmatmul.mubr.f32.gmra.mxu0 %v8976
  %v9343 = vpop.f32.mrf.mxu0
  %v9344 = vadd.f32 0.0, %v9343
  %v9345 = vpop.f32.mrf.mxu0
  %9346 = vmatprep.mubr.f32.mxu0 0.0
  %9347 = vmatmul.mubr.f32.gmra.mxu0 %v8977
  %v9348 = vpop.f32.mrf.mxu0
  %v9349 = vadd.f32 0.0, %v9348
  %v9350 = vpop.f32.mrf.mxu0
  %9351 = vmatprep.mubr.f32.mxu0 0.0
  %9352 = vmatmul.mubr.f32.gmra.mxu0 %v8978
  %v9353 = vpop.f32.mrf.mxu0
  %v9354 = vadd.f32 0.0, %v9353
  %v9355 = vpop.f32.mrf.mxu0
  %9356 = vmatprep.mubr.f32.mxu0 0.0
  %9357 = vmatmul.mubr.f32.gmra.mxu0 %v8979
  %v9358 = vpop.f32.mrf.mxu0
  %v9359 = vadd.f32 0.0, %v9358
  %v9360 = vpop.f32.mrf.mxu0
  %9361 = vmatprep.mubr.f32.mxu0 0.0
  %9362 = vmatmul.mubr.f32.gmra.mxu0 %v8980
  %v9363 = vpop.f32.mrf.mxu0
  %v9364 = vadd.f32 0.0, %v9363
  %v9365 = vpop.f32.mrf.mxu0
  %9366 = vmatprep.mubr.f32.mxu0 0.0
  %9367 = vmatmul.mubr.f32.gmra.mxu0 %v8981
  %v9368 = vpop.f32.mrf.mxu0
  %v9369 = vadd.f32 0.0, %v9368
  %v9370 = vpop.f32.mrf.mxu0
  %9371 = vmatprep.mubr.f32.mxu0 0.0
  %9372 = vmatmul.mubr.f32.gmra.mxu0 %v8982
  %v9373 = vpop.f32.mrf.mxu0
  %v9374 = vadd.f32 0.0, %v9373
  %v9375 = vpop.f32.mrf.mxu0
  %9376 = vmatprep.mubr.f32.mxu0 0.0
  %9377 = vmatmul.mubr.f32.gmra.mxu0 %v8983
  %v9378 = vpop.f32.mrf.mxu0
  %v9379 = vadd.f32 0.0, %v9378
  %v9380 = vpop.f32.mrf.mxu0
  %9381 = vmatprep.mubr.f32.mxu0 0.0
  %9382 = vmatmul.mubr.f32.gmra.mxu0 %v8984
  %v9383 = vpop.f32.mrf.mxu0
  %v9384 = vadd.f32 0.0, %v9383
  %v9385 = vpop.f32.mrf.mxu0
  %9386 = vdwg.mxu0
  %v9387 = vadd.f32 %v8857, %v9069
  %v9388 = vadd.f32 %v8858, %v9074
  %v9389 = vadd.f32 %v8859, %v9079
  %v9390 = vadd.f32 %v8860, %v9084
  %v9391 = vadd.f32 %v8861, %v9089
  %v9392 = vadd.f32 %v8862, %v9094
  %v9393 = vadd.f32 %v8863, %v9099
  %v9394 = vadd.f32 %v8864, %v9104
  %v9395 = vadd.f32 %v8865, %v9109
  %v9396 = vadd.f32 %v8866, %v9114
  %v9397 = vadd.f32 %v8867, %v9119
  %v9398 = vadd.f32 %v8868, %v9124
  %v9399 = vadd.f32 %v8869, %v9129
  %v9400 = vadd.f32 %v8870, %v9134
  %v9401 = vadd.f32 %v8871, %v9139
  %v9402 = vadd.f32 %v8872, %v9144
  %v9403 = vadd.f32 %v8873, %v9149
  %v9404 = vadd.f32 %v8874, %v9154
  %v9405 = vadd.f32 %v8875, %v9159
  %v9406 = vadd.f32 %v8876, %v9164
  %v9407 = vadd.f32 %v8877, %v9169
  %v9408 = vadd.f32 %v8878, %v9174
  %v9409 = vadd.f32 %v8879, %v9179
  %v9410 = vadd.f32 %v8880, %v9184
  %v9411 = vadd.f32 %v8881, %v9189
  %v9412 = vadd.f32 %v8882, %v9194
  %v9413 = vadd.f32 %v8883, %v9199
  %v9414 = vadd.f32 %v8884, %v9204
  %v9415 = vadd.f32 %v8885, %v9209
  %v9416 = vadd.f32 %v8886, %v9214
  %v9417 = vadd.f32 %v8887, %v9219
  %v9418 = vadd.f32 %v8888, %v9224
  %v9419 = vadd.f32 %v8889, %v9229
  %v9420 = vadd.f32 %v8890, %v9234
  %v9421 = vadd.f32 %v8891, %v9239
  %v9422 = vadd.f32 %v8892, %v9244
  %v9423 = vadd.f32 %v8893, %v9249
  %v9424 = vadd.f32 %v8894, %v9254
  %v9425 = vadd.f32 %v8895, %v9259
  %v9426 = vadd.f32 %v8896, %v9264
  %v9427 = vadd.f32 %v8897, %v9269
  %v9428 = vadd.f32 %v8898, %v9274
  %v9429 = vadd.f32 %v8899, %v9279
  %v9430 = vadd.f32 %v8900, %v9284
  %v9431 = vadd.f32 %v8901, %v9289
  %v9432 = vadd.f32 %v8902, %v9294
  %v9433 = vadd.f32 %v8903, %v9299
  %v9434 = vadd.f32 %v8904, %v9304
  %v9435 = vadd.f32 %v8905, %v9309
  %v9436 = vadd.f32 %v8906, %v9314
  %v9437 = vadd.f32 %v8907, %v9319
  %v9438 = vadd.f32 %v8908, %v9324
  %v9439 = vadd.f32 %v8909, %v9329
  %v9440 = vadd.f32 %v8910, %v9334
  %v9441 = vadd.f32 %v8911, %v9339
  %v9442 = vadd.f32 %v8912, %v9344
  %v9443 = vadd.f32 %v8913, %v9349
  %v9444 = vadd.f32 %v8914, %v9354
  %v9445 = vadd.f32 %v8915, %v9359
  %v9446 = vadd.f32 %v8916, %v9364
  %v9447 = vadd.f32 %v8917, %v9369
  %v9448 = vadd.f32 %v8918, %v9374
  %v9449 = vadd.f32 %v8919, %v9379
  %v9450 = vadd.f32 %v8920, %v9384
  %v9451 = vld [vmem:[%s8390 + $0x2] sm:$0xff]
  %v9452 = vld [vmem:[%s8390 + $0xa] sm:$0xff]
  %v9453 = vld [vmem:[%s8390 + $0x1a] sm:$0xff]
  %v9454 = vld [vmem:[%s8390 + $0x22] sm:$0xff]
  %v9455 = vld [vmem:[%s8390 + $0x32] sm:$0xff]
  %v9456 = vld [vmem:[%s8390 + $0x3a] sm:$0xff]
  %v9457 = vld [vmem:[%s8390 + $0x4a] sm:$0xff]
  %v9458 = vld [vmem:[%s8390 + $0x52] sm:$0xff]
  %v9459 = vld [vmem:[%s8390 + $0x62] sm:$0xff]
  %v9460 = vld [vmem:[%s8390 + $0x6a] sm:$0xff]
  %v9461 = vld [vmem:[%s8390 + $0x7a] sm:$0xff]
  %v9462 = vld [vmem:[%s8390 + $0x82] sm:$0xff]
  %v9463 = vld [vmem:[%s8390 + $0x92] sm:$0xff]
  %v9464 = vld [vmem:[%s8390 + $0x9a] sm:$0xff]
  %v9465 = vld [vmem:[%s8390 + $0xaa] sm:$0xff]
  %v9466 = vld [vmem:[%s8390 + $0xb2] sm:$0xff]
  %v9467 = vld [vmem:[%s8390 + $0xc2] sm:$0xff]
  %v9468 = vld [vmem:[%s8390 + $0xca] sm:$0xff]
  %v9469 = vld [vmem:[%s8390 + $0xda] sm:$0xff]
  %v9470 = vld [vmem:[%s8390 + $0xe2] sm:$0xff]
  %v9471 = vld [vmem:[%s8390 + $0xf2] sm:$0xff]
  %v9472 = vld [vmem:[%s8390 + $0xfa] sm:$0xff]
  %v9473 = vld [vmem:[%s8390 + $0x10a] sm:$0xff]
  %v9474 = vld [vmem:[%s8390 + $0x112] sm:$0xff]
  %v9475 = vld [vmem:[%s8390 + $0x122] sm:$0xff]
  %v9476 = vld [vmem:[%s8390 + $0x12a] sm:$0xff]
  %v9477 = vld [vmem:[%s8390 + $0x13a] sm:$0xff]
  %v9478 = vld [vmem:[%s8390 + $0x142] sm:$0xff]
  %v9479 = vld [vmem:[%s8390 + $0x152] sm:$0xff]
  %v9480 = vld [vmem:[%s8390 + $0x15a] sm:$0xff]
  %v9481 = vld [vmem:[%s8390 + $0x16a] sm:$0xff]
  %v9482 = vld [vmem:[%s8390 + $0x172] sm:$0xff]
  %v9483 = vld [vmem:[%s8390 + $0x1b2] sm:$0xff]
  %v9484 = vld [vmem:[%s8390 + $0x1ba] sm:$0xff]
  %v9485 = vld [vmem:[%s8390 + $0x1ca] sm:$0xff]
  %v9486 = vld [vmem:[%s8390 + $0x1d2] sm:$0xff]
  %v9487 = vld [vmem:[%s8390 + $0x1e2] sm:$0xff]
  %v9488 = vld [vmem:[%s8390 + $0x1ea] sm:$0xff]
  %v9489 = vld [vmem:[%s8390 + $0x1fa] sm:$0xff]
  %v9490 = vld [vmem:[%s8390 + $0x202] sm:$0xff]
  %v9491 = vld [vmem:[%s8390 + $0x212] sm:$0xff]
  %v9492 = vld [vmem:[%s8390 + $0x21a] sm:$0xff]
  %v9493 = vld [vmem:[%s8390 + $0x22a] sm:$0xff]
  %v9494 = vld [vmem:[%s8390 + $0x232] sm:$0xff]
  %v9495 = vld [vmem:[%s8390 + $0x242] sm:$0xff]
  %v9496 = vld [vmem:[%s8390 + $0x24a] sm:$0xff]
  %v9497 = vld [vmem:[%s8390 + $0x25a] sm:$0xff]
  %v9498 = vld [vmem:[%s8390 + $0x262] sm:$0xff]
  %v9499 = vld [vmem:[%s8390 + $0x272] sm:$0xff]
  %v9500 = vld [vmem:[%s8390 + $0x27a] sm:$0xff]
  %v9501 = vld [vmem:[%s8390 + $0x28a] sm:$0xff]
  %v9502 = vld [vmem:[%s8390 + $0x292] sm:$0xff]
  %v9503 = vld [vmem:[%s8390 + $0x2a2] sm:$0xff]
  %v9504 = vld [vmem:[%s8390 + $0x2aa] sm:$0xff]
  %v9505 = vld [vmem:[%s8390 + $0x2ba] sm:$0xff]
  %v9506 = vld [vmem:[%s8390 + $0x2c2] sm:$0xff]
  %v9507 = vld [vmem:[%s8390 + $0x2d2] sm:$0xff]
  %v9508 = vld [vmem:[%s8390 + $0x2da] sm:$0xff]
  %v9509 = vld [vmem:[%s8390 + $0x2ea] sm:$0xff]
  %v9510 = vld [vmem:[%s8390 + $0x2f2] sm:$0xff]
  %v9511 = vld [vmem:[%s8390 + $0x302] sm:$0xff]
  %v9512 = vld [vmem:[%s8390 + $0x30a] sm:$0xff]
  %v9513 = vld [vmem:[%s8390 + $0x31a] sm:$0xff]
  %v9514 = vld [vmem:[%s8390 + $0x322] sm:$0xff]
  %s9515 = scalar_lea.vmem %s3, 1024
  %v9516 = vld [vmem:[%s9515] sm:$0xff]
  %v9517 = vld [vmem:[%s9515 + $0x8] sm:$0xff]
  %v9518 = vld [vmem:[%s9515 + $0x10] sm:$0xff]
  %v9519 = vld [vmem:[%s9515 + $0x18] sm:$0xff]
  %v9520 = vld [vmem:[%s9515 + $0x20] sm:$0xff]
  %v9521 = vld [vmem:[%s9515 + $0x28] sm:$0xff]
  %v9522 = vld [vmem:[%s9515 + $0x30] sm:$0xff]
  %v9523 = vld [vmem:[%s9515 + $0x38] sm:$0xff]
  %v9524 = vld [vmem:[%s9515 + $0x40] sm:$0xff]
  %v9525 = vld [vmem:[%s9515 + $0x48] sm:$0xff]
  %v9526 = vld [vmem:[%s9515 + $0x50] sm:$0xff]
  %v9527 = vld [vmem:[%s9515 + $0x58] sm:$0xff]
  %v9528 = vld [vmem:[%s9515 + $0x60] sm:$0xff]
  %v9529 = vld [vmem:[%s9515 + $0x68] sm:$0xff]
  %v9530 = vld [vmem:[%s9515 + $0x70] sm:$0xff]
  %v9531 = vld [vmem:[%s9515 + $0x78] sm:$0xff]
  %9532 = vmatprep.subr.mxu0 0.0
  %9533 = vmatpush1.msra.mxu0 %v9531
  %9534 = vmatprep.subr.mxu0 0.0
  %9535 = vmatpush1.msra.mxu0 %v9530
  %9536 = vmatprep.subr.mxu0 0.0
  %9537 = vmatpush1.msra.mxu0 %v9529
  %9538 = vmatprep.subr.mxu0 0.0
  %9539 = vmatpush1.msra.mxu0 %v9528
  %9540 = vmatprep.subr.mxu0 0.0
  %9541 = vmatpush1.msra.mxu0 %v9527
  %9542 = vmatprep.subr.mxu0 0.0
  %9543 = vmatpush1.msra.mxu0 %v9526
  %9544 = vmatprep.subr.mxu0 0.0
  %9545 = vmatpush1.msra.mxu0 %v9525
  %9546 = vmatprep.subr.mxu0 0.0
  %9547 = vmatpush1.msra.mxu0 %v9524
  %9548 = vmatprep.subr.mxu0 0.0
  %9549 = vmatpush1.msra.mxu0 %v9523
  %9550 = vmatprep.subr.mxu0 0.0
  %9551 = vmatpush1.msra.mxu0 %v9522
  %9552 = vmatprep.subr.mxu0 0.0
  %9553 = vmatpush1.msra.mxu0 %v9521
  %9554 = vmatprep.subr.mxu0 0.0
  %9555 = vmatpush1.msra.mxu0 %v9520
  %9556 = vmatprep.subr.mxu0 0.0
  %9557 = vmatpush1.msra.mxu0 %v9519
  %9558 = vmatprep.subr.mxu0 0.0
  %9559 = vmatpush1.msra.mxu0 %v9518
  %9560 = vmatprep.subr.mxu0 0.0
  %9561 = vmatpush1.msra.mxu0 %v9517
  %9562 = vmatprep.subr.mxu0 0.0
  %9563 = vmatpush1.msra.mxu0 %v9516
  %9564 = vmatprep.subr.mxu0 0.0
  %9565 = vmatpush2.msra.mxu0 0.0
  %9566 = vmatprep.subr.mxu0 0.0
  %9567 = vmatpush2.msra.mxu0 0.0
  %9568 = vmatprep.subr.mxu0 0.0
  %9569 = vmatpush2.msra.mxu0 0.0
  %9570 = vmatprep.subr.mxu0 0.0
  %9571 = vmatpush2.msra.mxu0 0.0
  %9572 = vmatprep.subr.mxu0 0.0
  %9573 = vmatpush2.msra.mxu0 0.0
  %9574 = vmatprep.subr.mxu0 0.0
  %9575 = vmatpush2.msra.mxu0 0.0
  %9576 = vmatprep.subr.mxu0 0.0
  %9577 = vmatpush2.msra.mxu0 0.0
  %9578 = vmatprep.subr.mxu0 0.0
  %9579 = vmatpush2.msra.mxu0 0.0
  %9580 = vmatprep.subr.mxu0 0.0
  %9581 = vmatpush2.msra.mxu0 0.0
  %9582 = vmatprep.subr.mxu0 0.0
  %9583 = vmatpush2.msra.mxu0 0.0
  %9584 = vmatprep.subr.mxu0 0.0
  %9585 = vmatpush2.msra.mxu0 0.0
  %9586 = vmatprep.subr.mxu0 0.0
  %9587 = vmatpush2.msra.mxu0 0.0
  %9588 = vmatprep.subr.mxu0 0.0
  %9589 = vmatpush2.msra.mxu0 0.0
  %9590 = vmatprep.subr.mxu0 0.0
  %9591 = vmatpush2.msra.mxu0 0.0
  %9592 = vmatprep.subr.mxu0 0.0
  %9593 = vmatpush2.msra.mxu0 0.0
  %9594 = vmatprep.subr.mxu0 0.0
  %9595 = vmatpush2.msra.mxu0 0.0
  %9596 = vmatprep.mubr.f32.mxu0 0.0
  %9597 = vmatmul.mubr.f32.gmra.mxu0 %v9451
  %v9598 = vpop.f32.mrf.mxu0
  %v9599 = vadd.f32 0.0, %v9598
  %v9600 = vpop.f32.mrf.mxu0
  %9601 = vmatprep.mubr.f32.mxu0 0.0
  %9602 = vmatmul.mubr.f32.gmra.mxu0 %v9452
  %v9603 = vpop.f32.mrf.mxu0
  %v9604 = vadd.f32 0.0, %v9603
  %v9605 = vpop.f32.mrf.mxu0
  %9606 = vmatprep.mubr.f32.mxu0 0.0
  %9607 = vmatmul.mubr.f32.gmra.mxu0 %v9453
  %v9608 = vpop.f32.mrf.mxu0
  %v9609 = vadd.f32 0.0, %v9608
  %v9610 = vpop.f32.mrf.mxu0
  %9611 = vmatprep.mubr.f32.mxu0 0.0
  %9612 = vmatmul.mubr.f32.gmra.mxu0 %v9454
  %v9613 = vpop.f32.mrf.mxu0
  %v9614 = vadd.f32 0.0, %v9613
  %v9615 = vpop.f32.mrf.mxu0
  %9616 = vmatprep.mubr.f32.mxu0 0.0
  %9617 = vmatmul.mubr.f32.gmra.mxu0 %v9455
  %v9618 = vpop.f32.mrf.mxu0
  %v9619 = vadd.f32 0.0, %v9618
  %v9620 = vpop.f32.mrf.mxu0
  %9621 = vmatprep.mubr.f32.mxu0 0.0
  %9622 = vmatmul.mubr.f32.gmra.mxu0 %v9456
  %v9623 = vpop.f32.mrf.mxu0
  %v9624 = vadd.f32 0.0, %v9623
  %v9625 = vpop.f32.mrf.mxu0
  %9626 = vmatprep.mubr.f32.mxu0 0.0
  %9627 = vmatmul.mubr.f32.gmra.mxu0 %v9457
  %v9628 = vpop.f32.mrf.mxu0
  %v9629 = vadd.f32 0.0, %v9628
  %v9630 = vpop.f32.mrf.mxu0
  %9631 = vmatprep.mubr.f32.mxu0 0.0
  %9632 = vmatmul.mubr.f32.gmra.mxu0 %v9458
  %v9633 = vpop.f32.mrf.mxu0
  %v9634 = vadd.f32 0.0, %v9633
  %v9635 = vpop.f32.mrf.mxu0
  %9636 = vmatprep.mubr.f32.mxu0 0.0
  %9637 = vmatmul.mubr.f32.gmra.mxu0 %v9459
  %v9638 = vpop.f32.mrf.mxu0
  %v9639 = vadd.f32 0.0, %v9638
  %v9640 = vpop.f32.mrf.mxu0
  %9641 = vmatprep.mubr.f32.mxu0 0.0
  %9642 = vmatmul.mubr.f32.gmra.mxu0 %v9460
  %v9643 = vpop.f32.mrf.mxu0
  %v9644 = vadd.f32 0.0, %v9643
  %v9645 = vpop.f32.mrf.mxu0
  %9646 = vmatprep.mubr.f32.mxu0 0.0
  %9647 = vmatmul.mubr.f32.gmra.mxu0 %v9461
  %v9648 = vpop.f32.mrf.mxu0
  %v9649 = vadd.f32 0.0, %v9648
  %v9650 = vpop.f32.mrf.mxu0
  %9651 = vmatprep.mubr.f32.mxu0 0.0
  %9652 = vmatmul.mubr.f32.gmra.mxu0 %v9462
  %v9653 = vpop.f32.mrf.mxu0
  %v9654 = vadd.f32 0.0, %v9653
  %v9655 = vpop.f32.mrf.mxu0
  %9656 = vmatprep.mubr.f32.mxu0 0.0
  %9657 = vmatmul.mubr.f32.gmra.mxu0 %v9463
  %v9658 = vpop.f32.mrf.mxu0
  %v9659 = vadd.f32 0.0, %v9658
  %v9660 = vpop.f32.mrf.mxu0
  %9661 = vmatprep.mubr.f32.mxu0 0.0
  %9662 = vmatmul.mubr.f32.gmra.mxu0 %v9464
  %v9663 = vpop.f32.mrf.mxu0
  %v9664 = vadd.f32 0.0, %v9663
  %v9665 = vpop.f32.mrf.mxu0
  %9666 = vmatprep.mubr.f32.mxu0 0.0
  %9667 = vmatmul.mubr.f32.gmra.mxu0 %v9465
  %v9668 = vpop.f32.mrf.mxu0
  %v9669 = vadd.f32 0.0, %v9668
  %v9670 = vpop.f32.mrf.mxu0
  %9671 = vmatprep.mubr.f32.mxu0 0.0
  %9672 = vmatmul.mubr.f32.gmra.mxu0 %v9466
  %v9673 = vpop.f32.mrf.mxu0
  %v9674 = vadd.f32 0.0, %v9673
  %v9675 = vpop.f32.mrf.mxu0
  %9676 = vmatprep.mubr.f32.mxu0 0.0
  %9677 = vmatmul.mubr.f32.gmra.mxu0 %v9467
  %v9678 = vpop.f32.mrf.mxu0
  %v9679 = vadd.f32 0.0, %v9678
  %v9680 = vpop.f32.mrf.mxu0
  %9681 = vmatprep.mubr.f32.mxu0 0.0
  %9682 = vmatmul.mubr.f32.gmra.mxu0 %v9468
  %v9683 = vpop.f32.mrf.mxu0
  %v9684 = vadd.f32 0.0, %v9683
  %v9685 = vpop.f32.mrf.mxu0
  %9686 = vmatprep.mubr.f32.mxu0 0.0
  %9687 = vmatmul.mubr.f32.gmra.mxu0 %v9469
  %v9688 = vpop.f32.mrf.mxu0
  %v9689 = vadd.f32 0.0, %v9688
  %v9690 = vpop.f32.mrf.mxu0
  %9691 = vmatprep.mubr.f32.mxu0 0.0
  %9692 = vmatmul.mubr.f32.gmra.mxu0 %v9470
  %v9693 = vpop.f32.mrf.mxu0
  %v9694 = vadd.f32 0.0, %v9693
  %v9695 = vpop.f32.mrf.mxu0
  %9696 = vmatprep.mubr.f32.mxu0 0.0
  %9697 = vmatmul.mubr.f32.gmra.mxu0 %v9471
  %v9698 = vpop.f32.mrf.mxu0
  %v9699 = vadd.f32 0.0, %v9698
  %v9700 = vpop.f32.mrf.mxu0
  %9701 = vmatprep.mubr.f32.mxu0 0.0
  %9702 = vmatmul.mubr.f32.gmra.mxu0 %v9472
  %v9703 = vpop.f32.mrf.mxu0
  %v9704 = vadd.f32 0.0, %v9703
  %v9705 = vpop.f32.mrf.mxu0
  %9706 = vmatprep.mubr.f32.mxu0 0.0
  %9707 = vmatmul.mubr.f32.gmra.mxu0 %v9473
  %v9708 = vpop.f32.mrf.mxu0
  %v9709 = vadd.f32 0.0, %v9708
  %v9710 = vpop.f32.mrf.mxu0
  %9711 = vmatprep.mubr.f32.mxu0 0.0
  %9712 = vmatmul.mubr.f32.gmra.mxu0 %v9474
  %v9713 = vpop.f32.mrf.mxu0
  %v9714 = vadd.f32 0.0, %v9713
  %v9715 = vpop.f32.mrf.mxu0
  %9716 = vmatprep.mubr.f32.mxu0 0.0
  %9717 = vmatmul.mubr.f32.gmra.mxu0 %v9475
  %v9718 = vpop.f32.mrf.mxu0
  %v9719 = vadd.f32 0.0, %v9718
  %v9720 = vpop.f32.mrf.mxu0
  %9721 = vmatprep.mubr.f32.mxu0 0.0
  %9722 = vmatmul.mubr.f32.gmra.mxu0 %v9476
  %v9723 = vpop.f32.mrf.mxu0
  %v9724 = vadd.f32 0.0, %v9723
  %v9725 = vpop.f32.mrf.mxu0
  %9726 = vmatprep.mubr.f32.mxu0 0.0
  %9727 = vmatmul.mubr.f32.gmra.mxu0 %v9477
  %v9728 = vpop.f32.mrf.mxu0
  %v9729 = vadd.f32 0.0, %v9728
  %v9730 = vpop.f32.mrf.mxu0
  %9731 = vmatprep.mubr.f32.mxu0 0.0
  %9732 = vmatmul.mubr.f32.gmra.mxu0 %v9478
  %v9733 = vpop.f32.mrf.mxu0
  %v9734 = vadd.f32 0.0, %v9733
  %v9735 = vpop.f32.mrf.mxu0
  %9736 = vmatprep.mubr.f32.mxu0 0.0
  %9737 = vmatmul.mubr.f32.gmra.mxu0 %v9479
  %v9738 = vpop.f32.mrf.mxu0
  %v9739 = vadd.f32 0.0, %v9738
  %v9740 = vpop.f32.mrf.mxu0
  %9741 = vmatprep.mubr.f32.mxu0 0.0
  %9742 = vmatmul.mubr.f32.gmra.mxu0 %v9480
  %v9743 = vpop.f32.mrf.mxu0
  %v9744 = vadd.f32 0.0, %v9743
  %v9745 = vpop.f32.mrf.mxu0
  %9746 = vmatprep.mubr.f32.mxu0 0.0
  %9747 = vmatmul.mubr.f32.gmra.mxu0 %v9481
  %v9748 = vpop.f32.mrf.mxu0
  %v9749 = vadd.f32 0.0, %v9748
  %v9750 = vpop.f32.mrf.mxu0
  %9751 = vmatprep.mubr.f32.mxu0 0.0
  %9752 = vmatmul.mubr.f32.gmra.mxu0 %v9482
  %v9753 = vpop.f32.mrf.mxu0
  %v9754 = vadd.f32 0.0, %v9753
  %v9755 = vpop.f32.mrf.mxu0
  %9756 = vmatprep.mubr.f32.mxu0 0.0
  %9757 = vmatmul.mubr.f32.gmra.mxu0 %v9483
  %v9758 = vpop.f32.mrf.mxu0
  %v9759 = vadd.f32 0.0, %v9758
  %v9760 = vpop.f32.mrf.mxu0
  %9761 = vmatprep.mubr.f32.mxu0 0.0
  %9762 = vmatmul.mubr.f32.gmra.mxu0 %v9484
  %v9763 = vpop.f32.mrf.mxu0
  %v9764 = vadd.f32 0.0, %v9763
  %v9765 = vpop.f32.mrf.mxu0
  %9766 = vmatprep.mubr.f32.mxu0 0.0
  %9767 = vmatmul.mubr.f32.gmra.mxu0 %v9485
  %v9768 = vpop.f32.mrf.mxu0
  %v9769 = vadd.f32 0.0, %v9768
  %v9770 = vpop.f32.mrf.mxu0
  %9771 = vmatprep.mubr.f32.mxu0 0.0
  %9772 = vmatmul.mubr.f32.gmra.mxu0 %v9486
  %v9773 = vpop.f32.mrf.mxu0
  %v9774 = vadd.f32 0.0, %v9773
  %v9775 = vpop.f32.mrf.mxu0
  %9776 = vmatprep.mubr.f32.mxu0 0.0
  %9777 = vmatmul.mubr.f32.gmra.mxu0 %v9487
  %v9778 = vpop.f32.mrf.mxu0
  %v9779 = vadd.f32 0.0, %v9778
  %v9780 = vpop.f32.mrf.mxu0
  %9781 = vmatprep.mubr.f32.mxu0 0.0
  %9782 = vmatmul.mubr.f32.gmra.mxu0 %v9488
  %v9783 = vpop.f32.mrf.mxu0
  %v9784 = vadd.f32 0.0, %v9783
  %v9785 = vpop.f32.mrf.mxu0
  %9786 = vmatprep.mubr.f32.mxu0 0.0
  %9787 = vmatmul.mubr.f32.gmra.mxu0 %v9489
  %v9788 = vpop.f32.mrf.mxu0
  %v9789 = vadd.f32 0.0, %v9788
  %v9790 = vpop.f32.mrf.mxu0
  %9791 = vmatprep.mubr.f32.mxu0 0.0
  %9792 = vmatmul.mubr.f32.gmra.mxu0 %v9490
  %v9793 = vpop.f32.mrf.mxu0
  %v9794 = vadd.f32 0.0, %v9793
  %v9795 = vpop.f32.mrf.mxu0
  %9796 = vmatprep.mubr.f32.mxu0 0.0
  %9797 = vmatmul.mubr.f32.gmra.mxu0 %v9491
  %v9798 = vpop.f32.mrf.mxu0
  %v9799 = vadd.f32 0.0, %v9798
  %v9800 = vpop.f32.mrf.mxu0
  %9801 = vmatprep.mubr.f32.mxu0 0.0
  %9802 = vmatmul.mubr.f32.gmra.mxu0 %v9492
  %v9803 = vpop.f32.mrf.mxu0
  %v9804 = vadd.f32 0.0, %v9803
  %v9805 = vpop.f32.mrf.mxu0
  %9806 = vmatprep.mubr.f32.mxu0 0.0
  %9807 = vmatmul.mubr.f32.gmra.mxu0 %v9493
  %v9808 = vpop.f32.mrf.mxu0
  %v9809 = vadd.f32 0.0, %v9808
  %v9810 = vpop.f32.mrf.mxu0
  %9811 = vmatprep.mubr.f32.mxu0 0.0
  %9812 = vmatmul.mubr.f32.gmra.mxu0 %v9494
  %v9813 = vpop.f32.mrf.mxu0
  %v9814 = vadd.f32 0.0, %v9813
  %v9815 = vpop.f32.mrf.mxu0
  %9816 = vmatprep.mubr.f32.mxu0 0.0
  %9817 = vmatmul.mubr.f32.gmra.mxu0 %v9495
  %v9818 = vpop.f32.mrf.mxu0
  %v9819 = vadd.f32 0.0, %v9818
  %v9820 = vpop.f32.mrf.mxu0
  %9821 = vmatprep.mubr.f32.mxu0 0.0
  %9822 = vmatmul.mubr.f32.gmra.mxu0 %v9496
  %v9823 = vpop.f32.mrf.mxu0
  %v9824 = vadd.f32 0.0, %v9823
  %v9825 = vpop.f32.mrf.mxu0
  %9826 = vmatprep.mubr.f32.mxu0 0.0
  %9827 = vmatmul.mubr.f32.gmra.mxu0 %v9497
  %v9828 = vpop.f32.mrf.mxu0
  %v9829 = vadd.f32 0.0, %v9828
  %v9830 = vpop.f32.mrf.mxu0
  %9831 = vmatprep.mubr.f32.mxu0 0.0
  %9832 = vmatmul.mubr.f32.gmra.mxu0 %v9498
  %v9833 = vpop.f32.mrf.mxu0
  %v9834 = vadd.f32 0.0, %v9833
  %v9835 = vpop.f32.mrf.mxu0
  %9836 = vmatprep.mubr.f32.mxu0 0.0
  %9837 = vmatmul.mubr.f32.gmra.mxu0 %v9499
  %v9838 = vpop.f32.mrf.mxu0
  %v9839 = vadd.f32 0.0, %v9838
  %v9840 = vpop.f32.mrf.mxu0
  %9841 = vmatprep.mubr.f32.mxu0 0.0
  %9842 = vmatmul.mubr.f32.gmra.mxu0 %v9500
  %v9843 = vpop.f32.mrf.mxu0
  %v9844 = vadd.f32 0.0, %v9843
  %v9845 = vpop.f32.mrf.mxu0
  %9846 = vmatprep.mubr.f32.mxu0 0.0
  %9847 = vmatmul.mubr.f32.gmra.mxu0 %v9501
  %v9848 = vpop.f32.mrf.mxu0
  %v9849 = vadd.f32 0.0, %v9848
  %v9850 = vpop.f32.mrf.mxu0
  %9851 = vmatprep.mubr.f32.mxu0 0.0
  %9852 = vmatmul.mubr.f32.gmra.mxu0 %v9502
  %v9853 = vpop.f32.mrf.mxu0
  %v9854 = vadd.f32 0.0, %v9853
  %v9855 = vpop.f32.mrf.mxu0
  %9856 = vmatprep.mubr.f32.mxu0 0.0
  %9857 = vmatmul.mubr.f32.gmra.mxu0 %v9503
  %v9858 = vpop.f32.mrf.mxu0
  %v9859 = vadd.f32 0.0, %v9858
  %v9860 = vpop.f32.mrf.mxu0
  %9861 = vmatprep.mubr.f32.mxu0 0.0
  %9862 = vmatmul.mubr.f32.gmra.mxu0 %v9504
  %v9863 = vpop.f32.mrf.mxu0
  %v9864 = vadd.f32 0.0, %v9863
  %v9865 = vpop.f32.mrf.mxu0
  %9866 = vmatprep.mubr.f32.mxu0 0.0
  %9867 = vmatmul.mubr.f32.gmra.mxu0 %v9505
  %v9868 = vpop.f32.mrf.mxu0
  %v9869 = vadd.f32 0.0, %v9868
  %v9870 = vpop.f32.mrf.mxu0
  %9871 = vmatprep.mubr.f32.mxu0 0.0
  %9872 = vmatmul.mubr.f32.gmra.mxu0 %v9506
  %v9873 = vpop.f32.mrf.mxu0
  %v9874 = vadd.f32 0.0, %v9873
  %v9875 = vpop.f32.mrf.mxu0
  %9876 = vmatprep.mubr.f32.mxu0 0.0
  %9877 = vmatmul.mubr.f32.gmra.mxu0 %v9507
  %v9878 = vpop.f32.mrf.mxu0
  %v9879 = vadd.f32 0.0, %v9878
  %v9880 = vpop.f32.mrf.mxu0
  %9881 = vmatprep.mubr.f32.mxu0 0.0
  %9882 = vmatmul.mubr.f32.gmra.mxu0 %v9508
  %v9883 = vpop.f32.mrf.mxu0
  %v9884 = vadd.f32 0.0, %v9883
  %v9885 = vpop.f32.mrf.mxu0
  %9886 = vmatprep.mubr.f32.mxu0 0.0
  %9887 = vmatmul.mubr.f32.gmra.mxu0 %v9509
  %v9888 = vpop.f32.mrf.mxu0
  %v9889 = vadd.f32 0.0, %v9888
  %v9890 = vpop.f32.mrf.mxu0
  %9891 = vmatprep.mubr.f32.mxu0 0.0
  %9892 = vmatmul.mubr.f32.gmra.mxu0 %v9510
  %v9893 = vpop.f32.mrf.mxu0
  %v9894 = vadd.f32 0.0, %v9893
  %v9895 = vpop.f32.mrf.mxu0
  %9896 = vmatprep.mubr.f32.mxu0 0.0
  %9897 = vmatmul.mubr.f32.gmra.mxu0 %v9511
  %v9898 = vpop.f32.mrf.mxu0
  %v9899 = vadd.f32 0.0, %v9898
  %v9900 = vpop.f32.mrf.mxu0
  %9901 = vmatprep.mubr.f32.mxu0 0.0
  %9902 = vmatmul.mubr.f32.gmra.mxu0 %v9512
  %v9903 = vpop.f32.mrf.mxu0
  %v9904 = vadd.f32 0.0, %v9903
  %v9905 = vpop.f32.mrf.mxu0
  %9906 = vmatprep.mubr.f32.mxu0 0.0
  %9907 = vmatmul.mubr.f32.gmra.mxu0 %v9513
  %v9908 = vpop.f32.mrf.mxu0
  %v9909 = vadd.f32 0.0, %v9908
  %v9910 = vpop.f32.mrf.mxu0
  %9911 = vmatprep.mubr.f32.mxu0 0.0
  %9912 = vmatmul.mubr.f32.gmra.mxu0 %v9514
  %v9913 = vpop.f32.mrf.mxu0
  %v9914 = vadd.f32 0.0, %v9913
  %v9915 = vpop.f32.mrf.mxu0
  %9916 = vdwg.mxu0
  %v9917 = vadd.f32 %v9387, %v9599
  %v9918 = vadd.f32 %v9388, %v9604
  %v9919 = vadd.f32 %v9389, %v9609
  %v9920 = vadd.f32 %v9390, %v9614
  %v9921 = vadd.f32 %v9391, %v9619
  %v9922 = vadd.f32 %v9392, %v9624
  %v9923 = vadd.f32 %v9393, %v9629
  %v9924 = vadd.f32 %v9394, %v9634
  %v9925 = vadd.f32 %v9395, %v9639
  %v9926 = vadd.f32 %v9396, %v9644
  %v9927 = vadd.f32 %v9397, %v9649
  %v9928 = vadd.f32 %v9398, %v9654
  %v9929 = vadd.f32 %v9399, %v9659
  %v9930 = vadd.f32 %v9400, %v9664
  %v9931 = vadd.f32 %v9401, %v9669
  %v9932 = vadd.f32 %v9402, %v9674
  %v9933 = vadd.f32 %v9403, %v9679
  %v9934 = vadd.f32 %v9404, %v9684
  %v9935 = vadd.f32 %v9405, %v9689
  %v9936 = vadd.f32 %v9406, %v9694
  %v9937 = vadd.f32 %v9407, %v9699
  %v9938 = vadd.f32 %v9408, %v9704
  %v9939 = vadd.f32 %v9409, %v9709
  %v9940 = vadd.f32 %v9410, %v9714
  %v9941 = vadd.f32 %v9411, %v9719
  %v9942 = vadd.f32 %v9412, %v9724
  %v9943 = vadd.f32 %v9413, %v9729
  %v9944 = vadd.f32 %v9414, %v9734
  %v9945 = vadd.f32 %v9415, %v9739
  %v9946 = vadd.f32 %v9416, %v9744
  %v9947 = vadd.f32 %v9417, %v9749
  %v9948 = vadd.f32 %v9418, %v9754
  %v9949 = vadd.f32 %v9419, %v9759
  %v9950 = vadd.f32 %v9420, %v9764
  %v9951 = vadd.f32 %v9421, %v9769
  %v9952 = vadd.f32 %v9422, %v9774
  %v9953 = vadd.f32 %v9423, %v9779
  %v9954 = vadd.f32 %v9424, %v9784
  %v9955 = vadd.f32 %v9425, %v9789
  %v9956 = vadd.f32 %v9426, %v9794
  %v9957 = vadd.f32 %v9427, %v9799
  %v9958 = vadd.f32 %v9428, %v9804
  %v9959 = vadd.f32 %v9429, %v9809
  %v9960 = vadd.f32 %v9430, %v9814
  %v9961 = vadd.f32 %v9431, %v9819
  %v9962 = vadd.f32 %v9432, %v9824
  %v9963 = vadd.f32 %v9433, %v9829
  %v9964 = vadd.f32 %v9434, %v9834
  %v9965 = vadd.f32 %v9435, %v9839
  %v9966 = vadd.f32 %v9436, %v9844
  %v9967 = vadd.f32 %v9437, %v9849
  %v9968 = vadd.f32 %v9438, %v9854
  %v9969 = vadd.f32 %v9439, %v9859
  %v9970 = vadd.f32 %v9440, %v9864
  %v9971 = vadd.f32 %v9441, %v9869
  %v9972 = vadd.f32 %v9442, %v9874
  %v9973 = vadd.f32 %v9443, %v9879
  %v9974 = vadd.f32 %v9444, %v9884
  %v9975 = vadd.f32 %v9445, %v9889
  %v9976 = vadd.f32 %v9446, %v9894
  %v9977 = vadd.f32 %v9447, %v9899
  %v9978 = vadd.f32 %v9448, %v9904
  %v9979 = vadd.f32 %v9449, %v9909
  %v9980 = vadd.f32 %v9450, %v9914
  %v9981 = vmul.f32 %v9917, 0.01
  %v9982 = vmul.f32 %v9918, 0.01
  %v9983 = vmul.f32 %v9919, 0.01
  %v9984 = vmul.f32 %v9920, 0.01
  %v9985 = vmul.f32 %v9921, 0.01
  %v9986 = vmul.f32 %v9922, 0.01
  %v9987 = vmul.f32 %v9923, 0.01
  %v9988 = vmul.f32 %v9924, 0.01
  %v9989 = vmul.f32 %v9925, 0.01
  %v9990 = vmul.f32 %v9926, 0.01
  %v9991 = vmul.f32 %v9927, 0.01
  %v9992 = vmul.f32 %v9928, 0.01
  %v9993 = vmul.f32 %v9929, 0.01
  %v9994 = vmul.f32 %v9930, 0.01
  %v9995 = vmul.f32 %v9931, 0.01
  %v9996 = vmul.f32 %v9932, 0.01
  %v9997 = vmul.f32 %v9933, 0.01
  %v9998 = vmul.f32 %v9934, 0.01
  %v9999 = vmul.f32 %v9935, 0.01
  %v10000 = vmul.f32 %v9936, 0.01
  %v10001 = vmul.f32 %v9937, 0.01
  %v10002 = vmul.f32 %v9938, 0.01
  %v10003 = vmul.f32 %v9939, 0.01
  %v10004 = vmul.f32 %v9940, 0.01
  %v10005 = vmul.f32 %v9941, 0.01
  %v10006 = vmul.f32 %v9942, 0.01
  %v10007 = vmul.f32 %v9943, 0.01
  %v10008 = vmul.f32 %v9944, 0.01
  %v10009 = vmul.f32 %v9945, 0.01
  %v10010 = vmul.f32 %v9946, 0.01
  %v10011 = vmul.f32 %v9947, 0.01
  %v10012 = vmul.f32 %v9948, 0.01
  %v10013 = vmul.f32 %v9949, 0.01
  %v10014 = vmul.f32 %v9950, 0.01
  %v10015 = vmul.f32 %v9951, 0.01
  %v10016 = vmul.f32 %v9952, 0.01
  %v10017 = vmul.f32 %v9953, 0.01
  %v10018 = vmul.f32 %v9954, 0.01
  %v10019 = vmul.f32 %v9955, 0.01
  %v10020 = vmul.f32 %v9956, 0.01
  %v10021 = vmul.f32 %v9957, 0.01
  %v10022 = vmul.f32 %v9958, 0.01
  %v10023 = vmul.f32 %v9959, 0.01
  %v10024 = vmul.f32 %v9960, 0.01
  %v10025 = vmul.f32 %v9961, 0.01
  %v10026 = vmul.f32 %v9962, 0.01
  %v10027 = vmul.f32 %v9963, 0.01
  %v10028 = vmul.f32 %v9964, 0.01
  %v10029 = vmul.f32 %v9965, 0.01
  %v10030 = vmul.f32 %v9966, 0.01
  %v10031 = vmul.f32 %v9967, 0.01
  %v10032 = vmul.f32 %v9968, 0.01
  %v10033 = vmul.f32 %v9969, 0.01
  %v10034 = vmul.f32 %v9970, 0.01
  %v10035 = vmul.f32 %v9971, 0.01
  %v10036 = vmul.f32 %v9972, 0.01
  %v10037 = vmul.f32 %v9973, 0.01
  %v10038 = vmul.f32 %v9974, 0.01
  %v10039 = vmul.f32 %v9975, 0.01
  %v10040 = vmul.f32 %v9976, 0.01
  %v10041 = vmul.f32 %v9977, 0.01
  %v10042 = vmul.f32 %v9978, 0.01
  %v10043 = vmul.f32 %v9979, 0.01
  %v10044 = vmul.f32 %v9980, 0.01
  %v10045 = vmax.f32 %v9917, %v9981
  %v10046 = vmax.f32 %v9918, %v9982
  %v10047 = vmax.f32 %v9919, %v9983
  %v10048 = vmax.f32 %v9920, %v9984
  %v10049 = vmax.f32 %v9921, %v9985
  %v10050 = vmax.f32 %v9922, %v9986
  %v10051 = vmax.f32 %v9923, %v9987
  %v10052 = vmax.f32 %v9924, %v9988
  %v10053 = vmax.f32 %v9925, %v9989
  %v10054 = vmax.f32 %v9926, %v9990
  %v10055 = vmax.f32 %v9927, %v9991
  %v10056 = vmax.f32 %v9928, %v9992
  %v10057 = vmax.f32 %v9929, %v9993
  %v10058 = vmax.f32 %v9930, %v9994
  %v10059 = vmax.f32 %v9931, %v9995
  %v10060 = vmax.f32 %v9932, %v9996
  %v10061 = vmax.f32 %v9933, %v9997
  %v10062 = vmax.f32 %v9934, %v9998
  %v10063 = vmax.f32 %v9935, %v9999
  %v10064 = vmax.f32 %v9936, %v10000
  %v10065 = vmax.f32 %v9937, %v10001
  %v10066 = vmax.f32 %v9938, %v10002
  %v10067 = vmax.f32 %v9939, %v10003
  %v10068 = vmax.f32 %v9940, %v10004
  %v10069 = vmax.f32 %v9941, %v10005
  %v10070 = vmax.f32 %v9942, %v10006
  %v10071 = vmax.f32 %v9943, %v10007
  %v10072 = vmax.f32 %v9944, %v10008
  %v10073 = vmax.f32 %v9945, %v10009
  %v10074 = vmax.f32 %v9946, %v10010
  %v10075 = vmax.f32 %v9947, %v10011
  %v10076 = vmax.f32 %v9948, %v10012
  %v10077 = vmax.f32 %v9949, %v10013
  %v10078 = vmax.f32 %v9950, %v10014
  %v10079 = vmax.f32 %v9951, %v10015
  %v10080 = vmax.f32 %v9952, %v10016
  %v10081 = vmax.f32 %v9953, %v10017
  %v10082 = vmax.f32 %v9954, %v10018
  %v10083 = vmax.f32 %v9955, %v10019
  %v10084 = vmax.f32 %v9956, %v10020
  %v10085 = vmax.f32 %v9957, %v10021
  %v10086 = vmax.f32 %v9958, %v10022
  %v10087 = vmax.f32 %v9959, %v10023
  %v10088 = vmax.f32 %v9960, %v10024
  %v10089 = vmax.f32 %v9961, %v10025
  %v10090 = vmax.f32 %v9962, %v10026
  %v10091 = vmax.f32 %v9963, %v10027
  %v10092 = vmax.f32 %v9964, %v10028
  %v10093 = vmax.f32 %v9965, %v10029
  %v10094 = vmax.f32 %v9966, %v10030
  %v10095 = vmax.f32 %v9967, %v10031
  %v10096 = vmax.f32 %v9968, %v10032
  %v10097 = vmax.f32 %v9969, %v10033
  %v10098 = vmax.f32 %v9970, %v10034
  %v10099 = vmax.f32 %v9971, %v10035
  %v10100 = vmax.f32 %v9972, %v10036
  %v10101 = vmax.f32 %v9973, %v10037
  %v10102 = vmax.f32 %v9974, %v10038
  %v10103 = vmax.f32 %v9975, %v10039
  %v10104 = vmax.f32 %v9976, %v10040
  %v10105 = vmax.f32 %v9977, %v10041
  %v10106 = vmax.f32 %v9978, %v10042
  %v10107 = vmax.f32 %v9979, %v10043
  %v10108 = vmax.f32 %v9980, %v10044
  %10109 = vst [vmem:[%s5] sm:$0xff] %v10045
  %10110 = vst [vmem:[%s5 + $0x8] sm:$0xff] %v10046
  %10111 = vst [vmem:[%s5 + $0x10] sm:$0xff] %v10047
  %10112 = vst [vmem:[%s5 + $0x18] sm:$0xff] %v10048
  %10113 = vst [vmem:[%s5 + $0x20] sm:$0xff] %v10049
  %10114 = vst [vmem:[%s5 + $0x28] sm:$0xff] %v10050
  %10115 = vst [vmem:[%s5 + $0x30] sm:$0xff] %v10051
  %10116 = vst [vmem:[%s5 + $0x38] sm:$0xff] %v10052
  %10117 = vst [vmem:[%s5 + $0x40] sm:$0xff] %v10053
  %10118 = vst [vmem:[%s5 + $0x48] sm:$0xff] %v10054
  %10119 = vst [vmem:[%s5 + $0x50] sm:$0xff] %v10055
  %10120 = vst [vmem:[%s5 + $0x58] sm:$0xff] %v10056
  %10121 = vst [vmem:[%s5 + $0x60] sm:$0xff] %v10057
  %10122 = vst [vmem:[%s5 + $0x68] sm:$0xff] %v10058
  %10123 = vst [vmem:[%s5 + $0x70] sm:$0xff] %v10059
  %10124 = vst [vmem:[%s5 + $0x78] sm:$0xff] %v10060
  %10125 = vst [vmem:[%s5 + $0x80] sm:$0xff] %v10061
  %10126 = vst [vmem:[%s5 + $0x88] sm:$0xff] %v10062
  %10127 = vst [vmem:[%s5 + $0x90] sm:$0xff] %v10063
  %10128 = vst [vmem:[%s5 + $0x98] sm:$0xff] %v10064
  %10129 = vst [vmem:[%s5 + $0xa0] sm:$0xff] %v10065
  %10130 = vst [vmem:[%s5 + $0xa8] sm:$0xff] %v10066
  %10131 = vst [vmem:[%s5 + $0xb0] sm:$0xff] %v10067
  %10132 = vst [vmem:[%s5 + $0xb8] sm:$0xff] %v10068
  %10133 = vst [vmem:[%s5 + $0xc0] sm:$0xff] %v10069
  %10134 = vst [vmem:[%s5 + $0xc8] sm:$0xff] %v10070
  %10135 = vst [vmem:[%s5 + $0xd0] sm:$0xff] %v10071
  %10136 = vst [vmem:[%s5 + $0xd8] sm:$0xff] %v10072
  %10137 = vst [vmem:[%s5 + $0xe0] sm:$0xff] %v10073
  %10138 = vst [vmem:[%s5 + $0xe8] sm:$0xff] %v10074
  %10139 = vst [vmem:[%s5 + $0xf0] sm:$0xff] %v10075
  %10140 = vst [vmem:[%s5 + $0xf8] sm:$0xff] %v10076
  %10141 = vst [vmem:[%s5 + $0x100] sm:$0xff] %v10077
  %10142 = vst [vmem:[%s5 + $0x108] sm:$0xff] %v10078
  %10143 = vst [vmem:[%s5 + $0x110] sm:$0xff] %v10079
  %10144 = vst [vmem:[%s5 + $0x118] sm:$0xff] %v10080
  %10145 = vst [vmem:[%s5 + $0x120] sm:$0xff] %v10081
  %10146 = vst [vmem:[%s5 + $0x128] sm:$0xff] %v10082
  %10147 = vst [vmem:[%s5 + $0x130] sm:$0xff] %v10083
  %10148 = vst [vmem:[%s5 + $0x138] sm:$0xff] %v10084
  %10149 = vst [vmem:[%s5 + $0x140] sm:$0xff] %v10085
  %10150 = vst [vmem:[%s5 + $0x148] sm:$0xff] %v10086
  %10151 = vst [vmem:[%s5 + $0x150] sm:$0xff] %v10087
  %10152 = vst [vmem:[%s5 + $0x158] sm:$0xff] %v10088
  %10153 = vst [vmem:[%s5 + $0x160] sm:$0xff] %v10089
  %10154 = vst [vmem:[%s5 + $0x168] sm:$0xff] %v10090
  %10155 = vst [vmem:[%s5 + $0x170] sm:$0xff] %v10091
  %10156 = vst [vmem:[%s5 + $0x178] sm:$0xff] %v10092
  %10157 = vst [vmem:[%s5 + $0x180] sm:$0xff] %v10093
  %10158 = vst [vmem:[%s5 + $0x188] sm:$0xff] %v10094
  %10159 = vst [vmem:[%s5 + $0x190] sm:$0xff] %v10095
  %10160 = vst [vmem:[%s5 + $0x198] sm:$0xff] %v10096
  %10161 = vst [vmem:[%s5 + $0x1a0] sm:$0xff] %v10097
  %10162 = vst [vmem:[%s5 + $0x1a8] sm:$0xff] %v10098
  %10163 = vst [vmem:[%s5 + $0x1b0] sm:$0xff] %v10099
  %10164 = vst [vmem:[%s5 + $0x1b8] sm:$0xff] %v10100
  %10165 = vst [vmem:[%s5 + $0x1c0] sm:$0xff] %v10101
  %10166 = vst [vmem:[%s5 + $0x1c8] sm:$0xff] %v10102
  %10167 = vst [vmem:[%s5 + $0x1d0] sm:$0xff] %v10103
  %10168 = vst [vmem:[%s5 + $0x1d8] sm:$0xff] %v10104
  %10169 = vst [vmem:[%s5 + $0x1e0] sm:$0xff] %v10105
  %10170 = vst [vmem:[%s5 + $0x1e8] sm:$0xff] %v10106
  %10171 = vst [vmem:[%s5 + $0x1f0] sm:$0xff] %v10107
  %10172 = vst [vmem:[%s5 + $0x1f8] sm:$0xff] %v10108
  // Predicated region
  $region22: #{res_block_forward_nhwc.1} parent=0 // pred_check
    _
  $region23: #{res_block_forward_nhwc.1} parent=0 // pred_check_branch
    %10174 = sbr.rel (0) target = $region25
  $region24: #{res_block_forward_nhwc.1} parent=0 // pred_region
    _
  $region25: #{res_block_forward_nhwc.1} parent=0 // pred_fallthru
    _
  // Predicated region
  $region26: #{res_block_forward_nhwc.1} parent=0 // pred_check
    _
  $region27: #{res_block_forward_nhwc.1} parent=0 // pred_check_branch
    %10176 = sbr.rel (0) target = $region29
  $region28: #{res_block_forward_nhwc.1} parent=0 // pred_region
    _
  $region29: #{res_block_forward_nhwc.1} parent=0 // pred_fallthru
    _

</llo_original>
